<compile_context>
chip_gen: v7x
topology: tpu7x:2x2x1
jax: 0.10.0
libtpu: 0.0.40
codegen_flags: <defaults>
</compile_context>

<pallas_src>
import numpy as np
import jax
import jax.numpy as jnp
from jax.experimental import pallas as pl
from jax.experimental.pallas import tpu as pltpu


_VMEM = pl.BlockSpec(memory_space=pltpu.MemorySpace.VMEM)


# ----------------------------------------------------------------------------
# In-kernel helpers
# ----------------------------------------------------------------------------
def _lstm_gates(gates, c, H):
    """LSTM nonlinearities on a packed (M, 4H) gate slab [i | f | g | o].

    sigmoid / tanh are evaluated ONCE over the full slab (2 EUP passes) and the
    four gates are taken as lane slices, instead of 3 sigmoid + 1 tanh on
    narrow 32-lane slices."""
    sg = jax.nn.sigmoid(gates)
    th = jnp.tanh(gates)
    i = sg[:, 0:H]
    f = sg[:, H:2 * H]
    g = th[:, 2 * H:3 * H]
    o = sg[:, 3 * H:4 * H]
    c_new = f * c + i * g
    h_new = o * jnp.tanh(c_new)
    return h_new, c_new


def _lstm2_recurrence(gx_ref, lens, whh0, w1cat, b1, T, RB, H):
    """2-layer masked LSTM recurrence over T timesteps for RB folded sequences.

    gx_ref : (T, RB, 4H) hoisted layer-0 input projection (bias already added)
    lens   : (RB, 1) int32; states freeze once t >= len  (pack_padded finals)
    whh0   : (H, 4H) layer-0 recurrent weights
    w1cat  : (2H, 4H) row-stacked [Wih1 ; Whh1] -> ONE K=2H matmul per step
    Returns final (h0, c0, h1, c1), each (RB, H)."""
    z = jnp.zeros((RB, H), jnp.float32)
    h0, c0, h1, c1 = z, z, z, z
    # Static trip count -> fully unrolled; the two dependent MXU pushes per
    # step are the serial critical path, everything else interleaves.
    for t in range(T):
        keep = t < lens                                   # (RB, 1) bool
        g0 = gx_ref[t] + jnp.dot(h0, whh0, preferred_element_type=jnp.float32)
        h0n, c0n = _lstm_gates(g0, c0, H)
        g1 = jnp.dot(jnp.concatenate([h0n, h1], axis=-1), w1cat,
                     preferred_element_type=jnp.float32) + b1
        h1n, c1n = _lstm_gates(g1, c1, H)
        h0 = jnp.where(keep, h0n, h0)
        c0 = jnp.where(keep, c0n, c0)
        h1 = jnp.where(keep, h1n, h1)
        c1 = jnp.where(keep, c1n, c1)
    return h0, c0, h1, c1


# ----------------------------------------------------------------------------
# The single fused encoder kernel
# ----------------------------------------------------------------------------
def encoder_kernel(image_ref, fact_x_ref, fact_len_ref, ques_x_ref, ques_len_ref,
                   img_w_ref, img_b_ref,
                   f_wih0_ref, f_whh0_ref, f_b0_ref, f_w1_ref, f_b1_ref,
                   q_wih0w_ref, q_wih0i_ref, q_whh0_ref, q_b0_ref,
                   q_w1_ref, q_b1_ref,
                   d_wihf_ref, d_wihq_ref, d_whh_ref, d_b_ref,
                   out_ref, gx_f_ref, gx_q_ref):
    f32 = jnp.float32
    Bp = image_ref.shape[0]
    RB = fact_len_ref.shape[0]
    R = RB // Bp
    H = d_whh_ref.shape[0]
    T_f = fact_x_ref.shape[0]
    T_q = ques_x_ref.shape[0]

    # --- imgNet + fold the constant image term into the quesRNN layer-0 bias
    img_emb = jnp.dot(image_ref[...], img_w_ref[...],
                      preferred_element_type=f32) + img_b_ref[...]      # (Bp, Ei)
    b0q_img = jnp.dot(img_emb, q_wih0i_ref[...],
                      preferred_element_type=f32)                        # (Bp, 4H)
    b0q_full = jnp.concatenate([b0q_img] * R, axis=0) + q_b0_ref[...]    # (RB, 4H)

    # --- hoisted x-side projections (off the serial critical path),
    #     biases folded in so the per-step layer-0 gates are gx[t] + h0 @ Whh0
    f_wih0 = f_wih0_ref[...]
    f_b0 = f_b0_ref[...]
    for t in range(T_f):
        gx_f_ref[t] = jnp.dot(fact_x_ref[t], f_wih0,
                              preferred_element_type=f32) + f_b0
    q_wih0w = q_wih0w_ref[...]
    for t in range(T_q):
        gx_q_ref[t] = jnp.dot(ques_x_ref[t], q_wih0w,
                              preferred_element_type=f32) + b0q_full

    # --- two independent 2-layer masked recurrences (all rounds folded into
    #     the batch axis).  They share no state, so the scheduler is free to
    #     interleave their dependent MXU/EUP chains inside this basic block.
    fh0, fc0, fh1, fc1 = _lstm2_recurrence(
        gx_f_ref, fact_len_ref[...], f_whh0_ref[...], f_w1_ref[...],
        f_b1_ref[...], T_f, RB, H)
    qh0, qc0, qh1, qc1 = _lstm2_recurrence(
        gx_q_ref, ques_len_ref[...], q_whh0_ref[...], q_w1_ref[...],
        q_b1_ref[...], T_q, RB, H)

    # --- dialogRNN (LSTMCell) over rounds.  Input projection hoisted; no lane
    #     concat: Wih is pre-split into fact / ques halves.
    gx_d = (jnp.dot(fh1, d_wihf_ref[...], preferred_element_type=f32)
            + jnp.dot(qh1, d_wihq_ref[...], preferred_element_type=f32)
            + d_b_ref[...])                                              # (RB, 4H)
    d_whh = d_whh_ref[...]
    hd = jnp.zeros((Bp, H), f32)
    cd = jnp.zeros((Bp, H), f32)
    for r in range(R):
        gates = gx_d[r * Bp:(r + 1) * Bp, :] + jnp.dot(
            hd, d_whh, preferred_element_type=f32)
        hd, cd = _lstm_gates(gates, cd, H)

    # --- lane-dense (Bp, 128) output slab for the LAST round:
    #     [ quesRNN h0 | dialog h | quesRNN c0 | quesRNN c1 ]
    lo = (R - 1) * Bp
    out_ref[...] = jnp.concatenate(
        [qh0[lo:lo + Bp], hd, qc0[lo:lo + Bp], qc1[lo:lo + Bp]], axis=-1)


def pallas_encoder(image_p, fact_x, fact_l, ques_x, ques_l, params):
    Bp = image_p.shape[0]
    T_f, RB, _ = fact_x.shape
    T_q = ques_x.shape[0]
    H = params['dialogRNN']['whh'].shape[0]
    G = 4 * H
    fr, qr, dl = params['factRNN'], params['quesRNN'], params['dialogRNN']
    inputs = (image_p, fact_x, fact_l, ques_x, ques_l,
              params['img_w'], params['img_b'],
              fr['wih0'], fr['whh0'], fr['b0'], fr['w1'], fr['b1'],
              qr['wih0_word'], qr['wih0_img'], qr['whh0'], qr['b0'],
              qr['w1'], qr['b1'],
              dl['wih_fact'], dl['wih_ques'], dl['whh'], dl['b'])
    return pl.pallas_call(
        encoder_kernel,
        out_shape=jax.ShapeDtypeStruct((Bp, G), jnp.float32),
        in_specs=[_VMEM] * len(inputs),
        out_specs=_VMEM,
        scratch_shapes=[pltpu.VMEM((T_f, RB, G), jnp.float32),
                        pltpu.VMEM((T_q, RB, G), jnp.float32)],
    )(*inputs)


# ----------------------------------------------------------------------------
# Parameter init (deterministic, synthetic — no checkpoint load)
# ----------------------------------------------------------------------------
def _uni(key, shape, s):
    return jax.random.uniform(key, shape, jnp.float32, -s, s)


def init_lstm2(key, in_size, H):
    """2-layer LSTM; packed gate order [i|f|g|o]; b = b_ih + b_hh folded.
    Layer-1 input (h0) and recurrent (h1) weights are row-stacked into one
    (2H, 4H) matrix so the per-timestep layer-1 gates need ONE matmul."""
    k = jax.random.split(key, 6)
    s = 1.0 / np.sqrt(H)
    return dict(
        wih0=_uni(k[0], (in_size, 4 * H), s),
        whh0=_uni(k[1], (H, 4 * H), s),
        b0=_uni(k[2], (1, 4 * H), s),
        w1=jnp.concatenate([_uni(k[3], (H, 4 * H), s),   # Wih1 (from h0)
                            _uni(k[4], (H, 4 * H), s)],  # Whh1 (from h1)
                           axis=0),
        b1=_uni(k[5], (1, 4 * H), s),
    )


def init_params(key, vocab, embed_size, H, img_feat, img_emb):
    ks = jax.random.split(key, 8)
    embed = 0.1 * jax.random.normal(ks[0], (vocab, embed_size), jnp.float32)
    embed = embed.at[0].set(0.0)                              # padding_idx = 0

    ques = init_lstm2(ks[3], embed_size + img_emb, H)
    ques_wih0 = ques.pop('wih0')
    # embedQuestion concat order is [wordEmb | imgEmb] -> split the same way.
    ques['wih0_word'] = ques_wih0[:embed_size]
    ques['wih0_img'] = ques_wih0[embed_size:]

    s = 1.0 / np.sqrt(H)
    dk = jax.random.split(ks[7], 3)
    d_wih = _uni(dk[0], (2 * H, 4 * H), s)                    # [fact | ques] rows
    return dict(
        embed=embed,
        img_w=0.1 * jax.random.normal(ks[1], (img_feat, img_emb), jnp.float32),
        img_b=0.1 * jax.random.normal(ks[2], (1, img_emb), jnp.float32),
        quesRNN=ques,
        factRNN=init_lstm2(ks[5], embed_size, H),
        dialogRNN=dict(wih_fact=d_wih[:H], wih_ques=d_wih[H:],
                       whh=_uni(dk[1], (H, 4 * H), s),
                       b=_uni(dk[2], (1, 4 * H), s)),
    )


# ----------------------------------------------------------------------------
# On-device glue (runs inside the same jit as the pallas_call)
# ----------------------------------------------------------------------------
def concat_padded_sequences(q, qlen, a, alen):
    """utils.concatPaddedSequences(padding='right'), fully on-device."""
    B, Tq = q.shape
    Ta = a.shape[1]
    T_out = Tq + Ta
    pos = jnp.arange(T_out)[None, :]
    ql = qlen[:, None]
    al = alen[:, None]
    q_pad = jnp.pad(q, ((0, 0), (0, Ta)))
    q_part = jnp.where(pos < ql, q_pad, 0)
    a_idx = jnp.clip(pos - ql, 0, Ta - 1)
    a_gather = jnp.take_along_axis(a, a_idx, axis=1)
    a_part = jnp.where((pos >= ql) & (pos < ql + al), a_gather, 0)
    return (q_part + a_part).astype(jnp.int32)


def _stack_pad(tok_list, T_max):
    return jnp.stack([jnp.pad(t, ((0, 0), (0, T_max - t.shape[1])))
                      for t in tok_list]).astype(jnp.int32)


# ----------------------------------------------------------------------------
# Encoder forward (A-Bot, useIm='early')
# ----------------------------------------------------------------------------
def encoder_forward(params, image, cap_tok, cap_len,
                    ques_toks, ques_lens, ans_toks, ans_lens):
    """Returns (H_link, C_link), each (numLayers=2, B, rnnHiddenSize)."""
    E_tab = params['embed']
    embed_size = E_tab.shape[1]
    H = params['dialogRNN']['whh'].shape[0]
    B = image.shape[0]
    Bp = max(8, -(-B // 8) * 8)                      # pad batch to 8 sublanes

    # --- processSequence: strip <START>, len -= 1 ------------------------------
    cap_tok = cap_tok[:, 1:].astype(jnp.int32)
    cap_len = cap_len - 1
    ques_toks = [q[:, 1:].astype(jnp.int32) for q in ques_toks]
    ques_lens = [l - 1 for l in ques_lens]
    ans_toks = [a[:, 1:].astype(jnp.int32) for a in ans_toks]
    ans_lens = [l - 1 for l in ans_lens]

    R = len(ques_toks)                               # A-Bot: rounds = #questions

    # --- facts: caption (round 0) + QA pairs (rounds 1..R-1) -------------------
    fact_tok_list = [cap_tok]
    fact_len_list = [cap_len]
    for r in range(1, R):
        qa = concat_padded_sequences(ques_toks[r - 1], ques_lens[r - 1],
                                     ans_toks[r - 1], ans_lens[r - 1])
        fact_tok_list.append(qa)
        fact_len_list.append(ques_lens[r - 1] + ans_lens[r - 1])
    T_f = max(t.shape[1] for t in fact_tok_list)
    fact_toks = _stack_pad(fact_tok_list, T_f)       # (R, B, T_f)
    fact_lens = jnp.stack(fact_len_list)             # (R, B)

    T_q = max(q.shape[1] for q in ques_toks)
    ques_stk = _stack_pad(ques_toks, T_q)            # (R, B, T_q)
    ques_lens_arr = jnp.stack(ques_lens)             # (R, B)

    # --- pad batch, fold rounds into batch, build time-major embedded inputs ---
    def prep(toks, lens, T):
        toks_p = jnp.pad(toks, ((0, 0), (0, Bp - B), (0, 0)))    # (R, Bp, T)
        lens_p = jnp.pad(lens, ((0, 0), (0, Bp - B)))            # padded len = 0
        x = E_tab[toks_p]                                        # (R, Bp, T, E)
        x = jnp.transpose(x, (2, 0, 1, 3)).reshape(T, R * Bp, embed_size)
        return x.astype(jnp.float32), lens_p.reshape(R * Bp, 1).astype(jnp.int32)

    fact_x, fact_l = prep(fact_toks, fact_lens, T_f)
    ques_x, ques_l = prep(ques_stk, ques_lens_arr, T_q)
    image_p = jnp.pad(image.astype(jnp.float32), ((0, Bp - B), (0, 0)))

    # --- one fused Pallas kernel for the whole encoder -------------------------
    out = pallas_encoder(image_p, fact_x, fact_l, ques_x, ques_l, params)

    # --- unpack the lane-dense output slab --------------------------------------
    h0q = out[:B, 0:H]
    hd = out[:B, H:2 * H]
    c0q = out[:B, 2 * H:3 * H]
    c1q = out[:B, 3 * H:4 * H]
    H_link = jnp.stack([h0q, hd], axis=0)            # (2, B, H)
    C_link = jnp.stack([c0q, c1q], axis=0)           # (2, B, H)
    return H_link, C_link


# ----------------------------------------------------------------------------
# Test harness
# ----------------------------------------------------------------------------
def make_tokens(key, B, T, lens, vocab):
    toks = jax.random.randint(key, (B, T), 2, vocab)
    toks = toks.at[:, 0].set(1)                                  # <START>
    pos = jnp.arange(T)[None, :]
    toks = jnp.where(pos < jnp.asarray(lens)[:, None], toks, 0)  # right-pad
    return toks.astype(jnp.int32)


if __name__ == "__main__":
    B = 2
    vocabSize = 20
    embedSize = 32
    rnnHiddenSize = 32
    imgEmbedSize = 32
    imgFeatureSize = 64

    root = jax.random.PRNGKey(0)
    k_param, k_img, k_cap, k_q0, k_q1, k_a0 = jax.random.split(root, 6)

    params = init_params(k_param, vocabSize, embedSize, rnnHiddenSize,
                         imgFeatureSize, imgEmbedSize)

    image = jax.random.normal(k_img, (B, imgFeatureSize), jnp.float32)

    cap_len = jnp.array([9, 7], jnp.int32)
    cap_tok = make_tokens(k_cap, B, 10, cap_len, vocabSize)

    q0_len = jnp.array([7, 6], jnp.int32)
    q1_len = jnp.array([8, 5], jnp.int32)
    a0_len = jnp.array([6, 5], jnp.int32)
    q0 = make_tokens(k_q0, B, 8, q0_len, vocabSize)
    q1 = make_tokens(k_q1, B, 8, q1_len, vocabSize)
    a0 = make_tokens(k_a0, B, 7, a0_len, vocabSize)

    # Dialog history: caption + image at round -1, (q0, a0) at round 0,
    # current question q1 at round 1  =>  forward round = 1.
    encoder_jit = jax.jit(encoder_forward)
    H_link, C_link = encoder_jit(
        params, image, cap_tok, cap_len,
        ques_toks=[q0, q1], ques_lens=[q0_len, q1_len],
        ans_toks=[a0], ans_lens=[a0_len])

    jax.block_until_ready((H_link, C_link))
    assert H_link.shape == (2, B, rnnHiddenSize)
    assert C_link.shape == (2, B, rnnHiddenSize)
    assert bool(jnp.all(jnp.isfinite(H_link))) and bool(jnp.all(jnp.isfinite(C_link)))
    print("KERNEL_OK")
</pallas_src>

<mosaic_0001>
module attributes {stable_mosaic.version = 11 : i64} {
  func.func @encoder_kernel(%arg0: memref<8x64xf32, #tpu.memory_space<vmem>>, %arg1: memref<13x16x32xf32, #tpu.memory_space<vmem>>, %arg2: memref<16x1xi32, #tpu.memory_space<vmem>>, %arg3: memref<7x16x32xf32, #tpu.memory_space<vmem>>, %arg4: memref<16x1xi32, #tpu.memory_space<vmem>>, %arg5: memref<64x32xf32, #tpu.memory_space<vmem>>, %arg6: memref<1x32xf32, #tpu.memory_space<vmem>>, %arg7: memref<32x128xf32, #tpu.memory_space<vmem>>, %arg8: memref<32x128xf32, #tpu.memory_space<vmem>>, %arg9: memref<1x128xf32, #tpu.memory_space<vmem>>, %arg10: memref<64x128xf32, #tpu.memory_space<vmem>>, %arg11: memref<1x128xf32, #tpu.memory_space<vmem>>, %arg12: memref<32x128xf32, #tpu.memory_space<vmem>>, %arg13: memref<32x128xf32, #tpu.memory_space<vmem>>, %arg14: memref<32x128xf32, #tpu.memory_space<vmem>>, %arg15: memref<1x128xf32, #tpu.memory_space<vmem>>, %arg16: memref<64x128xf32, #tpu.memory_space<vmem>>, %arg17: memref<1x128xf32, #tpu.memory_space<vmem>>, %arg18: memref<32x128xf32, #tpu.memory_space<vmem>>, %arg19: memref<32x128xf32, #tpu.memory_space<vmem>>, %arg20: memref<32x128xf32, #tpu.memory_space<vmem>>, %arg21: memref<1x128xf32, #tpu.memory_space<vmem>>, %arg22: memref<8x128xf32, #tpu.memory_space<vmem>>, %arg23: memref<13x16x128xf32, #tpu.memory_space<vmem>>, %arg24: memref<7x16x128xf32, #tpu.memory_space<vmem>>) attributes {dimension_semantics = [], scalar_prefetch = 0 : i64, scratch_operands = 2 : i64, tpu.core_type = #tpu.core_type<tc>} {
    %c0 = arith.constant 0 : index
    %c0_0 = arith.constant 0 : index
    %0 = vector.load %arg0[%c0, %c0_0] : memref<8x64xf32, #tpu.memory_space<vmem>>, vector<8x64xf32>
    %c0_1 = arith.constant 0 : index
    %c0_2 = arith.constant 0 : index
    %1 = vector.load %arg5[%c0_1, %c0_2] : memref<64x32xf32, #tpu.memory_space<vmem>>, vector<64x32xf32>
    %cst = arith.constant dense<0.000000e+00> : vector<8x32xf32>
    %2 = tpu.matmul %0, %1, %cst {dimension_numbers = #tpu.dot_dimension_numbers<[1], [0], [0], [1], [0, 0, 1, 1], [], []>} : vector<8x64xf32>, vector<64x32xf32>, vector<8x32xf32> -> vector<8x32xf32>
    %c0_3 = arith.constant 0 : index
    %c0_4 = arith.constant 0 : index
    %3 = vector.load %arg6[%c0_3, %c0_4] : memref<1x32xf32, #tpu.memory_space<vmem>>, vector<1x32xf32>
    %4 = vector.broadcast %3 : vector<1x32xf32> to vector<8x32xf32>
    %5 = arith.addf %2, %4 : vector<8x32xf32>
    %c0_5 = arith.constant 0 : index
    %c0_6 = arith.constant 0 : index
    %6 = vector.load %arg13[%c0_5, %c0_6] : memref<32x128xf32, #tpu.memory_space<vmem>>, vector<32x128xf32>
    %cst_7 = arith.constant dense<0.000000e+00> : vector<8x128xf32>
    %7 = tpu.matmul %5, %6, %cst_7 {dimension_numbers = #tpu.dot_dimension_numbers<[1], [0], [0], [1], [0, 0, 1, 1], [], []>} : vector<8x32xf32>, vector<32x128xf32>, vector<8x128xf32> -> vector<8x128xf32>
    %8 = tpu.concatenate %7, %7 in 0 : vector<8x128xf32>, vector<8x128xf32> -> vector<16x128xf32>
    %c0_8 = arith.constant 0 : index
    %c0_9 = arith.constant 0 : index
    %9 = vector.load %arg15[%c0_8, %c0_9] : memref<1x128xf32, #tpu.memory_space<vmem>>, vector<1x128xf32>
    %10 = vector.broadcast %9 : vector<1x128xf32> to vector<16x128xf32>
    %11 = arith.addf %8, %10 : vector<16x128xf32>
    %c0_10 = arith.constant 0 : index
    %c0_11 = arith.constant 0 : index
    %12 = vector.load %arg7[%c0_10, %c0_11] : memref<32x128xf32, #tpu.memory_space<vmem>>, vector<32x128xf32>
    %c0_12 = arith.constant 0 : index
    %c0_13 = arith.constant 0 : index
    %13 = vector.load %arg9[%c0_12, %c0_13] : memref<1x128xf32, #tpu.memory_space<vmem>>, vector<1x128xf32>
    %c0_14 = arith.constant 0 : index
    %c0_15 = arith.constant 0 : index
    %c0_16 = arith.constant 0 : index
    %14 = vector.load %arg1[%c0_14, %c0_15, %c0_16] : memref<13x16x32xf32, #tpu.memory_space<vmem>>, vector<1x16x32xf32>
    %15 = vector.shape_cast %14 : vector<1x16x32xf32> to vector<16x32xf32>
    %cst_17 = arith.constant dense<0.000000e+00> : vector<16x128xf32>
    %16 = tpu.matmul %15, %12, %cst_17 {dimension_numbers = #tpu.dot_dimension_numbers<[1], [0], [0], [1], [0, 0, 1, 1], [], []>} : vector<16x32xf32>, vector<32x128xf32>, vector<16x128xf32> -> vector<16x128xf32>
    %17 = vector.broadcast %13 : vector<1x128xf32> to vector<16x128xf32>
    %18 = arith.addf %16, %17 : vector<16x128xf32>
    %c0_18 = arith.constant 0 : index
    %c0_19 = arith.constant 0 : index
    %c0_20 = arith.constant 0 : index
    %19 = vector.load %arg23[%c0_18, %c0_19, %c0_20] : memref<13x16x128xf32, #tpu.memory_space<vmem>>, vector<1x16x128xf32>
    %20 = vector.shape_cast %19 : vector<1x16x128xf32> to vector<16x128xf32>
    %21 = vector.shape_cast %18 : vector<16x128xf32> to vector<1x16x128xf32>
    tpu.vector_store %arg23[%c0_18, %c0_19, %c0_20], %21 {strides = array<i32>} : memref<13x16x128xf32, #tpu.memory_space<vmem>>, vector<1x16x128xf32>,
    %c1 = arith.constant 1 : index
    %c0_21 = arith.constant 0 : index
    %c0_22 = arith.constant 0 : index
    %22 = vector.load %arg1[%c1, %c0_21, %c0_22] : memref<13x16x32xf32, #tpu.memory_space<vmem>>, vector<1x16x32xf32>
    %23 = vector.shape_cast %22 : vector<1x16x32xf32> to vector<16x32xf32>
    %cst_23 = arith.constant dense<0.000000e+00> : vector<16x128xf32>
    %24 = tpu.matmul %23, %12, %cst_23 {dimension_numbers = #tpu.dot_dimension_numbers<[1], [0], [0], [1], [0, 0, 1, 1], [], []>} : vector<16x32xf32>, vector<32x128xf32>, vector<16x128xf32> -> vector<16x128xf32>
    %25 = vector.broadcast %13 : vector<1x128xf32> to vector<16x128xf32>
    %26 = arith.addf %24, %25 : vector<16x128xf32>
    %c1_24 = arith.constant 1 : index
    %c0_25 = arith.constant 0 : index
    %c0_26 = arith.constant 0 : index
    %27 = vector.load %arg23[%c1_24, %c0_25, %c0_26] : memref<13x16x128xf32, #tpu.memory_space<vmem>>, vector<1x16x128xf32>
    %28 = vector.shape_cast %27 : vector<1x16x128xf32> to vector<16x128xf32>
    %29 = vector.shape_cast %26 : vector<16x128xf32> to vector<1x16x128xf32>
    tpu.vector_store %arg23[%c1_24, %c0_25, %c0_26], %29 {strides = array<i32>} : memref<13x16x128xf32, #tpu.memory_space<vmem>>, vector<1x16x128xf32>,
    %c2 = arith.constant 2 : index
    %c0_27 = arith.constant 0 : index
    %c0_28 = arith.constant 0 : index
    %30 = vector.load %arg1[%c2, %c0_27, %c0_28] : memref<13x16x32xf32, #tpu.memory_space<vmem>>, vector<1x16x32xf32>
    %31 = vector.shape_cast %30 : vector<1x16x32xf32> to vector<16x32xf32>
    %cst_29 = arith.constant dense<0.000000e+00> : vector<16x128xf32>
    %32 = tpu.matmul %31, %12, %cst_29 {dimension_numbers = #tpu.dot_dimension_numbers<[1], [0], [0], [1], [0, 0, 1, 1], [], []>} : vector<16x32xf32>, vector<32x128xf32>, vector<16x128xf32> -> vector<16x128xf32>
    %33 = vector.broadcast %13 : vector<1x128xf32> to vector<16x128xf32>
    %34 = arith.addf %32, %33 : vector<16x128xf32>
    %c2_30 = arith.constant 2 : index
    %c0_31 = arith.constant 0 : index
    %c0_32 = arith.constant 0 : index
    %35 = vector.load %arg23[%c2_30, %c0_31, %c0_32] : memref<13x16x128xf32, #tpu.memory_space<vmem>>, vector<1x16x128xf32>
    %36 = vector.shape_cast %35 : vector<1x16x128xf32> to vector<16x128xf32>
    %37 = vector.shape_cast %34 : vector<16x128xf32> to vector<1x16x128xf32>
    tpu.vector_store %arg23[%c2_30, %c0_31, %c0_32], %37 {strides = array<i32>} : memref<13x16x128xf32, #tpu.memory_space<vmem>>, vector<1x16x128xf32>,
    %c3 = arith.constant 3 : index
    %c0_33 = arith.constant 0 : index
    %c0_34 = arith.constant 0 : index
    %38 = vector.load %arg1[%c3, %c0_33, %c0_34] : memref<13x16x32xf32, #tpu.memory_space<vmem>>, vector<1x16x32xf32>
    %39 = vector.shape_cast %38 : vector<1x16x32xf32> to vector<16x32xf32>
    %cst_35 = arith.constant dense<0.000000e+00> : vector<16x128xf32>
    %40 = tpu.matmul %39, %12, %cst_35 {dimension_numbers = #tpu.dot_dimension_numbers<[1], [0], [0], [1], [0, 0, 1, 1], [], []>} : vector<16x32xf32>, vector<32x128xf32>, vector<16x128xf32> -> vector<16x128xf32>
    %41 = vector.broadcast %13 : vector<1x128xf32> to vector<16x128xf32>
    %42 = arith.addf %40, %41 : vector<16x128xf32>
    %c3_36 = arith.constant 3 : index
    %c0_37 = arith.constant 0 : index
    %c0_38 = arith.constant 0 : index
    %43 = vector.load %arg23[%c3_36, %c0_37, %c0_38] : memref<13x16x128xf32, #tpu.memory_space<vmem>>, vector<1x16x128xf32>
    %44 = vector.shape_cast %43 : vector<1x16x128xf32> to vector<16x128xf32>
    %45 = vector.shape_cast %42 : vector<16x128xf32> to vector<1x16x128xf32>
    tpu.vector_store %arg23[%c3_36, %c0_37, %c0_38], %45 {strides = array<i32>} : memref<13x16x128xf32, #tpu.memory_space<vmem>>, vector<1x16x128xf32>,
    %c4 = arith.constant 4 : index
    %c0_39 = arith.constant 0 : index
    %c0_40 = arith.constant 0 : index
    %46 = vector.load %arg1[%c4, %c0_39, %c0_40] : memref<13x16x32xf32, #tpu.memory_space<vmem>>, vector<1x16x32xf32>
    %47 = vector.shape_cast %46 : vector<1x16x32xf32> to vector<16x32xf32>
    %cst_41 = arith.constant dense<0.000000e+00> : vector<16x128xf32>
    %48 = tpu.matmul %47, %12, %cst_41 {dimension_numbers = #tpu.dot_dimension_numbers<[1], [0], [0], [1], [0, 0, 1, 1], [], []>} : vector<16x32xf32>, vector<32x128xf32>, vector<16x128xf32> -> vector<16x128xf32>
    %49 = vector.broadcast %13 : vector<1x128xf32> to vector<16x128xf32>
    %50 = arith.addf %48, %49 : vector<16x128xf32>
    %c4_42 = arith.constant 4 : index
    %c0_43 = arith.constant 0 : index
    %c0_44 = arith.constant 0 : index
    %51 = vector.load %arg23[%c4_42, %c0_43, %c0_44] : memref<13x16x128xf32, #tpu.memory_space<vmem>>, vector<1x16x128xf32>
    %52 = vector.shape_cast %51 : vector<1x16x128xf32> to vector<16x128xf32>
    %53 = vector.shape_cast %50 : vector<16x128xf32> to vector<1x16x128xf32>
    tpu.vector_store %arg23[%c4_42, %c0_43, %c0_44], %53 {strides = array<i32>} : memref<13x16x128xf32, #tpu.memory_space<vmem>>, vector<1x16x128xf32>,
    %c5 = arith.constant 5 : index
    %c0_45 = arith.constant 0 : index
    %c0_46 = arith.constant 0 : index
    %54 = vector.load %arg1[%c5, %c0_45, %c0_46] : memref<13x16x32xf32, #tpu.memory_space<vmem>>, vector<1x16x32xf32>
    %55 = vector.shape_cast %54 : vector<1x16x32xf32> to vector<16x32xf32>
    %cst_47 = arith.constant dense<0.000000e+00> : vector<16x128xf32>
    %56 = tpu.matmul %55, %12, %cst_47 {dimension_numbers = #tpu.dot_dimension_numbers<[1], [0], [0], [1], [0, 0, 1, 1], [], []>} : vector<16x32xf32>, vector<32x128xf32>, vector<16x128xf32> -> vector<16x128xf32>
    %57 = vector.broadcast %13 : vector<1x128xf32> to vector<16x128xf32>
    %58 = arith.addf %56, %57 : vector<16x128xf32>
    %c5_48 = arith.constant 5 : index
    %c0_49 = arith.constant 0 : index
    %c0_50 = arith.constant 0 : index
    %59 = vector.load %arg23[%c5_48, %c0_49, %c0_50] : memref<13x16x128xf32, #tpu.memory_space<vmem>>, vector<1x16x128xf32>
    %60 = vector.shape_cast %59 : vector<1x16x128xf32> to vector<16x128xf32>
    %61 = vector.shape_cast %58 : vector<16x128xf32> to vector<1x16x128xf32>
    tpu.vector_store %arg23[%c5_48, %c0_49, %c0_50], %61 {strides = array<i32>} : memref<13x16x128xf32, #tpu.memory_space<vmem>>, vector<1x16x128xf32>,
    %c6 = arith.constant 6 : index
    %c0_51 = arith.constant 0 : index
    %c0_52 = arith.constant 0 : index
    %62 = vector.load %arg1[%c6, %c0_51, %c0_52] : memref<13x16x32xf32, #tpu.memory_space<vmem>>, vector<1x16x32xf32>
    %63 = vector.shape_cast %62 : vector<1x16x32xf32> to vector<16x32xf32>
    %cst_53 = arith.constant dense<0.000000e+00> : vector<16x128xf32>
    %64 = tpu.matmul %63, %12, %cst_53 {dimension_numbers = #tpu.dot_dimension_numbers<[1], [0], [0], [1], [0, 0, 1, 1], [], []>} : vector<16x32xf32>, vector<32x128xf32>, vector<16x128xf32> -> vector<16x128xf32>
    %65 = vector.broadcast %13 : vector<1x128xf32> to vector<16x128xf32>
    %66 = arith.addf %64, %65 : vector<16x128xf32>
    %c6_54 = arith.constant 6 : index
    %c0_55 = arith.constant 0 : index
    %c0_56 = arith.constant 0 : index
    %67 = vector.load %arg23[%c6_54, %c0_55, %c0_56] : memref<13x16x128xf32, #tpu.memory_space<vmem>>, vector<1x16x128xf32>
    %68 = vector.shape_cast %67 : vector<1x16x128xf32> to vector<16x128xf32>
    %69 = vector.shape_cast %66 : vector<16x128xf32> to vector<1x16x128xf32>
    tpu.vector_store %arg23[%c6_54, %c0_55, %c0_56], %69 {strides = array<i32>} : memref<13x16x128xf32, #tpu.memory_space<vmem>>, vector<1x16x128xf32>,
    %c7 = arith.constant 7 : index
    %c0_57 = arith.constant 0 : index
    %c0_58 = arith.constant 0 : index
    %70 = vector.load %arg1[%c7, %c0_57, %c0_58] : memref<13x16x32xf32, #tpu.memory_space<vmem>>, vector<1x16x32xf32>
    %71 = vector.shape_cast %70 : vector<1x16x32xf32> to vector<16x32xf32>
    %cst_59 = arith.constant dense<0.000000e+00> : vector<16x128xf32>
    %72 = tpu.matmul %71, %12, %cst_59 {dimension_numbers = #tpu.dot_dimension_numbers<[1], [0], [0], [1], [0, 0, 1, 1], [], []>} : vector<16x32xf32>, vector<32x128xf32>, vector<16x128xf32> -> vector<16x128xf32>
    %73 = vector.broadcast %13 : vector<1x128xf32> to vector<16x128xf32>
    %74 = arith.addf %72, %73 : vector<16x128xf32>
    %c7_60 = arith.constant 7 : index
    %c0_61 = arith.constant 0 : index
    %c0_62 = arith.constant 0 : index
    %75 = vector.load %arg23[%c7_60, %c0_61, %c0_62] : memref<13x16x128xf32, #tpu.memory_space<vmem>>, vector<1x16x128xf32>
    %76 = vector.shape_cast %75 : vector<1x16x128xf32> to vector<16x128xf32>
    %77 = vector.shape_cast %74 : vector<16x128xf32> to vector<1x16x128xf32>
    tpu.vector_store %arg23[%c7_60, %c0_61, %c0_62], %77 {strides = array<i32>} : memref<13x16x128xf32, #tpu.memory_space<vmem>>, vector<1x16x128xf32>,
    %c8 = arith.constant 8 : index
    %c0_63 = arith.constant 0 : index
    %c0_64 = arith.constant 0 : index
    %78 = vector.load %arg1[%c8, %c0_63, %c0_64] : memref<13x16x32xf32, #tpu.memory_space<vmem>>, vector<1x16x32xf32>
    %79 = vector.shape_cast %78 : vector<1x16x32xf32> to vector<16x32xf32>
    %cst_65 = arith.constant dense<0.000000e+00> : vector<16x128xf32>
    %80 = tpu.matmul %79, %12, %cst_65 {dimension_numbers = #tpu.dot_dimension_numbers<[1], [0], [0], [1], [0, 0, 1, 1], [], []>} : vector<16x32xf32>, vector<32x128xf32>, vector<16x128xf32> -> vector<16x128xf32>
    %81 = vector.broadcast %13 : vector<1x128xf32> to vector<16x128xf32>
    %82 = arith.addf %80, %81 : vector<16x128xf32>
    %c8_66 = arith.constant 8 : index
    %c0_67 = arith.constant 0 : index
    %c0_68 = arith.constant 0 : index
    %83 = vector.load %arg23[%c8_66, %c0_67, %c0_68] : memref<13x16x128xf32, #tpu.memory_space<vmem>>, vector<1x16x128xf32>
    %84 = vector.shape_cast %83 : vector<1x16x128xf32> to vector<16x128xf32>
    %85 = vector.shape_cast %82 : vector<16x128xf32> to vector<1x16x128xf32>
    tpu.vector_store %arg23[%c8_66, %c0_67, %c0_68], %85 {strides = array<i32>} : memref<13x16x128xf32, #tpu.memory_space<vmem>>, vector<1x16x128xf32>,
    %c9 = arith.constant 9 : index
    %c0_69 = arith.constant 0 : index
    %c0_70 = arith.constant 0 : index
    %86 = vector.load %arg1[%c9, %c0_69, %c0_70] : memref<13x16x32xf32, #tpu.memory_space<vmem>>, vector<1x16x32xf32>
    %87 = vector.shape_cast %86 : vector<1x16x32xf32> to vector<16x32xf32>
    %cst_71 = arith.constant dense<0.000000e+00> : vector<16x128xf32>
    %88 = tpu.matmul %87, %12, %cst_71 {dimension_numbers = #tpu.dot_dimension_numbers<[1], [0], [0], [1], [0, 0, 1, 1], [], []>} : vector<16x32xf32>, vector<32x128xf32>, vector<16x128xf32> -> vector<16x128xf32>
    %89 = vector.broadcast %13 : vector<1x128xf32> to vector<16x128xf32>
    %90 = arith.addf %88, %89 : vector<16x128xf32>
    %c9_72 = arith.constant 9 : index
    %c0_73 = arith.constant 0 : index
    %c0_74 = arith.constant 0 : index
    %91 = vector.load %arg23[%c9_72, %c0_73, %c0_74] : memref<13x16x128xf32, #tpu.memory_space<vmem>>, vector<1x16x128xf32>
    %92 = vector.shape_cast %91 : vector<1x16x128xf32> to vector<16x128xf32>
    %93 = vector.shape_cast %90 : vector<16x128xf32> to vector<1x16x128xf32>
    tpu.vector_store %arg23[%c9_72, %c0_73, %c0_74], %93 {strides = array<i32>} : memref<13x16x128xf32, #tpu.memory_space<vmem>>, vector<1x16x128xf32>,
    %c10 = arith.constant 10 : index
    %c0_75 = arith.constant 0 : index
    %c0_76 = arith.constant 0 : index
    %94 = vector.load %arg1[%c10, %c0_75, %c0_76] : memref<13x16x32xf32, #tpu.memory_space<vmem>>, vector<1x16x32xf32>
    %95 = vector.shape_cast %94 : vector<1x16x32xf32> to vector<16x32xf32>
    %cst_77 = arith.constant dense<0.000000e+00> : vector<16x128xf32>
    %96 = tpu.matmul %95, %12, %cst_77 {dimension_numbers = #tpu.dot_dimension_numbers<[1], [0], [0], [1], [0, 0, 1, 1], [], []>} : vector<16x32xf32>, vector<32x128xf32>, vector<16x128xf32> -> vector<16x128xf32>
    %97 = vector.broadcast %13 : vector<1x128xf32> to vector<16x128xf32>
    %98 = arith.addf %96, %97 : vector<16x128xf32>
    %c10_78 = arith.constant 10 : index
    %c0_79 = arith.constant 0 : index
    %c0_80 = arith.constant 0 : index
    %99 = vector.load %arg23[%c10_78, %c0_79, %c0_80] : memref<13x16x128xf32, #tpu.memory_space<vmem>>, vector<1x16x128xf32>
    %100 = vector.shape_cast %99 : vector<1x16x128xf32> to vector<16x128xf32>
    %101 = vector.shape_cast %98 : vector<16x128xf32> to vector<1x16x128xf32>
    tpu.vector_store %arg23[%c10_78, %c0_79, %c0_80], %101 {strides = array<i32>} : memref<13x16x128xf32, #tpu.memory_space<vmem>>, vector<1x16x128xf32>,
    %c11 = arith.constant 11 : index
    %c0_81 = arith.constant 0 : index
    %c0_82 = arith.constant 0 : index
    %102 = vector.load %arg1[%c11, %c0_81, %c0_82] : memref<13x16x32xf32, #tpu.memory_space<vmem>>, vector<1x16x32xf32>
    %103 = vector.shape_cast %102 : vector<1x16x32xf32> to vector<16x32xf32>
    %cst_83 = arith.constant dense<0.000000e+00> : vector<16x128xf32>
    %104 = tpu.matmul %103, %12, %cst_83 {dimension_numbers = #tpu.dot_dimension_numbers<[1], [0], [0], [1], [0, 0, 1, 1], [], []>} : vector<16x32xf32>, vector<32x128xf32>, vector<16x128xf32> -> vector<16x128xf32>
    %105 = vector.broadcast %13 : vector<1x128xf32> to vector<16x128xf32>
    %106 = arith.addf %104, %105 : vector<16x128xf32>
    %c11_84 = arith.constant 11 : index
    %c0_85 = arith.constant 0 : index
    %c0_86 = arith.constant 0 : index
    %107 = vector.load %arg23[%c11_84, %c0_85, %c0_86] : memref<13x16x128xf32, #tpu.memory_space<vmem>>, vector<1x16x128xf32>
    %108 = vector.shape_cast %107 : vector<1x16x128xf32> to vector<16x128xf32>
    %109 = vector.shape_cast %106 : vector<16x128xf32> to vector<1x16x128xf32>
    tpu.vector_store %arg23[%c11_84, %c0_85, %c0_86], %109 {strides = array<i32>} : memref<13x16x128xf32, #tpu.memory_space<vmem>>, vector<1x16x128xf32>,
    %c12 = arith.constant 12 : index
    %c0_87 = arith.constant 0 : index
    %c0_88 = arith.constant 0 : index
    %110 = vector.load %arg1[%c12, %c0_87, %c0_88] : memref<13x16x32xf32, #tpu.memory_space<vmem>>, vector<1x16x32xf32>
    %111 = vector.shape_cast %110 : vector<1x16x32xf32> to vector<16x32xf32>
    %cst_89 = arith.constant dense<0.000000e+00> : vector<16x128xf32>
    %112 = tpu.matmul %111, %12, %cst_89 {dimension_numbers = #tpu.dot_dimension_numbers<[1], [0], [0], [1], [0, 0, 1, 1], [], []>} : vector<16x32xf32>, vector<32x128xf32>, vector<16x128xf32> -> vector<16x128xf32>
    %113 = vector.broadcast %13 : vector<1x128xf32> to vector<16x128xf32>
    %114 = arith.addf %112, %113 : vector<16x128xf32>
    %c12_90 = arith.constant 12 : index
    %c0_91 = arith.constant 0 : index
    %c0_92 = arith.constant 0 : index
    %115 = vector.load %arg23[%c12_90, %c0_91, %c0_92] : memref<13x16x128xf32, #tpu.memory_space<vmem>>, vector<1x16x128xf32>
    %116 = vector.shape_cast %115 : vector<1x16x128xf32> to vector<16x128xf32>
    %117 = vector.shape_cast %114 : vector<16x128xf32> to vector<1x16x128xf32>
    tpu.vector_store %arg23[%c12_90, %c0_91, %c0_92], %117 {strides = array<i32>} : memref<13x16x128xf32, #tpu.memory_space<vmem>>, vector<1x16x128xf32>,
    %c0_93 = arith.constant 0 : index
    %c0_94 = arith.constant 0 : index
    %118 = vector.load %arg12[%c0_93, %c0_94] : memref<32x128xf32, #tpu.memory_space<vmem>>, vector<32x128xf32>
    %c0_95 = arith.constant 0 : index
    %c0_96 = arith.constant 0 : index
    %c0_97 = arith.constant 0 : index
    %119 = vector.load %arg3[%c0_95, %c0_96, %c0_97] : memref<7x16x32xf32, #tpu.memory_space<vmem>>, vector<1x16x32xf32>
    %120 = vector.shape_cast %119 : vector<1x16x32xf32> to vector<16x32xf32>
    %cst_98 = arith.constant dense<0.000000e+00> : vector<16x128xf32>
    %121 = tpu.matmul %120, %118, %cst_98 {dimension_numbers = #tpu.dot_dimension_numbers<[1], [0], [0], [1], [0, 0, 1, 1], [], []>} : vector<16x32xf32>, vector<32x128xf32>, vector<16x128xf32> -> vector<16x128xf32>
    %122 = arith.addf %121, %11 : vector<16x128xf32>
    %c0_99 = arith.constant 0 : index
    %c0_100 = arith.constant 0 : index
    %c0_101 = arith.constant 0 : index
    %123 = vector.load %arg24[%c0_99, %c0_100, %c0_101] : memref<7x16x128xf32, #tpu.memory_space<vmem>>, vector<1x16x128xf32>
    %124 = vector.shape_cast %123 : vector<1x16x128xf32> to vector<16x128xf32>
    %125 = vector.shape_cast %122 : vector<16x128xf32> to vector<1x16x128xf32>
    tpu.vector_store %arg24[%c0_99, %c0_100, %c0_101], %125 {strides = array<i32>} : memref<7x16x128xf32, #tpu.memory_space<vmem>>, vector<1x16x128xf32>,
    %c1_102 = arith.constant 1 : index
    %c0_103 = arith.constant 0 : index
    %c0_104 = arith.constant 0 : index
    %126 = vector.load %arg3[%c1_102, %c0_103, %c0_104] : memref<7x16x32xf32, #tpu.memory_space<vmem>>, vector<1x16x32xf32>
    %127 = vector.shape_cast %126 : vector<1x16x32xf32> to vector<16x32xf32>
    %cst_105 = arith.constant dense<0.000000e+00> : vector<16x128xf32>
    %128 = tpu.matmul %127, %118, %cst_105 {dimension_numbers = #tpu.dot_dimension_numbers<[1], [0], [0], [1], [0, 0, 1, 1], [], []>} : vector<16x32xf32>, vector<32x128xf32>, vector<16x128xf32> -> vector<16x128xf32>
    %129 = arith.addf %128, %11 : vector<16x128xf32>
    %c1_106 = arith.constant 1 : index
    %c0_107 = arith.constant 0 : index
    %c0_108 = arith.constant 0 : index
    %130 = vector.load %arg24[%c1_106, %c0_107, %c0_108] : memref<7x16x128xf32, #tpu.memory_space<vmem>>, vector<1x16x128xf32>
    %131 = vector.shape_cast %130 : vector<1x16x128xf32> to vector<16x128xf32>
    %132 = vector.shape_cast %129 : vector<16x128xf32> to vector<1x16x128xf32>
    tpu.vector_store %arg24[%c1_106, %c0_107, %c0_108], %132 {strides = array<i32>} : memref<7x16x128xf32, #tpu.memory_space<vmem>>, vector<1x16x128xf32>,
    %c2_109 = arith.constant 2 : index
    %c0_110 = arith.constant 0 : index
    %c0_111 = arith.constant 0 : index
    %133 = vector.load %arg3[%c2_109, %c0_110, %c0_111] : memref<7x16x32xf32, #tpu.memory_space<vmem>>, vector<1x16x32xf32>
    %134 = vector.shape_cast %133 : vector<1x16x32xf32> to vector<16x32xf32>
    %cst_112 = arith.constant dense<0.000000e+00> : vector<16x128xf32>
    %135 = tpu.matmul %134, %118, %cst_112 {dimension_numbers = #tpu.dot_dimension_numbers<[1], [0], [0], [1], [0, 0, 1, 1], [], []>} : vector<16x32xf32>, vector<32x128xf32>, vector<16x128xf32> -> vector<16x128xf32>
    %136 = arith.addf %135, %11 : vector<16x128xf32>
    %c2_113 = arith.constant 2 : index
    %c0_114 = arith.constant 0 : index
    %c0_115 = arith.constant 0 : index
    %137 = vector.load %arg24[%c2_113, %c0_114, %c0_115] : memref<7x16x128xf32, #tpu.memory_space<vmem>>, vector<1x16x128xf32>
    %138 = vector.shape_cast %137 : vector<1x16x128xf32> to vector<16x128xf32>
    %139 = vector.shape_cast %136 : vector<16x128xf32> to vector<1x16x128xf32>
    tpu.vector_store %arg24[%c2_113, %c0_114, %c0_115], %139 {strides = array<i32>} : memref<7x16x128xf32, #tpu.memory_space<vmem>>, vector<1x16x128xf32>,
    %c3_116 = arith.constant 3 : index
    %c0_117 = arith.constant 0 : index
    %c0_118 = arith.constant 0 : index
    %140 = vector.load %arg3[%c3_116, %c0_117, %c0_118] : memref<7x16x32xf32, #tpu.memory_space<vmem>>, vector<1x16x32xf32>
    %141 = vector.shape_cast %140 : vector<1x16x32xf32> to vector<16x32xf32>
    %cst_119 = arith.constant dense<0.000000e+00> : vector<16x128xf32>
    %142 = tpu.matmul %141, %118, %cst_119 {dimension_numbers = #tpu.dot_dimension_numbers<[1], [0], [0], [1], [0, 0, 1, 1], [], []>} : vector<16x32xf32>, vector<32x128xf32>, vector<16x128xf32> -> vector<16x128xf32>
    %143 = arith.addf %142, %11 : vector<16x128xf32>
    %c3_120 = arith.constant 3 : index
    %c0_121 = arith.constant 0 : index
    %c0_122 = arith.constant 0 : index
    %144 = vector.load %arg24[%c3_120, %c0_121, %c0_122] : memref<7x16x128xf32, #tpu.memory_space<vmem>>, vector<1x16x128xf32>
    %145 = vector.shape_cast %144 : vector<1x16x128xf32> to vector<16x128xf32>
    %146 = vector.shape_cast %143 : vector<16x128xf32> to vector<1x16x128xf32>
    tpu.vector_store %arg24[%c3_120, %c0_121, %c0_122], %146 {strides = array<i32>} : memref<7x16x128xf32, #tpu.memory_space<vmem>>, vector<1x16x128xf32>,
    %c4_123 = arith.constant 4 : index
    %c0_124 = arith.constant 0 : index
    %c0_125 = arith.constant 0 : index
    %147 = vector.load %arg3[%c4_123, %c0_124, %c0_125] : memref<7x16x32xf32, #tpu.memory_space<vmem>>, vector<1x16x32xf32>
    %148 = vector.shape_cast %147 : vector<1x16x32xf32> to vector<16x32xf32>
    %cst_126 = arith.constant dense<0.000000e+00> : vector<16x128xf32>
    %149 = tpu.matmul %148, %118, %cst_126 {dimension_numbers = #tpu.dot_dimension_numbers<[1], [0], [0], [1], [0, 0, 1, 1], [], []>} : vector<16x32xf32>, vector<32x128xf32>, vector<16x128xf32> -> vector<16x128xf32>
    %150 = arith.addf %149, %11 : vector<16x128xf32>
    %c4_127 = arith.constant 4 : index
    %c0_128 = arith.constant 0 : index
    %c0_129 = arith.constant 0 : index
    %151 = vector.load %arg24[%c4_127, %c0_128, %c0_129] : memref<7x16x128xf32, #tpu.memory_space<vmem>>, vector<1x16x128xf32>
    %152 = vector.shape_cast %151 : vector<1x16x128xf32> to vector<16x128xf32>
    %153 = vector.shape_cast %150 : vector<16x128xf32> to vector<1x16x128xf32>
    tpu.vector_store %arg24[%c4_127, %c0_128, %c0_129], %153 {strides = array<i32>} : memref<7x16x128xf32, #tpu.memory_space<vmem>>, vector<1x16x128xf32>,
    %c5_130 = arith.constant 5 : index
    %c0_131 = arith.constant 0 : index
    %c0_132 = arith.constant 0 : index
    %154 = vector.load %arg3[%c5_130, %c0_131, %c0_132] : memref<7x16x32xf32, #tpu.memory_space<vmem>>, vector<1x16x32xf32>
    %155 = vector.shape_cast %154 : vector<1x16x32xf32> to vector<16x32xf32>
    %cst_133 = arith.constant dense<0.000000e+00> : vector<16x128xf32>
    %156 = tpu.matmul %155, %118, %cst_133 {dimension_numbers = #tpu.dot_dimension_numbers<[1], [0], [0], [1], [0, 0, 1, 1], [], []>} : vector<16x32xf32>, vector<32x128xf32>, vector<16x128xf32> -> vector<16x128xf32>
    %157 = arith.addf %156, %11 : vector<16x128xf32>
    %c5_134 = arith.constant 5 : index
    %c0_135 = arith.constant 0 : index
    %c0_136 = arith.constant 0 : index
    %158 = vector.load %arg24[%c5_134, %c0_135, %c0_136] : memref<7x16x128xf32, #tpu.memory_space<vmem>>, vector<1x16x128xf32>
    %159 = vector.shape_cast %158 : vector<1x16x128xf32> to vector<16x128xf32>
    %160 = vector.shape_cast %157 : vector<16x128xf32> to vector<1x16x128xf32>
    tpu.vector_store %arg24[%c5_134, %c0_135, %c0_136], %160 {strides = array<i32>} : memref<7x16x128xf32, #tpu.memory_space<vmem>>, vector<1x16x128xf32>,
    %c6_137 = arith.constant 6 : index
    %c0_138 = arith.constant 0 : index
    %c0_139 = arith.constant 0 : index
    %161 = vector.load %arg3[%c6_137, %c0_138, %c0_139] : memref<7x16x32xf32, #tpu.memory_space<vmem>>, vector<1x16x32xf32>
    %162 = vector.shape_cast %161 : vector<1x16x32xf32> to vector<16x32xf32>
    %cst_140 = arith.constant dense<0.000000e+00> : vector<16x128xf32>
    %163 = tpu.matmul %162, %118, %cst_140 {dimension_numbers = #tpu.dot_dimension_numbers<[1], [0], [0], [1], [0, 0, 1, 1], [], []>} : vector<16x32xf32>, vector<32x128xf32>, vector<16x128xf32> -> vector<16x128xf32>
    %164 = arith.addf %163, %11 : vector<16x128xf32>
    %c6_141 = arith.constant 6 : index
    %c0_142 = arith.constant 0 : index
    %c0_143 = arith.constant 0 : index
    %165 = vector.load %arg24[%c6_141, %c0_142, %c0_143] : memref<7x16x128xf32, #tpu.memory_space<vmem>>, vector<1x16x128xf32>
    %166 = vector.shape_cast %165 : vector<1x16x128xf32> to vector<16x128xf32>
    %167 = vector.shape_cast %164 : vector<16x128xf32> to vector<1x16x128xf32>
    tpu.vector_store %arg24[%c6_141, %c0_142, %c0_143], %167 {strides = array<i32>} : memref<7x16x128xf32, #tpu.memory_space<vmem>>, vector<1x16x128xf32>,
    %c0_144 = arith.constant 0 : index
    %c0_145 = arith.constant 0 : index
    %168 = vector.load %arg2[%c0_144, %c0_145] : memref<16x1xi32, #tpu.memory_space<vmem>>, vector<16x1xi32>
    %c0_146 = arith.constant 0 : index
    %c0_147 = arith.constant 0 : index
    %169 = vector.load %arg8[%c0_146, %c0_147] : memref<32x128xf32, #tpu.memory_space<vmem>>, vector<32x128xf32>
    %c0_148 = arith.constant 0 : index
    %c0_149 = arith.constant 0 : index
    %170 = vector.load %arg10[%c0_148, %c0_149] : memref<64x128xf32, #tpu.memory_space<vmem>>, vector<64x128xf32>
    %c0_150 = arith.constant 0 : index
    %c0_151 = arith.constant 0 : index
    %171 = vector.load %arg11[%c0_150, %c0_151] : memref<1x128xf32, #tpu.memory_space<vmem>>, vector<1x128xf32>
    %cst_152 = arith.constant 0.000000e+00 : f32
    %172 = vector.broadcast %cst_152 : f32 to vector<16x32xf32>
    %c0_i32 = arith.constant 0 : i32
    %173 = vector.broadcast %c0_i32 : i32 to vector<16x1xi32>
    %174 = arith.cmpi sgt, %168, %173 : vector<16x1xi32>
    %c0_153 = arith.constant 0 : index
    %c0_154 = arith.constant 0 : index
    %c0_155 = arith.constant 0 : index
    %175 = vector.load %arg23[%c0_153, %c0_154, %c0_155] : memref<13x16x128xf32, #tpu.memory_space<vmem>>, vector<1x16x128xf32>
    %176 = vector.shape_cast %175 : vector<1x16x128xf32> to vector<16x128xf32>
    %cst_156 = arith.constant dense<0.000000e+00> : vector<16x128xf32>
    %177 = tpu.matmul %172, %169, %cst_156 {dimension_numbers = #tpu.dot_dimension_numbers<[1], [0], [0], [1], [0, 0, 1, 1], [], []>} : vector<16x32xf32>, vector<32x128xf32>, vector<16x128xf32> -> vector<16x128xf32>
    %178 = arith.addf %176, %177 : vector<16x128xf32>
    %179 = arith.negf %178 : vector<16x128xf32>
    %180 = math.exp %179 : vector<16x128xf32>
    %cst_157 = arith.constant 1.000000e+00 : f32
    %181 = vector.broadcast %cst_157 : f32 to vector<16x128xf32>
    %182 = arith.addf %181, %180 : vector<16x128xf32>
    %183 = arith.divf %181, %182 : vector<16x128xf32>
    %184 = math.tanh %178 : vector<16x128xf32>
    %185 = vector.extract_strided_slice %183 {offsets = [0, 0], sizes = [16, 32], strides = [1, 1]} : vector<16x128xf32> to vector<16x32xf32>
    %186 = vector.extract_strided_slice %183 {offsets = [0, 32], sizes = [16, 32], strides = [1, 1]} : vector<16x128xf32> to vector<16x32xf32>
    %187 = vector.extract_strided_slice %184 {offsets = [0, 64], sizes = [16, 32], strides = [1, 1]} : vector<16x128xf32> to vector<16x32xf32>
    %188 = vector.extract_strided_slice %183 {offsets = [0, 96], sizes = [16, 32], strides = [1, 1]} : vector<16x128xf32> to vector<16x32xf32>
    %189 = arith.mulf %186, %172 : vector<16x32xf32>
    %190 = arith.mulf %185, %187 : vector<16x32xf32>
    %191 = arith.addf %189, %190 : vector<16x32xf32>
    %192 = math.tanh %191 : vector<16x32xf32>
    %193 = arith.mulf %188, %192 : vector<16x32xf32>
    %194 = tpu.concatenate %193, %172 in 1 : vector<16x32xf32>, vector<16x32xf32> -> vector<16x64xf32>
    %cst_158 = arith.constant dense<0.000000e+00> : vector<16x128xf32>
    %195 = tpu.matmul %194, %170, %cst_158 {dimension_numbers = #tpu.dot_dimension_numbers<[1], [0], [0], [1], [0, 0, 1, 1], [], []>} : vector<16x64xf32>, vector<64x128xf32>, vector<16x128xf32> -> vector<16x128xf32>
    %196 = vector.broadcast %171 : vector<1x128xf32> to vector<16x128xf32>
    %197 = arith.addf %195, %196 : vector<16x128xf32>
    %198 = arith.negf %197 : vector<16x128xf32>
    %199 = math.exp %198 : vector<16x128xf32>
    %cst_159 = arith.constant 1.000000e+00 : f32
    %200 = vector.broadcast %cst_159 : f32 to vector<16x128xf32>
    %201 = arith.addf %200, %199 : vector<16x128xf32>
    %202 = arith.divf %200, %201 : vector<16x128xf32>
    %203 = math.tanh %197 : vector<16x128xf32>
    %204 = vector.extract_strided_slice %202 {offsets = [0, 0], sizes = [16, 32], strides = [1, 1]} : vector<16x128xf32> to vector<16x32xf32>
    %205 = vector.extract_strided_slice %202 {offsets = [0, 32], sizes = [16, 32], strides = [1, 1]} : vector<16x128xf32> to vector<16x32xf32>
    %206 = vector.extract_strided_slice %203 {offsets = [0, 64], sizes = [16, 32], strides = [1, 1]} : vector<16x128xf32> to vector<16x32xf32>
    %207 = vector.extract_strided_slice %202 {offsets = [0, 96], sizes = [16, 32], strides = [1, 1]} : vector<16x128xf32> to vector<16x32xf32>
    %208 = arith.mulf %205, %172 : vector<16x32xf32>
    %209 = arith.mulf %204, %206 : vector<16x32xf32>
    %210 = arith.addf %208, %209 : vector<16x32xf32>
    %211 = math.tanh %210 : vector<16x32xf32>
    %212 = arith.mulf %207, %211 : vector<16x32xf32>
    %213 = vector.shape_cast %174 : vector<16x1xi1> to vector<16x1xi1>
    %214 = vector.broadcast %213 : vector<16x1xi1> to vector<16x32xi1>
    %215 = arith.select %214, %193, %172 : vector<16x32xi1>, vector<16x32xf32>
    %216 = vector.shape_cast %174 : vector<16x1xi1> to vector<16x1xi1>
    %217 = vector.broadcast %216 : vector<16x1xi1> to vector<16x32xi1>
    %218 = arith.select %217, %191, %172 : vector<16x32xi1>, vector<16x32xf32>
    %219 = vector.shape_cast %174 : vector<16x1xi1> to vector<16x1xi1>
    %220 = vector.broadcast %219 : vector<16x1xi1> to vector<16x32xi1>
    %221 = arith.select %220, %212, %172 : vector<16x32xi1>, vector<16x32xf32>
    %222 = vector.shape_cast %174 : vector<16x1xi1> to vector<16x1xi1>
    %223 = vector.broadcast %222 : vector<16x1xi1> to vector<16x32xi1>
    %224 = arith.select %223, %210, %172 : vector<16x32xi1>, vector<16x32xf32>
    %c1_i32 = arith.constant 1 : i32
    %225 = vector.broadcast %c1_i32 : i32 to vector<16x1xi32>
    %226 = arith.cmpi sgt, %168, %225 : vector<16x1xi32>
    %c1_160 = arith.constant 1 : index
    %c0_161 = arith.constant 0 : index
    %c0_162 = arith.constant 0 : index
    %227 = vector.load %arg23[%c1_160, %c0_161, %c0_162] : memref<13x16x128xf32, #tpu.memory_space<vmem>>, vector<1x16x128xf32>
    %228 = vector.shape_cast %227 : vector<1x16x128xf32> to vector<16x128xf32>
    %cst_163 = arith.constant dense<0.000000e+00> : vector<16x128xf32>
    %229 = tpu.matmul %215, %169, %cst_163 {dimension_numbers = #tpu.dot_dimension_numbers<[1], [0], [0], [1], [0, 0, 1, 1], [], []>} : vector<16x32xf32>, vector<32x128xf32>, vector<16x128xf32> -> vector<16x128xf32>
    %230 = arith.addf %228, %229 : vector<16x128xf32>
    %231 = arith.negf %230 : vector<16x128xf32>
    %232 = math.exp %231 : vector<16x128xf32>
    %cst_164 = arith.constant 1.000000e+00 : f32
    %233 = vector.broadcast %cst_164 : f32 to vector<16x128xf32>
    %234 = arith.addf %233, %232 : vector<16x128xf32>
    %235 = arith.divf %233, %234 : vector<16x128xf32>
    %236 = math.tanh %230 : vector<16x128xf32>
    %237 = vector.extract_strided_slice %235 {offsets = [0, 0], sizes = [16, 32], strides = [1, 1]} : vector<16x128xf32> to vector<16x32xf32>
    %238 = vector.extract_strided_slice %235 {offsets = [0, 32], sizes = [16, 32], strides = [1, 1]} : vector<16x128xf32> to vector<16x32xf32>
    %239 = vector.extract_strided_slice %236 {offsets = [0, 64], sizes = [16, 32], strides = [1, 1]} : vector<16x128xf32> to vector<16x32xf32>
    %240 = vector.extract_strided_slice %235 {offsets = [0, 96], sizes = [16, 32], strides = [1, 1]} : vector<16x128xf32> to vector<16x32xf32>
    %241 = arith.mulf %238, %218 : vector<16x32xf32>
    %242 = arith.mulf %237, %239 : vector<16x32xf32>
    %243 = arith.addf %241, %242 : vector<16x32xf32>
    %244 = math.tanh %243 : vector<16x32xf32>
    %245 = arith.mulf %240, %244 : vector<16x32xf32>
    %246 = tpu.concatenate %245, %221 in 1 : vector<16x32xf32>, vector<16x32xf32> -> vector<16x64xf32>
    %cst_165 = arith.constant dense<0.000000e+00> : vector<16x128xf32>
    %247 = tpu.matmul %246, %170, %cst_165 {dimension_numbers = #tpu.dot_dimension_numbers<[1], [0], [0], [1], [0, 0, 1, 1], [], []>} : vector<16x64xf32>, vector<64x128xf32>, vector<16x128xf32> -> vector<16x128xf32>
    %248 = vector.broadcast %171 : vector<1x128xf32> to vector<16x128xf32>
    %249 = arith.addf %247, %248 : vector<16x128xf32>
    %250 = arith.negf %249 : vector<16x128xf32>
    %251 = math.exp %250 : vector<16x128xf32>
    %cst_166 = arith.constant 1.000000e+00 : f32
    %252 = vector.broadcast %cst_166 : f32 to vector<16x128xf32>
    %253 = arith.addf %252, %251 : vector<16x128xf32>
    %254 = arith.divf %252, %253 : vector<16x128xf32>
    %255 = math.tanh %249 : vector<16x128xf32>
    %256 = vector.extract_strided_slice %254 {offsets = [0, 0], sizes = [16, 32], strides = [1, 1]} : vector<16x128xf32> to vector<16x32xf32>
    %257 = vector.extract_strided_slice %254 {offsets = [0, 32], sizes = [16, 32], strides = [1, 1]} : vector<16x128xf32> to vector<16x32xf32>
    %258 = vector.extract_strided_slice %255 {offsets = [0, 64], sizes = [16, 32], strides = [1, 1]} : vector<16x128xf32> to vector<16x32xf32>
    %259 = vector.extract_strided_slice %254 {offsets = [0, 96], sizes = [16, 32], strides = [1, 1]} : vector<16x128xf32> to vector<16x32xf32>
    %260 = arith.mulf %257, %224 : vector<16x32xf32>
    %261 = arith.mulf %256, %258 : vector<16x32xf32>
    %262 = arith.addf %260, %261 : vector<16x32xf32>
    %263 = math.tanh %262 : vector<16x32xf32>
    %264 = arith.mulf %259, %263 : vector<16x32xf32>
    %265 = vector.shape_cast %226 : vector<16x1xi1> to vector<16x1xi1>
    %266 = vector.broadcast %265 : vector<16x1xi1> to vector<16x32xi1>
    %267 = arith.select %266, %245, %215 : vector<16x32xi1>, vector<16x32xf32>
    %268 = vector.shape_cast %226 : vector<16x1xi1> to vector<16x1xi1>
    %269 = vector.broadcast %268 : vector<16x1xi1> to vector<16x32xi1>
    %270 = arith.select %269, %243, %218 : vector<16x32xi1>, vector<16x32xf32>
    %271 = vector.shape_cast %226 : vector<16x1xi1> to vector<16x1xi1>
    %272 = vector.broadcast %271 : vector<16x1xi1> to vector<16x32xi1>
    %273 = arith.select %272, %264, %221 : vector<16x32xi1>, vector<16x32xf32>
    %274 = vector.shape_cast %226 : vector<16x1xi1> to vector<16x1xi1>
    %275 = vector.broadcast %274 : vector<16x1xi1> to vector<16x32xi1>
    %276 = arith.select %275, %262, %224 : vector<16x32xi1>, vector<16x32xf32>
    %c2_i32 = arith.constant 2 : i32
    %277 = vector.broadcast %c2_i32 : i32 to vector<16x1xi32>
    %278 = arith.cmpi sgt, %168, %277 : vector<16x1xi32>
    %c2_167 = arith.constant 2 : index
    %c0_168 = arith.constant 0 : index
    %c0_169 = arith.constant 0 : index
    %279 = vector.load %arg23[%c2_167, %c0_168, %c0_169] : memref<13x16x128xf32, #tpu.memory_space<vmem>>, vector<1x16x128xf32>
    %280 = vector.shape_cast %279 : vector<1x16x128xf32> to vector<16x128xf32>
    %cst_170 = arith.constant dense<0.000000e+00> : vector<16x128xf32>
    %281 = tpu.matmul %267, %169, %cst_170 {dimension_numbers = #tpu.dot_dimension_numbers<[1], [0], [0], [1], [0, 0, 1, 1], [], []>} : vector<16x32xf32>, vector<32x128xf32>, vector<16x128xf32> -> vector<16x128xf32>
    %282 = arith.addf %280, %281 : vector<16x128xf32>
    %283 = arith.negf %282 : vector<16x128xf32>
    %284 = math.exp %283 : vector<16x128xf32>
    %cst_171 = arith.constant 1.000000e+00 : f32
    %285 = vector.broadcast %cst_171 : f32 to vector<16x128xf32>
    %286 = arith.addf %285, %284 : vector<16x128xf32>
    %287 = arith.divf %285, %286 : vector<16x128xf32>
    %288 = math.tanh %282 : vector<16x128xf32>
    %289 = vector.extract_strided_slice %287 {offsets = [0, 0], sizes = [16, 32], strides = [1, 1]} : vector<16x128xf32> to vector<16x32xf32>
    %290 = vector.extract_strided_slice %287 {offsets = [0, 32], sizes = [16, 32], strides = [1, 1]} : vector<16x128xf32> to vector<16x32xf32>
    %291 = vector.extract_strided_slice %288 {offsets = [0, 64], sizes = [16, 32], strides = [1, 1]} : vector<16x128xf32> to vector<16x32xf32>
    %292 = vector.extract_strided_slice %287 {offsets = [0, 96], sizes = [16, 32], strides = [1, 1]} : vector<16x128xf32> to vector<16x32xf32>
    %293 = arith.mulf %290, %270 : vector<16x32xf32>
    %294 = arith.mulf %289, %291 : vector<16x32xf32>
    %295 = arith.addf %293, %294 : vector<16x32xf32>
    %296 = math.tanh %295 : vector<16x32xf32>
    %297 = arith.mulf %292, %296 : vector<16x32xf32>
    %298 = tpu.concatenate %297, %273 in 1 : vector<16x32xf32>, vector<16x32xf32> -> vector<16x64xf32>
    %cst_172 = arith.constant dense<0.000000e+00> : vector<16x128xf32>
    %299 = tpu.matmul %298, %170, %cst_172 {dimension_numbers = #tpu.dot_dimension_numbers<[1], [0], [0], [1], [0, 0, 1, 1], [], []>} : vector<16x64xf32>, vector<64x128xf32>, vector<16x128xf32> -> vector<16x128xf32>
    %300 = vector.broadcast %171 : vector<1x128xf32> to vector<16x128xf32>
    %301 = arith.addf %299, %300 : vector<16x128xf32>
    %302 = arith.negf %301 : vector<16x128xf32>
    %303 = math.exp %302 : vector<16x128xf32>
    %cst_173 = arith.constant 1.000000e+00 : f32
    %304 = vector.broadcast %cst_173 : f32 to vector<16x128xf32>
    %305 = arith.addf %304, %303 : vector<16x128xf32>
    %306 = arith.divf %304, %305 : vector<16x128xf32>
    %307 = math.tanh %301 : vector<16x128xf32>
    %308 = vector.extract_strided_slice %306 {offsets = [0, 0], sizes = [16, 32], strides = [1, 1]} : vector<16x128xf32> to vector<16x32xf32>
    %309 = vector.extract_strided_slice %306 {offsets = [0, 32], sizes = [16, 32], strides = [1, 1]} : vector<16x128xf32> to vector<16x32xf32>
    %310 = vector.extract_strided_slice %307 {offsets = [0, 64], sizes = [16, 32], strides = [1, 1]} : vector<16x128xf32> to vector<16x32xf32>
    %311 = vector.extract_strided_slice %306 {offsets = [0, 96], sizes = [16, 32], strides = [1, 1]} : vector<16x128xf32> to vector<16x32xf32>
    %312 = arith.mulf %309, %276 : vector<16x32xf32>
    %313 = arith.mulf %308, %310 : vector<16x32xf32>
    %314 = arith.addf %312, %313 : vector<16x32xf32>
    %315 = math.tanh %314 : vector<16x32xf32>
    %316 = arith.mulf %311, %315 : vector<16x32xf32>
    %317 = vector.shape_cast %278 : vector<16x1xi1> to vector<16x1xi1>
    %318 = vector.broadcast %317 : vector<16x1xi1> to vector<16x32xi1>
    %319 = arith.select %318, %297, %267 : vector<16x32xi1>, vector<16x32xf32>
    %320 = vector.shape_cast %278 : vector<16x1xi1> to vector<16x1xi1>
    %321 = vector.broadcast %320 : vector<16x1xi1> to vector<16x32xi1>
    %322 = arith.select %321, %295, %270 : vector<16x32xi1>, vector<16x32xf32>
    %323 = vector.shape_cast %278 : vector<16x1xi1> to vector<16x1xi1>
    %324 = vector.broadcast %323 : vector<16x1xi1> to vector<16x32xi1>
    %325 = arith.select %324, %316, %273 : vector<16x32xi1>, vector<16x32xf32>
    %326 = vector.shape_cast %278 : vector<16x1xi1> to vector<16x1xi1>
    %327 = vector.broadcast %326 : vector<16x1xi1> to vector<16x32xi1>
    %328 = arith.select %327, %314, %276 : vector<16x32xi1>, vector<16x32xf32>
    %c3_i32 = arith.constant 3 : i32
    %329 = vector.broadcast %c3_i32 : i32 to vector<16x1xi32>
    %330 = arith.cmpi sgt, %168, %329 : vector<16x1xi32>
    %c3_174 = arith.constant 3 : index
    %c0_175 = arith.constant 0 : index
    %c0_176 = arith.constant 0 : index
    %331 = vector.load %arg23[%c3_174, %c0_175, %c0_176] : memref<13x16x128xf32, #tpu.memory_space<vmem>>, vector<1x16x128xf32>
    %332 = vector.shape_cast %331 : vector<1x16x128xf32> to vector<16x128xf32>
    %cst_177 = arith.constant dense<0.000000e+00> : vector<16x128xf32>
    %333 = tpu.matmul %319, %169, %cst_177 {dimension_numbers = #tpu.dot_dimension_numbers<[1], [0], [0], [1], [0, 0, 1, 1], [], []>} : vector<16x32xf32>, vector<32x128xf32>, vector<16x128xf32> -> vector<16x128xf32>
    %334 = arith.addf %332, %333 : vector<16x128xf32>
    %335 = arith.negf %334 : vector<16x128xf32>
    %336 = math.exp %335 : vector<16x128xf32>
    %cst_178 = arith.constant 1.000000e+00 : f32
    %337 = vector.broadcast %cst_178 : f32 to vector<16x128xf32>
    %338 = arith.addf %337, %336 : vector<16x128xf32>
    %339 = arith.divf %337, %338 : vector<16x128xf32>
    %340 = math.tanh %334 : vector<16x128xf32>
    %341 = vector.extract_strided_slice %339 {offsets = [0, 0], sizes = [16, 32], strides = [1, 1]} : vector<16x128xf32> to vector<16x32xf32>
    %342 = vector.extract_strided_slice %339 {offsets = [0, 32], sizes = [16, 32], strides = [1, 1]} : vector<16x128xf32> to vector<16x32xf32>
    %343 = vector.extract_strided_slice %340 {offsets = [0, 64], sizes = [16, 32], strides = [1, 1]} : vector<16x128xf32> to vector<16x32xf32>
    %344 = vector.extract_strided_slice %339 {offsets = [0, 96], sizes = [16, 32], strides = [1, 1]} : vector<16x128xf32> to vector<16x32xf32>
    %345 = arith.mulf %342, %322 : vector<16x32xf32>
    %346 = arith.mulf %341, %343 : vector<16x32xf32>
    %347 = arith.addf %345, %346 : vector<16x32xf32>
    %348 = math.tanh %347 : vector<16x32xf32>
    %349 = arith.mulf %344, %348 : vector<16x32xf32>
    %350 = tpu.concatenate %349, %325 in 1 : vector<16x32xf32>, vector<16x32xf32> -> vector<16x64xf32>
    %cst_179 = arith.constant dense<0.000000e+00> : vector<16x128xf32>
    %351 = tpu.matmul %350, %170, %cst_179 {dimension_numbers = #tpu.dot_dimension_numbers<[1], [0], [0], [1], [0, 0, 1, 1], [], []>} : vector<16x64xf32>, vector<64x128xf32>, vector<16x128xf32> -> vector<16x128xf32>
    %352 = vector.broadcast %171 : vector<1x128xf32> to vector<16x128xf32>
    %353 = arith.addf %351, %352 : vector<16x128xf32>
    %354 = arith.negf %353 : vector<16x128xf32>
    %355 = math.exp %354 : vector<16x128xf32>
    %cst_180 = arith.constant 1.000000e+00 : f32
    %356 = vector.broadcast %cst_180 : f32 to vector<16x128xf32>
    %357 = arith.addf %356, %355 : vector<16x128xf32>
    %358 = arith.divf %356, %357 : vector<16x128xf32>
    %359 = math.tanh %353 : vector<16x128xf32>
    %360 = vector.extract_strided_slice %358 {offsets = [0, 0], sizes = [16, 32], strides = [1, 1]} : vector<16x128xf32> to vector<16x32xf32>
    %361 = vector.extract_strided_slice %358 {offsets = [0, 32], sizes = [16, 32], strides = [1, 1]} : vector<16x128xf32> to vector<16x32xf32>
    %362 = vector.extract_strided_slice %359 {offsets = [0, 64], sizes = [16, 32], strides = [1, 1]} : vector<16x128xf32> to vector<16x32xf32>
    %363 = vector.extract_strided_slice %358 {offsets = [0, 96], sizes = [16, 32], strides = [1, 1]} : vector<16x128xf32> to vector<16x32xf32>
    %364 = arith.mulf %361, %328 : vector<16x32xf32>
    %365 = arith.mulf %360, %362 : vector<16x32xf32>
    %366 = arith.addf %364, %365 : vector<16x32xf32>
    %367 = math.tanh %366 : vector<16x32xf32>
    %368 = arith.mulf %363, %367 : vector<16x32xf32>
    %369 = vector.shape_cast %330 : vector<16x1xi1> to vector<16x1xi1>
    %370 = vector.broadcast %369 : vector<16x1xi1> to vector<16x32xi1>
    %371 = arith.select %370, %349, %319 : vector<16x32xi1>, vector<16x32xf32>
    %372 = vector.shape_cast %330 : vector<16x1xi1> to vector<16x1xi1>
    %373 = vector.broadcast %372 : vector<16x1xi1> to vector<16x32xi1>
    %374 = arith.select %373, %347, %322 : vector<16x32xi1>, vector<16x32xf32>
    %375 = vector.shape_cast %330 : vector<16x1xi1> to vector<16x1xi1>
    %376 = vector.broadcast %375 : vector<16x1xi1> to vector<16x32xi1>
    %377 = arith.select %376, %368, %325 : vector<16x32xi1>, vector<16x32xf32>
    %378 = vector.shape_cast %330 : vector<16x1xi1> to vector<16x1xi1>
    %379 = vector.broadcast %378 : vector<16x1xi1> to vector<16x32xi1>
    %380 = arith.select %379, %366, %328 : vector<16x32xi1>, vector<16x32xf32>
    %c4_i32 = arith.constant 4 : i32
    %381 = vector.broadcast %c4_i32 : i32 to vector<16x1xi32>
    %382 = arith.cmpi sgt, %168, %381 : vector<16x1xi32>
    %c4_181 = arith.constant 4 : index
    %c0_182 = arith.constant 0 : index
    %c0_183 = arith.constant 0 : index
    %383 = vector.load %arg23[%c4_181, %c0_182, %c0_183] : memref<13x16x128xf32, #tpu.memory_space<vmem>>, vector<1x16x128xf32>
    %384 = vector.shape_cast %383 : vector<1x16x128xf32> to vector<16x128xf32>
    %cst_184 = arith.constant dense<0.000000e+00> : vector<16x128xf32>
    %385 = tpu.matmul %371, %169, %cst_184 {dimension_numbers = #tpu.dot_dimension_numbers<[1], [0], [0], [1], [0, 0, 1, 1], [], []>} : vector<16x32xf32>, vector<32x128xf32>, vector<16x128xf32> -> vector<16x128xf32>
    %386 = arith.addf %384, %385 : vector<16x128xf32>
    %387 = arith.negf %386 : vector<16x128xf32>
    %388 = math.exp %387 : vector<16x128xf32>
    %cst_185 = arith.constant 1.000000e+00 : f32
    %389 = vector.broadcast %cst_185 : f32 to vector<16x128xf32>
    %390 = arith.addf %389, %388 : vector<16x128xf32>
    %391 = arith.divf %389, %390 : vector<16x128xf32>
    %392 = math.tanh %386 : vector<16x128xf32>
    %393 = vector.extract_strided_slice %391 {offsets = [0, 0], sizes = [16, 32], strides = [1, 1]} : vector<16x128xf32> to vector<16x32xf32>
    %394 = vector.extract_strided_slice %391 {offsets = [0, 32], sizes = [16, 32], strides = [1, 1]} : vector<16x128xf32> to vector<16x32xf32>
    %395 = vector.extract_strided_slice %392 {offsets = [0, 64], sizes = [16, 32], strides = [1, 1]} : vector<16x128xf32> to vector<16x32xf32>
    %396 = vector.extract_strided_slice %391 {offsets = [0, 96], sizes = [16, 32], strides = [1, 1]} : vector<16x128xf32> to vector<16x32xf32>
    %397 = arith.mulf %394, %374 : vector<16x32xf32>
    %398 = arith.mulf %393, %395 : vector<16x32xf32>
    %399 = arith.addf %397, %398 : vector<16x32xf32>
    %400 = math.tanh %399 : vector<16x32xf32>
    %401 = arith.mulf %396, %400 : vector<16x32xf32>
    %402 = tpu.concatenate %401, %377 in 1 : vector<16x32xf32>, vector<16x32xf32> -> vector<16x64xf32>
    %cst_186 = arith.constant dense<0.000000e+00> : vector<16x128xf32>
    %403 = tpu.matmul %402, %170, %cst_186 {dimension_numbers = #tpu.dot_dimension_numbers<[1], [0], [0], [1], [0, 0, 1, 1], [], []>} : vector<16x64xf32>, vector<64x128xf32>, vector<16x128xf32> -> vector<16x128xf32>
    %404 = vector.broadcast %171 : vector<1x128xf32> to vector<16x128xf32>
    %405 = arith.addf %403, %404 : vector<16x128xf32>
    %406 = arith.negf %405 : vector<16x128xf32>
    %407 = math.exp %406 : vector<16x128xf32>
    %cst_187 = arith.constant 1.000000e+00 : f32
    %408 = vector.broadcast %cst_187 : f32 to vector<16x128xf32>
    %409 = arith.addf %408, %407 : vector<16x128xf32>
    %410 = arith.divf %408, %409 : vector<16x128xf32>
    %411 = math.tanh %405 : vector<16x128xf32>
    %412 = vector.extract_strided_slice %410 {offsets = [0, 0], sizes = [16, 32], strides = [1, 1]} : vector<16x128xf32> to vector<16x32xf32>
    %413 = vector.extract_strided_slice %410 {offsets = [0, 32], sizes = [16, 32], strides = [1, 1]} : vector<16x128xf32> to vector<16x32xf32>
    %414 = vector.extract_strided_slice %411 {offsets = [0, 64], sizes = [16, 32], strides = [1, 1]} : vector<16x128xf32> to vector<16x32xf32>
    %415 = vector.extract_strided_slice %410 {offsets = [0, 96], sizes = [16, 32], strides = [1, 1]} : vector<16x128xf32> to vector<16x32xf32>
    %416 = arith.mulf %413, %380 : vector<16x32xf32>
    %417 = arith.mulf %412, %414 : vector<16x32xf32>
    %418 = arith.addf %416, %417 : vector<16x32xf32>
    %419 = math.tanh %418 : vector<16x32xf32>
    %420 = arith.mulf %415, %419 : vector<16x32xf32>
    %421 = vector.shape_cast %382 : vector<16x1xi1> to vector<16x1xi1>
    %422 = vector.broadcast %421 : vector<16x1xi1> to vector<16x32xi1>
    %423 = arith.select %422, %401, %371 : vector<16x32xi1>, vector<16x32xf32>
    %424 = vector.shape_cast %382 : vector<16x1xi1> to vector<16x1xi1>
    %425 = vector.broadcast %424 : vector<16x1xi1> to vector<16x32xi1>
    %426 = arith.select %425, %399, %374 : vector<16x32xi1>, vector<16x32xf32>
    %427 = vector.shape_cast %382 : vector<16x1xi1> to vector<16x1xi1>
    %428 = vector.broadcast %427 : vector<16x1xi1> to vector<16x32xi1>
    %429 = arith.select %428, %420, %377 : vector<16x32xi1>, vector<16x32xf32>
    %430 = vector.shape_cast %382 : vector<16x1xi1> to vector<16x1xi1>
    %431 = vector.broadcast %430 : vector<16x1xi1> to vector<16x32xi1>
    %432 = arith.select %431, %418, %380 : vector<16x32xi1>, vector<16x32xf32>
    %c5_i32 = arith.constant 5 : i32
    %433 = vector.broadcast %c5_i32 : i32 to vector<16x1xi32>
    %434 = arith.cmpi sgt, %168, %433 : vector<16x1xi32>
    %c5_188 = arith.constant 5 : index
    %c0_189 = arith.constant 0 : index
    %c0_190 = arith.constant 0 : index
    %435 = vector.load %arg23[%c5_188, %c0_189, %c0_190] : memref<13x16x128xf32, #tpu.memory_space<vmem>>, vector<1x16x128xf32>
    %436 = vector.shape_cast %435 : vector<1x16x128xf32> to vector<16x128xf32>
    %cst_191 = arith.constant dense<0.000000e+00> : vector<16x128xf32>
    %437 = tpu.matmul %423, %169, %cst_191 {dimension_numbers = #tpu.dot_dimension_numbers<[1], [0], [0], [1], [0, 0, 1, 1], [], []>} : vector<16x32xf32>, vector<32x128xf32>, vector<16x128xf32> -> vector<16x128xf32>
    %438 = arith.addf %436, %437 : vector<16x128xf32>
    %439 = arith.negf %438 : vector<16x128xf32>
    %440 = math.exp %439 : vector<16x128xf32>
    %cst_192 = arith.constant 1.000000e+00 : f32
    %441 = vector.broadcast %cst_192 : f32 to vector<16x128xf32>
    %442 = arith.addf %441, %440 : vector<16x128xf32>
    %443 = arith.divf %441, %442 : vector<16x128xf32>
    %444 = math.tanh %438 : vector<16x128xf32>
    %445 = vector.extract_strided_slice %443 {offsets = [0, 0], sizes = [16, 32], strides = [1, 1]} : vector<16x128xf32> to vector<16x32xf32>
    %446 = vector.extract_strided_slice %443 {offsets = [0, 32], sizes = [16, 32], strides = [1, 1]} : vector<16x128xf32> to vector<16x32xf32>
    %447 = vector.extract_strided_slice %444 {offsets = [0, 64], sizes = [16, 32], strides = [1, 1]} : vector<16x128xf32> to vector<16x32xf32>
    %448 = vector.extract_strided_slice %443 {offsets = [0, 96], sizes = [16, 32], strides = [1, 1]} : vector<16x128xf32> to vector<16x32xf32>
    %449 = arith.mulf %446, %426 : vector<16x32xf32>
    %450 = arith.mulf %445, %447 : vector<16x32xf32>
    %451 = arith.addf %449, %450 : vector<16x32xf32>
    %452 = math.tanh %451 : vector<16x32xf32>
    %453 = arith.mulf %448, %452 : vector<16x32xf32>
    %454 = tpu.concatenate %453, %429 in 1 : vector<16x32xf32>, vector<16x32xf32> -> vector<16x64xf32>
    %cst_193 = arith.constant dense<0.000000e+00> : vector<16x128xf32>
    %455 = tpu.matmul %454, %170, %cst_193 {dimension_numbers = #tpu.dot_dimension_numbers<[1], [0], [0], [1], [0, 0, 1, 1], [], []>} : vector<16x64xf32>, vector<64x128xf32>, vector<16x128xf32> -> vector<16x128xf32>
    %456 = vector.broadcast %171 : vector<1x128xf32> to vector<16x128xf32>
    %457 = arith.addf %455, %456 : vector<16x128xf32>
    %458 = arith.negf %457 : vector<16x128xf32>
    %459 = math.exp %458 : vector<16x128xf32>
    %cst_194 = arith.constant 1.000000e+00 : f32
    %460 = vector.broadcast %cst_194 : f32 to vector<16x128xf32>
    %461 = arith.addf %460, %459 : vector<16x128xf32>
    %462 = arith.divf %460, %461 : vector<16x128xf32>
    %463 = math.tanh %457 : vector<16x128xf32>
    %464 = vector.extract_strided_slice %462 {offsets = [0, 0], sizes = [16, 32], strides = [1, 1]} : vector<16x128xf32> to vector<16x32xf32>
    %465 = vector.extract_strided_slice %462 {offsets = [0, 32], sizes = [16, 32], strides = [1, 1]} : vector<16x128xf32> to vector<16x32xf32>
    %466 = vector.extract_strided_slice %463 {offsets = [0, 64], sizes = [16, 32], strides = [1, 1]} : vector<16x128xf32> to vector<16x32xf32>
    %467 = vector.extract_strided_slice %462 {offsets = [0, 96], sizes = [16, 32], strides = [1, 1]} : vector<16x128xf32> to vector<16x32xf32>
    %468 = arith.mulf %465, %432 : vector<16x32xf32>
    %469 = arith.mulf %464, %466 : vector<16x32xf32>
    %470 = arith.addf %468, %469 : vector<16x32xf32>
    %471 = math.tanh %470 : vector<16x32xf32>
    %472 = arith.mulf %467, %471 : vector<16x32xf32>
    %473 = vector.shape_cast %434 : vector<16x1xi1> to vector<16x1xi1>
    %474 = vector.broadcast %473 : vector<16x1xi1> to vector<16x32xi1>
    %475 = arith.select %474, %453, %423 : vector<16x32xi1>, vector<16x32xf32>
    %476 = vector.shape_cast %434 : vector<16x1xi1> to vector<16x1xi1>
    %477 = vector.broadcast %476 : vector<16x1xi1> to vector<16x32xi1>
    %478 = arith.select %477, %451, %426 : vector<16x32xi1>, vector<16x32xf32>
    %479 = vector.shape_cast %434 : vector<16x1xi1> to vector<16x1xi1>
    %480 = vector.broadcast %479 : vector<16x1xi1> to vector<16x32xi1>
    %481 = arith.select %480, %472, %429 : vector<16x32xi1>, vector<16x32xf32>
    %482 = vector.shape_cast %434 : vector<16x1xi1> to vector<16x1xi1>
    %483 = vector.broadcast %482 : vector<16x1xi1> to vector<16x32xi1>
    %484 = arith.select %483, %470, %432 : vector<16x32xi1>, vector<16x32xf32>
    %c6_i32 = arith.constant 6 : i32
    %485 = vector.broadcast %c6_i32 : i32 to vector<16x1xi32>
    %486 = arith.cmpi sgt, %168, %485 : vector<16x1xi32>
    %c6_195 = arith.constant 6 : index
    %c0_196 = arith.constant 0 : index
    %c0_197 = arith.constant 0 : index
    %487 = vector.load %arg23[%c6_195, %c0_196, %c0_197] : memref<13x16x128xf32, #tpu.memory_space<vmem>>, vector<1x16x128xf32>
    %488 = vector.shape_cast %487 : vector<1x16x128xf32> to vector<16x128xf32>
    %cst_198 = arith.constant dense<0.000000e+00> : vector<16x128xf32>
    %489 = tpu.matmul %475, %169, %cst_198 {dimension_numbers = #tpu.dot_dimension_numbers<[1], [0], [0], [1], [0, 0, 1, 1], [], []>} : vector<16x32xf32>, vector<32x128xf32>, vector<16x128xf32> -> vector<16x128xf32>
    %490 = arith.addf %488, %489 : vector<16x128xf32>
    %491 = arith.negf %490 : vector<16x128xf32>
    %492 = math.exp %491 : vector<16x128xf32>
    %cst_199 = arith.constant 1.000000e+00 : f32
    %493 = vector.broadcast %cst_199 : f32 to vector<16x128xf32>
    %494 = arith.addf %493, %492 : vector<16x128xf32>
    %495 = arith.divf %493, %494 : vector<16x128xf32>
    %496 = math.tanh %490 : vector<16x128xf32>
    %497 = vector.extract_strided_slice %495 {offsets = [0, 0], sizes = [16, 32], strides = [1, 1]} : vector<16x128xf32> to vector<16x32xf32>
    %498 = vector.extract_strided_slice %495 {offsets = [0, 32], sizes = [16, 32], strides = [1, 1]} : vector<16x128xf32> to vector<16x32xf32>
    %499 = vector.extract_strided_slice %496 {offsets = [0, 64], sizes = [16, 32], strides = [1, 1]} : vector<16x128xf32> to vector<16x32xf32>
    %500 = vector.extract_strided_slice %495 {offsets = [0, 96], sizes = [16, 32], strides = [1, 1]} : vector<16x128xf32> to vector<16x32xf32>
    %501 = arith.mulf %498, %478 : vector<16x32xf32>
    %502 = arith.mulf %497, %499 : vector<16x32xf32>
    %503 = arith.addf %501, %502 : vector<16x32xf32>
    %504 = math.tanh %503 : vector<16x32xf32>
    %505 = arith.mulf %500, %504 : vector<16x32xf32>
    %506 = tpu.concatenate %505, %481 in 1 : vector<16x32xf32>, vector<16x32xf32> -> vector<16x64xf32>
    %cst_200 = arith.constant dense<0.000000e+00> : vector<16x128xf32>
    %507 = tpu.matmul %506, %170, %cst_200 {dimension_numbers = #tpu.dot_dimension_numbers<[1], [0], [0], [1], [0, 0, 1, 1], [], []>} : vector<16x64xf32>, vector<64x128xf32>, vector<16x128xf32> -> vector<16x128xf32>
    %508 = vector.broadcast %171 : vector<1x128xf32> to vector<16x128xf32>
    %509 = arith.addf %507, %508 : vector<16x128xf32>
    %510 = arith.negf %509 : vector<16x128xf32>
    %511 = math.exp %510 : vector<16x128xf32>
    %cst_201 = arith.constant 1.000000e+00 : f32
    %512 = vector.broadcast %cst_201 : f32 to vector<16x128xf32>
    %513 = arith.addf %512, %511 : vector<16x128xf32>
    %514 = arith.divf %512, %513 : vector<16x128xf32>
    %515 = math.tanh %509 : vector<16x128xf32>
    %516 = vector.extract_strided_slice %514 {offsets = [0, 0], sizes = [16, 32], strides = [1, 1]} : vector<16x128xf32> to vector<16x32xf32>
    %517 = vector.extract_strided_slice %514 {offsets = [0, 32], sizes = [16, 32], strides = [1, 1]} : vector<16x128xf32> to vector<16x32xf32>
    %518 = vector.extract_strided_slice %515 {offsets = [0, 64], sizes = [16, 32], strides = [1, 1]} : vector<16x128xf32> to vector<16x32xf32>
    %519 = vector.extract_strided_slice %514 {offsets = [0, 96], sizes = [16, 32], strides = [1, 1]} : vector<16x128xf32> to vector<16x32xf32>
    %520 = arith.mulf %517, %484 : vector<16x32xf32>
    %521 = arith.mulf %516, %518 : vector<16x32xf32>
    %522 = arith.addf %520, %521 : vector<16x32xf32>
    %523 = math.tanh %522 : vector<16x32xf32>
    %524 = arith.mulf %519, %523 : vector<16x32xf32>
    %525 = vector.shape_cast %486 : vector<16x1xi1> to vector<16x1xi1>
    %526 = vector.broadcast %525 : vector<16x1xi1> to vector<16x32xi1>
    %527 = arith.select %526, %505, %475 : vector<16x32xi1>, vector<16x32xf32>
    %528 = vector.shape_cast %486 : vector<16x1xi1> to vector<16x1xi1>
    %529 = vector.broadcast %528 : vector<16x1xi1> to vector<16x32xi1>
    %530 = arith.select %529, %503, %478 : vector<16x32xi1>, vector<16x32xf32>
    %531 = vector.shape_cast %486 : vector<16x1xi1> to vector<16x1xi1>
    %532 = vector.broadcast %531 : vector<16x1xi1> to vector<16x32xi1>
    %533 = arith.select %532, %524, %481 : vector<16x32xi1>, vector<16x32xf32>
    %534 = vector.shape_cast %486 : vector<16x1xi1> to vector<16x1xi1>
    %535 = vector.broadcast %534 : vector<16x1xi1> to vector<16x32xi1>
    %536 = arith.select %535, %522, %484 : vector<16x32xi1>, vector<16x32xf32>
    %c7_i32 = arith.constant 7 : i32
    %537 = vector.broadcast %c7_i32 : i32 to vector<16x1xi32>
    %538 = arith.cmpi sgt, %168, %537 : vector<16x1xi32>
    %c7_202 = arith.constant 7 : index
    %c0_203 = arith.constant 0 : index
    %c0_204 = arith.constant 0 : index
    %539 = vector.load %arg23[%c7_202, %c0_203, %c0_204] : memref<13x16x128xf32, #tpu.memory_space<vmem>>, vector<1x16x128xf32>
    %540 = vector.shape_cast %539 : vector<1x16x128xf32> to vector<16x128xf32>
    %cst_205 = arith.constant dense<0.000000e+00> : vector<16x128xf32>
    %541 = tpu.matmul %527, %169, %cst_205 {dimension_numbers = #tpu.dot_dimension_numbers<[1], [0], [0], [1], [0, 0, 1, 1], [], []>} : vector<16x32xf32>, vector<32x128xf32>, vector<16x128xf32> -> vector<16x128xf32>
    %542 = arith.addf %540, %541 : vector<16x128xf32>
    %543 = arith.negf %542 : vector<16x128xf32>
    %544 = math.exp %543 : vector<16x128xf32>
    %cst_206 = arith.constant 1.000000e+00 : f32
    %545 = vector.broadcast %cst_206 : f32 to vector<16x128xf32>
    %546 = arith.addf %545, %544 : vector<16x128xf32>
    %547 = arith.divf %545, %546 : vector<16x128xf32>
    %548 = math.tanh %542 : vector<16x128xf32>
    %549 = vector.extract_strided_slice %547 {offsets = [0, 0], sizes = [16, 32], strides = [1, 1]} : vector<16x128xf32> to vector<16x32xf32>
    %550 = vector.extract_strided_slice %547 {offsets = [0, 32], sizes = [16, 32], strides = [1, 1]} : vector<16x128xf32> to vector<16x32xf32>
    %551 = vector.extract_strided_slice %548 {offsets = [0, 64], sizes = [16, 32], strides = [1, 1]} : vector<16x128xf32> to vector<16x32xf32>
    %552 = vector.extract_strided_slice %547 {offsets = [0, 96], sizes = [16, 32], strides = [1, 1]} : vector<16x128xf32> to vector<16x32xf32>
    %553 = arith.mulf %550, %530 : vector<16x32xf32>
    %554 = arith.mulf %549, %551 : vector<16x32xf32>
    %555 = arith.addf %553, %554 : vector<16x32xf32>
    %556 = math.tanh %555 : vector<16x32xf32>
    %557 = arith.mulf %552, %556 : vector<16x32xf32>
    %558 = tpu.concatenate %557, %533 in 1 : vector<16x32xf32>, vector<16x32xf32> -> vector<16x64xf32>
    %cst_207 = arith.constant dense<0.000000e+00> : vector<16x128xf32>
    %559 = tpu.matmul %558, %170, %cst_207 {dimension_numbers = #tpu.dot_dimension_numbers<[1], [0], [0], [1], [0, 0, 1, 1], [], []>} : vector<16x64xf32>, vector<64x128xf32>, vector<16x128xf32> -> vector<16x128xf32>
    %560 = vector.broadcast %171 : vector<1x128xf32> to vector<16x128xf32>
    %561 = arith.addf %559, %560 : vector<16x128xf32>
    %562 = arith.negf %561 : vector<16x128xf32>
    %563 = math.exp %562 : vector<16x128xf32>
    %cst_208 = arith.constant 1.000000e+00 : f32
    %564 = vector.broadcast %cst_208 : f32 to vector<16x128xf32>
    %565 = arith.addf %564, %563 : vector<16x128xf32>
    %566 = arith.divf %564, %565 : vector<16x128xf32>
    %567 = math.tanh %561 : vector<16x128xf32>
    %568 = vector.extract_strided_slice %566 {offsets = [0, 0], sizes = [16, 32], strides = [1, 1]} : vector<16x128xf32> to vector<16x32xf32>
    %569 = vector.extract_strided_slice %566 {offsets = [0, 32], sizes = [16, 32], strides = [1, 1]} : vector<16x128xf32> to vector<16x32xf32>
    %570 = vector.extract_strided_slice %567 {offsets = [0, 64], sizes = [16, 32], strides = [1, 1]} : vector<16x128xf32> to vector<16x32xf32>
    %571 = vector.extract_strided_slice %566 {offsets = [0, 96], sizes = [16, 32], strides = [1, 1]} : vector<16x128xf32> to vector<16x32xf32>
    %572 = arith.mulf %569, %536 : vector<16x32xf32>
    %573 = arith.mulf %568, %570 : vector<16x32xf32>
    %574 = arith.addf %572, %573 : vector<16x32xf32>
    %575 = math.tanh %574 : vector<16x32xf32>
    %576 = arith.mulf %571, %575 : vector<16x32xf32>
    %577 = vector.shape_cast %538 : vector<16x1xi1> to vector<16x1xi1>
    %578 = vector.broadcast %577 : vector<16x1xi1> to vector<16x32xi1>
    %579 = arith.select %578, %557, %527 : vector<16x32xi1>, vector<16x32xf32>
    %580 = vector.shape_cast %538 : vector<16x1xi1> to vector<16x1xi1>
    %581 = vector.broadcast %580 : vector<16x1xi1> to vector<16x32xi1>
    %582 = arith.select %581, %555, %530 : vector<16x32xi1>, vector<16x32xf32>
    %583 = vector.shape_cast %538 : vector<16x1xi1> to vector<16x1xi1>
    %584 = vector.broadcast %583 : vector<16x1xi1> to vector<16x32xi1>
    %585 = arith.select %584, %576, %533 : vector<16x32xi1>, vector<16x32xf32>
    %586 = vector.shape_cast %538 : vector<16x1xi1> to vector<16x1xi1>
    %587 = vector.broadcast %586 : vector<16x1xi1> to vector<16x32xi1>
    %588 = arith.select %587, %574, %536 : vector<16x32xi1>, vector<16x32xf32>
    %c8_i32 = arith.constant 8 : i32
    %589 = vector.broadcast %c8_i32 : i32 to vector<16x1xi32>
    %590 = arith.cmpi sgt, %168, %589 : vector<16x1xi32>
    %c8_209 = arith.constant 8 : index
    %c0_210 = arith.constant 0 : index
    %c0_211 = arith.constant 0 : index
    %591 = vector.load %arg23[%c8_209, %c0_210, %c0_211] : memref<13x16x128xf32, #tpu.memory_space<vmem>>, vector<1x16x128xf32>
    %592 = vector.shape_cast %591 : vector<1x16x128xf32> to vector<16x128xf32>
    %cst_212 = arith.constant dense<0.000000e+00> : vector<16x128xf32>
    %593 = tpu.matmul %579, %169, %cst_212 {dimension_numbers = #tpu.dot_dimension_numbers<[1], [0], [0], [1], [0, 0, 1, 1], [], []>} : vector<16x32xf32>, vector<32x128xf32>, vector<16x128xf32> -> vector<16x128xf32>
    %594 = arith.addf %592, %593 : vector<16x128xf32>
    %595 = arith.negf %594 : vector<16x128xf32>
    %596 = math.exp %595 : vector<16x128xf32>
    %cst_213 = arith.constant 1.000000e+00 : f32
    %597 = vector.broadcast %cst_213 : f32 to vector<16x128xf32>
    %598 = arith.addf %597, %596 : vector<16x128xf32>
    %599 = arith.divf %597, %598 : vector<16x128xf32>
    %600 = math.tanh %594 : vector<16x128xf32>
    %601 = vector.extract_strided_slice %599 {offsets = [0, 0], sizes = [16, 32], strides = [1, 1]} : vector<16x128xf32> to vector<16x32xf32>
    %602 = vector.extract_strided_slice %599 {offsets = [0, 32], sizes = [16, 32], strides = [1, 1]} : vector<16x128xf32> to vector<16x32xf32>
    %603 = vector.extract_strided_slice %600 {offsets = [0, 64], sizes = [16, 32], strides = [1, 1]} : vector<16x128xf32> to vector<16x32xf32>
    %604 = vector.extract_strided_slice %599 {offsets = [0, 96], sizes = [16, 32], strides = [1, 1]} : vector<16x128xf32> to vector<16x32xf32>
    %605 = arith.mulf %602, %582 : vector<16x32xf32>
    %606 = arith.mulf %601, %603 : vector<16x32xf32>
    %607 = arith.addf %605, %606 : vector<16x32xf32>
    %608 = math.tanh %607 : vector<16x32xf32>
    %609 = arith.mulf %604, %608 : vector<16x32xf32>
    %610 = tpu.concatenate %609, %585 in 1 : vector<16x32xf32>, vector<16x32xf32> -> vector<16x64xf32>
    %cst_214 = arith.constant dense<0.000000e+00> : vector<16x128xf32>
    %611 = tpu.matmul %610, %170, %cst_214 {dimension_numbers = #tpu.dot_dimension_numbers<[1], [0], [0], [1], [0, 0, 1, 1], [], []>} : vector<16x64xf32>, vector<64x128xf32>, vector<16x128xf32> -> vector<16x128xf32>
    %612 = vector.broadcast %171 : vector<1x128xf32> to vector<16x128xf32>
    %613 = arith.addf %611, %612 : vector<16x128xf32>
    %614 = arith.negf %613 : vector<16x128xf32>
    %615 = math.exp %614 : vector<16x128xf32>
    %cst_215 = arith.constant 1.000000e+00 : f32
    %616 = vector.broadcast %cst_215 : f32 to vector<16x128xf32>
    %617 = arith.addf %616, %615 : vector<16x128xf32>
    %618 = arith.divf %616, %617 : vector<16x128xf32>
    %619 = math.tanh %613 : vector<16x128xf32>
    %620 = vector.extract_strided_slice %618 {offsets = [0, 0], sizes = [16, 32], strides = [1, 1]} : vector<16x128xf32> to vector<16x32xf32>
    %621 = vector.extract_strided_slice %618 {offsets = [0, 32], sizes = [16, 32], strides = [1, 1]} : vector<16x128xf32> to vector<16x32xf32>
    %622 = vector.extract_strided_slice %619 {offsets = [0, 64], sizes = [16, 32], strides = [1, 1]} : vector<16x128xf32> to vector<16x32xf32>
    %623 = vector.extract_strided_slice %618 {offsets = [0, 96], sizes = [16, 32], strides = [1, 1]} : vector<16x128xf32> to vector<16x32xf32>
    %624 = arith.mulf %621, %588 : vector<16x32xf32>
    %625 = arith.mulf %620, %622 : vector<16x32xf32>
    %626 = arith.addf %624, %625 : vector<16x32xf32>
    %627 = math.tanh %626 : vector<16x32xf32>
    %628 = arith.mulf %623, %627 : vector<16x32xf32>
    %629 = vector.shape_cast %590 : vector<16x1xi1> to vector<16x1xi1>
    %630 = vector.broadcast %629 : vector<16x1xi1> to vector<16x32xi1>
    %631 = arith.select %630, %609, %579 : vector<16x32xi1>, vector<16x32xf32>
    %632 = vector.shape_cast %590 : vector<16x1xi1> to vector<16x1xi1>
    %633 = vector.broadcast %632 : vector<16x1xi1> to vector<16x32xi1>
    %634 = arith.select %633, %607, %582 : vector<16x32xi1>, vector<16x32xf32>
    %635 = vector.shape_cast %590 : vector<16x1xi1> to vector<16x1xi1>
    %636 = vector.broadcast %635 : vector<16x1xi1> to vector<16x32xi1>
    %637 = arith.select %636, %628, %585 : vector<16x32xi1>, vector<16x32xf32>
    %638 = vector.shape_cast %590 : vector<16x1xi1> to vector<16x1xi1>
    %639 = vector.broadcast %638 : vector<16x1xi1> to vector<16x32xi1>
    %640 = arith.select %639, %626, %588 : vector<16x32xi1>, vector<16x32xf32>
    %c9_i32 = arith.constant 9 : i32
    %641 = vector.broadcast %c9_i32 : i32 to vector<16x1xi32>
    %642 = arith.cmpi sgt, %168, %641 : vector<16x1xi32>
    %c9_216 = arith.constant 9 : index
    %c0_217 = arith.constant 0 : index
    %c0_218 = arith.constant 0 : index
    %643 = vector.load %arg23[%c9_216, %c0_217, %c0_218] : memref<13x16x128xf32, #tpu.memory_space<vmem>>, vector<1x16x128xf32>
    %644 = vector.shape_cast %643 : vector<1x16x128xf32> to vector<16x128xf32>
    %cst_219 = arith.constant dense<0.000000e+00> : vector<16x128xf32>
    %645 = tpu.matmul %631, %169, %cst_219 {dimension_numbers = #tpu.dot_dimension_numbers<[1], [0], [0], [1], [0, 0, 1, 1], [], []>} : vector<16x32xf32>, vector<32x128xf32>, vector<16x128xf32> -> vector<16x128xf32>
    %646 = arith.addf %644, %645 : vector<16x128xf32>
    %647 = arith.negf %646 : vector<16x128xf32>
    %648 = math.exp %647 : vector<16x128xf32>
    %cst_220 = arith.constant 1.000000e+00 : f32
    %649 = vector.broadcast %cst_220 : f32 to vector<16x128xf32>
    %650 = arith.addf %649, %648 : vector<16x128xf32>
    %651 = arith.divf %649, %650 : vector<16x128xf32>
    %652 = math.tanh %646 : vector<16x128xf32>
    %653 = vector.extract_strided_slice %651 {offsets = [0, 0], sizes = [16, 32], strides = [1, 1]} : vector<16x128xf32> to vector<16x32xf32>
    %654 = vector.extract_strided_slice %651 {offsets = [0, 32], sizes = [16, 32], strides = [1, 1]} : vector<16x128xf32> to vector<16x32xf32>
    %655 = vector.extract_strided_slice %652 {offsets = [0, 64], sizes = [16, 32], strides = [1, 1]} : vector<16x128xf32> to vector<16x32xf32>
    %656 = vector.extract_strided_slice %651 {offsets = [0, 96], sizes = [16, 32], strides = [1, 1]} : vector<16x128xf32> to vector<16x32xf32>
    %657 = arith.mulf %654, %634 : vector<16x32xf32>
    %658 = arith.mulf %653, %655 : vector<16x32xf32>
    %659 = arith.addf %657, %658 : vector<16x32xf32>
    %660 = math.tanh %659 : vector<16x32xf32>
    %661 = arith.mulf %656, %660 : vector<16x32xf32>
    %662 = tpu.concatenate %661, %637 in 1 : vector<16x32xf32>, vector<16x32xf32> -> vector<16x64xf32>
    %cst_221 = arith.constant dense<0.000000e+00> : vector<16x128xf32>
    %663 = tpu.matmul %662, %170, %cst_221 {dimension_numbers = #tpu.dot_dimension_numbers<[1], [0], [0], [1], [0, 0, 1, 1], [], []>} : vector<16x64xf32>, vector<64x128xf32>, vector<16x128xf32> -> vector<16x128xf32>
    %664 = vector.broadcast %171 : vector<1x128xf32> to vector<16x128xf32>
    %665 = arith.addf %663, %664 : vector<16x128xf32>
    %666 = arith.negf %665 : vector<16x128xf32>
    %667 = math.exp %666 : vector<16x128xf32>
    %cst_222 = arith.constant 1.000000e+00 : f32
    %668 = vector.broadcast %cst_222 : f32 to vector<16x128xf32>
    %669 = arith.addf %668, %667 : vector<16x128xf32>
    %670 = arith.divf %668, %669 : vector<16x128xf32>
    %671 = math.tanh %665 : vector<16x128xf32>
    %672 = vector.extract_strided_slice %670 {offsets = [0, 0], sizes = [16, 32], strides = [1, 1]} : vector<16x128xf32> to vector<16x32xf32>
    %673 = vector.extract_strided_slice %670 {offsets = [0, 32], sizes = [16, 32], strides = [1, 1]} : vector<16x128xf32> to vector<16x32xf32>
    %674 = vector.extract_strided_slice %671 {offsets = [0, 64], sizes = [16, 32], strides = [1, 1]} : vector<16x128xf32> to vector<16x32xf32>
    %675 = vector.extract_strided_slice %670 {offsets = [0, 96], sizes = [16, 32], strides = [1, 1]} : vector<16x128xf32> to vector<16x32xf32>
    %676 = arith.mulf %673, %640 : vector<16x32xf32>
    %677 = arith.mulf %672, %674 : vector<16x32xf32>
    %678 = arith.addf %676, %677 : vector<16x32xf32>
    %679 = math.tanh %678 : vector<16x32xf32>
    %680 = arith.mulf %675, %679 : vector<16x32xf32>
    %681 = vector.shape_cast %642 : vector<16x1xi1> to vector<16x1xi1>
    %682 = vector.broadcast %681 : vector<16x1xi1> to vector<16x32xi1>
    %683 = arith.select %682, %661, %631 : vector<16x32xi1>, vector<16x32xf32>
    %684 = vector.shape_cast %642 : vector<16x1xi1> to vector<16x1xi1>
    %685 = vector.broadcast %684 : vector<16x1xi1> to vector<16x32xi1>
    %686 = arith.select %685, %659, %634 : vector<16x32xi1>, vector<16x32xf32>
    %687 = vector.shape_cast %642 : vector<16x1xi1> to vector<16x1xi1>
    %688 = vector.broadcast %687 : vector<16x1xi1> to vector<16x32xi1>
    %689 = arith.select %688, %680, %637 : vector<16x32xi1>, vector<16x32xf32>
    %690 = vector.shape_cast %642 : vector<16x1xi1> to vector<16x1xi1>
    %691 = vector.broadcast %690 : vector<16x1xi1> to vector<16x32xi1>
    %692 = arith.select %691, %678, %640 : vector<16x32xi1>, vector<16x32xf32>
    %c10_i32 = arith.constant 10 : i32
    %693 = vector.broadcast %c10_i32 : i32 to vector<16x1xi32>
    %694 = arith.cmpi sgt, %168, %693 : vector<16x1xi32>
    %c10_223 = arith.constant 10 : index
    %c0_224 = arith.constant 0 : index
    %c0_225 = arith.constant 0 : index
    %695 = vector.load %arg23[%c10_223, %c0_224, %c0_225] : memref<13x16x128xf32, #tpu.memory_space<vmem>>, vector<1x16x128xf32>
    %696 = vector.shape_cast %695 : vector<1x16x128xf32> to vector<16x128xf32>
    %cst_226 = arith.constant dense<0.000000e+00> : vector<16x128xf32>
    %697 = tpu.matmul %683, %169, %cst_226 {dimension_numbers = #tpu.dot_dimension_numbers<[1], [0], [0], [1], [0, 0, 1, 1], [], []>} : vector<16x32xf32>, vector<32x128xf32>, vector<16x128xf32> -> vector<16x128xf32>
    %698 = arith.addf %696, %697 : vector<16x128xf32>
    %699 = arith.negf %698 : vector<16x128xf32>
    %700 = math.exp %699 : vector<16x128xf32>
    %cst_227 = arith.constant 1.000000e+00 : f32
    %701 = vector.broadcast %cst_227 : f32 to vector<16x128xf32>
    %702 = arith.addf %701, %700 : vector<16x128xf32>
    %703 = arith.divf %701, %702 : vector<16x128xf32>
    %704 = math.tanh %698 : vector<16x128xf32>
    %705 = vector.extract_strided_slice %703 {offsets = [0, 0], sizes = [16, 32], strides = [1, 1]} : vector<16x128xf32> to vector<16x32xf32>
    %706 = vector.extract_strided_slice %703 {offsets = [0, 32], sizes = [16, 32], strides = [1, 1]} : vector<16x128xf32> to vector<16x32xf32>
    %707 = vector.extract_strided_slice %704 {offsets = [0, 64], sizes = [16, 32], strides = [1, 1]} : vector<16x128xf32> to vector<16x32xf32>
    %708 = vector.extract_strided_slice %703 {offsets = [0, 96], sizes = [16, 32], strides = [1, 1]} : vector<16x128xf32> to vector<16x32xf32>
    %709 = arith.mulf %706, %686 : vector<16x32xf32>
    %710 = arith.mulf %705, %707 : vector<16x32xf32>
    %711 = arith.addf %709, %710 : vector<16x32xf32>
    %712 = math.tanh %711 : vector<16x32xf32>
    %713 = arith.mulf %708, %712 : vector<16x32xf32>
    %714 = tpu.concatenate %713, %689 in 1 : vector<16x32xf32>, vector<16x32xf32> -> vector<16x64xf32>
    %cst_228 = arith.constant dense<0.000000e+00> : vector<16x128xf32>
    %715 = tpu.matmul %714, %170, %cst_228 {dimension_numbers = #tpu.dot_dimension_numbers<[1], [0], [0], [1], [0, 0, 1, 1], [], []>} : vector<16x64xf32>, vector<64x128xf32>, vector<16x128xf32> -> vector<16x128xf32>
    %716 = vector.broadcast %171 : vector<1x128xf32> to vector<16x128xf32>
    %717 = arith.addf %715, %716 : vector<16x128xf32>
    %718 = arith.negf %717 : vector<16x128xf32>
    %719 = math.exp %718 : vector<16x128xf32>
    %cst_229 = arith.constant 1.000000e+00 : f32
    %720 = vector.broadcast %cst_229 : f32 to vector<16x128xf32>
    %721 = arith.addf %720, %719 : vector<16x128xf32>
    %722 = arith.divf %720, %721 : vector<16x128xf32>
    %723 = math.tanh %717 : vector<16x128xf32>
    %724 = vector.extract_strided_slice %722 {offsets = [0, 0], sizes = [16, 32], strides = [1, 1]} : vector<16x128xf32> to vector<16x32xf32>
    %725 = vector.extract_strided_slice %722 {offsets = [0, 32], sizes = [16, 32], strides = [1, 1]} : vector<16x128xf32> to vector<16x32xf32>
    %726 = vector.extract_strided_slice %723 {offsets = [0, 64], sizes = [16, 32], strides = [1, 1]} : vector<16x128xf32> to vector<16x32xf32>
    %727 = vector.extract_strided_slice %722 {offsets = [0, 96], sizes = [16, 32], strides = [1, 1]} : vector<16x128xf32> to vector<16x32xf32>
    %728 = arith.mulf %725, %692 : vector<16x32xf32>
    %729 = arith.mulf %724, %726 : vector<16x32xf32>
    %730 = arith.addf %728, %729 : vector<16x32xf32>
    %731 = math.tanh %730 : vector<16x32xf32>
    %732 = arith.mulf %727, %731 : vector<16x32xf32>
    %733 = vector.shape_cast %694 : vector<16x1xi1> to vector<16x1xi1>
    %734 = vector.broadcast %733 : vector<16x1xi1> to vector<16x32xi1>
    %735 = arith.select %734, %713, %683 : vector<16x32xi1>, vector<16x32xf32>
    %736 = vector.shape_cast %694 : vector<16x1xi1> to vector<16x1xi1>
    %737 = vector.broadcast %736 : vector<16x1xi1> to vector<16x32xi1>
    %738 = arith.select %737, %711, %686 : vector<16x32xi1>, vector<16x32xf32>
    %739 = vector.shape_cast %694 : vector<16x1xi1> to vector<16x1xi1>
    %740 = vector.broadcast %739 : vector<16x1xi1> to vector<16x32xi1>
    %741 = arith.select %740, %732, %689 : vector<16x32xi1>, vector<16x32xf32>
    %742 = vector.shape_cast %694 : vector<16x1xi1> to vector<16x1xi1>
    %743 = vector.broadcast %742 : vector<16x1xi1> to vector<16x32xi1>
    %744 = arith.select %743, %730, %692 : vector<16x32xi1>, vector<16x32xf32>
    %c11_i32 = arith.constant 11 : i32
    %745 = vector.broadcast %c11_i32 : i32 to vector<16x1xi32>
    %746 = arith.cmpi sgt, %168, %745 : vector<16x1xi32>
    %c11_230 = arith.constant 11 : index
    %c0_231 = arith.constant 0 : index
    %c0_232 = arith.constant 0 : index
    %747 = vector.load %arg23[%c11_230, %c0_231, %c0_232] : memref<13x16x128xf32, #tpu.memory_space<vmem>>, vector<1x16x128xf32>
    %748 = vector.shape_cast %747 : vector<1x16x128xf32> to vector<16x128xf32>
    %cst_233 = arith.constant dense<0.000000e+00> : vector<16x128xf32>
    %749 = tpu.matmul %735, %169, %cst_233 {dimension_numbers = #tpu.dot_dimension_numbers<[1], [0], [0], [1], [0, 0, 1, 1], [], []>} : vector<16x32xf32>, vector<32x128xf32>, vector<16x128xf32> -> vector<16x128xf32>
    %750 = arith.addf %748, %749 : vector<16x128xf32>
    %751 = arith.negf %750 : vector<16x128xf32>
    %752 = math.exp %751 : vector<16x128xf32>
    %cst_234 = arith.constant 1.000000e+00 : f32
    %753 = vector.broadcast %cst_234 : f32 to vector<16x128xf32>
    %754 = arith.addf %753, %752 : vector<16x128xf32>
    %755 = arith.divf %753, %754 : vector<16x128xf32>
    %756 = math.tanh %750 : vector<16x128xf32>
    %757 = vector.extract_strided_slice %755 {offsets = [0, 0], sizes = [16, 32], strides = [1, 1]} : vector<16x128xf32> to vector<16x32xf32>
    %758 = vector.extract_strided_slice %755 {offsets = [0, 32], sizes = [16, 32], strides = [1, 1]} : vector<16x128xf32> to vector<16x32xf32>
    %759 = vector.extract_strided_slice %756 {offsets = [0, 64], sizes = [16, 32], strides = [1, 1]} : vector<16x128xf32> to vector<16x32xf32>
    %760 = vector.extract_strided_slice %755 {offsets = [0, 96], sizes = [16, 32], strides = [1, 1]} : vector<16x128xf32> to vector<16x32xf32>
    %761 = arith.mulf %758, %738 : vector<16x32xf32>
    %762 = arith.mulf %757, %759 : vector<16x32xf32>
    %763 = arith.addf %761, %762 : vector<16x32xf32>
    %764 = math.tanh %763 : vector<16x32xf32>
    %765 = arith.mulf %760, %764 : vector<16x32xf32>
    %766 = tpu.concatenate %765, %741 in 1 : vector<16x32xf32>, vector<16x32xf32> -> vector<16x64xf32>
    %cst_235 = arith.constant dense<0.000000e+00> : vector<16x128xf32>
    %767 = tpu.matmul %766, %170, %cst_235 {dimension_numbers = #tpu.dot_dimension_numbers<[1], [0], [0], [1], [0, 0, 1, 1], [], []>} : vector<16x64xf32>, vector<64x128xf32>, vector<16x128xf32> -> vector<16x128xf32>
    %768 = vector.broadcast %171 : vector<1x128xf32> to vector<16x128xf32>
    %769 = arith.addf %767, %768 : vector<16x128xf32>
    %770 = arith.negf %769 : vector<16x128xf32>
    %771 = math.exp %770 : vector<16x128xf32>
    %cst_236 = arith.constant 1.000000e+00 : f32
    %772 = vector.broadcast %cst_236 : f32 to vector<16x128xf32>
    %773 = arith.addf %772, %771 : vector<16x128xf32>
    %774 = arith.divf %772, %773 : vector<16x128xf32>
    %775 = math.tanh %769 : vector<16x128xf32>
    %776 = vector.extract_strided_slice %774 {offsets = [0, 0], sizes = [16, 32], strides = [1, 1]} : vector<16x128xf32> to vector<16x32xf32>
    %777 = vector.extract_strided_slice %774 {offsets = [0, 32], sizes = [16, 32], strides = [1, 1]} : vector<16x128xf32> to vector<16x32xf32>
    %778 = vector.extract_strided_slice %775 {offsets = [0, 64], sizes = [16, 32], strides = [1, 1]} : vector<16x128xf32> to vector<16x32xf32>
    %779 = vector.extract_strided_slice %774 {offsets = [0, 96], sizes = [16, 32], strides = [1, 1]} : vector<16x128xf32> to vector<16x32xf32>
    %780 = arith.mulf %777, %744 : vector<16x32xf32>
    %781 = arith.mulf %776, %778 : vector<16x32xf32>
    %782 = arith.addf %780, %781 : vector<16x32xf32>
    %783 = math.tanh %782 : vector<16x32xf32>
    %784 = arith.mulf %779, %783 : vector<16x32xf32>
    %785 = vector.shape_cast %746 : vector<16x1xi1> to vector<16x1xi1>
    %786 = vector.broadcast %785 : vector<16x1xi1> to vector<16x32xi1>
    %787 = arith.select %786, %765, %735 : vector<16x32xi1>, vector<16x32xf32>
    %788 = vector.shape_cast %746 : vector<16x1xi1> to vector<16x1xi1>
    %789 = vector.broadcast %788 : vector<16x1xi1> to vector<16x32xi1>
    %790 = arith.select %789, %763, %738 : vector<16x32xi1>, vector<16x32xf32>
    %791 = vector.shape_cast %746 : vector<16x1xi1> to vector<16x1xi1>
    %792 = vector.broadcast %791 : vector<16x1xi1> to vector<16x32xi1>
    %793 = arith.select %792, %784, %741 : vector<16x32xi1>, vector<16x32xf32>
    %794 = vector.shape_cast %746 : vector<16x1xi1> to vector<16x1xi1>
    %795 = vector.broadcast %794 : vector<16x1xi1> to vector<16x32xi1>
    %796 = arith.select %795, %782, %744 : vector<16x32xi1>, vector<16x32xf32>
    %c12_i32 = arith.constant 12 : i32
    %797 = vector.broadcast %c12_i32 : i32 to vector<16x1xi32>
    %798 = arith.cmpi sgt, %168, %797 : vector<16x1xi32>
    %c12_237 = arith.constant 12 : index
    %c0_238 = arith.constant 0 : index
    %c0_239 = arith.constant 0 : index
    %799 = vector.load %arg23[%c12_237, %c0_238, %c0_239] : memref<13x16x128xf32, #tpu.memory_space<vmem>>, vector<1x16x128xf32>
    %800 = vector.shape_cast %799 : vector<1x16x128xf32> to vector<16x128xf32>
    %cst_240 = arith.constant dense<0.000000e+00> : vector<16x128xf32>
    %801 = tpu.matmul %787, %169, %cst_240 {dimension_numbers = #tpu.dot_dimension_numbers<[1], [0], [0], [1], [0, 0, 1, 1], [], []>} : vector<16x32xf32>, vector<32x128xf32>, vector<16x128xf32> -> vector<16x128xf32>
    %802 = arith.addf %800, %801 : vector<16x128xf32>
    %803 = arith.negf %802 : vector<16x128xf32>
    %804 = math.exp %803 : vector<16x128xf32>
    %cst_241 = arith.constant 1.000000e+00 : f32
    %805 = vector.broadcast %cst_241 : f32 to vector<16x128xf32>
    %806 = arith.addf %805, %804 : vector<16x128xf32>
    %807 = arith.divf %805, %806 : vector<16x128xf32>
    %808 = math.tanh %802 : vector<16x128xf32>
    %809 = vector.extract_strided_slice %807 {offsets = [0, 0], sizes = [16, 32], strides = [1, 1]} : vector<16x128xf32> to vector<16x32xf32>
    %810 = vector.extract_strided_slice %807 {offsets = [0, 32], sizes = [16, 32], strides = [1, 1]} : vector<16x128xf32> to vector<16x32xf32>
    %811 = vector.extract_strided_slice %808 {offsets = [0, 64], sizes = [16, 32], strides = [1, 1]} : vector<16x128xf32> to vector<16x32xf32>
    %812 = vector.extract_strided_slice %807 {offsets = [0, 96], sizes = [16, 32], strides = [1, 1]} : vector<16x128xf32> to vector<16x32xf32>
    %813 = arith.mulf %810, %790 : vector<16x32xf32>
    %814 = arith.mulf %809, %811 : vector<16x32xf32>
    %815 = arith.addf %813, %814 : vector<16x32xf32>
    %816 = math.tanh %815 : vector<16x32xf32>
    %817 = arith.mulf %812, %816 : vector<16x32xf32>
    %818 = tpu.concatenate %817, %793 in 1 : vector<16x32xf32>, vector<16x32xf32> -> vector<16x64xf32>
    %cst_242 = arith.constant dense<0.000000e+00> : vector<16x128xf32>
    %819 = tpu.matmul %818, %170, %cst_242 {dimension_numbers = #tpu.dot_dimension_numbers<[1], [0], [0], [1], [0, 0, 1, 1], [], []>} : vector<16x64xf32>, vector<64x128xf32>, vector<16x128xf32> -> vector<16x128xf32>
    %820 = vector.broadcast %171 : vector<1x128xf32> to vector<16x128xf32>
    %821 = arith.addf %819, %820 : vector<16x128xf32>
    %822 = arith.negf %821 : vector<16x128xf32>
    %823 = math.exp %822 : vector<16x128xf32>
    %cst_243 = arith.constant 1.000000e+00 : f32
    %824 = vector.broadcast %cst_243 : f32 to vector<16x128xf32>
    %825 = arith.addf %824, %823 : vector<16x128xf32>
    %826 = arith.divf %824, %825 : vector<16x128xf32>
    %827 = math.tanh %821 : vector<16x128xf32>
    %828 = vector.extract_strided_slice %826 {offsets = [0, 0], sizes = [16, 32], strides = [1, 1]} : vector<16x128xf32> to vector<16x32xf32>
    %829 = vector.extract_strided_slice %826 {offsets = [0, 32], sizes = [16, 32], strides = [1, 1]} : vector<16x128xf32> to vector<16x32xf32>
    %830 = vector.extract_strided_slice %827 {offsets = [0, 64], sizes = [16, 32], strides = [1, 1]} : vector<16x128xf32> to vector<16x32xf32>
    %831 = vector.extract_strided_slice %826 {offsets = [0, 96], sizes = [16, 32], strides = [1, 1]} : vector<16x128xf32> to vector<16x32xf32>
    %832 = arith.mulf %829, %796 : vector<16x32xf32>
    %833 = arith.mulf %828, %830 : vector<16x32xf32>
    %834 = arith.addf %832, %833 : vector<16x32xf32>
    %835 = math.tanh %834 : vector<16x32xf32>
    %836 = arith.mulf %831, %835 : vector<16x32xf32>
    %837 = vector.shape_cast %798 : vector<16x1xi1> to vector<16x1xi1>
    %838 = vector.broadcast %837 : vector<16x1xi1> to vector<16x32xi1>
    %839 = arith.select %838, %836, %793 : vector<16x32xi1>, vector<16x32xf32>
    %c0_244 = arith.constant 0 : index
    %c0_245 = arith.constant 0 : index
    %840 = vector.load %arg4[%c0_244, %c0_245] : memref<16x1xi32, #tpu.memory_space<vmem>>, vector<16x1xi32>
    %c0_246 = arith.constant 0 : index
    %c0_247 = arith.constant 0 : index
    %841 = vector.load %arg14[%c0_246, %c0_247] : memref<32x128xf32, #tpu.memory_space<vmem>>, vector<32x128xf32>
    %c0_248 = arith.constant 0 : index
    %c0_249 = arith.constant 0 : index
    %842 = vector.load %arg16[%c0_248, %c0_249] : memref<64x128xf32, #tpu.memory_space<vmem>>, vector<64x128xf32>
    %c0_250 = arith.constant 0 : index
    %c0_251 = arith.constant 0 : index
    %843 = vector.load %arg17[%c0_250, %c0_251] : memref<1x128xf32, #tpu.memory_space<vmem>>, vector<1x128xf32>
    %cst_252 = arith.constant 0.000000e+00 : f32
    %844 = vector.broadcast %cst_252 : f32 to vector<16x32xf32>
    %c0_i32_253 = arith.constant 0 : i32
    %845 = vector.broadcast %c0_i32_253 : i32 to vector<16x1xi32>
    %846 = arith.cmpi sgt, %840, %845 : vector<16x1xi32>
    %c0_254 = arith.constant 0 : index
    %c0_255 = arith.constant 0 : index
    %c0_256 = arith.constant 0 : index
    %847 = vector.load %arg24[%c0_254, %c0_255, %c0_256] : memref<7x16x128xf32, #tpu.memory_space<vmem>>, vector<1x16x128xf32>
    %848 = vector.shape_cast %847 : vector<1x16x128xf32> to vector<16x128xf32>
    %cst_257 = arith.constant dense<0.000000e+00> : vector<16x128xf32>
    %849 = tpu.matmul %844, %841, %cst_257 {dimension_numbers = #tpu.dot_dimension_numbers<[1], [0], [0], [1], [0, 0, 1, 1], [], []>} : vector<16x32xf32>, vector<32x128xf32>, vector<16x128xf32> -> vector<16x128xf32>
    %850 = arith.addf %848, %849 : vector<16x128xf32>
    %851 = arith.negf %850 : vector<16x128xf32>
    %852 = math.exp %851 : vector<16x128xf32>
    %cst_258 = arith.constant 1.000000e+00 : f32
    %853 = vector.broadcast %cst_258 : f32 to vector<16x128xf32>
    %854 = arith.addf %853, %852 : vector<16x128xf32>
    %855 = arith.divf %853, %854 : vector<16x128xf32>
    %856 = math.tanh %850 : vector<16x128xf32>
    %857 = vector.extract_strided_slice %855 {offsets = [0, 0], sizes = [16, 32], strides = [1, 1]} : vector<16x128xf32> to vector<16x32xf32>
    %858 = vector.extract_strided_slice %855 {offsets = [0, 32], sizes = [16, 32], strides = [1, 1]} : vector<16x128xf32> to vector<16x32xf32>
    %859 = vector.extract_strided_slice %856 {offsets = [0, 64], sizes = [16, 32], strides = [1, 1]} : vector<16x128xf32> to vector<16x32xf32>
    %860 = vector.extract_strided_slice %855 {offsets = [0, 96], sizes = [16, 32], strides = [1, 1]} : vector<16x128xf32> to vector<16x32xf32>
    %861 = arith.mulf %858, %844 : vector<16x32xf32>
    %862 = arith.mulf %857, %859 : vector<16x32xf32>
    %863 = arith.addf %861, %862 : vector<16x32xf32>
    %864 = math.tanh %863 : vector<16x32xf32>
    %865 = arith.mulf %860, %864 : vector<16x32xf32>
    %866 = tpu.concatenate %865, %844 in 1 : vector<16x32xf32>, vector<16x32xf32> -> vector<16x64xf32>
    %cst_259 = arith.constant dense<0.000000e+00> : vector<16x128xf32>
    %867 = tpu.matmul %866, %842, %cst_259 {dimension_numbers = #tpu.dot_dimension_numbers<[1], [0], [0], [1], [0, 0, 1, 1], [], []>} : vector<16x64xf32>, vector<64x128xf32>, vector<16x128xf32> -> vector<16x128xf32>
    %868 = vector.broadcast %843 : vector<1x128xf32> to vector<16x128xf32>
    %869 = arith.addf %867, %868 : vector<16x128xf32>
    %870 = arith.negf %869 : vector<16x128xf32>
    %871 = math.exp %870 : vector<16x128xf32>
    %cst_260 = arith.constant 1.000000e+00 : f32
    %872 = vector.broadcast %cst_260 : f32 to vector<16x128xf32>
    %873 = arith.addf %872, %871 : vector<16x128xf32>
    %874 = arith.divf %872, %873 : vector<16x128xf32>
    %875 = math.tanh %869 : vector<16x128xf32>
    %876 = vector.extract_strided_slice %874 {offsets = [0, 0], sizes = [16, 32], strides = [1, 1]} : vector<16x128xf32> to vector<16x32xf32>
    %877 = vector.extract_strided_slice %874 {offsets = [0, 32], sizes = [16, 32], strides = [1, 1]} : vector<16x128xf32> to vector<16x32xf32>
    %878 = vector.extract_strided_slice %875 {offsets = [0, 64], sizes = [16, 32], strides = [1, 1]} : vector<16x128xf32> to vector<16x32xf32>
    %879 = vector.extract_strided_slice %874 {offsets = [0, 96], sizes = [16, 32], strides = [1, 1]} : vector<16x128xf32> to vector<16x32xf32>
    %880 = arith.mulf %877, %844 : vector<16x32xf32>
    %881 = arith.mulf %876, %878 : vector<16x32xf32>
    %882 = arith.addf %880, %881 : vector<16x32xf32>
    %883 = math.tanh %882 : vector<16x32xf32>
    %884 = arith.mulf %879, %883 : vector<16x32xf32>
    %885 = vector.shape_cast %846 : vector<16x1xi1> to vector<16x1xi1>
    %886 = vector.broadcast %885 : vector<16x1xi1> to vector<16x32xi1>
    %887 = arith.select %886, %865, %844 : vector<16x32xi1>, vector<16x32xf32>
    %888 = vector.shape_cast %846 : vector<16x1xi1> to vector<16x1xi1>
    %889 = vector.broadcast %888 : vector<16x1xi1> to vector<16x32xi1>
    %890 = arith.select %889, %863, %844 : vector<16x32xi1>, vector<16x32xf32>
    %891 = vector.shape_cast %846 : vector<16x1xi1> to vector<16x1xi1>
    %892 = vector.broadcast %891 : vector<16x1xi1> to vector<16x32xi1>
    %893 = arith.select %892, %884, %844 : vector<16x32xi1>, vector<16x32xf32>
    %894 = vector.shape_cast %846 : vector<16x1xi1> to vector<16x1xi1>
    %895 = vector.broadcast %894 : vector<16x1xi1> to vector<16x32xi1>
    %896 = arith.select %895, %882, %844 : vector<16x32xi1>, vector<16x32xf32>
    %c1_i32_261 = arith.constant 1 : i32
    %897 = vector.broadcast %c1_i32_261 : i32 to vector<16x1xi32>
    %898 = arith.cmpi sgt, %840, %897 : vector<16x1xi32>
    %c1_262 = arith.constant 1 : index
    %c0_263 = arith.constant 0 : index
    %c0_264 = arith.constant 0 : index
    %899 = vector.load %arg24[%c1_262, %c0_263, %c0_264] : memref<7x16x128xf32, #tpu.memory_space<vmem>>, vector<1x16x128xf32>
    %900 = vector.shape_cast %899 : vector<1x16x128xf32> to vector<16x128xf32>
    %cst_265 = arith.constant dense<0.000000e+00> : vector<16x128xf32>
    %901 = tpu.matmul %887, %841, %cst_265 {dimension_numbers = #tpu.dot_dimension_numbers<[1], [0], [0], [1], [0, 0, 1, 1], [], []>} : vector<16x32xf32>, vector<32x128xf32>, vector<16x128xf32> -> vector<16x128xf32>
    %902 = arith.addf %900, %901 : vector<16x128xf32>
    %903 = arith.negf %902 : vector<16x128xf32>
    %904 = math.exp %903 : vector<16x128xf32>
    %cst_266 = arith.constant 1.000000e+00 : f32
    %905 = vector.broadcast %cst_266 : f32 to vector<16x128xf32>
    %906 = arith.addf %905, %904 : vector<16x128xf32>
    %907 = arith.divf %905, %906 : vector<16x128xf32>
    %908 = math.tanh %902 : vector<16x128xf32>
    %909 = vector.extract_strided_slice %907 {offsets = [0, 0], sizes = [16, 32], strides = [1, 1]} : vector<16x128xf32> to vector<16x32xf32>
    %910 = vector.extract_strided_slice %907 {offsets = [0, 32], sizes = [16, 32], strides = [1, 1]} : vector<16x128xf32> to vector<16x32xf32>
    %911 = vector.extract_strided_slice %908 {offsets = [0, 64], sizes = [16, 32], strides = [1, 1]} : vector<16x128xf32> to vector<16x32xf32>
    %912 = vector.extract_strided_slice %907 {offsets = [0, 96], sizes = [16, 32], strides = [1, 1]} : vector<16x128xf32> to vector<16x32xf32>
    %913 = arith.mulf %910, %890 : vector<16x32xf32>
    %914 = arith.mulf %909, %911 : vector<16x32xf32>
    %915 = arith.addf %913, %914 : vector<16x32xf32>
    %916 = math.tanh %915 : vector<16x32xf32>
    %917 = arith.mulf %912, %916 : vector<16x32xf32>
    %918 = tpu.concatenate %917, %893 in 1 : vector<16x32xf32>, vector<16x32xf32> -> vector<16x64xf32>
    %cst_267 = arith.constant dense<0.000000e+00> : vector<16x128xf32>
    %919 = tpu.matmul %918, %842, %cst_267 {dimension_numbers = #tpu.dot_dimension_numbers<[1], [0], [0], [1], [0, 0, 1, 1], [], []>} : vector<16x64xf32>, vector<64x128xf32>, vector<16x128xf32> -> vector<16x128xf32>
    %920 = vector.broadcast %843 : vector<1x128xf32> to vector<16x128xf32>
    %921 = arith.addf %919, %920 : vector<16x128xf32>
    %922 = arith.negf %921 : vector<16x128xf32>
    %923 = math.exp %922 : vector<16x128xf32>
    %cst_268 = arith.constant 1.000000e+00 : f32
    %924 = vector.broadcast %cst_268 : f32 to vector<16x128xf32>
    %925 = arith.addf %924, %923 : vector<16x128xf32>
    %926 = arith.divf %924, %925 : vector<16x128xf32>
    %927 = math.tanh %921 : vector<16x128xf32>
    %928 = vector.extract_strided_slice %926 {offsets = [0, 0], sizes = [16, 32], strides = [1, 1]} : vector<16x128xf32> to vector<16x32xf32>
    %929 = vector.extract_strided_slice %926 {offsets = [0, 32], sizes = [16, 32], strides = [1, 1]} : vector<16x128xf32> to vector<16x32xf32>
    %930 = vector.extract_strided_slice %927 {offsets = [0, 64], sizes = [16, 32], strides = [1, 1]} : vector<16x128xf32> to vector<16x32xf32>
    %931 = vector.extract_strided_slice %926 {offsets = [0, 96], sizes = [16, 32], strides = [1, 1]} : vector<16x128xf32> to vector<16x32xf32>
    %932 = arith.mulf %929, %896 : vector<16x32xf32>
    %933 = arith.mulf %928, %930 : vector<16x32xf32>
    %934 = arith.addf %932, %933 : vector<16x32xf32>
    %935 = math.tanh %934 : vector<16x32xf32>
    %936 = arith.mulf %931, %935 : vector<16x32xf32>
    %937 = vector.shape_cast %898 : vector<16x1xi1> to vector<16x1xi1>
    %938 = vector.broadcast %937 : vector<16x1xi1> to vector<16x32xi1>
    %939 = arith.select %938, %917, %887 : vector<16x32xi1>, vector<16x32xf32>
    %940 = vector.shape_cast %898 : vector<16x1xi1> to vector<16x1xi1>
    %941 = vector.broadcast %940 : vector<16x1xi1> to vector<16x32xi1>
    %942 = arith.select %941, %915, %890 : vector<16x32xi1>, vector<16x32xf32>
    %943 = vector.shape_cast %898 : vector<16x1xi1> to vector<16x1xi1>
    %944 = vector.broadcast %943 : vector<16x1xi1> to vector<16x32xi1>
    %945 = arith.select %944, %936, %893 : vector<16x32xi1>, vector<16x32xf32>
    %946 = vector.shape_cast %898 : vector<16x1xi1> to vector<16x1xi1>
    %947 = vector.broadcast %946 : vector<16x1xi1> to vector<16x32xi1>
    %948 = arith.select %947, %934, %896 : vector<16x32xi1>, vector<16x32xf32>
    %c2_i32_269 = arith.constant 2 : i32
    %949 = vector.broadcast %c2_i32_269 : i32 to vector<16x1xi32>
    %950 = arith.cmpi sgt, %840, %949 : vector<16x1xi32>
    %c2_270 = arith.constant 2 : index
    %c0_271 = arith.constant 0 : index
    %c0_272 = arith.constant 0 : index
    %951 = vector.load %arg24[%c2_270, %c0_271, %c0_272] : memref<7x16x128xf32, #tpu.memory_space<vmem>>, vector<1x16x128xf32>
    %952 = vector.shape_cast %951 : vector<1x16x128xf32> to vector<16x128xf32>
    %cst_273 = arith.constant dense<0.000000e+00> : vector<16x128xf32>
    %953 = tpu.matmul %939, %841, %cst_273 {dimension_numbers = #tpu.dot_dimension_numbers<[1], [0], [0], [1], [0, 0, 1, 1], [], []>} : vector<16x32xf32>, vector<32x128xf32>, vector<16x128xf32> -> vector<16x128xf32>
    %954 = arith.addf %952, %953 : vector<16x128xf32>
    %955 = arith.negf %954 : vector<16x128xf32>
    %956 = math.exp %955 : vector<16x128xf32>
    %cst_274 = arith.constant 1.000000e+00 : f32
    %957 = vector.broadcast %cst_274 : f32 to vector<16x128xf32>
    %958 = arith.addf %957, %956 : vector<16x128xf32>
    %959 = arith.divf %957, %958 : vector<16x128xf32>
    %960 = math.tanh %954 : vector<16x128xf32>
    %961 = vector.extract_strided_slice %959 {offsets = [0, 0], sizes = [16, 32], strides = [1, 1]} : vector<16x128xf32> to vector<16x32xf32>
    %962 = vector.extract_strided_slice %959 {offsets = [0, 32], sizes = [16, 32], strides = [1, 1]} : vector<16x128xf32> to vector<16x32xf32>
    %963 = vector.extract_strided_slice %960 {offsets = [0, 64], sizes = [16, 32], strides = [1, 1]} : vector<16x128xf32> to vector<16x32xf32>
    %964 = vector.extract_strided_slice %959 {offsets = [0, 96], sizes = [16, 32], strides = [1, 1]} : vector<16x128xf32> to vector<16x32xf32>
    %965 = arith.mulf %962, %942 : vector<16x32xf32>
    %966 = arith.mulf %961, %963 : vector<16x32xf32>
    %967 = arith.addf %965, %966 : vector<16x32xf32>
    %968 = math.tanh %967 : vector<16x32xf32>
    %969 = arith.mulf %964, %968 : vector<16x32xf32>
    %970 = tpu.concatenate %969, %945 in 1 : vector<16x32xf32>, vector<16x32xf32> -> vector<16x64xf32>
    %cst_275 = arith.constant dense<0.000000e+00> : vector<16x128xf32>
    %971 = tpu.matmul %970, %842, %cst_275 {dimension_numbers = #tpu.dot_dimension_numbers<[1], [0], [0], [1], [0, 0, 1, 1], [], []>} : vector<16x64xf32>, vector<64x128xf32>, vector<16x128xf32> -> vector<16x128xf32>
    %972 = vector.broadcast %843 : vector<1x128xf32> to vector<16x128xf32>
    %973 = arith.addf %971, %972 : vector<16x128xf32>
    %974 = arith.negf %973 : vector<16x128xf32>
    %975 = math.exp %974 : vector<16x128xf32>
    %cst_276 = arith.constant 1.000000e+00 : f32
    %976 = vector.broadcast %cst_276 : f32 to vector<16x128xf32>
    %977 = arith.addf %976, %975 : vector<16x128xf32>
    %978 = arith.divf %976, %977 : vector<16x128xf32>
    %979 = math.tanh %973 : vector<16x128xf32>
    %980 = vector.extract_strided_slice %978 {offsets = [0, 0], sizes = [16, 32], strides = [1, 1]} : vector<16x128xf32> to vector<16x32xf32>
    %981 = vector.extract_strided_slice %978 {offsets = [0, 32], sizes = [16, 32], strides = [1, 1]} : vector<16x128xf32> to vector<16x32xf32>
    %982 = vector.extract_strided_slice %979 {offsets = [0, 64], sizes = [16, 32], strides = [1, 1]} : vector<16x128xf32> to vector<16x32xf32>
    %983 = vector.extract_strided_slice %978 {offsets = [0, 96], sizes = [16, 32], strides = [1, 1]} : vector<16x128xf32> to vector<16x32xf32>
    %984 = arith.mulf %981, %948 : vector<16x32xf32>
    %985 = arith.mulf %980, %982 : vector<16x32xf32>
    %986 = arith.addf %984, %985 : vector<16x32xf32>
    %987 = math.tanh %986 : vector<16x32xf32>
    %988 = arith.mulf %983, %987 : vector<16x32xf32>
    %989 = vector.shape_cast %950 : vector<16x1xi1> to vector<16x1xi1>
    %990 = vector.broadcast %989 : vector<16x1xi1> to vector<16x32xi1>
    %991 = arith.select %990, %969, %939 : vector<16x32xi1>, vector<16x32xf32>
    %992 = vector.shape_cast %950 : vector<16x1xi1> to vector<16x1xi1>
    %993 = vector.broadcast %992 : vector<16x1xi1> to vector<16x32xi1>
    %994 = arith.select %993, %967, %942 : vector<16x32xi1>, vector<16x32xf32>
    %995 = vector.shape_cast %950 : vector<16x1xi1> to vector<16x1xi1>
    %996 = vector.broadcast %995 : vector<16x1xi1> to vector<16x32xi1>
    %997 = arith.select %996, %988, %945 : vector<16x32xi1>, vector<16x32xf32>
    %998 = vector.shape_cast %950 : vector<16x1xi1> to vector<16x1xi1>
    %999 = vector.broadcast %998 : vector<16x1xi1> to vector<16x32xi1>
    %1000 = arith.select %999, %986, %948 : vector<16x32xi1>, vector<16x32xf32>
    %c3_i32_277 = arith.constant 3 : i32
    %1001 = vector.broadcast %c3_i32_277 : i32 to vector<16x1xi32>
    %1002 = arith.cmpi sgt, %840, %1001 : vector<16x1xi32>
    %c3_278 = arith.constant 3 : index
    %c0_279 = arith.constant 0 : index
    %c0_280 = arith.constant 0 : index
    %1003 = vector.load %arg24[%c3_278, %c0_279, %c0_280] : memref<7x16x128xf32, #tpu.memory_space<vmem>>, vector<1x16x128xf32>
    %1004 = vector.shape_cast %1003 : vector<1x16x128xf32> to vector<16x128xf32>
    %cst_281 = arith.constant dense<0.000000e+00> : vector<16x128xf32>
    %1005 = tpu.matmul %991, %841, %cst_281 {dimension_numbers = #tpu.dot_dimension_numbers<[1], [0], [0], [1], [0, 0, 1, 1], [], []>} : vector<16x32xf32>, vector<32x128xf32>, vector<16x128xf32> -> vector<16x128xf32>
    %1006 = arith.addf %1004, %1005 : vector<16x128xf32>
    %1007 = arith.negf %1006 : vector<16x128xf32>
    %1008 = math.exp %1007 : vector<16x128xf32>
    %cst_282 = arith.constant 1.000000e+00 : f32
    %1009 = vector.broadcast %cst_282 : f32 to vector<16x128xf32>
    %1010 = arith.addf %1009, %1008 : vector<16x128xf32>
    %1011 = arith.divf %1009, %1010 : vector<16x128xf32>
    %1012 = math.tanh %1006 : vector<16x128xf32>
    %1013 = vector.extract_strided_slice %1011 {offsets = [0, 0], sizes = [16, 32], strides = [1, 1]} : vector<16x128xf32> to vector<16x32xf32>
    %1014 = vector.extract_strided_slice %1011 {offsets = [0, 32], sizes = [16, 32], strides = [1, 1]} : vector<16x128xf32> to vector<16x32xf32>
    %1015 = vector.extract_strided_slice %1012 {offsets = [0, 64], sizes = [16, 32], strides = [1, 1]} : vector<16x128xf32> to vector<16x32xf32>
    %1016 = vector.extract_strided_slice %1011 {offsets = [0, 96], sizes = [16, 32], strides = [1, 1]} : vector<16x128xf32> to vector<16x32xf32>
    %1017 = arith.mulf %1014, %994 : vector<16x32xf32>
    %1018 = arith.mulf %1013, %1015 : vector<16x32xf32>
    %1019 = arith.addf %1017, %1018 : vector<16x32xf32>
    %1020 = math.tanh %1019 : vector<16x32xf32>
    %1021 = arith.mulf %1016, %1020 : vector<16x32xf32>
    %1022 = tpu.concatenate %1021, %997 in 1 : vector<16x32xf32>, vector<16x32xf32> -> vector<16x64xf32>
    %cst_283 = arith.constant dense<0.000000e+00> : vector<16x128xf32>
    %1023 = tpu.matmul %1022, %842, %cst_283 {dimension_numbers = #tpu.dot_dimension_numbers<[1], [0], [0], [1], [0, 0, 1, 1], [], []>} : vector<16x64xf32>, vector<64x128xf32>, vector<16x128xf32> -> vector<16x128xf32>
    %1024 = vector.broadcast %843 : vector<1x128xf32> to vector<16x128xf32>
    %1025 = arith.addf %1023, %1024 : vector<16x128xf32>
    %1026 = arith.negf %1025 : vector<16x128xf32>
    %1027 = math.exp %1026 : vector<16x128xf32>
    %cst_284 = arith.constant 1.000000e+00 : f32
    %1028 = vector.broadcast %cst_284 : f32 to vector<16x128xf32>
    %1029 = arith.addf %1028, %1027 : vector<16x128xf32>
    %1030 = arith.divf %1028, %1029 : vector<16x128xf32>
    %1031 = math.tanh %1025 : vector<16x128xf32>
    %1032 = vector.extract_strided_slice %1030 {offsets = [0, 0], sizes = [16, 32], strides = [1, 1]} : vector<16x128xf32> to vector<16x32xf32>
    %1033 = vector.extract_strided_slice %1030 {offsets = [0, 32], sizes = [16, 32], strides = [1, 1]} : vector<16x128xf32> to vector<16x32xf32>
    %1034 = vector.extract_strided_slice %1031 {offsets = [0, 64], sizes = [16, 32], strides = [1, 1]} : vector<16x128xf32> to vector<16x32xf32>
    %1035 = vector.extract_strided_slice %1030 {offsets = [0, 96], sizes = [16, 32], strides = [1, 1]} : vector<16x128xf32> to vector<16x32xf32>
    %1036 = arith.mulf %1033, %1000 : vector<16x32xf32>
    %1037 = arith.mulf %1032, %1034 : vector<16x32xf32>
    %1038 = arith.addf %1036, %1037 : vector<16x32xf32>
    %1039 = math.tanh %1038 : vector<16x32xf32>
    %1040 = arith.mulf %1035, %1039 : vector<16x32xf32>
    %1041 = vector.shape_cast %1002 : vector<16x1xi1> to vector<16x1xi1>
    %1042 = vector.broadcast %1041 : vector<16x1xi1> to vector<16x32xi1>
    %1043 = arith.select %1042, %1021, %991 : vector<16x32xi1>, vector<16x32xf32>
    %1044 = vector.shape_cast %1002 : vector<16x1xi1> to vector<16x1xi1>
    %1045 = vector.broadcast %1044 : vector<16x1xi1> to vector<16x32xi1>
    %1046 = arith.select %1045, %1019, %994 : vector<16x32xi1>, vector<16x32xf32>
    %1047 = vector.shape_cast %1002 : vector<16x1xi1> to vector<16x1xi1>
    %1048 = vector.broadcast %1047 : vector<16x1xi1> to vector<16x32xi1>
    %1049 = arith.select %1048, %1040, %997 : vector<16x32xi1>, vector<16x32xf32>
    %1050 = vector.shape_cast %1002 : vector<16x1xi1> to vector<16x1xi1>
    %1051 = vector.broadcast %1050 : vector<16x1xi1> to vector<16x32xi1>
    %1052 = arith.select %1051, %1038, %1000 : vector<16x32xi1>, vector<16x32xf32>
    %c4_i32_285 = arith.constant 4 : i32
    %1053 = vector.broadcast %c4_i32_285 : i32 to vector<16x1xi32>
    %1054 = arith.cmpi sgt, %840, %1053 : vector<16x1xi32>
    %c4_286 = arith.constant 4 : index
    %c0_287 = arith.constant 0 : index
    %c0_288 = arith.constant 0 : index
    %1055 = vector.load %arg24[%c4_286, %c0_287, %c0_288] : memref<7x16x128xf32, #tpu.memory_space<vmem>>, vector<1x16x128xf32>
    %1056 = vector.shape_cast %1055 : vector<1x16x128xf32> to vector<16x128xf32>
    %cst_289 = arith.constant dense<0.000000e+00> : vector<16x128xf32>
    %1057 = tpu.matmul %1043, %841, %cst_289 {dimension_numbers = #tpu.dot_dimension_numbers<[1], [0], [0], [1], [0, 0, 1, 1], [], []>} : vector<16x32xf32>, vector<32x128xf32>, vector<16x128xf32> -> vector<16x128xf32>
    %1058 = arith.addf %1056, %1057 : vector<16x128xf32>
    %1059 = arith.negf %1058 : vector<16x128xf32>
    %1060 = math.exp %1059 : vector<16x128xf32>
    %cst_290 = arith.constant 1.000000e+00 : f32
    %1061 = vector.broadcast %cst_290 : f32 to vector<16x128xf32>
    %1062 = arith.addf %1061, %1060 : vector<16x128xf32>
    %1063 = arith.divf %1061, %1062 : vector<16x128xf32>
    %1064 = math.tanh %1058 : vector<16x128xf32>
    %1065 = vector.extract_strided_slice %1063 {offsets = [0, 0], sizes = [16, 32], strides = [1, 1]} : vector<16x128xf32> to vector<16x32xf32>
    %1066 = vector.extract_strided_slice %1063 {offsets = [0, 32], sizes = [16, 32], strides = [1, 1]} : vector<16x128xf32> to vector<16x32xf32>
    %1067 = vector.extract_strided_slice %1064 {offsets = [0, 64], sizes = [16, 32], strides = [1, 1]} : vector<16x128xf32> to vector<16x32xf32>
    %1068 = vector.extract_strided_slice %1063 {offsets = [0, 96], sizes = [16, 32], strides = [1, 1]} : vector<16x128xf32> to vector<16x32xf32>
    %1069 = arith.mulf %1066, %1046 : vector<16x32xf32>
    %1070 = arith.mulf %1065, %1067 : vector<16x32xf32>
    %1071 = arith.addf %1069, %1070 : vector<16x32xf32>
    %1072 = math.tanh %1071 : vector<16x32xf32>
    %1073 = arith.mulf %1068, %1072 : vector<16x32xf32>
    %1074 = tpu.concatenate %1073, %1049 in 1 : vector<16x32xf32>, vector<16x32xf32> -> vector<16x64xf32>
    %cst_291 = arith.constant dense<0.000000e+00> : vector<16x128xf32>
    %1075 = tpu.matmul %1074, %842, %cst_291 {dimension_numbers = #tpu.dot_dimension_numbers<[1], [0], [0], [1], [0, 0, 1, 1], [], []>} : vector<16x64xf32>, vector<64x128xf32>, vector<16x128xf32> -> vector<16x128xf32>
    %1076 = vector.broadcast %843 : vector<1x128xf32> to vector<16x128xf32>
    %1077 = arith.addf %1075, %1076 : vector<16x128xf32>
    %1078 = arith.negf %1077 : vector<16x128xf32>
    %1079 = math.exp %1078 : vector<16x128xf32>
    %cst_292 = arith.constant 1.000000e+00 : f32
    %1080 = vector.broadcast %cst_292 : f32 to vector<16x128xf32>
    %1081 = arith.addf %1080, %1079 : vector<16x128xf32>
    %1082 = arith.divf %1080, %1081 : vector<16x128xf32>
    %1083 = math.tanh %1077 : vector<16x128xf32>
    %1084 = vector.extract_strided_slice %1082 {offsets = [0, 0], sizes = [16, 32], strides = [1, 1]} : vector<16x128xf32> to vector<16x32xf32>
    %1085 = vector.extract_strided_slice %1082 {offsets = [0, 32], sizes = [16, 32], strides = [1, 1]} : vector<16x128xf32> to vector<16x32xf32>
    %1086 = vector.extract_strided_slice %1083 {offsets = [0, 64], sizes = [16, 32], strides = [1, 1]} : vector<16x128xf32> to vector<16x32xf32>
    %1087 = vector.extract_strided_slice %1082 {offsets = [0, 96], sizes = [16, 32], strides = [1, 1]} : vector<16x128xf32> to vector<16x32xf32>
    %1088 = arith.mulf %1085, %1052 : vector<16x32xf32>
    %1089 = arith.mulf %1084, %1086 : vector<16x32xf32>
    %1090 = arith.addf %1088, %1089 : vector<16x32xf32>
    %1091 = math.tanh %1090 : vector<16x32xf32>
    %1092 = arith.mulf %1087, %1091 : vector<16x32xf32>
    %1093 = vector.shape_cast %1054 : vector<16x1xi1> to vector<16x1xi1>
    %1094 = vector.broadcast %1093 : vector<16x1xi1> to vector<16x32xi1>
    %1095 = arith.select %1094, %1073, %1043 : vector<16x32xi1>, vector<16x32xf32>
    %1096 = vector.shape_cast %1054 : vector<16x1xi1> to vector<16x1xi1>
    %1097 = vector.broadcast %1096 : vector<16x1xi1> to vector<16x32xi1>
    %1098 = arith.select %1097, %1071, %1046 : vector<16x32xi1>, vector<16x32xf32>
    %1099 = vector.shape_cast %1054 : vector<16x1xi1> to vector<16x1xi1>
    %1100 = vector.broadcast %1099 : vector<16x1xi1> to vector<16x32xi1>
    %1101 = arith.select %1100, %1092, %1049 : vector<16x32xi1>, vector<16x32xf32>
    %1102 = vector.shape_cast %1054 : vector<16x1xi1> to vector<16x1xi1>
    %1103 = vector.broadcast %1102 : vector<16x1xi1> to vector<16x32xi1>
    %1104 = arith.select %1103, %1090, %1052 : vector<16x32xi1>, vector<16x32xf32>
    %c5_i32_293 = arith.constant 5 : i32
    %1105 = vector.broadcast %c5_i32_293 : i32 to vector<16x1xi32>
    %1106 = arith.cmpi sgt, %840, %1105 : vector<16x1xi32>
    %c5_294 = arith.constant 5 : index
    %c0_295 = arith.constant 0 : index
    %c0_296 = arith.constant 0 : index
    %1107 = vector.load %arg24[%c5_294, %c0_295, %c0_296] : memref<7x16x128xf32, #tpu.memory_space<vmem>>, vector<1x16x128xf32>
    %1108 = vector.shape_cast %1107 : vector<1x16x128xf32> to vector<16x128xf32>
    %cst_297 = arith.constant dense<0.000000e+00> : vector<16x128xf32>
    %1109 = tpu.matmul %1095, %841, %cst_297 {dimension_numbers = #tpu.dot_dimension_numbers<[1], [0], [0], [1], [0, 0, 1, 1], [], []>} : vector<16x32xf32>, vector<32x128xf32>, vector<16x128xf32> -> vector<16x128xf32>
    %1110 = arith.addf %1108, %1109 : vector<16x128xf32>
    %1111 = arith.negf %1110 : vector<16x128xf32>
    %1112 = math.exp %1111 : vector<16x128xf32>
    %cst_298 = arith.constant 1.000000e+00 : f32
    %1113 = vector.broadcast %cst_298 : f32 to vector<16x128xf32>
    %1114 = arith.addf %1113, %1112 : vector<16x128xf32>
    %1115 = arith.divf %1113, %1114 : vector<16x128xf32>
    %1116 = math.tanh %1110 : vector<16x128xf32>
    %1117 = vector.extract_strided_slice %1115 {offsets = [0, 0], sizes = [16, 32], strides = [1, 1]} : vector<16x128xf32> to vector<16x32xf32>
    %1118 = vector.extract_strided_slice %1115 {offsets = [0, 32], sizes = [16, 32], strides = [1, 1]} : vector<16x128xf32> to vector<16x32xf32>
    %1119 = vector.extract_strided_slice %1116 {offsets = [0, 64], sizes = [16, 32], strides = [1, 1]} : vector<16x128xf32> to vector<16x32xf32>
    %1120 = vector.extract_strided_slice %1115 {offsets = [0, 96], sizes = [16, 32], strides = [1, 1]} : vector<16x128xf32> to vector<16x32xf32>
    %1121 = arith.mulf %1118, %1098 : vector<16x32xf32>
    %1122 = arith.mulf %1117, %1119 : vector<16x32xf32>
    %1123 = arith.addf %1121, %1122 : vector<16x32xf32>
    %1124 = math.tanh %1123 : vector<16x32xf32>
    %1125 = arith.mulf %1120, %1124 : vector<16x32xf32>
    %1126 = tpu.concatenate %1125, %1101 in 1 : vector<16x32xf32>, vector<16x32xf32> -> vector<16x64xf32>
    %cst_299 = arith.constant dense<0.000000e+00> : vector<16x128xf32>
    %1127 = tpu.matmul %1126, %842, %cst_299 {dimension_numbers = #tpu.dot_dimension_numbers<[1], [0], [0], [1], [0, 0, 1, 1], [], []>} : vector<16x64xf32>, vector<64x128xf32>, vector<16x128xf32> -> vector<16x128xf32>
    %1128 = vector.broadcast %843 : vector<1x128xf32> to vector<16x128xf32>
    %1129 = arith.addf %1127, %1128 : vector<16x128xf32>
    %1130 = arith.negf %1129 : vector<16x128xf32>
    %1131 = math.exp %1130 : vector<16x128xf32>
    %cst_300 = arith.constant 1.000000e+00 : f32
    %1132 = vector.broadcast %cst_300 : f32 to vector<16x128xf32>
    %1133 = arith.addf %1132, %1131 : vector<16x128xf32>
    %1134 = arith.divf %1132, %1133 : vector<16x128xf32>
    %1135 = math.tanh %1129 : vector<16x128xf32>
    %1136 = vector.extract_strided_slice %1134 {offsets = [0, 0], sizes = [16, 32], strides = [1, 1]} : vector<16x128xf32> to vector<16x32xf32>
    %1137 = vector.extract_strided_slice %1134 {offsets = [0, 32], sizes = [16, 32], strides = [1, 1]} : vector<16x128xf32> to vector<16x32xf32>
    %1138 = vector.extract_strided_slice %1135 {offsets = [0, 64], sizes = [16, 32], strides = [1, 1]} : vector<16x128xf32> to vector<16x32xf32>
    %1139 = vector.extract_strided_slice %1134 {offsets = [0, 96], sizes = [16, 32], strides = [1, 1]} : vector<16x128xf32> to vector<16x32xf32>
    %1140 = arith.mulf %1137, %1104 : vector<16x32xf32>
    %1141 = arith.mulf %1136, %1138 : vector<16x32xf32>
    %1142 = arith.addf %1140, %1141 : vector<16x32xf32>
    %1143 = math.tanh %1142 : vector<16x32xf32>
    %1144 = arith.mulf %1139, %1143 : vector<16x32xf32>
    %1145 = vector.shape_cast %1106 : vector<16x1xi1> to vector<16x1xi1>
    %1146 = vector.broadcast %1145 : vector<16x1xi1> to vector<16x32xi1>
    %1147 = arith.select %1146, %1125, %1095 : vector<16x32xi1>, vector<16x32xf32>
    %1148 = vector.shape_cast %1106 : vector<16x1xi1> to vector<16x1xi1>
    %1149 = vector.broadcast %1148 : vector<16x1xi1> to vector<16x32xi1>
    %1150 = arith.select %1149, %1123, %1098 : vector<16x32xi1>, vector<16x32xf32>
    %1151 = vector.shape_cast %1106 : vector<16x1xi1> to vector<16x1xi1>
    %1152 = vector.broadcast %1151 : vector<16x1xi1> to vector<16x32xi1>
    %1153 = arith.select %1152, %1144, %1101 : vector<16x32xi1>, vector<16x32xf32>
    %1154 = vector.shape_cast %1106 : vector<16x1xi1> to vector<16x1xi1>
    %1155 = vector.broadcast %1154 : vector<16x1xi1> to vector<16x32xi1>
    %1156 = arith.select %1155, %1142, %1104 : vector<16x32xi1>, vector<16x32xf32>
    %c6_i32_301 = arith.constant 6 : i32
    %1157 = vector.broadcast %c6_i32_301 : i32 to vector<16x1xi32>
    %1158 = arith.cmpi sgt, %840, %1157 : vector<16x1xi32>
    %c6_302 = arith.constant 6 : index
    %c0_303 = arith.constant 0 : index
    %c0_304 = arith.constant 0 : index
    %1159 = vector.load %arg24[%c6_302, %c0_303, %c0_304] : memref<7x16x128xf32, #tpu.memory_space<vmem>>, vector<1x16x128xf32>
    %1160 = vector.shape_cast %1159 : vector<1x16x128xf32> to vector<16x128xf32>
    %cst_305 = arith.constant dense<0.000000e+00> : vector<16x128xf32>
    %1161 = tpu.matmul %1147, %841, %cst_305 {dimension_numbers = #tpu.dot_dimension_numbers<[1], [0], [0], [1], [0, 0, 1, 1], [], []>} : vector<16x32xf32>, vector<32x128xf32>, vector<16x128xf32> -> vector<16x128xf32>
    %1162 = arith.addf %1160, %1161 : vector<16x128xf32>
    %1163 = arith.negf %1162 : vector<16x128xf32>
    %1164 = math.exp %1163 : vector<16x128xf32>
    %cst_306 = arith.constant 1.000000e+00 : f32
    %1165 = vector.broadcast %cst_306 : f32 to vector<16x128xf32>
    %1166 = arith.addf %1165, %1164 : vector<16x128xf32>
    %1167 = arith.divf %1165, %1166 : vector<16x128xf32>
    %1168 = math.tanh %1162 : vector<16x128xf32>
    %1169 = vector.extract_strided_slice %1167 {offsets = [0, 0], sizes = [16, 32], strides = [1, 1]} : vector<16x128xf32> to vector<16x32xf32>
    %1170 = vector.extract_strided_slice %1167 {offsets = [0, 32], sizes = [16, 32], strides = [1, 1]} : vector<16x128xf32> to vector<16x32xf32>
    %1171 = vector.extract_strided_slice %1168 {offsets = [0, 64], sizes = [16, 32], strides = [1, 1]} : vector<16x128xf32> to vector<16x32xf32>
    %1172 = vector.extract_strided_slice %1167 {offsets = [0, 96], sizes = [16, 32], strides = [1, 1]} : vector<16x128xf32> to vector<16x32xf32>
    %1173 = arith.mulf %1170, %1150 : vector<16x32xf32>
    %1174 = arith.mulf %1169, %1171 : vector<16x32xf32>
    %1175 = arith.addf %1173, %1174 : vector<16x32xf32>
    %1176 = math.tanh %1175 : vector<16x32xf32>
    %1177 = arith.mulf %1172, %1176 : vector<16x32xf32>
    %1178 = tpu.concatenate %1177, %1153 in 1 : vector<16x32xf32>, vector<16x32xf32> -> vector<16x64xf32>
    %cst_307 = arith.constant dense<0.000000e+00> : vector<16x128xf32>
    %1179 = tpu.matmul %1178, %842, %cst_307 {dimension_numbers = #tpu.dot_dimension_numbers<[1], [0], [0], [1], [0, 0, 1, 1], [], []>} : vector<16x64xf32>, vector<64x128xf32>, vector<16x128xf32> -> vector<16x128xf32>
    %1180 = vector.broadcast %843 : vector<1x128xf32> to vector<16x128xf32>
    %1181 = arith.addf %1179, %1180 : vector<16x128xf32>
    %1182 = arith.negf %1181 : vector<16x128xf32>
    %1183 = math.exp %1182 : vector<16x128xf32>
    %cst_308 = arith.constant 1.000000e+00 : f32
    %1184 = vector.broadcast %cst_308 : f32 to vector<16x128xf32>
    %1185 = arith.addf %1184, %1183 : vector<16x128xf32>
    %1186 = arith.divf %1184, %1185 : vector<16x128xf32>
    %1187 = math.tanh %1181 : vector<16x128xf32>
    %1188 = vector.extract_strided_slice %1186 {offsets = [0, 0], sizes = [16, 32], strides = [1, 1]} : vector<16x128xf32> to vector<16x32xf32>
    %1189 = vector.extract_strided_slice %1186 {offsets = [0, 32], sizes = [16, 32], strides = [1, 1]} : vector<16x128xf32> to vector<16x32xf32>
    %1190 = vector.extract_strided_slice %1187 {offsets = [0, 64], sizes = [16, 32], strides = [1, 1]} : vector<16x128xf32> to vector<16x32xf32>
    %1191 = vector.extract_strided_slice %1186 {offsets = [0, 96], sizes = [16, 32], strides = [1, 1]} : vector<16x128xf32> to vector<16x32xf32>
    %1192 = arith.mulf %1189, %1156 : vector<16x32xf32>
    %1193 = arith.mulf %1188, %1190 : vector<16x32xf32>
    %1194 = arith.addf %1192, %1193 : vector<16x32xf32>
    %1195 = math.tanh %1194 : vector<16x32xf32>
    %1196 = arith.mulf %1191, %1195 : vector<16x32xf32>
    %1197 = vector.shape_cast %1158 : vector<16x1xi1> to vector<16x1xi1>
    %1198 = vector.broadcast %1197 : vector<16x1xi1> to vector<16x32xi1>
    %1199 = arith.select %1198, %1177, %1147 : vector<16x32xi1>, vector<16x32xf32>
    %1200 = vector.shape_cast %1158 : vector<16x1xi1> to vector<16x1xi1>
    %1201 = vector.broadcast %1200 : vector<16x1xi1> to vector<16x32xi1>
    %1202 = arith.select %1201, %1175, %1150 : vector<16x32xi1>, vector<16x32xf32>
    %1203 = vector.shape_cast %1158 : vector<16x1xi1> to vector<16x1xi1>
    %1204 = vector.broadcast %1203 : vector<16x1xi1> to vector<16x32xi1>
    %1205 = arith.select %1204, %1196, %1153 : vector<16x32xi1>, vector<16x32xf32>
    %1206 = vector.shape_cast %1158 : vector<16x1xi1> to vector<16x1xi1>
    %1207 = vector.broadcast %1206 : vector<16x1xi1> to vector<16x32xi1>
    %1208 = arith.select %1207, %1194, %1156 : vector<16x32xi1>, vector<16x32xf32>
    %c0_309 = arith.constant 0 : index
    %c0_310 = arith.constant 0 : index
    %1209 = vector.load %arg18[%c0_309, %c0_310] : memref<32x128xf32, #tpu.memory_space<vmem>>, vector<32x128xf32>
    %cst_311 = arith.constant dense<0.000000e+00> : vector<16x128xf32>
    %1210 = tpu.matmul %839, %1209, %cst_311 {dimension_numbers = #tpu.dot_dimension_numbers<[1], [0], [0], [1], [0, 0, 1, 1], [], []>} : vector<16x32xf32>, vector<32x128xf32>, vector<16x128xf32> -> vector<16x128xf32>
    %c0_312 = arith.constant 0 : index
    %c0_313 = arith.constant 0 : index
    %1211 = vector.load %arg19[%c0_312, %c0_313] : memref<32x128xf32, #tpu.memory_space<vmem>>, vector<32x128xf32>
    %cst_314 = arith.constant dense<0.000000e+00> : vector<16x128xf32>
    %1212 = tpu.matmul %1205, %1211, %cst_314 {dimension_numbers = #tpu.dot_dimension_numbers<[1], [0], [0], [1], [0, 0, 1, 1], [], []>} : vector<16x32xf32>, vector<32x128xf32>, vector<16x128xf32> -> vector<16x128xf32>
    %1213 = arith.addf %1210, %1212 : vector<16x128xf32>
    %c0_315 = arith.constant 0 : index
    %c0_316 = arith.constant 0 : index
    %1214 = vector.load %arg21[%c0_315, %c0_316] : memref<1x128xf32, #tpu.memory_space<vmem>>, vector<1x128xf32>
    %1215 = vector.broadcast %1214 : vector<1x128xf32> to vector<16x128xf32>
    %1216 = arith.addf %1213, %1215 : vector<16x128xf32>
    %c0_317 = arith.constant 0 : index
    %c0_318 = arith.constant 0 : index
    %1217 = vector.load %arg20[%c0_317, %c0_318] : memref<32x128xf32, #tpu.memory_space<vmem>>, vector<32x128xf32>
    %cst_319 = arith.constant 0.000000e+00 : f32
    %1218 = vector.broadcast %cst_319 : f32 to vector<8x32xf32>
    %cst_320 = arith.constant 0.000000e+00 : f32
    %1219 = vector.broadcast %cst_320 : f32 to vector<8x32xf32>
    %1220 = vector.extract_strided_slice %1216 {offsets = [0, 0], sizes = [8, 128], strides = [1, 1]} : vector<16x128xf32> to vector<8x128xf32>
    %cst_321 = arith.constant dense<0.000000e+00> : vector<8x128xf32>
    %1221 = tpu.matmul %1218, %1217, %cst_321 {dimension_numbers = #tpu.dot_dimension_numbers<[1], [0], [0], [1], [0, 0, 1, 1], [], []>} : vector<8x32xf32>, vector<32x128xf32>, vector<8x128xf32> -> vector<8x128xf32>
    %1222 = arith.addf %1220, %1221 : vector<8x128xf32>
    %1223 = arith.negf %1222 : vector<8x128xf32>
    %1224 = math.exp %1223 : vector<8x128xf32>
    %cst_322 = arith.constant 1.000000e+00 : f32
    %1225 = vector.broadcast %cst_322 : f32 to vector<8x128xf32>
    %1226 = arith.addf %1225, %1224 : vector<8x128xf32>
    %1227 = arith.divf %1225, %1226 : vector<8x128xf32>
    %1228 = math.tanh %1222 : vector<8x128xf32>
    %1229 = vector.extract_strided_slice %1227 {offsets = [0, 0], sizes = [8, 32], strides = [1, 1]} : vector<8x128xf32> to vector<8x32xf32>
    %1230 = vector.extract_strided_slice %1227 {offsets = [0, 32], sizes = [8, 32], strides = [1, 1]} : vector<8x128xf32> to vector<8x32xf32>
    %1231 = vector.extract_strided_slice %1228 {offsets = [0, 64], sizes = [8, 32], strides = [1, 1]} : vector<8x128xf32> to vector<8x32xf32>
    %1232 = vector.extract_strided_slice %1227 {offsets = [0, 96], sizes = [8, 32], strides = [1, 1]} : vector<8x128xf32> to vector<8x32xf32>
    %1233 = arith.mulf %1230, %1219 : vector<8x32xf32>
    %1234 = arith.mulf %1229, %1231 : vector<8x32xf32>
    %1235 = arith.addf %1233, %1234 : vector<8x32xf32>
    %1236 = math.tanh %1235 : vector<8x32xf32>
    %1237 = arith.mulf %1232, %1236 : vector<8x32xf32>
    %1238 = vector.extract_strided_slice %1216 {offsets = [8, 0], sizes = [8, 128], strides = [1, 1]} : vector<16x128xf32> to vector<8x128xf32>
    %cst_323 = arith.constant dense<0.000000e+00> : vector<8x128xf32>
    %1239 = tpu.matmul %1237, %1217, %cst_323 {dimension_numbers = #tpu.dot_dimension_numbers<[1], [0], [0], [1], [0, 0, 1, 1], [], []>} : vector<8x32xf32>, vector<32x128xf32>, vector<8x128xf32> -> vector<8x128xf32>
    %1240 = arith.addf %1238, %1239 : vector<8x128xf32>
    %1241 = arith.negf %1240 : vector<8x128xf32>
    %1242 = math.exp %1241 : vector<8x128xf32>
    %cst_324 = arith.constant 1.000000e+00 : f32
    %1243 = vector.broadcast %cst_324 : f32 to vector<8x128xf32>
    %1244 = arith.addf %1243, %1242 : vector<8x128xf32>
    %1245 = arith.divf %1243, %1244 : vector<8x128xf32>
    %1246 = math.tanh %1240 : vector<8x128xf32>
    %1247 = vector.extract_strided_slice %1245 {offsets = [0, 0], sizes = [8, 32], strides = [1, 1]} : vector<8x128xf32> to vector<8x32xf32>
    %1248 = vector.extract_strided_slice %1245 {offsets = [0, 32], sizes = [8, 32], strides = [1, 1]} : vector<8x128xf32> to vector<8x32xf32>
    %1249 = vector.extract_strided_slice %1246 {offsets = [0, 64], sizes = [8, 32], strides = [1, 1]} : vector<8x128xf32> to vector<8x32xf32>
    %1250 = vector.extract_strided_slice %1245 {offsets = [0, 96], sizes = [8, 32], strides = [1, 1]} : vector<8x128xf32> to vector<8x32xf32>
    %1251 = arith.mulf %1248, %1235 : vector<8x32xf32>
    %1252 = arith.mulf %1247, %1249 : vector<8x32xf32>
    %1253 = arith.addf %1251, %1252 : vector<8x32xf32>
    %1254 = math.tanh %1253 : vector<8x32xf32>
    %1255 = arith.mulf %1250, %1254 : vector<8x32xf32>
    %1256 = vector.extract_strided_slice %1199 {offsets = [8, 0], sizes = [8, 32], strides = [1, 1]} : vector<16x32xf32> to vector<8x32xf32>
    %1257 = vector.extract_strided_slice %1202 {offsets = [8, 0], sizes = [8, 32], strides = [1, 1]} : vector<16x32xf32> to vector<8x32xf32>
    %1258 = vector.extract_strided_slice %1208 {offsets = [8, 0], sizes = [8, 32], strides = [1, 1]} : vector<16x32xf32> to vector<8x32xf32>
    %1259 = tpu.concatenate %1256, %1255, %1257, %1258 in 1 : vector<8x32xf32>, vector<8x32xf32>, vector<8x32xf32>, vector<8x32xf32> -> vector<8x128xf32>
    %c0_325 = arith.constant 0 : index
    %c0_326 = arith.constant 0 : index
    %1260 = vector.load %arg22[%c0_325, %c0_326] : memref<8x128xf32, #tpu.memory_space<vmem>>, vector<8x128xf32>
    tpu.vector_store %arg22[%c0_325, %c0_326], %1259 {strides = array<i32>} : memref<8x128xf32, #tpu.memory_space<vmem>>, vector<8x128xf32>,
    return
  }
}

</mosaic_0001>

<llo_original>
// kernel: encoder_forward.1
$region0: #{encoder_forward.1}
  #allocation0 [shape = 'u32[]', space=smem, size = 0x4, offset = 0x4, fixed_abs, tag = 'smem constant byte address 0x4 - core index']
  #allocation1 [shape = 'u32[144,128]{1,0:T(1,128)}', space=vmem, size = 0x12000, scoped, tag = 'internal scratch']
  #allocation2 [shape = 'f32[13,16,128]{2,1,0:T(8,128)}', space=vmem, size = 0x1a000, scoped, tag = 'scratch operand']
  #allocation3 [shape = 'f32[7,16,128]{2,1,0:T(8,128)}', space=vmem, size = 0xe000, scoped, tag = 'scratch operand']
  %s0 = inlined_call_operand.vmem [shape: f32[8,64], index: 0, kind: input, shape index: {}]
  %s1 = inlined_call_operand.vmem [shape: f32[13,16,32], index: 1, kind: input, shape index: {}]
  %s2 = inlined_call_operand.vmem [shape: s32[16,1], index: 2, kind: input, shape index: {}]
  %s3 = inlined_call_operand.vmem [shape: f32[7,16,32], index: 3, kind: input, shape index: {}]
  %s4 = inlined_call_operand.vmem [shape: s32[16,1], index: 4, kind: input, shape index: {}]
  %s5 = inlined_call_operand.vmem [shape: f32[64,32], index: 5, kind: input, shape index: {}]
  %s6 = inlined_call_operand.vmem [shape: f32[1,32], index: 6, kind: input, shape index: {}]
  %s7 = inlined_call_operand.vmem [shape: f32[32,128], index: 7, kind: input, shape index: {}]
  %s8 = inlined_call_operand.vmem [shape: f32[32,128], index: 8, kind: input, shape index: {}]
  %s9 = inlined_call_operand.vmem [shape: f32[1,128], index: 9, kind: input, shape index: {}]
  %s10 = inlined_call_operand.vmem [shape: f32[64,128], index: 10, kind: input, shape index: {}]
  %s11 = inlined_call_operand.vmem [shape: f32[1,128], index: 11, kind: input, shape index: {}]
  %s12 = inlined_call_operand.vmem [shape: f32[32,128], index: 12, kind: input, shape index: {}]
  %s13 = inlined_call_operand.vmem [shape: f32[32,128], index: 13, kind: input, shape index: {}]
  %s14 = inlined_call_operand.vmem [shape: f32[32,128], index: 14, kind: input, shape index: {}]
  %s15 = inlined_call_operand.vmem [shape: f32[1,128], index: 15, kind: input, shape index: {}]
  %s16 = inlined_call_operand.vmem [shape: f32[64,128], index: 16, kind: input, shape index: {}]
  %s17 = inlined_call_operand.vmem [shape: f32[1,128], index: 17, kind: input, shape index: {}]
  %s18 = inlined_call_operand.vmem [shape: f32[32,128], index: 18, kind: input, shape index: {}]
  %s19 = inlined_call_operand.vmem [shape: f32[32,128], index: 19, kind: input, shape index: {}]
  %s20 = inlined_call_operand.vmem [shape: f32[32,128], index: 20, kind: input, shape index: {}]
  %s21 = inlined_call_operand.vmem [shape: f32[1,128], index: 21, kind: input, shape index: {}]
  %s22 = inlined_call_operand.vmem [shape: f32[8,128], index: 22, kind: output, shape index: {}]
  %s23 = sld [smem:[#allocation0]]
  $region98: #{encoder_forward.1} parent=0
    _
  %s25 = ssub.s32 1, %s23
  %s26 = scalar_select 0, %s25, %s23
  // Predicated region
  $region2: #{encoder_forward.1} parent=0 // pred_check
    _
  $region3: #{encoder_forward.1} parent=0 // pred_check_branch
    %28 = sbr.rel (0) target = $region5
  $region4: #{encoder_forward.1} parent=0 // pred_region
    _
  $region5: #{encoder_forward.1} parent=0 // pred_fallthru
    _
  // Predicated region
  $region6: #{encoder_forward.1} parent=0 // pred_check
    _
  $region7: #{encoder_forward.1} parent=0 // pred_check_branch
    %30 = sbr.rel (0) target = $region9
  $region8: #{encoder_forward.1} parent=0 // pred_region
    _
  $region9: #{encoder_forward.1} parent=0 // pred_fallthru
    _
  // Predicated region
  $region10: #{encoder_forward.1} parent=0 // pred_check
    _
  $region11: #{encoder_forward.1} parent=0 // pred_check_branch
    %32 = sbr.rel (0) target = $region13
  $region12: #{encoder_forward.1} parent=0 // pred_region
    _
  $region13: #{encoder_forward.1} parent=0 // pred_fallthru
    _
  // Predicated region
  $region14: #{encoder_forward.1} parent=0 // pred_check
    _
  $region15: #{encoder_forward.1} parent=0 // pred_check_branch
    %34 = sbr.rel (0) target = $region17
  $region16: #{encoder_forward.1} parent=0 // pred_region
    _
  $region17: #{encoder_forward.1} parent=0 // pred_fallthru
    _
  // Predicated region
  $region18: #{encoder_forward.1} parent=0 // pred_check
    _
  $region19: #{encoder_forward.1} parent=0 // pred_check_branch
    %36 = sbr.rel (0) target = $region21
  $region20: #{encoder_forward.1} parent=0 // pred_region
    _
  $region21: #{encoder_forward.1} parent=0 // pred_fallthru
    _
  // Predicated region
  $region22: #{encoder_forward.1} parent=0 // pred_check
    _
  $region23: #{encoder_forward.1} parent=0 // pred_check_branch
    %38 = sbr.rel (0) target = $region25
  $region24: #{encoder_forward.1} parent=0 // pred_region
    _
  $region25: #{encoder_forward.1} parent=0 // pred_fallthru
    _
  // Predicated region
  $region26: #{encoder_forward.1} parent=0 // pred_check
    _
  $region27: #{encoder_forward.1} parent=0 // pred_check_branch
    %40 = sbr.rel (0) target = $region29
  $region28: #{encoder_forward.1} parent=0 // pred_region
    _
  $region29: #{encoder_forward.1} parent=0 // pred_fallthru
    _
  // Predicated region
  $region30: #{encoder_forward.1} parent=0 // pred_check
    _
  $region31: #{encoder_forward.1} parent=0 // pred_check_branch
    %42 = sbr.rel (0) target = $region33
  $region32: #{encoder_forward.1} parent=0 // pred_region
    _
  $region33: #{encoder_forward.1} parent=0 // pred_fallthru
    _
  // Predicated region
  $region34: #{encoder_forward.1} parent=0 // pred_check
    _
  $region35: #{encoder_forward.1} parent=0 // pred_check_branch
    %44 = sbr.rel (0) target = $region37
  $region36: #{encoder_forward.1} parent=0 // pred_region
    _
  $region37: #{encoder_forward.1} parent=0 // pred_fallthru
    _
  // Predicated region
  $region38: #{encoder_forward.1} parent=0 // pred_check
    _
  $region39: #{encoder_forward.1} parent=0 // pred_check_branch
    %46 = sbr.rel (0) target = $region41
  $region40: #{encoder_forward.1} parent=0 // pred_region
    _
  $region41: #{encoder_forward.1} parent=0 // pred_fallthru
    _
  // Predicated region
  $region42: #{encoder_forward.1} parent=0 // pred_check
    _
  $region43: #{encoder_forward.1} parent=0 // pred_check_branch
    %48 = sbr.rel (0) target = $region45
  $region44: #{encoder_forward.1} parent=0 // pred_region
    _
  $region45: #{encoder_forward.1} parent=0 // pred_fallthru
    _
  // Predicated region
  $region46: #{encoder_forward.1} parent=0 // pred_check
    _
  $region47: #{encoder_forward.1} parent=0 // pred_check_branch
    %50 = sbr.rel (0) target = $region49
  $region48: #{encoder_forward.1} parent=0 // pred_region
    _
  $region49: #{encoder_forward.1} parent=0 // pred_fallthru
    _
  // Predicated region
  $region50: #{encoder_forward.1} parent=0 // pred_check
    _
  $region51: #{encoder_forward.1} parent=0 // pred_check_branch
    %52 = sbr.rel (0) target = $region53
  $region52: #{encoder_forward.1} parent=0 // pred_region
    _
  $region53: #{encoder_forward.1} parent=0 // pred_fallthru
    _
  // Predicated region
  $region54: #{encoder_forward.1} parent=0 // pred_check
    _
  $region55: #{encoder_forward.1} parent=0 // pred_check_branch
    %54 = sbr.rel (0) target = $region57
  $region56: #{encoder_forward.1} parent=0 // pred_region
    _
  $region57: #{encoder_forward.1} parent=0 // pred_fallthru
    _
  // Predicated region
  $region58: #{encoder_forward.1} parent=0 // pred_check
    _
  $region59: #{encoder_forward.1} parent=0 // pred_check_branch
    %56 = sbr.rel (0) target = $region61
  $region60: #{encoder_forward.1} parent=0 // pred_region
    _
  $region61: #{encoder_forward.1} parent=0 // pred_fallthru
    _
  // Predicated region
  $region62: #{encoder_forward.1} parent=0 // pred_check
    _
  $region63: #{encoder_forward.1} parent=0 // pred_check_branch
    %58 = sbr.rel (0) target = $region65
  $region64: #{encoder_forward.1} parent=0 // pred_region
    _
  $region65: #{encoder_forward.1} parent=0 // pred_fallthru
    _
  // Predicated region
  $region66: #{encoder_forward.1} parent=0 // pred_check
    _
  $region67: #{encoder_forward.1} parent=0 // pred_check_branch
    %60 = sbr.rel (0) target = $region69
  $region68: #{encoder_forward.1} parent=0 // pred_region
    _
  $region69: #{encoder_forward.1} parent=0 // pred_fallthru
    _
  // Predicated region
  $region70: #{encoder_forward.1} parent=0 // pred_check
    _
  $region71: #{encoder_forward.1} parent=0 // pred_check_branch
    %62 = sbr.rel (0) target = $region73
  $region72: #{encoder_forward.1} parent=0 // pred_region
    _
  $region73: #{encoder_forward.1} parent=0 // pred_fallthru
    _
  // Predicated region
  $region74: #{encoder_forward.1} parent=0 // pred_check
    _
  $region75: #{encoder_forward.1} parent=0 // pred_check_branch
    %64 = sbr.rel (0) target = $region77
  $region76: #{encoder_forward.1} parent=0 // pred_region
    _
  $region77: #{encoder_forward.1} parent=0 // pred_fallthru
    _
  // Predicated region
  $region78: #{encoder_forward.1} parent=0 // pred_check
    _
  $region79: #{encoder_forward.1} parent=0 // pred_check_branch
    %66 = sbr.rel (0) target = $region81
  $region80: #{encoder_forward.1} parent=0 // pred_region
    _
  $region81: #{encoder_forward.1} parent=0 // pred_fallthru
    _
  // Predicated region
  $region82: #{encoder_forward.1} parent=0 // pred_check
    _
  $region83: #{encoder_forward.1} parent=0 // pred_check_branch
    %68 = sbr.rel (0) target = $region85
  $region84: #{encoder_forward.1} parent=0 // pred_region
    _
  $region85: #{encoder_forward.1} parent=0 // pred_fallthru
    _
  // Predicated region
  $region86: #{encoder_forward.1} parent=0 // pred_check
    _
  $region87: #{encoder_forward.1} parent=0 // pred_check_branch
    %70 = sbr.rel (0) target = $region89
  $region88: #{encoder_forward.1} parent=0 // pred_region
    _
  $region89: #{encoder_forward.1} parent=0 // pred_fallthru
    _
  %v71 = vld [vmem:[%s0] sm:$0xff]
  %v72 = vld [vmem:[%s5] sm:$0xff]
  %v73 = vld [vmem:[%s5 + $0x8] sm:$0xff]
  %v74 = vld [vmem:[%s5 + $0x10] sm:$0xff]
  %v75 = vld [vmem:[%s5 + $0x18] sm:$0xff]
  %v76 = vld [vmem:[%s5 + $0x20] sm:$0xff]
  %v77 = vld [vmem:[%s5 + $0x28] sm:$0xff]
  %v78 = vld [vmem:[%s5 + $0x30] sm:$0xff]
  %v79 = vld [vmem:[%s5 + $0x38] sm:$0xff]
  %v80 = vld [vmem:[%s6] sm:$0x1]
  %v82 = vlaneseq
  %v83 = vshrl.u32 %v82, 7
  %v84 = vsub.s32 0, %v83
  %v85 = vrot.slane %v80, %v84
  %vm87 = vcmask 523264
  %v89 = vsel %vm87, %v71, 0
  %91 = vmatprep.subr.mxu0 0.0
  %92 = vmatpush1.msra.mxu0 %v72
  %93 = vmatprep.subr.mxu0 0.0
  %94 = vmatpush1.msra.mxu0 %v73
  %95 = vmatprep.subr.mxu0 0.0
  %96 = vmatpush1.msra.mxu0 %v74
  %97 = vmatprep.subr.mxu0 0.0
  %98 = vmatpush1.msra.mxu0 %v75
  %99 = vmatprep.subr.mxu0 0.0
  %100 = vmatpush1.msra.mxu0 %v76
  %101 = vmatprep.subr.mxu0 0.0
  %102 = vmatpush1.msra.mxu0 %v77
  %103 = vmatprep.subr.mxu0 0.0
  %104 = vmatpush1.msra.mxu0 %v78
  %105 = vmatprep.subr.mxu0 0.0
  %106 = vmatpush1.msra.mxu0 %v79
  %107 = vmatprep.subr.mxu0 0.0
  %108 = vmatpush1.msra.mxu0 0.0
  %109 = vmatprep.subr.mxu0 0.0
  %110 = vmatpush1.msra.mxu0 0.0
  %111 = vmatprep.subr.mxu0 0.0
  %112 = vmatpush1.msra.mxu0 0.0
  %113 = vmatprep.subr.mxu0 0.0
  %114 = vmatpush1.msra.mxu0 0.0
  %115 = vmatprep.subr.mxu0 0.0
  %116 = vmatpush1.msra.mxu0 0.0
  %117 = vmatprep.subr.mxu0 0.0
  %118 = vmatpush1.msra.mxu0 0.0
  %119 = vmatprep.subr.mxu0 0.0
  %120 = vmatpush1.msra.mxu0 0.0
  %121 = vmatprep.subr.mxu0 0.0
  %122 = vmatpush1.msra.mxu0 0.0
  %123 = vmatprep.subr.mxu0 0.0
  %124 = vmatpush1.msra.mxu0 0.0
  %125 = vmatprep.subr.mxu0 0.0
  %126 = vmatpush1.msra.mxu0 0.0
  %127 = vmatprep.subr.mxu0 0.0
  %128 = vmatpush1.msra.mxu0 0.0
  %129 = vmatprep.subr.mxu0 0.0
  %130 = vmatpush1.msra.mxu0 0.0
  %131 = vmatprep.subr.mxu0 0.0
  %132 = vmatpush1.msra.mxu0 0.0
  %133 = vmatprep.subr.mxu0 0.0
  %134 = vmatpush1.msra.mxu0 0.0
  %135 = vmatprep.subr.mxu0 0.0
  %136 = vmatpush1.msra.mxu0 0.0
  %137 = vmatprep.subr.mxu0 0.0
  %138 = vmatpush1.msra.mxu0 0.0
  %139 = vmatprep.subr.mxu0 0.0
  %140 = vmatpush1.msra.mxu0 0.0
  %141 = vmatprep.subr.mxu0 0.0
  %142 = vmatpush1.msra.mxu0 0.0
  %143 = vmatprep.subr.mxu0 0.0
  %144 = vmatpush1.msra.mxu0 0.0
  %145 = vmatprep.subr.mxu0 0.0
  %146 = vmatpush1.msra.mxu0 0.0
  %147 = vmatprep.subr.mxu0 0.0
  %148 = vmatpush1.msra.mxu0 0.0
  %149 = vmatprep.subr.mxu0 0.0
  %150 = vmatpush1.msra.mxu0 0.0
  %151 = vmatprep.subr.mxu0 0.0
  %152 = vmatpush1.msra.mxu0 0.0
  %153 = vmatprep.subr.mxu0 0.0
  %154 = vmatpush1.msra.mxu0 0.0
  %155 = vmatprep.mubr.f32.mxu0 0.0
  %156 = vmatmul.mubr.f32.gmra.mrb[0].mxu0 %v89
  %v157 = vpop.f32.mrb[0].mxu0
  %v158 = vadd.f32 %v85, %v157
  %v159 = vpop.f32.mrb[0].mxu0
  %160 = vdwg.mxu0
  %v161 = vld [vmem:[%s13] sm:$0xff]
  %v162 = vld [vmem:[%s13 + $0x8] sm:$0xff]
  %v163 = vld [vmem:[%s13 + $0x10] sm:$0xff]
  %v164 = vld [vmem:[%s13 + $0x18] sm:$0xff]
  %vm165 = vcmask 261120
  %v167 = vsel %vm165, %v158, 0
  %169 = vmatprep.subr.mxu0 0.0
  %170 = vmatpush1.msra.mxu0 %v161
  %171 = vmatprep.subr.mxu0 0.0
  %172 = vmatpush1.msra.mxu0 %v162
  %173 = vmatprep.subr.mxu0 0.0
  %174 = vmatpush1.msra.mxu0 %v163
  %175 = vmatprep.subr.mxu0 0.0
  %176 = vmatpush1.msra.mxu0 %v164
  %177 = vmatprep.subr.mxu0 0.0
  %178 = vmatpush1.msra.mxu0 0.0
  %179 = vmatprep.subr.mxu0 0.0
  %180 = vmatpush1.msra.mxu0 0.0
  %181 = vmatprep.subr.mxu0 0.0
  %182 = vmatpush1.msra.mxu0 0.0
  %183 = vmatprep.subr.mxu0 0.0
  %184 = vmatpush1.msra.mxu0 0.0
  %185 = vmatprep.subr.mxu0 0.0
  %186 = vmatpush1.msra.mxu0 0.0
  %187 = vmatprep.subr.mxu0 0.0
  %188 = vmatpush1.msra.mxu0 0.0
  %189 = vmatprep.subr.mxu0 0.0
  %190 = vmatpush1.msra.mxu0 0.0
  %191 = vmatprep.subr.mxu0 0.0
  %192 = vmatpush1.msra.mxu0 0.0
  %193 = vmatprep.subr.mxu0 0.0
  %194 = vmatpush1.msra.mxu0 0.0
  %195 = vmatprep.subr.mxu0 0.0
  %196 = vmatpush1.msra.mxu0 0.0
  %197 = vmatprep.subr.mxu0 0.0
  %198 = vmatpush1.msra.mxu0 0.0
  %199 = vmatprep.subr.mxu0 0.0
  %200 = vmatpush1.msra.mxu0 0.0
  %201 = vmatprep.subr.mxu0 0.0
  %202 = vmatpush1.msra.mxu0 0.0
  %203 = vmatprep.subr.mxu0 0.0
  %204 = vmatpush1.msra.mxu0 0.0
  %205 = vmatprep.subr.mxu0 0.0
  %206 = vmatpush1.msra.mxu0 0.0
  %207 = vmatprep.subr.mxu0 0.0
  %208 = vmatpush1.msra.mxu0 0.0
  %209 = vmatprep.subr.mxu0 0.0
  %210 = vmatpush1.msra.mxu0 0.0
  %211 = vmatprep.subr.mxu0 0.0
  %212 = vmatpush1.msra.mxu0 0.0
  %213 = vmatprep.subr.mxu0 0.0
  %214 = vmatpush1.msra.mxu0 0.0
  %215 = vmatprep.subr.mxu0 0.0
  %216 = vmatpush1.msra.mxu0 0.0
  %217 = vmatprep.subr.mxu0 0.0
  %218 = vmatpush1.msra.mxu0 0.0
  %219 = vmatprep.subr.mxu0 0.0
  %220 = vmatpush1.msra.mxu0 0.0
  %221 = vmatprep.subr.mxu0 0.0
  %222 = vmatpush1.msra.mxu0 0.0
  %223 = vmatprep.subr.mxu0 0.0
  %224 = vmatpush1.msra.mxu0 0.0
  %225 = vmatprep.subr.mxu0 0.0
  %226 = vmatpush1.msra.mxu0 0.0
  %227 = vmatprep.subr.mxu0 0.0
  %228 = vmatpush1.msra.mxu0 0.0
  %229 = vmatprep.subr.mxu0 0.0
  %230 = vmatpush1.msra.mxu0 0.0
  %231 = vmatprep.subr.mxu0 0.0
  %232 = vmatpush1.msra.mxu0 0.0
  %233 = vmatprep.mubr.f32.mxu0 0.0
  %234 = vmatmul.mubr.f32.gmra.mrb[0].mxu0 %v167
  %v235 = vpop.f32.mrb[0].mxu0
  %v236 = vadd.f32 0.0, %v235
  %v237 = vpop.f32.mrb[0].mxu0
  %238 = vdwg.mxu0
  %v239 = vld [vmem:[%s15] sm:$0x1]
  %v241 = vlaneseq
  %v242 = vshrl.u32 %v241, 7
  %v243 = vsub.s32 0, %v242
  %v244 = vrot.slane %v239, %v243
  %v246 = vadd.f32 %v236, %v244
  %v247 = vld [vmem:[%s7] sm:$0xff]
  %v248 = vld [vmem:[%s7 + $0x8] sm:$0xff]
  %v249 = vld [vmem:[%s7 + $0x10] sm:$0xff]
  %v250 = vld [vmem:[%s7 + $0x18] sm:$0xff]
  %v251 = vld [vmem:[%s9] sm:$0x1]
  %v252 = vld [vmem:[%s1] sm:$0xff]
  %v253 = vld [vmem:[%s1 + $0x8] sm:$0xff]
  %v255 = vlaneseq
  %v256 = vshrl.u32 %v255, 7
  %v257 = vsub.s32 0, %v256
  %v258 = vrot.slane %v251, %v257
  %v261 = vsel %vm165, %v252, 0
  %v264 = vsel %vm165, %v253, 0
  %266 = vmatprep.subr.mxu0 0.0
  %267 = vmatpush1.msra.mxu0 %v247
  %268 = vmatprep.subr.mxu0 0.0
  %269 = vmatpush1.msra.mxu0 %v248
  %270 = vmatprep.subr.mxu0 0.0
  %271 = vmatpush1.msra.mxu0 %v249
  %272 = vmatprep.subr.mxu0 0.0
  %273 = vmatpush1.msra.mxu0 %v250
  %274 = vmatprep.subr.mxu0 0.0
  %275 = vmatpush1.msra.mxu0 0.0
  %276 = vmatprep.subr.mxu0 0.0
  %277 = vmatpush1.msra.mxu0 0.0
  %278 = vmatprep.subr.mxu0 0.0
  %279 = vmatpush1.msra.mxu0 0.0
  %280 = vmatprep.subr.mxu0 0.0
  %281 = vmatpush1.msra.mxu0 0.0
  %282 = vmatprep.subr.mxu0 0.0
  %283 = vmatpush1.msra.mxu0 0.0
  %284 = vmatprep.subr.mxu0 0.0
  %285 = vmatpush1.msra.mxu0 0.0
  %286 = vmatprep.subr.mxu0 0.0
  %287 = vmatpush1.msra.mxu0 0.0
  %288 = vmatprep.subr.mxu0 0.0
  %289 = vmatpush1.msra.mxu0 0.0
  %290 = vmatprep.subr.mxu0 0.0
  %291 = vmatpush1.msra.mxu0 0.0
  %292 = vmatprep.subr.mxu0 0.0
  %293 = vmatpush1.msra.mxu0 0.0
  %294 = vmatprep.subr.mxu0 0.0
  %295 = vmatpush1.msra.mxu0 0.0
  %296 = vmatprep.subr.mxu0 0.0
  %297 = vmatpush1.msra.mxu0 0.0
  %298 = vmatprep.subr.mxu0 0.0
  %299 = vmatpush1.msra.mxu0 0.0
  %300 = vmatprep.subr.mxu0 0.0
  %301 = vmatpush1.msra.mxu0 0.0
  %302 = vmatprep.subr.mxu0 0.0
  %303 = vmatpush1.msra.mxu0 0.0
  %304 = vmatprep.subr.mxu0 0.0
  %305 = vmatpush1.msra.mxu0 0.0
  %306 = vmatprep.subr.mxu0 0.0
  %307 = vmatpush1.msra.mxu0 0.0
  %308 = vmatprep.subr.mxu0 0.0
  %309 = vmatpush1.msra.mxu0 0.0
  %310 = vmatprep.subr.mxu0 0.0
  %311 = vmatpush1.msra.mxu0 0.0
  %312 = vmatprep.subr.mxu0 0.0
  %313 = vmatpush1.msra.mxu0 0.0
  %314 = vmatprep.subr.mxu0 0.0
  %315 = vmatpush1.msra.mxu0 0.0
  %316 = vmatprep.subr.mxu0 0.0
  %317 = vmatpush1.msra.mxu0 0.0
  %318 = vmatprep.subr.mxu0 0.0
  %319 = vmatpush1.msra.mxu0 0.0
  %320 = vmatprep.subr.mxu0 0.0
  %321 = vmatpush1.msra.mxu0 0.0
  %322 = vmatprep.subr.mxu0 0.0
  %323 = vmatpush1.msra.mxu0 0.0
  %324 = vmatprep.subr.mxu0 0.0
  %325 = vmatpush1.msra.mxu0 0.0
  %326 = vmatprep.subr.mxu0 0.0
  %327 = vmatpush1.msra.mxu0 0.0
  %328 = vmatprep.subr.mxu0 0.0
  %329 = vmatpush1.msra.mxu0 0.0
  %330 = vmatprep.mubr.f32.mxu0 0.0
  %331 = vmatmul.mubr.f32.gmra.mrb[0].mxu0 %v261
  %v332 = vpop.f32.mrb[0].mxu0
  %v333 = vadd.f32 %v258, %v332
  %v334 = vpop.f32.mrb[0].mxu0
  %335 = vmatprep.mubr.f32.mxu0 0.0
  %336 = vmatmul.mubr.f32.gmra.mrb[0].mxu0 %v264
  %v337 = vpop.f32.mrb[0].mxu0
  %v338 = vadd.f32 %v258, %v337
  %v339 = vpop.f32.mrb[0].mxu0
  %340 = vdwg.mxu0
  %341 = vst [vmem:[#allocation2] sm:$0xff] %v333
  %342 = vst [vmem:[#allocation2 + $0x8] sm:$0xff] %v338
  %s343 = scalar_lea.vmem %s1, 16
  %v344 = vld [vmem:[%s343] sm:$0xff]
  %v345 = vld [vmem:[%s343 + $0x8] sm:$0xff]
  %v347 = vsel %vm165, %v344, 0
  %v350 = vsel %vm165, %v345, 0
  %352 = vmatprep.subr.mxu0 0.0
  %353 = vmatpush1.msra.mxu0 %v247
  %354 = vmatprep.subr.mxu0 0.0
  %355 = vmatpush1.msra.mxu0 %v248
  %356 = vmatprep.subr.mxu0 0.0
  %357 = vmatpush1.msra.mxu0 %v249
  %358 = vmatprep.subr.mxu0 0.0
  %359 = vmatpush1.msra.mxu0 %v250
  %360 = vmatprep.subr.mxu0 0.0
  %361 = vmatpush1.msra.mxu0 0.0
  %362 = vmatprep.subr.mxu0 0.0
  %363 = vmatpush1.msra.mxu0 0.0
  %364 = vmatprep.subr.mxu0 0.0
  %365 = vmatpush1.msra.mxu0 0.0
  %366 = vmatprep.subr.mxu0 0.0
  %367 = vmatpush1.msra.mxu0 0.0
  %368 = vmatprep.subr.mxu0 0.0
  %369 = vmatpush1.msra.mxu0 0.0
  %370 = vmatprep.subr.mxu0 0.0
  %371 = vmatpush1.msra.mxu0 0.0
  %372 = vmatprep.subr.mxu0 0.0
  %373 = vmatpush1.msra.mxu0 0.0
  %374 = vmatprep.subr.mxu0 0.0
  %375 = vmatpush1.msra.mxu0 0.0
  %376 = vmatprep.subr.mxu0 0.0
  %377 = vmatpush1.msra.mxu0 0.0
  %378 = vmatprep.subr.mxu0 0.0
  %379 = vmatpush1.msra.mxu0 0.0
  %380 = vmatprep.subr.mxu0 0.0
  %381 = vmatpush1.msra.mxu0 0.0
  %382 = vmatprep.subr.mxu0 0.0
  %383 = vmatpush1.msra.mxu0 0.0
  %384 = vmatprep.subr.mxu0 0.0
  %385 = vmatpush1.msra.mxu0 0.0
  %386 = vmatprep.subr.mxu0 0.0
  %387 = vmatpush1.msra.mxu0 0.0
  %388 = vmatprep.subr.mxu0 0.0
  %389 = vmatpush1.msra.mxu0 0.0
  %390 = vmatprep.subr.mxu0 0.0
  %391 = vmatpush1.msra.mxu0 0.0
  %392 = vmatprep.subr.mxu0 0.0
  %393 = vmatpush1.msra.mxu0 0.0
  %394 = vmatprep.subr.mxu0 0.0
  %395 = vmatpush1.msra.mxu0 0.0
  %396 = vmatprep.subr.mxu0 0.0
  %397 = vmatpush1.msra.mxu0 0.0
  %398 = vmatprep.subr.mxu0 0.0
  %399 = vmatpush1.msra.mxu0 0.0
  %400 = vmatprep.subr.mxu0 0.0
  %401 = vmatpush1.msra.mxu0 0.0
  %402 = vmatprep.subr.mxu0 0.0
  %403 = vmatpush1.msra.mxu0 0.0
  %404 = vmatprep.subr.mxu0 0.0
  %405 = vmatpush1.msra.mxu0 0.0
  %406 = vmatprep.subr.mxu0 0.0
  %407 = vmatpush1.msra.mxu0 0.0
  %408 = vmatprep.subr.mxu0 0.0
  %409 = vmatpush1.msra.mxu0 0.0
  %410 = vmatprep.subr.mxu0 0.0
  %411 = vmatpush1.msra.mxu0 0.0
  %412 = vmatprep.subr.mxu0 0.0
  %413 = vmatpush1.msra.mxu0 0.0
  %414 = vmatprep.subr.mxu0 0.0
  %415 = vmatpush1.msra.mxu0 0.0
  %416 = vmatprep.mubr.f32.mxu0 0.0
  %417 = vmatmul.mubr.f32.gmra.mrb[0].mxu0 %v347
  %v418 = vpop.f32.mrb[0].mxu0
  %v419 = vadd.f32 %v258, %v418
  %v420 = vpop.f32.mrb[0].mxu0
  %421 = vmatprep.mubr.f32.mxu0 0.0
  %422 = vmatmul.mubr.f32.gmra.mrb[0].mxu0 %v350
  %v423 = vpop.f32.mrb[0].mxu0
  %v424 = vadd.f32 %v258, %v423
  %v425 = vpop.f32.mrb[0].mxu0
  %426 = vdwg.mxu0
  %s427 = scalar_lea.vmem [#allocation2], 16
  %428 = vst [vmem:[%s427] sm:$0xff] %v419
  %429 = vst [vmem:[%s427 + $0x8] sm:$0xff] %v424
  %s430 = scalar_lea.vmem %s1, 32
  %v431 = vld [vmem:[%s430] sm:$0xff]
  %v432 = vld [vmem:[%s430 + $0x8] sm:$0xff]
  %v434 = vsel %vm165, %v431, 0
  %v437 = vsel %vm165, %v432, 0
  %439 = vmatprep.subr.mxu0 0.0
  %440 = vmatpush1.msra.mxu0 %v247
  %441 = vmatprep.subr.mxu0 0.0
  %442 = vmatpush1.msra.mxu0 %v248
  %443 = vmatprep.subr.mxu0 0.0
  %444 = vmatpush1.msra.mxu0 %v249
  %445 = vmatprep.subr.mxu0 0.0
  %446 = vmatpush1.msra.mxu0 %v250
  %447 = vmatprep.subr.mxu0 0.0
  %448 = vmatpush1.msra.mxu0 0.0
  %449 = vmatprep.subr.mxu0 0.0
  %450 = vmatpush1.msra.mxu0 0.0
  %451 = vmatprep.subr.mxu0 0.0
  %452 = vmatpush1.msra.mxu0 0.0
  %453 = vmatprep.subr.mxu0 0.0
  %454 = vmatpush1.msra.mxu0 0.0
  %455 = vmatprep.subr.mxu0 0.0
  %456 = vmatpush1.msra.mxu0 0.0
  %457 = vmatprep.subr.mxu0 0.0
  %458 = vmatpush1.msra.mxu0 0.0
  %459 = vmatprep.subr.mxu0 0.0
  %460 = vmatpush1.msra.mxu0 0.0
  %461 = vmatprep.subr.mxu0 0.0
  %462 = vmatpush1.msra.mxu0 0.0
  %463 = vmatprep.subr.mxu0 0.0
  %464 = vmatpush1.msra.mxu0 0.0
  %465 = vmatprep.subr.mxu0 0.0
  %466 = vmatpush1.msra.mxu0 0.0
  %467 = vmatprep.subr.mxu0 0.0
  %468 = vmatpush1.msra.mxu0 0.0
  %469 = vmatprep.subr.mxu0 0.0
  %470 = vmatpush1.msra.mxu0 0.0
  %471 = vmatprep.subr.mxu0 0.0
  %472 = vmatpush1.msra.mxu0 0.0
  %473 = vmatprep.subr.mxu0 0.0
  %474 = vmatpush1.msra.mxu0 0.0
  %475 = vmatprep.subr.mxu0 0.0
  %476 = vmatpush1.msra.mxu0 0.0
  %477 = vmatprep.subr.mxu0 0.0
  %478 = vmatpush1.msra.mxu0 0.0
  %479 = vmatprep.subr.mxu0 0.0
  %480 = vmatpush1.msra.mxu0 0.0
  %481 = vmatprep.subr.mxu0 0.0
  %482 = vmatpush1.msra.mxu0 0.0
  %483 = vmatprep.subr.mxu0 0.0
  %484 = vmatpush1.msra.mxu0 0.0
  %485 = vmatprep.subr.mxu0 0.0
  %486 = vmatpush1.msra.mxu0 0.0
  %487 = vmatprep.subr.mxu0 0.0
  %488 = vmatpush1.msra.mxu0 0.0
  %489 = vmatprep.subr.mxu0 0.0
  %490 = vmatpush1.msra.mxu0 0.0
  %491 = vmatprep.subr.mxu0 0.0
  %492 = vmatpush1.msra.mxu0 0.0
  %493 = vmatprep.subr.mxu0 0.0
  %494 = vmatpush1.msra.mxu0 0.0
  %495 = vmatprep.subr.mxu0 0.0
  %496 = vmatpush1.msra.mxu0 0.0
  %497 = vmatprep.subr.mxu0 0.0
  %498 = vmatpush1.msra.mxu0 0.0
  %499 = vmatprep.subr.mxu0 0.0
  %500 = vmatpush1.msra.mxu0 0.0
  %501 = vmatprep.subr.mxu0 0.0
  %502 = vmatpush1.msra.mxu0 0.0
  %503 = vmatprep.mubr.f32.mxu0 0.0
  %504 = vmatmul.mubr.f32.gmra.mrb[0].mxu0 %v434
  %v505 = vpop.f32.mrb[0].mxu0
  %v506 = vadd.f32 %v258, %v505
  %v507 = vpop.f32.mrb[0].mxu0
  %508 = vmatprep.mubr.f32.mxu0 0.0
  %509 = vmatmul.mubr.f32.gmra.mrb[0].mxu0 %v437
  %v510 = vpop.f32.mrb[0].mxu0
  %v511 = vadd.f32 %v258, %v510
  %v512 = vpop.f32.mrb[0].mxu0
  %513 = vdwg.mxu0
  %s514 = scalar_lea.vmem [#allocation2], 32
  %515 = vst [vmem:[%s514] sm:$0xff] %v506
  %516 = vst [vmem:[%s514 + $0x8] sm:$0xff] %v511
  %s517 = scalar_lea.vmem %s1, 48
  %v518 = vld [vmem:[%s517] sm:$0xff]
  %v519 = vld [vmem:[%s517 + $0x8] sm:$0xff]
  %v521 = vsel %vm165, %v518, 0
  %v524 = vsel %vm165, %v519, 0
  %526 = vmatprep.subr.mxu0 0.0
  %527 = vmatpush1.msra.mxu0 %v247
  %528 = vmatprep.subr.mxu0 0.0
  %529 = vmatpush1.msra.mxu0 %v248
  %530 = vmatprep.subr.mxu0 0.0
  %531 = vmatpush1.msra.mxu0 %v249
  %532 = vmatprep.subr.mxu0 0.0
  %533 = vmatpush1.msra.mxu0 %v250
  %534 = vmatprep.subr.mxu0 0.0
  %535 = vmatpush1.msra.mxu0 0.0
  %536 = vmatprep.subr.mxu0 0.0
  %537 = vmatpush1.msra.mxu0 0.0
  %538 = vmatprep.subr.mxu0 0.0
  %539 = vmatpush1.msra.mxu0 0.0
  %540 = vmatprep.subr.mxu0 0.0
  %541 = vmatpush1.msra.mxu0 0.0
  %542 = vmatprep.subr.mxu0 0.0
  %543 = vmatpush1.msra.mxu0 0.0
  %544 = vmatprep.subr.mxu0 0.0
  %545 = vmatpush1.msra.mxu0 0.0
  %546 = vmatprep.subr.mxu0 0.0
  %547 = vmatpush1.msra.mxu0 0.0
  %548 = vmatprep.subr.mxu0 0.0
  %549 = vmatpush1.msra.mxu0 0.0
  %550 = vmatprep.subr.mxu0 0.0
  %551 = vmatpush1.msra.mxu0 0.0
  %552 = vmatprep.subr.mxu0 0.0
  %553 = vmatpush1.msra.mxu0 0.0
  %554 = vmatprep.subr.mxu0 0.0
  %555 = vmatpush1.msra.mxu0 0.0
  %556 = vmatprep.subr.mxu0 0.0
  %557 = vmatpush1.msra.mxu0 0.0
  %558 = vmatprep.subr.mxu0 0.0
  %559 = vmatpush1.msra.mxu0 0.0
  %560 = vmatprep.subr.mxu0 0.0
  %561 = vmatpush1.msra.mxu0 0.0
  %562 = vmatprep.subr.mxu0 0.0
  %563 = vmatpush1.msra.mxu0 0.0
  %564 = vmatprep.subr.mxu0 0.0
  %565 = vmatpush1.msra.mxu0 0.0
  %566 = vmatprep.subr.mxu0 0.0
  %567 = vmatpush1.msra.mxu0 0.0
  %568 = vmatprep.subr.mxu0 0.0
  %569 = vmatpush1.msra.mxu0 0.0
  %570 = vmatprep.subr.mxu0 0.0
  %571 = vmatpush1.msra.mxu0 0.0
  %572 = vmatprep.subr.mxu0 0.0
  %573 = vmatpush1.msra.mxu0 0.0
  %574 = vmatprep.subr.mxu0 0.0
  %575 = vmatpush1.msra.mxu0 0.0
  %576 = vmatprep.subr.mxu0 0.0
  %577 = vmatpush1.msra.mxu0 0.0
  %578 = vmatprep.subr.mxu0 0.0
  %579 = vmatpush1.msra.mxu0 0.0
  %580 = vmatprep.subr.mxu0 0.0
  %581 = vmatpush1.msra.mxu0 0.0
  %582 = vmatprep.subr.mxu0 0.0
  %583 = vmatpush1.msra.mxu0 0.0
  %584 = vmatprep.subr.mxu0 0.0
  %585 = vmatpush1.msra.mxu0 0.0
  %586 = vmatprep.subr.mxu0 0.0
  %587 = vmatpush1.msra.mxu0 0.0
  %588 = vmatprep.subr.mxu0 0.0
  %589 = vmatpush1.msra.mxu0 0.0
  %590 = vmatprep.mubr.f32.mxu0 0.0
  %591 = vmatmul.mubr.f32.gmra.mrb[0].mxu0 %v521
  %v592 = vpop.f32.mrb[0].mxu0
  %v593 = vadd.f32 %v258, %v592
  %v594 = vpop.f32.mrb[0].mxu0
  %595 = vmatprep.mubr.f32.mxu0 0.0
  %596 = vmatmul.mubr.f32.gmra.mrb[0].mxu0 %v524
  %v597 = vpop.f32.mrb[0].mxu0
  %v598 = vadd.f32 %v258, %v597
  %v599 = vpop.f32.mrb[0].mxu0
  %600 = vdwg.mxu0
  %s601 = scalar_lea.vmem [#allocation2], 48
  %602 = vst [vmem:[%s601] sm:$0xff] %v593
  %603 = vst [vmem:[%s601 + $0x8] sm:$0xff] %v598
  %s604 = scalar_lea.vmem %s1, 64
  %v605 = vld [vmem:[%s604] sm:$0xff]
  %v606 = vld [vmem:[%s604 + $0x8] sm:$0xff]
  %v608 = vsel %vm165, %v605, 0
  %v611 = vsel %vm165, %v606, 0
  %613 = vmatprep.subr.mxu0 0.0
  %614 = vmatpush1.msra.mxu0 %v247
  %615 = vmatprep.subr.mxu0 0.0
  %616 = vmatpush1.msra.mxu0 %v248
  %617 = vmatprep.subr.mxu0 0.0
  %618 = vmatpush1.msra.mxu0 %v249
  %619 = vmatprep.subr.mxu0 0.0
  %620 = vmatpush1.msra.mxu0 %v250
  %621 = vmatprep.subr.mxu0 0.0
  %622 = vmatpush1.msra.mxu0 0.0
  %623 = vmatprep.subr.mxu0 0.0
  %624 = vmatpush1.msra.mxu0 0.0
  %625 = vmatprep.subr.mxu0 0.0
  %626 = vmatpush1.msra.mxu0 0.0
  %627 = vmatprep.subr.mxu0 0.0
  %628 = vmatpush1.msra.mxu0 0.0
  %629 = vmatprep.subr.mxu0 0.0
  %630 = vmatpush1.msra.mxu0 0.0
  %631 = vmatprep.subr.mxu0 0.0
  %632 = vmatpush1.msra.mxu0 0.0
  %633 = vmatprep.subr.mxu0 0.0
  %634 = vmatpush1.msra.mxu0 0.0
  %635 = vmatprep.subr.mxu0 0.0
  %636 = vmatpush1.msra.mxu0 0.0
  %637 = vmatprep.subr.mxu0 0.0
  %638 = vmatpush1.msra.mxu0 0.0
  %639 = vmatprep.subr.mxu0 0.0
  %640 = vmatpush1.msra.mxu0 0.0
  %641 = vmatprep.subr.mxu0 0.0
  %642 = vmatpush1.msra.mxu0 0.0
  %643 = vmatprep.subr.mxu0 0.0
  %644 = vmatpush1.msra.mxu0 0.0
  %645 = vmatprep.subr.mxu0 0.0
  %646 = vmatpush1.msra.mxu0 0.0
  %647 = vmatprep.subr.mxu0 0.0
  %648 = vmatpush1.msra.mxu0 0.0
  %649 = vmatprep.subr.mxu0 0.0
  %650 = vmatpush1.msra.mxu0 0.0
  %651 = vmatprep.subr.mxu0 0.0
  %652 = vmatpush1.msra.mxu0 0.0
  %653 = vmatprep.subr.mxu0 0.0
  %654 = vmatpush1.msra.mxu0 0.0
  %655 = vmatprep.subr.mxu0 0.0
  %656 = vmatpush1.msra.mxu0 0.0
  %657 = vmatprep.subr.mxu0 0.0
  %658 = vmatpush1.msra.mxu0 0.0
  %659 = vmatprep.subr.mxu0 0.0
  %660 = vmatpush1.msra.mxu0 0.0
  %661 = vmatprep.subr.mxu0 0.0
  %662 = vmatpush1.msra.mxu0 0.0
  %663 = vmatprep.subr.mxu0 0.0
  %664 = vmatpush1.msra.mxu0 0.0
  %665 = vmatprep.subr.mxu0 0.0
  %666 = vmatpush1.msra.mxu0 0.0
  %667 = vmatprep.subr.mxu0 0.0
  %668 = vmatpush1.msra.mxu0 0.0
  %669 = vmatprep.subr.mxu0 0.0
  %670 = vmatpush1.msra.mxu0 0.0
  %671 = vmatprep.subr.mxu0 0.0
  %672 = vmatpush1.msra.mxu0 0.0
  %673 = vmatprep.subr.mxu0 0.0
  %674 = vmatpush1.msra.mxu0 0.0
  %675 = vmatprep.subr.mxu0 0.0
  %676 = vmatpush1.msra.mxu0 0.0
  %677 = vmatprep.mubr.f32.mxu0 0.0
  %678 = vmatmul.mubr.f32.gmra.mrb[0].mxu0 %v608
  %v679 = vpop.f32.mrb[0].mxu0
  %v680 = vadd.f32 %v258, %v679
  %v681 = vpop.f32.mrb[0].mxu0
  %682 = vmatprep.mubr.f32.mxu0 0.0
  %683 = vmatmul.mubr.f32.gmra.mrb[0].mxu0 %v611
  %v684 = vpop.f32.mrb[0].mxu0
  %v685 = vadd.f32 %v258, %v684
  %v686 = vpop.f32.mrb[0].mxu0
  %687 = vdwg.mxu0
  %s688 = scalar_lea.vmem [#allocation2], 64
  %689 = vst [vmem:[%s688] sm:$0xff] %v680
  %690 = vst [vmem:[%s688 + $0x8] sm:$0xff] %v685
  %s691 = scalar_lea.vmem %s1, 80
  %v692 = vld [vmem:[%s691] sm:$0xff]
  %v693 = vld [vmem:[%s691 + $0x8] sm:$0xff]
  %v695 = vsel %vm165, %v692, 0
  %v698 = vsel %vm165, %v693, 0
  %700 = vmatprep.subr.mxu0 0.0
  %701 = vmatpush1.msra.mxu0 %v247
  %702 = vmatprep.subr.mxu0 0.0
  %703 = vmatpush1.msra.mxu0 %v248
  %704 = vmatprep.subr.mxu0 0.0
  %705 = vmatpush1.msra.mxu0 %v249
  %706 = vmatprep.subr.mxu0 0.0
  %707 = vmatpush1.msra.mxu0 %v250
  %708 = vmatprep.subr.mxu0 0.0
  %709 = vmatpush1.msra.mxu0 0.0
  %710 = vmatprep.subr.mxu0 0.0
  %711 = vmatpush1.msra.mxu0 0.0
  %712 = vmatprep.subr.mxu0 0.0
  %713 = vmatpush1.msra.mxu0 0.0
  %714 = vmatprep.subr.mxu0 0.0
  %715 = vmatpush1.msra.mxu0 0.0
  %716 = vmatprep.subr.mxu0 0.0
  %717 = vmatpush1.msra.mxu0 0.0
  %718 = vmatprep.subr.mxu0 0.0
  %719 = vmatpush1.msra.mxu0 0.0
  %720 = vmatprep.subr.mxu0 0.0
  %721 = vmatpush1.msra.mxu0 0.0
  %722 = vmatprep.subr.mxu0 0.0
  %723 = vmatpush1.msra.mxu0 0.0
  %724 = vmatprep.subr.mxu0 0.0
  %725 = vmatpush1.msra.mxu0 0.0
  %726 = vmatprep.subr.mxu0 0.0
  %727 = vmatpush1.msra.mxu0 0.0
  %728 = vmatprep.subr.mxu0 0.0
  %729 = vmatpush1.msra.mxu0 0.0
  %730 = vmatprep.subr.mxu0 0.0
  %731 = vmatpush1.msra.mxu0 0.0
  %732 = vmatprep.subr.mxu0 0.0
  %733 = vmatpush1.msra.mxu0 0.0
  %734 = vmatprep.subr.mxu0 0.0
  %735 = vmatpush1.msra.mxu0 0.0
  %736 = vmatprep.subr.mxu0 0.0
  %737 = vmatpush1.msra.mxu0 0.0
  %738 = vmatprep.subr.mxu0 0.0
  %739 = vmatpush1.msra.mxu0 0.0
  %740 = vmatprep.subr.mxu0 0.0
  %741 = vmatpush1.msra.mxu0 0.0
  %742 = vmatprep.subr.mxu0 0.0
  %743 = vmatpush1.msra.mxu0 0.0
  %744 = vmatprep.subr.mxu0 0.0
  %745 = vmatpush1.msra.mxu0 0.0
  %746 = vmatprep.subr.mxu0 0.0
  %747 = vmatpush1.msra.mxu0 0.0
  %748 = vmatprep.subr.mxu0 0.0
  %749 = vmatpush1.msra.mxu0 0.0
  %750 = vmatprep.subr.mxu0 0.0
  %751 = vmatpush1.msra.mxu0 0.0
  %752 = vmatprep.subr.mxu0 0.0
  %753 = vmatpush1.msra.mxu0 0.0
  %754 = vmatprep.subr.mxu0 0.0
  %755 = vmatpush1.msra.mxu0 0.0
  %756 = vmatprep.subr.mxu0 0.0
  %757 = vmatpush1.msra.mxu0 0.0
  %758 = vmatprep.subr.mxu0 0.0
  %759 = vmatpush1.msra.mxu0 0.0
  %760 = vmatprep.subr.mxu0 0.0
  %761 = vmatpush1.msra.mxu0 0.0
  %762 = vmatprep.subr.mxu0 0.0
  %763 = vmatpush1.msra.mxu0 0.0
  %764 = vmatprep.mubr.f32.mxu0 0.0
  %765 = vmatmul.mubr.f32.gmra.mrb[0].mxu0 %v695
  %v766 = vpop.f32.mrb[0].mxu0
  %v767 = vadd.f32 %v258, %v766
  %v768 = vpop.f32.mrb[0].mxu0
  %769 = vmatprep.mubr.f32.mxu0 0.0
  %770 = vmatmul.mubr.f32.gmra.mrb[0].mxu0 %v698
  %v771 = vpop.f32.mrb[0].mxu0
  %v772 = vadd.f32 %v258, %v771
  %v773 = vpop.f32.mrb[0].mxu0
  %774 = vdwg.mxu0
  %s775 = scalar_lea.vmem [#allocation2], 80
  %776 = vst [vmem:[%s775] sm:$0xff] %v767
  %777 = vst [vmem:[%s775 + $0x8] sm:$0xff] %v772
  %s778 = scalar_lea.vmem %s1, 96
  %v779 = vld [vmem:[%s778] sm:$0xff]
  %v780 = vld [vmem:[%s778 + $0x8] sm:$0xff]
  %v782 = vsel %vm165, %v779, 0
  %v785 = vsel %vm165, %v780, 0
  %787 = vmatprep.subr.mxu0 0.0
  %788 = vmatpush1.msra.mxu0 %v247
  %789 = vmatprep.subr.mxu0 0.0
  %790 = vmatpush1.msra.mxu0 %v248
  %791 = vmatprep.subr.mxu0 0.0
  %792 = vmatpush1.msra.mxu0 %v249
  %793 = vmatprep.subr.mxu0 0.0
  %794 = vmatpush1.msra.mxu0 %v250
  %795 = vmatprep.subr.mxu0 0.0
  %796 = vmatpush1.msra.mxu0 0.0
  %797 = vmatprep.subr.mxu0 0.0
  %798 = vmatpush1.msra.mxu0 0.0
  %799 = vmatprep.subr.mxu0 0.0
  %800 = vmatpush1.msra.mxu0 0.0
  %801 = vmatprep.subr.mxu0 0.0
  %802 = vmatpush1.msra.mxu0 0.0
  %803 = vmatprep.subr.mxu0 0.0
  %804 = vmatpush1.msra.mxu0 0.0
  %805 = vmatprep.subr.mxu0 0.0
  %806 = vmatpush1.msra.mxu0 0.0
  %807 = vmatprep.subr.mxu0 0.0
  %808 = vmatpush1.msra.mxu0 0.0
  %809 = vmatprep.subr.mxu0 0.0
  %810 = vmatpush1.msra.mxu0 0.0
  %811 = vmatprep.subr.mxu0 0.0
  %812 = vmatpush1.msra.mxu0 0.0
  %813 = vmatprep.subr.mxu0 0.0
  %814 = vmatpush1.msra.mxu0 0.0
  %815 = vmatprep.subr.mxu0 0.0
  %816 = vmatpush1.msra.mxu0 0.0
  %817 = vmatprep.subr.mxu0 0.0
  %818 = vmatpush1.msra.mxu0 0.0
  %819 = vmatprep.subr.mxu0 0.0
  %820 = vmatpush1.msra.mxu0 0.0
  %821 = vmatprep.subr.mxu0 0.0
  %822 = vmatpush1.msra.mxu0 0.0
  %823 = vmatprep.subr.mxu0 0.0
  %824 = vmatpush1.msra.mxu0 0.0
  %825 = vmatprep.subr.mxu0 0.0
  %826 = vmatpush1.msra.mxu0 0.0
  %827 = vmatprep.subr.mxu0 0.0
  %828 = vmatpush1.msra.mxu0 0.0
  %829 = vmatprep.subr.mxu0 0.0
  %830 = vmatpush1.msra.mxu0 0.0
  %831 = vmatprep.subr.mxu0 0.0
  %832 = vmatpush1.msra.mxu0 0.0
  %833 = vmatprep.subr.mxu0 0.0
  %834 = vmatpush1.msra.mxu0 0.0
  %835 = vmatprep.subr.mxu0 0.0
  %836 = vmatpush1.msra.mxu0 0.0
  %837 = vmatprep.subr.mxu0 0.0
  %838 = vmatpush1.msra.mxu0 0.0
  %839 = vmatprep.subr.mxu0 0.0
  %840 = vmatpush1.msra.mxu0 0.0
  %841 = vmatprep.subr.mxu0 0.0
  %842 = vmatpush1.msra.mxu0 0.0
  %843 = vmatprep.subr.mxu0 0.0
  %844 = vmatpush1.msra.mxu0 0.0
  %845 = vmatprep.subr.mxu0 0.0
  %846 = vmatpush1.msra.mxu0 0.0
  %847 = vmatprep.subr.mxu0 0.0
  %848 = vmatpush1.msra.mxu0 0.0
  %849 = vmatprep.subr.mxu0 0.0
  %850 = vmatpush1.msra.mxu0 0.0
  %851 = vmatprep.mubr.f32.mxu0 0.0
  %852 = vmatmul.mubr.f32.gmra.mrb[0].mxu0 %v782
  %v853 = vpop.f32.mrb[0].mxu0
  %v854 = vadd.f32 %v258, %v853
  %v855 = vpop.f32.mrb[0].mxu0
  %856 = vmatprep.mubr.f32.mxu0 0.0
  %857 = vmatmul.mubr.f32.gmra.mrb[0].mxu0 %v785
  %v858 = vpop.f32.mrb[0].mxu0
  %v859 = vadd.f32 %v258, %v858
  %v860 = vpop.f32.mrb[0].mxu0
  %861 = vdwg.mxu0
  %s862 = scalar_lea.vmem [#allocation2], 96
  %863 = vst [vmem:[%s862] sm:$0xff] %v854
  %864 = vst [vmem:[%s862 + $0x8] sm:$0xff] %v859
  %s865 = scalar_lea.vmem %s1, 112
  %v866 = vld [vmem:[%s865] sm:$0xff]
  %v867 = vld [vmem:[%s865 + $0x8] sm:$0xff]
  %v869 = vsel %vm165, %v866, 0
  %v872 = vsel %vm165, %v867, 0
  %874 = vmatprep.subr.mxu0 0.0
  %875 = vmatpush1.msra.mxu0 %v247
  %876 = vmatprep.subr.mxu0 0.0
  %877 = vmatpush1.msra.mxu0 %v248
  %878 = vmatprep.subr.mxu0 0.0
  %879 = vmatpush1.msra.mxu0 %v249
  %880 = vmatprep.subr.mxu0 0.0
  %881 = vmatpush1.msra.mxu0 %v250
  %882 = vmatprep.subr.mxu0 0.0
  %883 = vmatpush1.msra.mxu0 0.0
  %884 = vmatprep.subr.mxu0 0.0
  %885 = vmatpush1.msra.mxu0 0.0
  %886 = vmatprep.subr.mxu0 0.0
  %887 = vmatpush1.msra.mxu0 0.0
  %888 = vmatprep.subr.mxu0 0.0
  %889 = vmatpush1.msra.mxu0 0.0
  %890 = vmatprep.subr.mxu0 0.0
  %891 = vmatpush1.msra.mxu0 0.0
  %892 = vmatprep.subr.mxu0 0.0
  %893 = vmatpush1.msra.mxu0 0.0
  %894 = vmatprep.subr.mxu0 0.0
  %895 = vmatpush1.msra.mxu0 0.0
  %896 = vmatprep.subr.mxu0 0.0
  %897 = vmatpush1.msra.mxu0 0.0
  %898 = vmatprep.subr.mxu0 0.0
  %899 = vmatpush1.msra.mxu0 0.0
  %900 = vmatprep.subr.mxu0 0.0
  %901 = vmatpush1.msra.mxu0 0.0
  %902 = vmatprep.subr.mxu0 0.0
  %903 = vmatpush1.msra.mxu0 0.0
  %904 = vmatprep.subr.mxu0 0.0
  %905 = vmatpush1.msra.mxu0 0.0
  %906 = vmatprep.subr.mxu0 0.0
  %907 = vmatpush1.msra.mxu0 0.0
  %908 = vmatprep.subr.mxu0 0.0
  %909 = vmatpush1.msra.mxu0 0.0
  %910 = vmatprep.subr.mxu0 0.0
  %911 = vmatpush1.msra.mxu0 0.0
  %912 = vmatprep.subr.mxu0 0.0
  %913 = vmatpush1.msra.mxu0 0.0
  %914 = vmatprep.subr.mxu0 0.0
  %915 = vmatpush1.msra.mxu0 0.0
  %916 = vmatprep.subr.mxu0 0.0
  %917 = vmatpush1.msra.mxu0 0.0
  %918 = vmatprep.subr.mxu0 0.0
  %919 = vmatpush1.msra.mxu0 0.0
  %920 = vmatprep.subr.mxu0 0.0
  %921 = vmatpush1.msra.mxu0 0.0
  %922 = vmatprep.subr.mxu0 0.0
  %923 = vmatpush1.msra.mxu0 0.0
  %924 = vmatprep.subr.mxu0 0.0
  %925 = vmatpush1.msra.mxu0 0.0
  %926 = vmatprep.subr.mxu0 0.0
  %927 = vmatpush1.msra.mxu0 0.0
  %928 = vmatprep.subr.mxu0 0.0
  %929 = vmatpush1.msra.mxu0 0.0
  %930 = vmatprep.subr.mxu0 0.0
  %931 = vmatpush1.msra.mxu0 0.0
  %932 = vmatprep.subr.mxu0 0.0
  %933 = vmatpush1.msra.mxu0 0.0
  %934 = vmatprep.subr.mxu0 0.0
  %935 = vmatpush1.msra.mxu0 0.0
  %936 = vmatprep.subr.mxu0 0.0
  %937 = vmatpush1.msra.mxu0 0.0
  %938 = vmatprep.mubr.f32.mxu0 0.0
  %939 = vmatmul.mubr.f32.gmra.mrb[0].mxu0 %v869
  %v940 = vpop.f32.mrb[0].mxu0
  %v941 = vadd.f32 %v258, %v940
  %v942 = vpop.f32.mrb[0].mxu0
  %943 = vmatprep.mubr.f32.mxu0 0.0
  %944 = vmatmul.mubr.f32.gmra.mrb[0].mxu0 %v872
  %v945 = vpop.f32.mrb[0].mxu0
  %v946 = vadd.f32 %v258, %v945
  %v947 = vpop.f32.mrb[0].mxu0
  %948 = vdwg.mxu0
  %s949 = scalar_lea.vmem [#allocation2], 112
  %950 = vst [vmem:[%s949] sm:$0xff] %v941
  %951 = vst [vmem:[%s949 + $0x8] sm:$0xff] %v946
  %s952 = scalar_lea.vmem %s1, 128
  %v953 = vld [vmem:[%s952] sm:$0xff]
  %v954 = vld [vmem:[%s952 + $0x8] sm:$0xff]
  %v956 = vsel %vm165, %v953, 0
  %v959 = vsel %vm165, %v954, 0
  %961 = vmatprep.subr.mxu0 0.0
  %962 = vmatpush1.msra.mxu0 %v247
  %963 = vmatprep.subr.mxu0 0.0
  %964 = vmatpush1.msra.mxu0 %v248
  %965 = vmatprep.subr.mxu0 0.0
  %966 = vmatpush1.msra.mxu0 %v249
  %967 = vmatprep.subr.mxu0 0.0
  %968 = vmatpush1.msra.mxu0 %v250
  %969 = vmatprep.subr.mxu0 0.0
  %970 = vmatpush1.msra.mxu0 0.0
  %971 = vmatprep.subr.mxu0 0.0
  %972 = vmatpush1.msra.mxu0 0.0
  %973 = vmatprep.subr.mxu0 0.0
  %974 = vmatpush1.msra.mxu0 0.0
  %975 = vmatprep.subr.mxu0 0.0
  %976 = vmatpush1.msra.mxu0 0.0
  %977 = vmatprep.subr.mxu0 0.0
  %978 = vmatpush1.msra.mxu0 0.0
  %979 = vmatprep.subr.mxu0 0.0
  %980 = vmatpush1.msra.mxu0 0.0
  %981 = vmatprep.subr.mxu0 0.0
  %982 = vmatpush1.msra.mxu0 0.0
  %983 = vmatprep.subr.mxu0 0.0
  %984 = vmatpush1.msra.mxu0 0.0
  %985 = vmatprep.subr.mxu0 0.0
  %986 = vmatpush1.msra.mxu0 0.0
  %987 = vmatprep.subr.mxu0 0.0
  %988 = vmatpush1.msra.mxu0 0.0
  %989 = vmatprep.subr.mxu0 0.0
  %990 = vmatpush1.msra.mxu0 0.0
  %991 = vmatprep.subr.mxu0 0.0
  %992 = vmatpush1.msra.mxu0 0.0
  %993 = vmatprep.subr.mxu0 0.0
  %994 = vmatpush1.msra.mxu0 0.0
  %995 = vmatprep.subr.mxu0 0.0
  %996 = vmatpush1.msra.mxu0 0.0
  %997 = vmatprep.subr.mxu0 0.0
  %998 = vmatpush1.msra.mxu0 0.0
  %999 = vmatprep.subr.mxu0 0.0
  %1000 = vmatpush1.msra.mxu0 0.0
  %1001 = vmatprep.subr.mxu0 0.0
  %1002 = vmatpush1.msra.mxu0 0.0
  %1003 = vmatprep.subr.mxu0 0.0
  %1004 = vmatpush1.msra.mxu0 0.0
  %1005 = vmatprep.subr.mxu0 0.0
  %1006 = vmatpush1.msra.mxu0 0.0
  %1007 = vmatprep.subr.mxu0 0.0
  %1008 = vmatpush1.msra.mxu0 0.0
  %1009 = vmatprep.subr.mxu0 0.0
  %1010 = vmatpush1.msra.mxu0 0.0
  %1011 = vmatprep.subr.mxu0 0.0
  %1012 = vmatpush1.msra.mxu0 0.0
  %1013 = vmatprep.subr.mxu0 0.0
  %1014 = vmatpush1.msra.mxu0 0.0
  %1015 = vmatprep.subr.mxu0 0.0
  %1016 = vmatpush1.msra.mxu0 0.0
  %1017 = vmatprep.subr.mxu0 0.0
  %1018 = vmatpush1.msra.mxu0 0.0
  %1019 = vmatprep.subr.mxu0 0.0
  %1020 = vmatpush1.msra.mxu0 0.0
  %1021 = vmatprep.subr.mxu0 0.0
  %1022 = vmatpush1.msra.mxu0 0.0
  %1023 = vmatprep.subr.mxu0 0.0
  %1024 = vmatpush1.msra.mxu0 0.0
  %1025 = vmatprep.mubr.f32.mxu0 0.0
  %1026 = vmatmul.mubr.f32.gmra.mrb[0].mxu0 %v956
  %v1027 = vpop.f32.mrb[0].mxu0
  %v1028 = vadd.f32 %v258, %v1027
  %v1029 = vpop.f32.mrb[0].mxu0
  %1030 = vmatprep.mubr.f32.mxu0 0.0
  %1031 = vmatmul.mubr.f32.gmra.mrb[0].mxu0 %v959
  %v1032 = vpop.f32.mrb[0].mxu0
  %v1033 = vadd.f32 %v258, %v1032
  %v1034 = vpop.f32.mrb[0].mxu0
  %1035 = vdwg.mxu0
  %s1036 = scalar_lea.vmem [#allocation2], 128
  %1037 = vst [vmem:[%s1036] sm:$0xff] %v1028
  %1038 = vst [vmem:[%s1036 + $0x8] sm:$0xff] %v1033
  %s1039 = scalar_lea.vmem %s1, 144
  %v1040 = vld [vmem:[%s1039] sm:$0xff]
  %v1041 = vld [vmem:[%s1039 + $0x8] sm:$0xff]
  %v1043 = vsel %vm165, %v1040, 0
  %v1046 = vsel %vm165, %v1041, 0
  %1048 = vmatprep.subr.mxu0 0.0
  %1049 = vmatpush1.msra.mxu0 %v247
  %1050 = vmatprep.subr.mxu0 0.0
  %1051 = vmatpush1.msra.mxu0 %v248
  %1052 = vmatprep.subr.mxu0 0.0
  %1053 = vmatpush1.msra.mxu0 %v249
  %1054 = vmatprep.subr.mxu0 0.0
  %1055 = vmatpush1.msra.mxu0 %v250
  %1056 = vmatprep.subr.mxu0 0.0
  %1057 = vmatpush1.msra.mxu0 0.0
  %1058 = vmatprep.subr.mxu0 0.0
  %1059 = vmatpush1.msra.mxu0 0.0
  %1060 = vmatprep.subr.mxu0 0.0
  %1061 = vmatpush1.msra.mxu0 0.0
  %1062 = vmatprep.subr.mxu0 0.0
  %1063 = vmatpush1.msra.mxu0 0.0
  %1064 = vmatprep.subr.mxu0 0.0
  %1065 = vmatpush1.msra.mxu0 0.0
  %1066 = vmatprep.subr.mxu0 0.0
  %1067 = vmatpush1.msra.mxu0 0.0
  %1068 = vmatprep.subr.mxu0 0.0
  %1069 = vmatpush1.msra.mxu0 0.0
  %1070 = vmatprep.subr.mxu0 0.0
  %1071 = vmatpush1.msra.mxu0 0.0
  %1072 = vmatprep.subr.mxu0 0.0
  %1073 = vmatpush1.msra.mxu0 0.0
  %1074 = vmatprep.subr.mxu0 0.0
  %1075 = vmatpush1.msra.mxu0 0.0
  %1076 = vmatprep.subr.mxu0 0.0
  %1077 = vmatpush1.msra.mxu0 0.0
  %1078 = vmatprep.subr.mxu0 0.0
  %1079 = vmatpush1.msra.mxu0 0.0
  %1080 = vmatprep.subr.mxu0 0.0
  %1081 = vmatpush1.msra.mxu0 0.0
  %1082 = vmatprep.subr.mxu0 0.0
  %1083 = vmatpush1.msra.mxu0 0.0
  %1084 = vmatprep.subr.mxu0 0.0
  %1085 = vmatpush1.msra.mxu0 0.0
  %1086 = vmatprep.subr.mxu0 0.0
  %1087 = vmatpush1.msra.mxu0 0.0
  %1088 = vmatprep.subr.mxu0 0.0
  %1089 = vmatpush1.msra.mxu0 0.0
  %1090 = vmatprep.subr.mxu0 0.0
  %1091 = vmatpush1.msra.mxu0 0.0
  %1092 = vmatprep.subr.mxu0 0.0
  %1093 = vmatpush1.msra.mxu0 0.0
  %1094 = vmatprep.subr.mxu0 0.0
  %1095 = vmatpush1.msra.mxu0 0.0
  %1096 = vmatprep.subr.mxu0 0.0
  %1097 = vmatpush1.msra.mxu0 0.0
  %1098 = vmatprep.subr.mxu0 0.0
  %1099 = vmatpush1.msra.mxu0 0.0
  %1100 = vmatprep.subr.mxu0 0.0
  %1101 = vmatpush1.msra.mxu0 0.0
  %1102 = vmatprep.subr.mxu0 0.0
  %1103 = vmatpush1.msra.mxu0 0.0
  %1104 = vmatprep.subr.mxu0 0.0
  %1105 = vmatpush1.msra.mxu0 0.0
  %1106 = vmatprep.subr.mxu0 0.0
  %1107 = vmatpush1.msra.mxu0 0.0
  %1108 = vmatprep.subr.mxu0 0.0
  %1109 = vmatpush1.msra.mxu0 0.0
  %1110 = vmatprep.subr.mxu0 0.0
  %1111 = vmatpush1.msra.mxu0 0.0
  %1112 = vmatprep.mubr.f32.mxu0 0.0
  %1113 = vmatmul.mubr.f32.gmra.mrb[0].mxu0 %v1043
  %v1114 = vpop.f32.mrb[0].mxu0
  %v1115 = vadd.f32 %v258, %v1114
  %v1116 = vpop.f32.mrb[0].mxu0
  %1117 = vmatprep.mubr.f32.mxu0 0.0
  %1118 = vmatmul.mubr.f32.gmra.mrb[0].mxu0 %v1046
  %v1119 = vpop.f32.mrb[0].mxu0
  %v1120 = vadd.f32 %v258, %v1119
  %v1121 = vpop.f32.mrb[0].mxu0
  %1122 = vdwg.mxu0
  %s1123 = scalar_lea.vmem [#allocation2], 144
  %1124 = vst [vmem:[%s1123] sm:$0xff] %v1115
  %1125 = vst [vmem:[%s1123 + $0x8] sm:$0xff] %v1120
  %s1126 = scalar_lea.vmem %s1, 160
  %v1127 = vld [vmem:[%s1126] sm:$0xff]
  %v1128 = vld [vmem:[%s1126 + $0x8] sm:$0xff]
  %v1130 = vsel %vm165, %v1127, 0
  %v1133 = vsel %vm165, %v1128, 0
  %1135 = vmatprep.subr.mxu0 0.0
  %1136 = vmatpush1.msra.mxu0 %v247
  %1137 = vmatprep.subr.mxu0 0.0
  %1138 = vmatpush1.msra.mxu0 %v248
  %1139 = vmatprep.subr.mxu0 0.0
  %1140 = vmatpush1.msra.mxu0 %v249
  %1141 = vmatprep.subr.mxu0 0.0
  %1142 = vmatpush1.msra.mxu0 %v250
  %1143 = vmatprep.subr.mxu0 0.0
  %1144 = vmatpush1.msra.mxu0 0.0
  %1145 = vmatprep.subr.mxu0 0.0
  %1146 = vmatpush1.msra.mxu0 0.0
  %1147 = vmatprep.subr.mxu0 0.0
  %1148 = vmatpush1.msra.mxu0 0.0
  %1149 = vmatprep.subr.mxu0 0.0
  %1150 = vmatpush1.msra.mxu0 0.0
  %1151 = vmatprep.subr.mxu0 0.0
  %1152 = vmatpush1.msra.mxu0 0.0
  %1153 = vmatprep.subr.mxu0 0.0
  %1154 = vmatpush1.msra.mxu0 0.0
  %1155 = vmatprep.subr.mxu0 0.0
  %1156 = vmatpush1.msra.mxu0 0.0
  %1157 = vmatprep.subr.mxu0 0.0
  %1158 = vmatpush1.msra.mxu0 0.0
  %1159 = vmatprep.subr.mxu0 0.0
  %1160 = vmatpush1.msra.mxu0 0.0
  %1161 = vmatprep.subr.mxu0 0.0
  %1162 = vmatpush1.msra.mxu0 0.0
  %1163 = vmatprep.subr.mxu0 0.0
  %1164 = vmatpush1.msra.mxu0 0.0
  %1165 = vmatprep.subr.mxu0 0.0
  %1166 = vmatpush1.msra.mxu0 0.0
  %1167 = vmatprep.subr.mxu0 0.0
  %1168 = vmatpush1.msra.mxu0 0.0
  %1169 = vmatprep.subr.mxu0 0.0
  %1170 = vmatpush1.msra.mxu0 0.0
  %1171 = vmatprep.subr.mxu0 0.0
  %1172 = vmatpush1.msra.mxu0 0.0
  %1173 = vmatprep.subr.mxu0 0.0
  %1174 = vmatpush1.msra.mxu0 0.0
  %1175 = vmatprep.subr.mxu0 0.0
  %1176 = vmatpush1.msra.mxu0 0.0
  %1177 = vmatprep.subr.mxu0 0.0
  %1178 = vmatpush1.msra.mxu0 0.0
  %1179 = vmatprep.subr.mxu0 0.0
  %1180 = vmatpush1.msra.mxu0 0.0
  %1181 = vmatprep.subr.mxu0 0.0
  %1182 = vmatpush1.msra.mxu0 0.0
  %1183 = vmatprep.subr.mxu0 0.0
  %1184 = vmatpush1.msra.mxu0 0.0
  %1185 = vmatprep.subr.mxu0 0.0
  %1186 = vmatpush1.msra.mxu0 0.0
  %1187 = vmatprep.subr.mxu0 0.0
  %1188 = vmatpush1.msra.mxu0 0.0
  %1189 = vmatprep.subr.mxu0 0.0
  %1190 = vmatpush1.msra.mxu0 0.0
  %1191 = vmatprep.subr.mxu0 0.0
  %1192 = vmatpush1.msra.mxu0 0.0
  %1193 = vmatprep.subr.mxu0 0.0
  %1194 = vmatpush1.msra.mxu0 0.0
  %1195 = vmatprep.subr.mxu0 0.0
  %1196 = vmatpush1.msra.mxu0 0.0
  %1197 = vmatprep.subr.mxu0 0.0
  %1198 = vmatpush1.msra.mxu0 0.0
  %1199 = vmatprep.mubr.f32.mxu0 0.0
  %1200 = vmatmul.mubr.f32.gmra.mrb[0].mxu0 %v1130
  %v1201 = vpop.f32.mrb[0].mxu0
  %v1202 = vadd.f32 %v258, %v1201
  %v1203 = vpop.f32.mrb[0].mxu0
  %1204 = vmatprep.mubr.f32.mxu0 0.0
  %1205 = vmatmul.mubr.f32.gmra.mrb[0].mxu0 %v1133
  %v1206 = vpop.f32.mrb[0].mxu0
  %v1207 = vadd.f32 %v258, %v1206
  %v1208 = vpop.f32.mrb[0].mxu0
  %1209 = vdwg.mxu0
  %s1210 = scalar_lea.vmem [#allocation2], 160
  %1211 = vst [vmem:[%s1210] sm:$0xff] %v1202
  %1212 = vst [vmem:[%s1210 + $0x8] sm:$0xff] %v1207
  %s1213 = scalar_lea.vmem %s1, 176
  %v1214 = vld [vmem:[%s1213] sm:$0xff]
  %v1215 = vld [vmem:[%s1213 + $0x8] sm:$0xff]
  %v1217 = vsel %vm165, %v1214, 0
  %v1220 = vsel %vm165, %v1215, 0
  %1222 = vmatprep.subr.mxu0 0.0
  %1223 = vmatpush1.msra.mxu0 %v247
  %1224 = vmatprep.subr.mxu0 0.0
  %1225 = vmatpush1.msra.mxu0 %v248
  %1226 = vmatprep.subr.mxu0 0.0
  %1227 = vmatpush1.msra.mxu0 %v249
  %1228 = vmatprep.subr.mxu0 0.0
  %1229 = vmatpush1.msra.mxu0 %v250
  %1230 = vmatprep.subr.mxu0 0.0
  %1231 = vmatpush1.msra.mxu0 0.0
  %1232 = vmatprep.subr.mxu0 0.0
  %1233 = vmatpush1.msra.mxu0 0.0
  %1234 = vmatprep.subr.mxu0 0.0
  %1235 = vmatpush1.msra.mxu0 0.0
  %1236 = vmatprep.subr.mxu0 0.0
  %1237 = vmatpush1.msra.mxu0 0.0
  %1238 = vmatprep.subr.mxu0 0.0
  %1239 = vmatpush1.msra.mxu0 0.0
  %1240 = vmatprep.subr.mxu0 0.0
  %1241 = vmatpush1.msra.mxu0 0.0
  %1242 = vmatprep.subr.mxu0 0.0
  %1243 = vmatpush1.msra.mxu0 0.0
  %1244 = vmatprep.subr.mxu0 0.0
  %1245 = vmatpush1.msra.mxu0 0.0
  %1246 = vmatprep.subr.mxu0 0.0
  %1247 = vmatpush1.msra.mxu0 0.0
  %1248 = vmatprep.subr.mxu0 0.0
  %1249 = vmatpush1.msra.mxu0 0.0
  %1250 = vmatprep.subr.mxu0 0.0
  %1251 = vmatpush1.msra.mxu0 0.0
  %1252 = vmatprep.subr.mxu0 0.0
  %1253 = vmatpush1.msra.mxu0 0.0
  %1254 = vmatprep.subr.mxu0 0.0
  %1255 = vmatpush1.msra.mxu0 0.0
  %1256 = vmatprep.subr.mxu0 0.0
  %1257 = vmatpush1.msra.mxu0 0.0
  %1258 = vmatprep.subr.mxu0 0.0
  %1259 = vmatpush1.msra.mxu0 0.0
  %1260 = vmatprep.subr.mxu0 0.0
  %1261 = vmatpush1.msra.mxu0 0.0
  %1262 = vmatprep.subr.mxu0 0.0
  %1263 = vmatpush1.msra.mxu0 0.0
  %1264 = vmatprep.subr.mxu0 0.0
  %1265 = vmatpush1.msra.mxu0 0.0
  %1266 = vmatprep.subr.mxu0 0.0
  %1267 = vmatpush1.msra.mxu0 0.0
  %1268 = vmatprep.subr.mxu0 0.0
  %1269 = vmatpush1.msra.mxu0 0.0
  %1270 = vmatprep.subr.mxu0 0.0
  %1271 = vmatpush1.msra.mxu0 0.0
  %1272 = vmatprep.subr.mxu0 0.0
  %1273 = vmatpush1.msra.mxu0 0.0
  %1274 = vmatprep.subr.mxu0 0.0
  %1275 = vmatpush1.msra.mxu0 0.0
  %1276 = vmatprep.subr.mxu0 0.0
  %1277 = vmatpush1.msra.mxu0 0.0
  %1278 = vmatprep.subr.mxu0 0.0
  %1279 = vmatpush1.msra.mxu0 0.0
  %1280 = vmatprep.subr.mxu0 0.0
  %1281 = vmatpush1.msra.mxu0 0.0
  %1282 = vmatprep.subr.mxu0 0.0
  %1283 = vmatpush1.msra.mxu0 0.0
  %1284 = vmatprep.subr.mxu0 0.0
  %1285 = vmatpush1.msra.mxu0 0.0
  %1286 = vmatprep.mubr.f32.mxu0 0.0
  %1287 = vmatmul.mubr.f32.gmra.mrb[0].mxu0 %v1217
  %v1288 = vpop.f32.mrb[0].mxu0
  %v1289 = vadd.f32 %v258, %v1288
  %v1290 = vpop.f32.mrb[0].mxu0
  %1291 = vmatprep.mubr.f32.mxu0 0.0
  %1292 = vmatmul.mubr.f32.gmra.mrb[0].mxu0 %v1220
  %v1293 = vpop.f32.mrb[0].mxu0
  %v1294 = vadd.f32 %v258, %v1293
  %v1295 = vpop.f32.mrb[0].mxu0
  %1296 = vdwg.mxu0
  %s1297 = scalar_lea.vmem [#allocation2], 176
  %1298 = vst [vmem:[%s1297] sm:$0xff] %v1289
  %1299 = vst [vmem:[%s1297 + $0x8] sm:$0xff] %v1294
  %s1300 = scalar_lea.vmem %s1, 192
  %v1301 = vld [vmem:[%s1300] sm:$0xff]
  %v1302 = vld [vmem:[%s1300 + $0x8] sm:$0xff]
  %v1304 = vsel %vm165, %v1301, 0
  %v1307 = vsel %vm165, %v1302, 0
  %1309 = vmatprep.subr.mxu0 0.0
  %1310 = vmatpush1.msra.mxu0 %v247
  %1311 = vmatprep.subr.mxu0 0.0
  %1312 = vmatpush1.msra.mxu0 %v248
  %1313 = vmatprep.subr.mxu0 0.0
  %1314 = vmatpush1.msra.mxu0 %v249
  %1315 = vmatprep.subr.mxu0 0.0
  %1316 = vmatpush1.msra.mxu0 %v250
  %1317 = vmatprep.subr.mxu0 0.0
  %1318 = vmatpush1.msra.mxu0 0.0
  %1319 = vmatprep.subr.mxu0 0.0
  %1320 = vmatpush1.msra.mxu0 0.0
  %1321 = vmatprep.subr.mxu0 0.0
  %1322 = vmatpush1.msra.mxu0 0.0
  %1323 = vmatprep.subr.mxu0 0.0
  %1324 = vmatpush1.msra.mxu0 0.0
  %1325 = vmatprep.subr.mxu0 0.0
  %1326 = vmatpush1.msra.mxu0 0.0
  %1327 = vmatprep.subr.mxu0 0.0
  %1328 = vmatpush1.msra.mxu0 0.0
  %1329 = vmatprep.subr.mxu0 0.0
  %1330 = vmatpush1.msra.mxu0 0.0
  %1331 = vmatprep.subr.mxu0 0.0
  %1332 = vmatpush1.msra.mxu0 0.0
  %1333 = vmatprep.subr.mxu0 0.0
  %1334 = vmatpush1.msra.mxu0 0.0
  %1335 = vmatprep.subr.mxu0 0.0
  %1336 = vmatpush1.msra.mxu0 0.0
  %1337 = vmatprep.subr.mxu0 0.0
  %1338 = vmatpush1.msra.mxu0 0.0
  %1339 = vmatprep.subr.mxu0 0.0
  %1340 = vmatpush1.msra.mxu0 0.0
  %1341 = vmatprep.subr.mxu0 0.0
  %1342 = vmatpush1.msra.mxu0 0.0
  %1343 = vmatprep.subr.mxu0 0.0
  %1344 = vmatpush1.msra.mxu0 0.0
  %1345 = vmatprep.subr.mxu0 0.0
  %1346 = vmatpush1.msra.mxu0 0.0
  %1347 = vmatprep.subr.mxu0 0.0
  %1348 = vmatpush1.msra.mxu0 0.0
  %1349 = vmatprep.subr.mxu0 0.0
  %1350 = vmatpush1.msra.mxu0 0.0
  %1351 = vmatprep.subr.mxu0 0.0
  %1352 = vmatpush1.msra.mxu0 0.0
  %1353 = vmatprep.subr.mxu0 0.0
  %1354 = vmatpush1.msra.mxu0 0.0
  %1355 = vmatprep.subr.mxu0 0.0
  %1356 = vmatpush1.msra.mxu0 0.0
  %1357 = vmatprep.subr.mxu0 0.0
  %1358 = vmatpush1.msra.mxu0 0.0
  %1359 = vmatprep.subr.mxu0 0.0
  %1360 = vmatpush1.msra.mxu0 0.0
  %1361 = vmatprep.subr.mxu0 0.0
  %1362 = vmatpush1.msra.mxu0 0.0
  %1363 = vmatprep.subr.mxu0 0.0
  %1364 = vmatpush1.msra.mxu0 0.0
  %1365 = vmatprep.subr.mxu0 0.0
  %1366 = vmatpush1.msra.mxu0 0.0
  %1367 = vmatprep.subr.mxu0 0.0
  %1368 = vmatpush1.msra.mxu0 0.0
  %1369 = vmatprep.subr.mxu0 0.0
  %1370 = vmatpush1.msra.mxu0 0.0
  %1371 = vmatprep.subr.mxu0 0.0
  %1372 = vmatpush1.msra.mxu0 0.0
  %1373 = vmatprep.mubr.f32.mxu0 0.0
  %1374 = vmatmul.mubr.f32.gmra.mrb[0].mxu0 %v1304
  %v1375 = vpop.f32.mrb[0].mxu0
  %v1376 = vadd.f32 %v258, %v1375
  %v1377 = vpop.f32.mrb[0].mxu0
  %1378 = vmatprep.mubr.f32.mxu0 0.0
  %1379 = vmatmul.mubr.f32.gmra.mrb[0].mxu0 %v1307
  %v1380 = vpop.f32.mrb[0].mxu0
  %v1381 = vadd.f32 %v258, %v1380
  %v1382 = vpop.f32.mrb[0].mxu0
  %1383 = vdwg.mxu0
  %s1384 = scalar_lea.vmem [#allocation2], 192
  %1385 = vst [vmem:[%s1384] sm:$0xff] %v1376
  %1386 = vst [vmem:[%s1384 + $0x8] sm:$0xff] %v1381
  %v1387 = vld [vmem:[%s12] sm:$0xff]
  %v1388 = vld [vmem:[%s12 + $0x8] sm:$0xff]
  %v1389 = vld [vmem:[%s12 + $0x10] sm:$0xff]
  %v1390 = vld [vmem:[%s12 + $0x18] sm:$0xff]
  %v1391 = vld [vmem:[%s3] sm:$0xff]
  %v1392 = vld [vmem:[%s3 + $0x8] sm:$0xff]
  %v1394 = vsel %vm165, %v1391, 0
  %v1397 = vsel %vm165, %v1392, 0
  %1399 = vmatprep.subr.mxu0 0.0
  %1400 = vmatpush1.msra.mxu0 %v1387
  %1401 = vmatprep.subr.mxu0 0.0
  %1402 = vmatpush1.msra.mxu0 %v1388
  %1403 = vmatprep.subr.mxu0 0.0
  %1404 = vmatpush1.msra.mxu0 %v1389
  %1405 = vmatprep.subr.mxu0 0.0
  %1406 = vmatpush1.msra.mxu0 %v1390
  %1407 = vmatprep.subr.mxu0 0.0
  %1408 = vmatpush1.msra.mxu0 0.0
  %1409 = vmatprep.subr.mxu0 0.0
  %1410 = vmatpush1.msra.mxu0 0.0
  %1411 = vmatprep.subr.mxu0 0.0
  %1412 = vmatpush1.msra.mxu0 0.0
  %1413 = vmatprep.subr.mxu0 0.0
  %1414 = vmatpush1.msra.mxu0 0.0
  %1415 = vmatprep.subr.mxu0 0.0
  %1416 = vmatpush1.msra.mxu0 0.0
  %1417 = vmatprep.subr.mxu0 0.0
  %1418 = vmatpush1.msra.mxu0 0.0
  %1419 = vmatprep.subr.mxu0 0.0
  %1420 = vmatpush1.msra.mxu0 0.0
  %1421 = vmatprep.subr.mxu0 0.0
  %1422 = vmatpush1.msra.mxu0 0.0
  %1423 = vmatprep.subr.mxu0 0.0
  %1424 = vmatpush1.msra.mxu0 0.0
  %1425 = vmatprep.subr.mxu0 0.0
  %1426 = vmatpush1.msra.mxu0 0.0
  %1427 = vmatprep.subr.mxu0 0.0
  %1428 = vmatpush1.msra.mxu0 0.0
  %1429 = vmatprep.subr.mxu0 0.0
  %1430 = vmatpush1.msra.mxu0 0.0
  %1431 = vmatprep.subr.mxu0 0.0
  %1432 = vmatpush1.msra.mxu0 0.0
  %1433 = vmatprep.subr.mxu0 0.0
  %1434 = vmatpush1.msra.mxu0 0.0
  %1435 = vmatprep.subr.mxu0 0.0
  %1436 = vmatpush1.msra.mxu0 0.0
  %1437 = vmatprep.subr.mxu0 0.0
  %1438 = vmatpush1.msra.mxu0 0.0
  %1439 = vmatprep.subr.mxu0 0.0
  %1440 = vmatpush1.msra.mxu0 0.0
  %1441 = vmatprep.subr.mxu0 0.0
  %1442 = vmatpush1.msra.mxu0 0.0
  %1443 = vmatprep.subr.mxu0 0.0
  %1444 = vmatpush1.msra.mxu0 0.0
  %1445 = vmatprep.subr.mxu0 0.0
  %1446 = vmatpush1.msra.mxu0 0.0
  %1447 = vmatprep.subr.mxu0 0.0
  %1448 = vmatpush1.msra.mxu0 0.0
  %1449 = vmatprep.subr.mxu0 0.0
  %1450 = vmatpush1.msra.mxu0 0.0
  %1451 = vmatprep.subr.mxu0 0.0
  %1452 = vmatpush1.msra.mxu0 0.0
  %1453 = vmatprep.subr.mxu0 0.0
  %1454 = vmatpush1.msra.mxu0 0.0
  %1455 = vmatprep.subr.mxu0 0.0
  %1456 = vmatpush1.msra.mxu0 0.0
  %1457 = vmatprep.subr.mxu0 0.0
  %1458 = vmatpush1.msra.mxu0 0.0
  %1459 = vmatprep.subr.mxu0 0.0
  %1460 = vmatpush1.msra.mxu0 0.0
  %1461 = vmatprep.subr.mxu0 0.0
  %1462 = vmatpush1.msra.mxu0 0.0
  %1463 = vmatprep.mubr.f32.mxu0 0.0
  %1464 = vmatmul.mubr.f32.gmra.mrb[0].mxu0 %v1394
  %v1465 = vpop.f32.mrb[0].mxu0
  %v1466 = vadd.f32 %v246, %v1465
  %v1467 = vpop.f32.mrb[0].mxu0
  %1468 = vmatprep.mubr.f32.mxu0 0.0
  %1469 = vmatmul.mubr.f32.gmra.mrb[0].mxu0 %v1397
  %v1470 = vpop.f32.mrb[0].mxu0
  %v1471 = vadd.f32 %v246, %v1470
  %v1472 = vpop.f32.mrb[0].mxu0
  %1473 = vdwg.mxu0
  %1474 = vst [vmem:[#allocation3] sm:$0xff] %v1466
  %1475 = vst [vmem:[#allocation3 + $0x8] sm:$0xff] %v1471
  %s1476 = scalar_lea.vmem %s3, 16
  %v1477 = vld [vmem:[%s1476] sm:$0xff]
  %v1478 = vld [vmem:[%s1476 + $0x8] sm:$0xff]
  %v1480 = vsel %vm165, %v1477, 0
  %v1483 = vsel %vm165, %v1478, 0
  %1485 = vmatprep.subr.mxu0 0.0
  %1486 = vmatpush1.msra.mxu0 %v1387
  %1487 = vmatprep.subr.mxu0 0.0
  %1488 = vmatpush1.msra.mxu0 %v1388
  %1489 = vmatprep.subr.mxu0 0.0
  %1490 = vmatpush1.msra.mxu0 %v1389
  %1491 = vmatprep.subr.mxu0 0.0
  %1492 = vmatpush1.msra.mxu0 %v1390
  %1493 = vmatprep.subr.mxu0 0.0
  %1494 = vmatpush1.msra.mxu0 0.0
  %1495 = vmatprep.subr.mxu0 0.0
  %1496 = vmatpush1.msra.mxu0 0.0
  %1497 = vmatprep.subr.mxu0 0.0
  %1498 = vmatpush1.msra.mxu0 0.0
  %1499 = vmatprep.subr.mxu0 0.0
  %1500 = vmatpush1.msra.mxu0 0.0
  %1501 = vmatprep.subr.mxu0 0.0
  %1502 = vmatpush1.msra.mxu0 0.0
  %1503 = vmatprep.subr.mxu0 0.0
  %1504 = vmatpush1.msra.mxu0 0.0
  %1505 = vmatprep.subr.mxu0 0.0
  %1506 = vmatpush1.msra.mxu0 0.0
  %1507 = vmatprep.subr.mxu0 0.0
  %1508 = vmatpush1.msra.mxu0 0.0
  %1509 = vmatprep.subr.mxu0 0.0
  %1510 = vmatpush1.msra.mxu0 0.0
  %1511 = vmatprep.subr.mxu0 0.0
  %1512 = vmatpush1.msra.mxu0 0.0
  %1513 = vmatprep.subr.mxu0 0.0
  %1514 = vmatpush1.msra.mxu0 0.0
  %1515 = vmatprep.subr.mxu0 0.0
  %1516 = vmatpush1.msra.mxu0 0.0
  %1517 = vmatprep.subr.mxu0 0.0
  %1518 = vmatpush1.msra.mxu0 0.0
  %1519 = vmatprep.subr.mxu0 0.0
  %1520 = vmatpush1.msra.mxu0 0.0
  %1521 = vmatprep.subr.mxu0 0.0
  %1522 = vmatpush1.msra.mxu0 0.0
  %1523 = vmatprep.subr.mxu0 0.0
  %1524 = vmatpush1.msra.mxu0 0.0
  %1525 = vmatprep.subr.mxu0 0.0
  %1526 = vmatpush1.msra.mxu0 0.0
  %1527 = vmatprep.subr.mxu0 0.0
  %1528 = vmatpush1.msra.mxu0 0.0
  %1529 = vmatprep.subr.mxu0 0.0
  %1530 = vmatpush1.msra.mxu0 0.0
  %1531 = vmatprep.subr.mxu0 0.0
  %1532 = vmatpush1.msra.mxu0 0.0
  %1533 = vmatprep.subr.mxu0 0.0
  %1534 = vmatpush1.msra.mxu0 0.0
  %1535 = vmatprep.subr.mxu0 0.0
  %1536 = vmatpush1.msra.mxu0 0.0
  %1537 = vmatprep.subr.mxu0 0.0
  %1538 = vmatpush1.msra.mxu0 0.0
  %1539 = vmatprep.subr.mxu0 0.0
  %1540 = vmatpush1.msra.mxu0 0.0
  %1541 = vmatprep.subr.mxu0 0.0
  %1542 = vmatpush1.msra.mxu0 0.0
  %1543 = vmatprep.subr.mxu0 0.0
  %1544 = vmatpush1.msra.mxu0 0.0
  %1545 = vmatprep.subr.mxu0 0.0
  %1546 = vmatpush1.msra.mxu0 0.0
  %1547 = vmatprep.subr.mxu0 0.0
  %1548 = vmatpush1.msra.mxu0 0.0
  %1549 = vmatprep.mubr.f32.mxu0 0.0
  %1550 = vmatmul.mubr.f32.gmra.mrb[0].mxu0 %v1480
  %v1551 = vpop.f32.mrb[0].mxu0
  %v1552 = vadd.f32 %v246, %v1551
  %v1553 = vpop.f32.mrb[0].mxu0
  %1554 = vmatprep.mubr.f32.mxu0 0.0
  %1555 = vmatmul.mubr.f32.gmra.mrb[0].mxu0 %v1483
  %v1556 = vpop.f32.mrb[0].mxu0
  %v1557 = vadd.f32 %v246, %v1556
  %v1558 = vpop.f32.mrb[0].mxu0
  %1559 = vdwg.mxu0
  %s1560 = scalar_lea.vmem [#allocation3], 16
  %1561 = vst [vmem:[%s1560] sm:$0xff] %v1552
  %1562 = vst [vmem:[%s1560 + $0x8] sm:$0xff] %v1557
  %s1563 = scalar_lea.vmem %s3, 32
  %v1564 = vld [vmem:[%s1563] sm:$0xff]
  %v1565 = vld [vmem:[%s1563 + $0x8] sm:$0xff]
  %v1567 = vsel %vm165, %v1564, 0
  %v1570 = vsel %vm165, %v1565, 0
  %1572 = vmatprep.subr.mxu0 0.0
  %1573 = vmatpush1.msra.mxu0 %v1387
  %1574 = vmatprep.subr.mxu0 0.0
  %1575 = vmatpush1.msra.mxu0 %v1388
  %1576 = vmatprep.subr.mxu0 0.0
  %1577 = vmatpush1.msra.mxu0 %v1389
  %1578 = vmatprep.subr.mxu0 0.0
  %1579 = vmatpush1.msra.mxu0 %v1390
  %1580 = vmatprep.subr.mxu0 0.0
  %1581 = vmatpush1.msra.mxu0 0.0
  %1582 = vmatprep.subr.mxu0 0.0
  %1583 = vmatpush1.msra.mxu0 0.0
  %1584 = vmatprep.subr.mxu0 0.0
  %1585 = vmatpush1.msra.mxu0 0.0
  %1586 = vmatprep.subr.mxu0 0.0
  %1587 = vmatpush1.msra.mxu0 0.0
  %1588 = vmatprep.subr.mxu0 0.0
  %1589 = vmatpush1.msra.mxu0 0.0
  %1590 = vmatprep.subr.mxu0 0.0
  %1591 = vmatpush1.msra.mxu0 0.0
  %1592 = vmatprep.subr.mxu0 0.0
  %1593 = vmatpush1.msra.mxu0 0.0
  %1594 = vmatprep.subr.mxu0 0.0
  %1595 = vmatpush1.msra.mxu0 0.0
  %1596 = vmatprep.subr.mxu0 0.0
  %1597 = vmatpush1.msra.mxu0 0.0
  %1598 = vmatprep.subr.mxu0 0.0
  %1599 = vmatpush1.msra.mxu0 0.0
  %1600 = vmatprep.subr.mxu0 0.0
  %1601 = vmatpush1.msra.mxu0 0.0
  %1602 = vmatprep.subr.mxu0 0.0
  %1603 = vmatpush1.msra.mxu0 0.0
  %1604 = vmatprep.subr.mxu0 0.0
  %1605 = vmatpush1.msra.mxu0 0.0
  %1606 = vmatprep.subr.mxu0 0.0
  %1607 = vmatpush1.msra.mxu0 0.0
  %1608 = vmatprep.subr.mxu0 0.0
  %1609 = vmatpush1.msra.mxu0 0.0
  %1610 = vmatprep.subr.mxu0 0.0
  %1611 = vmatpush1.msra.mxu0 0.0
  %1612 = vmatprep.subr.mxu0 0.0
  %1613 = vmatpush1.msra.mxu0 0.0
  %1614 = vmatprep.subr.mxu0 0.0
  %1615 = vmatpush1.msra.mxu0 0.0
  %1616 = vmatprep.subr.mxu0 0.0
  %1617 = vmatpush1.msra.mxu0 0.0
  %1618 = vmatprep.subr.mxu0 0.0
  %1619 = vmatpush1.msra.mxu0 0.0
  %1620 = vmatprep.subr.mxu0 0.0
  %1621 = vmatpush1.msra.mxu0 0.0
  %1622 = vmatprep.subr.mxu0 0.0
  %1623 = vmatpush1.msra.mxu0 0.0
  %1624 = vmatprep.subr.mxu0 0.0
  %1625 = vmatpush1.msra.mxu0 0.0
  %1626 = vmatprep.subr.mxu0 0.0
  %1627 = vmatpush1.msra.mxu0 0.0
  %1628 = vmatprep.subr.mxu0 0.0
  %1629 = vmatpush1.msra.mxu0 0.0
  %1630 = vmatprep.subr.mxu0 0.0
  %1631 = vmatpush1.msra.mxu0 0.0
  %1632 = vmatprep.subr.mxu0 0.0
  %1633 = vmatpush1.msra.mxu0 0.0
  %1634 = vmatprep.subr.mxu0 0.0
  %1635 = vmatpush1.msra.mxu0 0.0
  %1636 = vmatprep.mubr.f32.mxu0 0.0
  %1637 = vmatmul.mubr.f32.gmra.mrb[0].mxu0 %v1567
  %v1638 = vpop.f32.mrb[0].mxu0
  %v1639 = vadd.f32 %v246, %v1638
  %v1640 = vpop.f32.mrb[0].mxu0
  %1641 = vmatprep.mubr.f32.mxu0 0.0
  %1642 = vmatmul.mubr.f32.gmra.mrb[0].mxu0 %v1570
  %v1643 = vpop.f32.mrb[0].mxu0
  %v1644 = vadd.f32 %v246, %v1643
  %v1645 = vpop.f32.mrb[0].mxu0
  %1646 = vdwg.mxu0
  %s1647 = scalar_lea.vmem [#allocation3], 32
  %1648 = vst [vmem:[%s1647] sm:$0xff] %v1639
  %1649 = vst [vmem:[%s1647 + $0x8] sm:$0xff] %v1644
  %s1650 = scalar_lea.vmem %s3, 48
  %v1651 = vld [vmem:[%s1650] sm:$0xff]
  %v1652 = vld [vmem:[%s1650 + $0x8] sm:$0xff]
  %v1654 = vsel %vm165, %v1651, 0
  %v1657 = vsel %vm165, %v1652, 0
  %1659 = vmatprep.subr.mxu0 0.0
  %1660 = vmatpush1.msra.mxu0 %v1387
  %1661 = vmatprep.subr.mxu0 0.0
  %1662 = vmatpush1.msra.mxu0 %v1388
  %1663 = vmatprep.subr.mxu0 0.0
  %1664 = vmatpush1.msra.mxu0 %v1389
  %1665 = vmatprep.subr.mxu0 0.0
  %1666 = vmatpush1.msra.mxu0 %v1390
  %1667 = vmatprep.subr.mxu0 0.0
  %1668 = vmatpush1.msra.mxu0 0.0
  %1669 = vmatprep.subr.mxu0 0.0
  %1670 = vmatpush1.msra.mxu0 0.0
  %1671 = vmatprep.subr.mxu0 0.0
  %1672 = vmatpush1.msra.mxu0 0.0
  %1673 = vmatprep.subr.mxu0 0.0
  %1674 = vmatpush1.msra.mxu0 0.0
  %1675 = vmatprep.subr.mxu0 0.0
  %1676 = vmatpush1.msra.mxu0 0.0
  %1677 = vmatprep.subr.mxu0 0.0
  %1678 = vmatpush1.msra.mxu0 0.0
  %1679 = vmatprep.subr.mxu0 0.0
  %1680 = vmatpush1.msra.mxu0 0.0
  %1681 = vmatprep.subr.mxu0 0.0
  %1682 = vmatpush1.msra.mxu0 0.0
  %1683 = vmatprep.subr.mxu0 0.0
  %1684 = vmatpush1.msra.mxu0 0.0
  %1685 = vmatprep.subr.mxu0 0.0
  %1686 = vmatpush1.msra.mxu0 0.0
  %1687 = vmatprep.subr.mxu0 0.0
  %1688 = vmatpush1.msra.mxu0 0.0
  %1689 = vmatprep.subr.mxu0 0.0
  %1690 = vmatpush1.msra.mxu0 0.0
  %1691 = vmatprep.subr.mxu0 0.0
  %1692 = vmatpush1.msra.mxu0 0.0
  %1693 = vmatprep.subr.mxu0 0.0
  %1694 = vmatpush1.msra.mxu0 0.0
  %1695 = vmatprep.subr.mxu0 0.0
  %1696 = vmatpush1.msra.mxu0 0.0
  %1697 = vmatprep.subr.mxu0 0.0
  %1698 = vmatpush1.msra.mxu0 0.0
  %1699 = vmatprep.subr.mxu0 0.0
  %1700 = vmatpush1.msra.mxu0 0.0
  %1701 = vmatprep.subr.mxu0 0.0
  %1702 = vmatpush1.msra.mxu0 0.0
  %1703 = vmatprep.subr.mxu0 0.0
  %1704 = vmatpush1.msra.mxu0 0.0
  %1705 = vmatprep.subr.mxu0 0.0
  %1706 = vmatpush1.msra.mxu0 0.0
  %1707 = vmatprep.subr.mxu0 0.0
  %1708 = vmatpush1.msra.mxu0 0.0
  %1709 = vmatprep.subr.mxu0 0.0
  %1710 = vmatpush1.msra.mxu0 0.0
  %1711 = vmatprep.subr.mxu0 0.0
  %1712 = vmatpush1.msra.mxu0 0.0
  %1713 = vmatprep.subr.mxu0 0.0
  %1714 = vmatpush1.msra.mxu0 0.0
  %1715 = vmatprep.subr.mxu0 0.0
  %1716 = vmatpush1.msra.mxu0 0.0
  %1717 = vmatprep.subr.mxu0 0.0
  %1718 = vmatpush1.msra.mxu0 0.0
  %1719 = vmatprep.subr.mxu0 0.0
  %1720 = vmatpush1.msra.mxu0 0.0
  %1721 = vmatprep.subr.mxu0 0.0
  %1722 = vmatpush1.msra.mxu0 0.0
  %1723 = vmatprep.mubr.f32.mxu0 0.0
  %1724 = vmatmul.mubr.f32.gmra.mrb[0].mxu0 %v1654
  %v1725 = vpop.f32.mrb[0].mxu0
  %v1726 = vadd.f32 %v246, %v1725
  %v1727 = vpop.f32.mrb[0].mxu0
  %1728 = vmatprep.mubr.f32.mxu0 0.0
  %1729 = vmatmul.mubr.f32.gmra.mrb[0].mxu0 %v1657
  %v1730 = vpop.f32.mrb[0].mxu0
  %v1731 = vadd.f32 %v246, %v1730
  %v1732 = vpop.f32.mrb[0].mxu0
  %1733 = vdwg.mxu0
  %s1734 = scalar_lea.vmem [#allocation3], 48
  %1735 = vst [vmem:[%s1734] sm:$0xff] %v1726
  %1736 = vst [vmem:[%s1734 + $0x8] sm:$0xff] %v1731
  %s1737 = scalar_lea.vmem %s3, 64
  %v1738 = vld [vmem:[%s1737] sm:$0xff]
  %v1739 = vld [vmem:[%s1737 + $0x8] sm:$0xff]
  %v1741 = vsel %vm165, %v1738, 0
  %v1744 = vsel %vm165, %v1739, 0
  %1746 = vmatprep.subr.mxu0 0.0
  %1747 = vmatpush1.msra.mxu0 %v1387
  %1748 = vmatprep.subr.mxu0 0.0
  %1749 = vmatpush1.msra.mxu0 %v1388
  %1750 = vmatprep.subr.mxu0 0.0
  %1751 = vmatpush1.msra.mxu0 %v1389
  %1752 = vmatprep.subr.mxu0 0.0
  %1753 = vmatpush1.msra.mxu0 %v1390
  %1754 = vmatprep.subr.mxu0 0.0
  %1755 = vmatpush1.msra.mxu0 0.0
  %1756 = vmatprep.subr.mxu0 0.0
  %1757 = vmatpush1.msra.mxu0 0.0
  %1758 = vmatprep.subr.mxu0 0.0
  %1759 = vmatpush1.msra.mxu0 0.0
  %1760 = vmatprep.subr.mxu0 0.0
  %1761 = vmatpush1.msra.mxu0 0.0
  %1762 = vmatprep.subr.mxu0 0.0
  %1763 = vmatpush1.msra.mxu0 0.0
  %1764 = vmatprep.subr.mxu0 0.0
  %1765 = vmatpush1.msra.mxu0 0.0
  %1766 = vmatprep.subr.mxu0 0.0
  %1767 = vmatpush1.msra.mxu0 0.0
  %1768 = vmatprep.subr.mxu0 0.0
  %1769 = vmatpush1.msra.mxu0 0.0
  %1770 = vmatprep.subr.mxu0 0.0
  %1771 = vmatpush1.msra.mxu0 0.0
  %1772 = vmatprep.subr.mxu0 0.0
  %1773 = vmatpush1.msra.mxu0 0.0
  %1774 = vmatprep.subr.mxu0 0.0
  %1775 = vmatpush1.msra.mxu0 0.0
  %1776 = vmatprep.subr.mxu0 0.0
  %1777 = vmatpush1.msra.mxu0 0.0
  %1778 = vmatprep.subr.mxu0 0.0
  %1779 = vmatpush1.msra.mxu0 0.0
  %1780 = vmatprep.subr.mxu0 0.0
  %1781 = vmatpush1.msra.mxu0 0.0
  %1782 = vmatprep.subr.mxu0 0.0
  %1783 = vmatpush1.msra.mxu0 0.0
  %1784 = vmatprep.subr.mxu0 0.0
  %1785 = vmatpush1.msra.mxu0 0.0
  %1786 = vmatprep.subr.mxu0 0.0
  %1787 = vmatpush1.msra.mxu0 0.0
  %1788 = vmatprep.subr.mxu0 0.0
  %1789 = vmatpush1.msra.mxu0 0.0
  %1790 = vmatprep.subr.mxu0 0.0
  %1791 = vmatpush1.msra.mxu0 0.0
  %1792 = vmatprep.subr.mxu0 0.0
  %1793 = vmatpush1.msra.mxu0 0.0
  %1794 = vmatprep.subr.mxu0 0.0
  %1795 = vmatpush1.msra.mxu0 0.0
  %1796 = vmatprep.subr.mxu0 0.0
  %1797 = vmatpush1.msra.mxu0 0.0
  %1798 = vmatprep.subr.mxu0 0.0
  %1799 = vmatpush1.msra.mxu0 0.0
  %1800 = vmatprep.subr.mxu0 0.0
  %1801 = vmatpush1.msra.mxu0 0.0
  %1802 = vmatprep.subr.mxu0 0.0
  %1803 = vmatpush1.msra.mxu0 0.0
  %1804 = vmatprep.subr.mxu0 0.0
  %1805 = vmatpush1.msra.mxu0 0.0
  %1806 = vmatprep.subr.mxu0 0.0
  %1807 = vmatpush1.msra.mxu0 0.0
  %1808 = vmatprep.subr.mxu0 0.0
  %1809 = vmatpush1.msra.mxu0 0.0
  %1810 = vmatprep.mubr.f32.mxu0 0.0
  %1811 = vmatmul.mubr.f32.gmra.mrb[0].mxu0 %v1741
  %v1812 = vpop.f32.mrb[0].mxu0
  %v1813 = vadd.f32 %v246, %v1812
  %v1814 = vpop.f32.mrb[0].mxu0
  %1815 = vmatprep.mubr.f32.mxu0 0.0
  %1816 = vmatmul.mubr.f32.gmra.mrb[0].mxu0 %v1744
  %v1817 = vpop.f32.mrb[0].mxu0
  %v1818 = vadd.f32 %v246, %v1817
  %v1819 = vpop.f32.mrb[0].mxu0
  %1820 = vdwg.mxu0
  %s1821 = scalar_lea.vmem [#allocation3], 64
  %1822 = vst [vmem:[%s1821] sm:$0xff] %v1813
  %1823 = vst [vmem:[%s1821 + $0x8] sm:$0xff] %v1818
  %s1824 = scalar_lea.vmem %s3, 80
  %v1825 = vld [vmem:[%s1824] sm:$0xff]
  %v1826 = vld [vmem:[%s1824 + $0x8] sm:$0xff]
  %v1828 = vsel %vm165, %v1825, 0
  %v1831 = vsel %vm165, %v1826, 0
  %1833 = vmatprep.subr.mxu0 0.0
  %1834 = vmatpush1.msra.mxu0 %v1387
  %1835 = vmatprep.subr.mxu0 0.0
  %1836 = vmatpush1.msra.mxu0 %v1388
  %1837 = vmatprep.subr.mxu0 0.0
  %1838 = vmatpush1.msra.mxu0 %v1389
  %1839 = vmatprep.subr.mxu0 0.0
  %1840 = vmatpush1.msra.mxu0 %v1390
  %1841 = vmatprep.subr.mxu0 0.0
  %1842 = vmatpush1.msra.mxu0 0.0
  %1843 = vmatprep.subr.mxu0 0.0
  %1844 = vmatpush1.msra.mxu0 0.0
  %1845 = vmatprep.subr.mxu0 0.0
  %1846 = vmatpush1.msra.mxu0 0.0
  %1847 = vmatprep.subr.mxu0 0.0
  %1848 = vmatpush1.msra.mxu0 0.0
  %1849 = vmatprep.subr.mxu0 0.0
  %1850 = vmatpush1.msra.mxu0 0.0
  %1851 = vmatprep.subr.mxu0 0.0
  %1852 = vmatpush1.msra.mxu0 0.0
  %1853 = vmatprep.subr.mxu0 0.0
  %1854 = vmatpush1.msra.mxu0 0.0
  %1855 = vmatprep.subr.mxu0 0.0
  %1856 = vmatpush1.msra.mxu0 0.0
  %1857 = vmatprep.subr.mxu0 0.0
  %1858 = vmatpush1.msra.mxu0 0.0
  %1859 = vmatprep.subr.mxu0 0.0
  %1860 = vmatpush1.msra.mxu0 0.0
  %1861 = vmatprep.subr.mxu0 0.0
  %1862 = vmatpush1.msra.mxu0 0.0
  %1863 = vmatprep.subr.mxu0 0.0
  %1864 = vmatpush1.msra.mxu0 0.0
  %1865 = vmatprep.subr.mxu0 0.0
  %1866 = vmatpush1.msra.mxu0 0.0
  %1867 = vmatprep.subr.mxu0 0.0
  %1868 = vmatpush1.msra.mxu0 0.0
  %1869 = vmatprep.subr.mxu0 0.0
  %1870 = vmatpush1.msra.mxu0 0.0
  %1871 = vmatprep.subr.mxu0 0.0
  %1872 = vmatpush1.msra.mxu0 0.0
  %1873 = vmatprep.subr.mxu0 0.0
  %1874 = vmatpush1.msra.mxu0 0.0
  %1875 = vmatprep.subr.mxu0 0.0
  %1876 = vmatpush1.msra.mxu0 0.0
  %1877 = vmatprep.subr.mxu0 0.0
  %1878 = vmatpush1.msra.mxu0 0.0
  %1879 = vmatprep.subr.mxu0 0.0
  %1880 = vmatpush1.msra.mxu0 0.0
  %1881 = vmatprep.subr.mxu0 0.0
  %1882 = vmatpush1.msra.mxu0 0.0
  %1883 = vmatprep.subr.mxu0 0.0
  %1884 = vmatpush1.msra.mxu0 0.0
  %1885 = vmatprep.subr.mxu0 0.0
  %1886 = vmatpush1.msra.mxu0 0.0
  %1887 = vmatprep.subr.mxu0 0.0
  %1888 = vmatpush1.msra.mxu0 0.0
  %1889 = vmatprep.subr.mxu0 0.0
  %1890 = vmatpush1.msra.mxu0 0.0
  %1891 = vmatprep.subr.mxu0 0.0
  %1892 = vmatpush1.msra.mxu0 0.0
  %1893 = vmatprep.subr.mxu0 0.0
  %1894 = vmatpush1.msra.mxu0 0.0
  %1895 = vmatprep.subr.mxu0 0.0
  %1896 = vmatpush1.msra.mxu0 0.0
  %1897 = vmatprep.mubr.f32.mxu0 0.0
  %1898 = vmatmul.mubr.f32.gmra.mrb[0].mxu0 %v1828
  %v1899 = vpop.f32.mrb[0].mxu0
  %v1900 = vadd.f32 %v246, %v1899
  %v1901 = vpop.f32.mrb[0].mxu0
  %1902 = vmatprep.mubr.f32.mxu0 0.0
  %1903 = vmatmul.mubr.f32.gmra.mrb[0].mxu0 %v1831
  %v1904 = vpop.f32.mrb[0].mxu0
  %v1905 = vadd.f32 %v246, %v1904
  %v1906 = vpop.f32.mrb[0].mxu0
  %1907 = vdwg.mxu0
  %s1908 = scalar_lea.vmem [#allocation3], 80
  %1909 = vst [vmem:[%s1908] sm:$0xff] %v1900
  %1910 = vst [vmem:[%s1908 + $0x8] sm:$0xff] %v1905
  %s1911 = scalar_lea.vmem %s3, 96
  %v1912 = vld [vmem:[%s1911] sm:$0xff]
  %v1913 = vld [vmem:[%s1911 + $0x8] sm:$0xff]
  %v1915 = vsel %vm165, %v1912, 0
  %v1918 = vsel %vm165, %v1913, 0
  %1920 = vmatprep.subr.mxu0 0.0
  %1921 = vmatpush1.msra.mxu0 %v1387
  %1922 = vmatprep.subr.mxu0 0.0
  %1923 = vmatpush1.msra.mxu0 %v1388
  %1924 = vmatprep.subr.mxu0 0.0
  %1925 = vmatpush1.msra.mxu0 %v1389
  %1926 = vmatprep.subr.mxu0 0.0
  %1927 = vmatpush1.msra.mxu0 %v1390
  %1928 = vmatprep.subr.mxu0 0.0
  %1929 = vmatpush1.msra.mxu0 0.0
  %1930 = vmatprep.subr.mxu0 0.0
  %1931 = vmatpush1.msra.mxu0 0.0
  %1932 = vmatprep.subr.mxu0 0.0
  %1933 = vmatpush1.msra.mxu0 0.0
  %1934 = vmatprep.subr.mxu0 0.0
  %1935 = vmatpush1.msra.mxu0 0.0
  %1936 = vmatprep.subr.mxu0 0.0
  %1937 = vmatpush1.msra.mxu0 0.0
  %1938 = vmatprep.subr.mxu0 0.0
  %1939 = vmatpush1.msra.mxu0 0.0
  %1940 = vmatprep.subr.mxu0 0.0
  %1941 = vmatpush1.msra.mxu0 0.0
  %1942 = vmatprep.subr.mxu0 0.0
  %1943 = vmatpush1.msra.mxu0 0.0
  %1944 = vmatprep.subr.mxu0 0.0
  %1945 = vmatpush1.msra.mxu0 0.0
  %1946 = vmatprep.subr.mxu0 0.0
  %1947 = vmatpush1.msra.mxu0 0.0
  %1948 = vmatprep.subr.mxu0 0.0
  %1949 = vmatpush1.msra.mxu0 0.0
  %1950 = vmatprep.subr.mxu0 0.0
  %1951 = vmatpush1.msra.mxu0 0.0
  %1952 = vmatprep.subr.mxu0 0.0
  %1953 = vmatpush1.msra.mxu0 0.0
  %1954 = vmatprep.subr.mxu0 0.0
  %1955 = vmatpush1.msra.mxu0 0.0
  %1956 = vmatprep.subr.mxu0 0.0
  %1957 = vmatpush1.msra.mxu0 0.0
  %1958 = vmatprep.subr.mxu0 0.0
  %1959 = vmatpush1.msra.mxu0 0.0
  %1960 = vmatprep.subr.mxu0 0.0
  %1961 = vmatpush1.msra.mxu0 0.0
  %1962 = vmatprep.subr.mxu0 0.0
  %1963 = vmatpush1.msra.mxu0 0.0
  %1964 = vmatprep.subr.mxu0 0.0
  %1965 = vmatpush1.msra.mxu0 0.0
  %1966 = vmatprep.subr.mxu0 0.0
  %1967 = vmatpush1.msra.mxu0 0.0
  %1968 = vmatprep.subr.mxu0 0.0
  %1969 = vmatpush1.msra.mxu0 0.0
  %1970 = vmatprep.subr.mxu0 0.0
  %1971 = vmatpush1.msra.mxu0 0.0
  %1972 = vmatprep.subr.mxu0 0.0
  %1973 = vmatpush1.msra.mxu0 0.0
  %1974 = vmatprep.subr.mxu0 0.0
  %1975 = vmatpush1.msra.mxu0 0.0
  %1976 = vmatprep.subr.mxu0 0.0
  %1977 = vmatpush1.msra.mxu0 0.0
  %1978 = vmatprep.subr.mxu0 0.0
  %1979 = vmatpush1.msra.mxu0 0.0
  %1980 = vmatprep.subr.mxu0 0.0
  %1981 = vmatpush1.msra.mxu0 0.0
  %1982 = vmatprep.subr.mxu0 0.0
  %1983 = vmatpush1.msra.mxu0 0.0
  %1984 = vmatprep.mubr.f32.mxu0 0.0
  %1985 = vmatmul.mubr.f32.gmra.mrb[0].mxu0 %v1915
  %v1986 = vpop.f32.mrb[0].mxu0
  %v1987 = vadd.f32 %v246, %v1986
  %v1988 = vpop.f32.mrb[0].mxu0
  %1989 = vmatprep.mubr.f32.mxu0 0.0
  %1990 = vmatmul.mubr.f32.gmra.mrb[0].mxu0 %v1918
  %v1991 = vpop.f32.mrb[0].mxu0
  %v1992 = vadd.f32 %v246, %v1991
  %v1993 = vpop.f32.mrb[0].mxu0
  %1994 = vdwg.mxu0
  %s1995 = scalar_lea.vmem [#allocation3], 96
  %1996 = vst [vmem:[%s1995] sm:$0xff] %v1987
  %1997 = vst [vmem:[%s1995 + $0x8] sm:$0xff] %v1992
  %v1998 = vld [vmem:[%s2] sm:$0xff]
  %v1999 = vld [vmem:[%s2 + $0x8] sm:$0xff]
  %v2000 = vld [vmem:[%s8] sm:$0xff]
  %v2001 = vld [vmem:[%s8 + $0x8] sm:$0xff]
  %v2002 = vld [vmem:[%s8 + $0x10] sm:$0xff]
  %v2003 = vld [vmem:[%s8 + $0x18] sm:$0xff]
  %v2004 = vld [vmem:[%s10] sm:$0xff]
  %v2005 = vld [vmem:[%s10 + $0x8] sm:$0xff]
  %v2006 = vld [vmem:[%s10 + $0x10] sm:$0xff]
  %v2007 = vld [vmem:[%s10 + $0x18] sm:$0xff]
  %v2008 = vld [vmem:[%s10 + $0x20] sm:$0xff]
  %v2009 = vld [vmem:[%s10 + $0x28] sm:$0xff]
  %v2010 = vld [vmem:[%s10 + $0x30] sm:$0xff]
  %v2011 = vld [vmem:[%s10 + $0x38] sm:$0xff]
  %v2012 = vld [vmem:[%s11] sm:$0x1]
  %vm2013 = vcmp.gt.s32.totalorder %v1998, 0
  %vm2014 = vcmp.gt.s32.totalorder %v1999, 0
  %v2015 = vld [vmem:[#allocation2] sm:$0xff]
  %v2016 = vld [vmem:[#allocation2 + $0x8] sm:$0xff]
  %v2018 = vsel %vm165, 0.0, 0
  %2020 = vmatprep.subr.mxu0 0.0
  %2021 = vmatpush1.msra.mxu0 %v2000
  %2022 = vmatprep.subr.mxu0 0.0
  %2023 = vmatpush1.msra.mxu0 %v2001
  %2024 = vmatprep.subr.mxu0 0.0
  %2025 = vmatpush1.msra.mxu0 %v2002
  %2026 = vmatprep.subr.mxu0 0.0
  %2027 = vmatpush1.msra.mxu0 %v2003
  %2028 = vmatprep.subr.mxu0 0.0
  %2029 = vmatpush1.msra.mxu0 0.0
  %2030 = vmatprep.subr.mxu0 0.0
  %2031 = vmatpush1.msra.mxu0 0.0
  %2032 = vmatprep.subr.mxu0 0.0
  %2033 = vmatpush1.msra.mxu0 0.0
  %2034 = vmatprep.subr.mxu0 0.0
  %2035 = vmatpush1.msra.mxu0 0.0
  %2036 = vmatprep.subr.mxu0 0.0
  %2037 = vmatpush1.msra.mxu0 0.0
  %2038 = vmatprep.subr.mxu0 0.0
  %2039 = vmatpush1.msra.mxu0 0.0
  %2040 = vmatprep.subr.mxu0 0.0
  %2041 = vmatpush1.msra.mxu0 0.0
  %2042 = vmatprep.subr.mxu0 0.0
  %2043 = vmatpush1.msra.mxu0 0.0
  %2044 = vmatprep.subr.mxu0 0.0
  %2045 = vmatpush1.msra.mxu0 0.0
  %2046 = vmatprep.subr.mxu0 0.0
  %2047 = vmatpush1.msra.mxu0 0.0
  %2048 = vmatprep.subr.mxu0 0.0
  %2049 = vmatpush1.msra.mxu0 0.0
  %2050 = vmatprep.subr.mxu0 0.0
  %2051 = vmatpush1.msra.mxu0 0.0
  %2052 = vmatprep.subr.mxu0 0.0
  %2053 = vmatpush1.msra.mxu0 0.0
  %2054 = vmatprep.subr.mxu0 0.0
  %2055 = vmatpush1.msra.mxu0 0.0
  %2056 = vmatprep.subr.mxu0 0.0
  %2057 = vmatpush1.msra.mxu0 0.0
  %2058 = vmatprep.subr.mxu0 0.0
  %2059 = vmatpush1.msra.mxu0 0.0
  %2060 = vmatprep.subr.mxu0 0.0
  %2061 = vmatpush1.msra.mxu0 0.0
  %2062 = vmatprep.subr.mxu0 0.0
  %2063 = vmatpush1.msra.mxu0 0.0
  %2064 = vmatprep.subr.mxu0 0.0
  %2065 = vmatpush1.msra.mxu0 0.0
  %2066 = vmatprep.subr.mxu0 0.0
  %2067 = vmatpush1.msra.mxu0 0.0
  %2068 = vmatprep.subr.mxu0 0.0
  %2069 = vmatpush1.msra.mxu0 0.0
  %2070 = vmatprep.subr.mxu0 0.0
  %2071 = vmatpush1.msra.mxu0 0.0
  %2072 = vmatprep.subr.mxu0 0.0
  %2073 = vmatpush1.msra.mxu0 0.0
  %2074 = vmatprep.subr.mxu0 0.0
  %2075 = vmatpush1.msra.mxu0 0.0
  %2076 = vmatprep.subr.mxu0 0.0
  %2077 = vmatpush1.msra.mxu0 0.0
  %2078 = vmatprep.subr.mxu0 0.0
  %2079 = vmatpush1.msra.mxu0 0.0
  %2080 = vmatprep.subr.mxu0 0.0
  %2081 = vmatpush1.msra.mxu0 0.0
  %2082 = vmatprep.subr.mxu0 0.0
  %2083 = vmatpush1.msra.mxu0 0.0
  %2084 = vmatprep.mubr.f32.mxu0 0.0
  %2085 = vmatmul.mubr.f32.gmra.mrb[0].mxu0 %v2018
  %v2086 = vpop.f32.mrb[0].mxu0
  %v2087 = vadd.f32 0.0, %v2086
  %v2088 = vpop.f32.mrb[0].mxu0
  %2089 = vmatprep.mubr.f32.mxu0 0.0
  %2090 = vmatmul.mubr.f32.gmra.mrb[0].mxu0 %v2018
  %v2091 = vpop.f32.mrb[0].mxu0
  %v2092 = vadd.f32 0.0, %v2091
  %v2093 = vpop.f32.mrb[0].mxu0
  %2094 = vdwg.mxu0
  %v2095 = vadd.f32 %v2015, %v2087
  %v2096 = vadd.f32 %v2016, %v2092
  %v2097 = vxor.u32 %v2095, 2147483648
  %v2098 = vxor.u32 %v2096, 2147483648
  %v2099 = vmul.f32 %v2097, 1.442695
  %v2100 = vpow.pop %v2099
  %v2101 = vmul.f32 %v2098, 1.442695
  %v2102 = vpow.pop %v2101
  %v2103 = vadd.f32 %v2100, 1.0
  %v2104 = vadd.f32 %v2102, 1.0
  %v2105 = vrcp.pop %v2103
  %v2106 = vmul.f32 1.0, %v2105
  %v2107 = vrcp.pop %v2104
  %v2108 = vmul.f32 1.0, %v2107
  %v2109 = vtanh.pop %v2095
  %v2110 = vtanh.pop %v2096
  %v2111 = vmul.f32 %v2106, 0.0
  %v2112 = vmul.f32 %v2108, 0.0
  %2115 = vrot.lane.b32.xlu0 %v2109, 64
  %v2116 = vpop.permute.xlu0 %2115
  %2117 = vrot.lane.b32.xlu0 %v2110, 64
  %v2118 = vpop.permute.xlu0 %2117
  %v2121 = vmul.f32 %v2106, %v2116
  %v2122 = vmul.f32 %v2108, %v2118
  %2125 = vrot.lane.b32.xlu0 %v2121, 32
  %v2126 = vpop.permute.xlu0 %2125
  %2127 = vrot.lane.b32.xlu0 %v2122, 32
  %v2128 = vpop.permute.xlu0 %2127
  %v2131 = vadd.f32 %v2111, %v2126
  %v2132 = vadd.f32 %v2112, %v2128
  %v2133 = vtanh.pop %v2131
  %v2134 = vtanh.pop %v2132
  %2137 = vrot.lane.b32.xlu0 %v2133, 64
  %v2138 = vpop.permute.xlu0 %2137
  %2139 = vrot.lane.b32.xlu0 %v2134, 64
  %v2140 = vpop.permute.xlu0 %2139
  %v2143 = vmul.f32 %v2106, %v2138
  %v2144 = vmul.f32 %v2108, %v2140
  %2147 = vrot.lane.b32.xlu0 %v2143, 32
  %v2148 = vpop.permute.xlu0 %2147
  %2149 = vrot.lane.b32.xlu0 %v2144, 32
  %v2150 = vpop.permute.xlu0 %2149
  %v2153 = vsel %vm165, %v2148, 0.0
  %v2154 = vsel %vm165, %v2150, 0.0
  %v2156 = vlaneseq
  %v2157 = vshrl.u32 %v2156, 7
  %v2158 = vsub.s32 0, %v2157
  %v2159 = vrot.slane %v2012, %v2158
  %v2162 = vsel %vm87, %v2153, 0
  %v2165 = vsel %vm87, %v2154, 0
  %2167 = vmatprep.subr.mxu0 0.0
  %2168 = vmatpush1.msra.mxu0 %v2004
  %2169 = vmatprep.subr.mxu0 0.0
  %2170 = vmatpush1.msra.mxu0 %v2005
  %2171 = vmatprep.subr.mxu0 0.0
  %2172 = vmatpush1.msra.mxu0 %v2006
  %2173 = vmatprep.subr.mxu0 0.0
  %2174 = vmatpush1.msra.mxu0 %v2007
  %2175 = vmatprep.subr.mxu0 0.0
  %2176 = vmatpush1.msra.mxu0 %v2008
  %2177 = vmatprep.subr.mxu0 0.0
  %2178 = vmatpush1.msra.mxu0 %v2009
  %2179 = vmatprep.subr.mxu0 0.0
  %2180 = vmatpush1.msra.mxu0 %v2010
  %2181 = vmatprep.subr.mxu0 0.0
  %2182 = vmatpush1.msra.mxu0 %v2011
  %2183 = vmatprep.subr.mxu0 0.0
  %2184 = vmatpush1.msra.mxu0 0.0
  %2185 = vmatprep.subr.mxu0 0.0
  %2186 = vmatpush1.msra.mxu0 0.0
  %2187 = vmatprep.subr.mxu0 0.0
  %2188 = vmatpush1.msra.mxu0 0.0
  %2189 = vmatprep.subr.mxu0 0.0
  %2190 = vmatpush1.msra.mxu0 0.0
  %2191 = vmatprep.subr.mxu0 0.0
  %2192 = vmatpush1.msra.mxu0 0.0
  %2193 = vmatprep.subr.mxu0 0.0
  %2194 = vmatpush1.msra.mxu0 0.0
  %2195 = vmatprep.subr.mxu0 0.0
  %2196 = vmatpush1.msra.mxu0 0.0
  %2197 = vmatprep.subr.mxu0 0.0
  %2198 = vmatpush1.msra.mxu0 0.0
  %2199 = vmatprep.subr.mxu0 0.0
  %2200 = vmatpush1.msra.mxu0 0.0
  %2201 = vmatprep.subr.mxu0 0.0
  %2202 = vmatpush1.msra.mxu0 0.0
  %2203 = vmatprep.subr.mxu0 0.0
  %2204 = vmatpush1.msra.mxu0 0.0
  %2205 = vmatprep.subr.mxu0 0.0
  %2206 = vmatpush1.msra.mxu0 0.0
  %2207 = vmatprep.subr.mxu0 0.0
  %2208 = vmatpush1.msra.mxu0 0.0
  %2209 = vmatprep.subr.mxu0 0.0
  %2210 = vmatpush1.msra.mxu0 0.0
  %2211 = vmatprep.subr.mxu0 0.0
  %2212 = vmatpush1.msra.mxu0 0.0
  %2213 = vmatprep.subr.mxu0 0.0
  %2214 = vmatpush1.msra.mxu0 0.0
  %2215 = vmatprep.subr.mxu0 0.0
  %2216 = vmatpush1.msra.mxu0 0.0
  %2217 = vmatprep.subr.mxu0 0.0
  %2218 = vmatpush1.msra.mxu0 0.0
  %2219 = vmatprep.subr.mxu0 0.0
  %2220 = vmatpush1.msra.mxu0 0.0
  %2221 = vmatprep.subr.mxu0 0.0
  %2222 = vmatpush1.msra.mxu0 0.0
  %2223 = vmatprep.subr.mxu0 0.0
  %2224 = vmatpush1.msra.mxu0 0.0
  %2225 = vmatprep.subr.mxu0 0.0
  %2226 = vmatpush1.msra.mxu0 0.0
  %2227 = vmatprep.subr.mxu0 0.0
  %2228 = vmatpush1.msra.mxu0 0.0
  %2229 = vmatprep.subr.mxu0 0.0
  %2230 = vmatpush1.msra.mxu0 0.0
  %2231 = vmatprep.mubr.f32.mxu0 0.0
  %2232 = vmatmul.mubr.f32.gmra.mrb[0].mxu0 %v2162
  %v2233 = vpop.f32.mrb[0].mxu0
  %v2234 = vadd.f32 %v2159, %v2233
  %v2235 = vpop.f32.mrb[0].mxu0
  %2236 = vmatprep.mubr.f32.mxu0 0.0
  %2237 = vmatmul.mubr.f32.gmra.mrb[0].mxu0 %v2165
  %v2238 = vpop.f32.mrb[0].mxu0
  %v2239 = vadd.f32 %v2159, %v2238
  %v2240 = vpop.f32.mrb[0].mxu0
  %2241 = vdwg.mxu0
  %v2242 = vxor.u32 %v2234, 2147483648
  %v2243 = vxor.u32 %v2239, 2147483648
  %v2244 = vmul.f32 %v2242, 1.442695
  %v2245 = vpow.pop %v2244
  %v2246 = vmul.f32 %v2243, 1.442695
  %v2247 = vpow.pop %v2246
  %v2248 = vadd.f32 %v2245, 1.0
  %v2249 = vadd.f32 %v2247, 1.0
  %v2250 = vrcp.pop %v2248
  %v2251 = vmul.f32 1.0, %v2250
  %v2252 = vrcp.pop %v2249
  %v2253 = vmul.f32 1.0, %v2252
  %v2254 = vtanh.pop %v2234
  %v2255 = vtanh.pop %v2239
  %v2256 = vmul.f32 %v2251, 0.0
  %v2257 = vmul.f32 %v2253, 0.0
  %2260 = vrot.lane.b32.xlu0 %v2254, 64
  %v2261 = vpop.permute.xlu0 %2260
  %2262 = vrot.lane.b32.xlu0 %v2255, 64
  %v2263 = vpop.permute.xlu0 %2262
  %v2266 = vmul.f32 %v2251, %v2261
  %v2267 = vmul.f32 %v2253, %v2263
  %2270 = vrot.lane.b32.xlu0 %v2266, 32
  %v2271 = vpop.permute.xlu0 %2270
  %2272 = vrot.lane.b32.xlu0 %v2267, 32
  %v2273 = vpop.permute.xlu0 %2272
  %v2276 = vadd.f32 %v2256, %v2271
  %v2277 = vadd.f32 %v2257, %v2273
  %v2278 = vtanh.pop %v2276
  %v2279 = vtanh.pop %v2277
  %2282 = vrot.lane.b32.xlu0 %v2278, 64
  %v2283 = vpop.permute.xlu0 %2282
  %2284 = vrot.lane.b32.xlu0 %v2279, 64
  %v2285 = vpop.permute.xlu0 %2284
  %v2288 = vmul.f32 %v2251, %v2283
  %v2289 = vmul.f32 %v2253, %v2285
  %v2290 = vsel %vm2013, 1, 0
  %v2291 = vsel %vm2014, 1, 0
  %2292 = vset.pattern.permute.xlu0 0
  %2293 = vperm.xlu0 %2292, %v2290
  %v2294 = vpop.permute.xlu0 %2293
  %2295 = vset.pattern.permute.xlu0 0
  %2296 = vperm.xlu0 %2295, %v2291
  %v2297 = vpop.permute.xlu0 %2296
  %vm2298 = vcmp.eq.s32.totalorder %v2294, 1
  %vm2299 = vcmp.eq.s32.totalorder %v2297, 1
  %v2300 = vsel %vm2298, %v2143, 0.0
  %v2301 = vsel %vm2299, %v2144, 0.0
  %v2302 = vsel %vm2298, %v2131, 0.0
  %v2303 = vsel %vm2299, %v2132, 0.0
  %v2304 = vsel %vm2298, %v2288, 0.0
  %v2305 = vsel %vm2299, %v2289, 0.0
  %v2306 = vsel %vm2298, %v2276, 0.0
  %v2307 = vsel %vm2299, %v2277, 0.0
  %vm2308 = vcmp.gt.s32.totalorder %v1998, 1
  %vm2309 = vcmp.gt.s32.totalorder %v1999, 1
  %v2310 = vld [vmem:[%s427] sm:$0xff]
  %v2311 = vld [vmem:[%s427 + $0x8] sm:$0xff]
  %2314 = vrot.lane.b32.xlu0 %v2300, 32
  %v2315 = vpop.permute.xlu0 %2314
  %2316 = vrot.lane.b32.xlu0 %v2301, 32
  %v2317 = vpop.permute.xlu0 %2316
  %v2318 = vsel %vm165, %v2315, 0
  %v2320 = vsel %vm165, %v2317, 0
  %2322 = vmatprep.subr.mxu0 0.0
  %2323 = vmatpush1.msra.mxu0 %v2000
  %2324 = vmatprep.subr.mxu0 0.0
  %2325 = vmatpush1.msra.mxu0 %v2001
  %2326 = vmatprep.subr.mxu0 0.0
  %2327 = vmatpush1.msra.mxu0 %v2002
  %2328 = vmatprep.subr.mxu0 0.0
  %2329 = vmatpush1.msra.mxu0 %v2003
  %2330 = vmatprep.subr.mxu0 0.0
  %2331 = vmatpush1.msra.mxu0 0.0
  %2332 = vmatprep.subr.mxu0 0.0
  %2333 = vmatpush1.msra.mxu0 0.0
  %2334 = vmatprep.subr.mxu0 0.0
  %2335 = vmatpush1.msra.mxu0 0.0
  %2336 = vmatprep.subr.mxu0 0.0
  %2337 = vmatpush1.msra.mxu0 0.0
  %2338 = vmatprep.subr.mxu0 0.0
  %2339 = vmatpush1.msra.mxu0 0.0
  %2340 = vmatprep.subr.mxu0 0.0
  %2341 = vmatpush1.msra.mxu0 0.0
  %2342 = vmatprep.subr.mxu0 0.0
  %2343 = vmatpush1.msra.mxu0 0.0
  %2344 = vmatprep.subr.mxu0 0.0
  %2345 = vmatpush1.msra.mxu0 0.0
  %2346 = vmatprep.subr.mxu0 0.0
  %2347 = vmatpush1.msra.mxu0 0.0
  %2348 = vmatprep.subr.mxu0 0.0
  %2349 = vmatpush1.msra.mxu0 0.0
  %2350 = vmatprep.subr.mxu0 0.0
  %2351 = vmatpush1.msra.mxu0 0.0
  %2352 = vmatprep.subr.mxu0 0.0
  %2353 = vmatpush1.msra.mxu0 0.0
  %2354 = vmatprep.subr.mxu0 0.0
  %2355 = vmatpush1.msra.mxu0 0.0
  %2356 = vmatprep.subr.mxu0 0.0
  %2357 = vmatpush1.msra.mxu0 0.0
  %2358 = vmatprep.subr.mxu0 0.0
  %2359 = vmatpush1.msra.mxu0 0.0
  %2360 = vmatprep.subr.mxu0 0.0
  %2361 = vmatpush1.msra.mxu0 0.0
  %2362 = vmatprep.subr.mxu0 0.0
  %2363 = vmatpush1.msra.mxu0 0.0
  %2364 = vmatprep.subr.mxu0 0.0
  %2365 = vmatpush1.msra.mxu0 0.0
  %2366 = vmatprep.subr.mxu0 0.0
  %2367 = vmatpush1.msra.mxu0 0.0
  %2368 = vmatprep.subr.mxu0 0.0
  %2369 = vmatpush1.msra.mxu0 0.0
  %2370 = vmatprep.subr.mxu0 0.0
  %2371 = vmatpush1.msra.mxu0 0.0
  %2372 = vmatprep.subr.mxu0 0.0
  %2373 = vmatpush1.msra.mxu0 0.0
  %2374 = vmatprep.subr.mxu0 0.0
  %2375 = vmatpush1.msra.mxu0 0.0
  %2376 = vmatprep.subr.mxu0 0.0
  %2377 = vmatpush1.msra.mxu0 0.0
  %2378 = vmatprep.subr.mxu0 0.0
  %2379 = vmatpush1.msra.mxu0 0.0
  %2380 = vmatprep.subr.mxu0 0.0
  %2381 = vmatpush1.msra.mxu0 0.0
  %2382 = vmatprep.subr.mxu0 0.0
  %2383 = vmatpush1.msra.mxu0 0.0
  %2384 = vmatprep.subr.mxu0 0.0
  %2385 = vmatpush1.msra.mxu0 0.0
  %2386 = vmatprep.mubr.f32.mxu0 0.0
  %2387 = vmatmul.mubr.f32.gmra.mrb[0].mxu0 %v2318
  %v2388 = vpop.f32.mrb[0].mxu0
  %v2389 = vadd.f32 0.0, %v2388
  %v2390 = vpop.f32.mrb[0].mxu0
  %2391 = vmatprep.mubr.f32.mxu0 0.0
  %2392 = vmatmul.mubr.f32.gmra.mrb[0].mxu0 %v2320
  %v2393 = vpop.f32.mrb[0].mxu0
  %v2394 = vadd.f32 0.0, %v2393
  %v2395 = vpop.f32.mrb[0].mxu0
  %2396 = vdwg.mxu0
  %v2397 = vadd.f32 %v2310, %v2389
  %v2398 = vadd.f32 %v2311, %v2394
  %v2399 = vxor.u32 %v2397, 2147483648
  %v2400 = vxor.u32 %v2398, 2147483648
  %v2401 = vmul.f32 %v2399, 1.442695
  %v2402 = vpow.pop %v2401
  %v2403 = vmul.f32 %v2400, 1.442695
  %v2404 = vpow.pop %v2403
  %v2405 = vadd.f32 %v2402, 1.0
  %v2406 = vadd.f32 %v2404, 1.0
  %v2407 = vrcp.pop %v2405
  %v2408 = vmul.f32 1.0, %v2407
  %v2409 = vrcp.pop %v2406
  %v2410 = vmul.f32 1.0, %v2409
  %v2411 = vtanh.pop %v2397
  %v2412 = vtanh.pop %v2398
  %v2413 = vmul.f32 %v2408, %v2302
  %v2414 = vmul.f32 %v2410, %v2303
  %2417 = vrot.lane.b32.xlu0 %v2411, 64
  %v2418 = vpop.permute.xlu0 %2417
  %2419 = vrot.lane.b32.xlu0 %v2412, 64
  %v2420 = vpop.permute.xlu0 %2419
  %v2423 = vmul.f32 %v2408, %v2418
  %v2424 = vmul.f32 %v2410, %v2420
  %2427 = vrot.lane.b32.xlu0 %v2423, 32
  %v2428 = vpop.permute.xlu0 %2427
  %2429 = vrot.lane.b32.xlu0 %v2424, 32
  %v2430 = vpop.permute.xlu0 %2429
  %v2433 = vadd.f32 %v2413, %v2428
  %v2434 = vadd.f32 %v2414, %v2430
  %v2435 = vtanh.pop %v2433
  %v2436 = vtanh.pop %v2434
  %2439 = vrot.lane.b32.xlu0 %v2435, 64
  %v2440 = vpop.permute.xlu0 %2439
  %2441 = vrot.lane.b32.xlu0 %v2436, 64
  %v2442 = vpop.permute.xlu0 %2441
  %v2445 = vmul.f32 %v2408, %v2440
  %v2446 = vmul.f32 %v2410, %v2442
  %2449 = vrot.lane.b32.xlu0 %v2445, 32
  %v2450 = vpop.permute.xlu0 %2449
  %2451 = vrot.lane.b32.xlu0 %v2446, 32
  %v2452 = vpop.permute.xlu0 %2451
  %2457 = vrot.lane.b32.xlu0 %v2304, 64
  %v2458 = vpop.permute.xlu0 %2457
  %2459 = vrot.lane.b32.xlu0 %v2305, 64
  %v2460 = vpop.permute.xlu0 %2459
  %v2463 = vsel %vm165, %v2450, %v2458
  %v2464 = vsel %vm165, %v2452, %v2460
  %v2466 = vsel %vm87, %v2463, 0
  %v2469 = vsel %vm87, %v2464, 0
  %2471 = vmatprep.subr.mxu0 0.0
  %2472 = vmatpush1.msra.mxu0 %v2004
  %2473 = vmatprep.subr.mxu0 0.0
  %2474 = vmatpush1.msra.mxu0 %v2005
  %2475 = vmatprep.subr.mxu0 0.0
  %2476 = vmatpush1.msra.mxu0 %v2006
  %2477 = vmatprep.subr.mxu0 0.0
  %2478 = vmatpush1.msra.mxu0 %v2007
  %2479 = vmatprep.subr.mxu0 0.0
  %2480 = vmatpush1.msra.mxu0 %v2008
  %2481 = vmatprep.subr.mxu0 0.0
  %2482 = vmatpush1.msra.mxu0 %v2009
  %2483 = vmatprep.subr.mxu0 0.0
  %2484 = vmatpush1.msra.mxu0 %v2010
  %2485 = vmatprep.subr.mxu0 0.0
  %2486 = vmatpush1.msra.mxu0 %v2011
  %2487 = vmatprep.subr.mxu0 0.0
  %2488 = vmatpush1.msra.mxu0 0.0
  %2489 = vmatprep.subr.mxu0 0.0
  %2490 = vmatpush1.msra.mxu0 0.0
  %2491 = vmatprep.subr.mxu0 0.0
  %2492 = vmatpush1.msra.mxu0 0.0
  %2493 = vmatprep.subr.mxu0 0.0
  %2494 = vmatpush1.msra.mxu0 0.0
  %2495 = vmatprep.subr.mxu0 0.0
  %2496 = vmatpush1.msra.mxu0 0.0
  %2497 = vmatprep.subr.mxu0 0.0
  %2498 = vmatpush1.msra.mxu0 0.0
  %2499 = vmatprep.subr.mxu0 0.0
  %2500 = vmatpush1.msra.mxu0 0.0
  %2501 = vmatprep.subr.mxu0 0.0
  %2502 = vmatpush1.msra.mxu0 0.0
  %2503 = vmatprep.subr.mxu0 0.0
  %2504 = vmatpush1.msra.mxu0 0.0
  %2505 = vmatprep.subr.mxu0 0.0
  %2506 = vmatpush1.msra.mxu0 0.0
  %2507 = vmatprep.subr.mxu0 0.0
  %2508 = vmatpush1.msra.mxu0 0.0
  %2509 = vmatprep.subr.mxu0 0.0
  %2510 = vmatpush1.msra.mxu0 0.0
  %2511 = vmatprep.subr.mxu0 0.0
  %2512 = vmatpush1.msra.mxu0 0.0
  %2513 = vmatprep.subr.mxu0 0.0
  %2514 = vmatpush1.msra.mxu0 0.0
  %2515 = vmatprep.subr.mxu0 0.0
  %2516 = vmatpush1.msra.mxu0 0.0
  %2517 = vmatprep.subr.mxu0 0.0
  %2518 = vmatpush1.msra.mxu0 0.0
  %2519 = vmatprep.subr.mxu0 0.0
  %2520 = vmatpush1.msra.mxu0 0.0
  %2521 = vmatprep.subr.mxu0 0.0
  %2522 = vmatpush1.msra.mxu0 0.0
  %2523 = vmatprep.subr.mxu0 0.0
  %2524 = vmatpush1.msra.mxu0 0.0
  %2525 = vmatprep.subr.mxu0 0.0
  %2526 = vmatpush1.msra.mxu0 0.0
  %2527 = vmatprep.subr.mxu0 0.0
  %2528 = vmatpush1.msra.mxu0 0.0
  %2529 = vmatprep.subr.mxu0 0.0
  %2530 = vmatpush1.msra.mxu0 0.0
  %2531 = vmatprep.subr.mxu0 0.0
  %2532 = vmatpush1.msra.mxu0 0.0
  %2533 = vmatprep.subr.mxu0 0.0
  %2534 = vmatpush1.msra.mxu0 0.0
  %2535 = vmatprep.mubr.f32.mxu0 0.0
  %2536 = vmatmul.mubr.f32.gmra.mrb[0].mxu0 %v2466
  %v2537 = vpop.f32.mrb[0].mxu0
  %v2538 = vadd.f32 %v2159, %v2537
  %v2539 = vpop.f32.mrb[0].mxu0
  %2540 = vmatprep.mubr.f32.mxu0 0.0
  %2541 = vmatmul.mubr.f32.gmra.mrb[0].mxu0 %v2469
  %v2542 = vpop.f32.mrb[0].mxu0
  %v2543 = vadd.f32 %v2159, %v2542
  %v2544 = vpop.f32.mrb[0].mxu0
  %2545 = vdwg.mxu0
  %v2546 = vxor.u32 %v2538, 2147483648
  %v2547 = vxor.u32 %v2543, 2147483648
  %v2548 = vmul.f32 %v2546, 1.442695
  %v2549 = vpow.pop %v2548
  %v2550 = vmul.f32 %v2547, 1.442695
  %v2551 = vpow.pop %v2550
  %v2552 = vadd.f32 %v2549, 1.0
  %v2553 = vadd.f32 %v2551, 1.0
  %v2554 = vrcp.pop %v2552
  %v2555 = vmul.f32 1.0, %v2554
  %v2556 = vrcp.pop %v2553
  %v2557 = vmul.f32 1.0, %v2556
  %v2558 = vtanh.pop %v2538
  %v2559 = vtanh.pop %v2543
  %v2560 = vmul.f32 %v2555, %v2306
  %v2561 = vmul.f32 %v2557, %v2307
  %2564 = vrot.lane.b32.xlu0 %v2558, 64
  %v2565 = vpop.permute.xlu0 %2564
  %2566 = vrot.lane.b32.xlu0 %v2559, 64
  %v2567 = vpop.permute.xlu0 %2566
  %v2570 = vmul.f32 %v2555, %v2565
  %v2571 = vmul.f32 %v2557, %v2567
  %2574 = vrot.lane.b32.xlu0 %v2570, 32
  %v2575 = vpop.permute.xlu0 %2574
  %2576 = vrot.lane.b32.xlu0 %v2571, 32
  %v2577 = vpop.permute.xlu0 %2576
  %v2580 = vadd.f32 %v2560, %v2575
  %v2581 = vadd.f32 %v2561, %v2577
  %v2582 = vtanh.pop %v2580
  %v2583 = vtanh.pop %v2581
  %2586 = vrot.lane.b32.xlu0 %v2582, 64
  %v2587 = vpop.permute.xlu0 %2586
  %2588 = vrot.lane.b32.xlu0 %v2583, 64
  %v2589 = vpop.permute.xlu0 %2588
  %v2592 = vmul.f32 %v2555, %v2587
  %v2593 = vmul.f32 %v2557, %v2589
  %v2594 = vsel %vm2308, 1, 0
  %v2595 = vsel %vm2309, 1, 0
  %2596 = vset.pattern.permute.xlu0 0
  %2597 = vperm.xlu0 %2596, %v2594
  %v2598 = vpop.permute.xlu0 %2597
  %2599 = vset.pattern.permute.xlu0 0
  %2600 = vperm.xlu0 %2599, %v2595
  %v2601 = vpop.permute.xlu0 %2600
  %vm2602 = vcmp.eq.s32.totalorder %v2598, 1
  %vm2603 = vcmp.eq.s32.totalorder %v2601, 1
  %v2604 = vsel %vm2602, %v2445, %v2300
  %v2605 = vsel %vm2603, %v2446, %v2301
  %v2606 = vsel %vm2602, %v2433, %v2302
  %v2607 = vsel %vm2603, %v2434, %v2303
  %v2608 = vsel %vm2602, %v2592, %v2304
  %v2609 = vsel %vm2603, %v2593, %v2305
  %v2610 = vsel %vm2602, %v2580, %v2306
  %v2611 = vsel %vm2603, %v2581, %v2307
  %vm2612 = vcmp.gt.s32.totalorder %v1998, 2
  %vm2613 = vcmp.gt.s32.totalorder %v1999, 2
  %v2614 = vld [vmem:[%s514] sm:$0xff]
  %v2615 = vld [vmem:[%s514 + $0x8] sm:$0xff]
  %2618 = vrot.lane.b32.xlu0 %v2604, 32
  %v2619 = vpop.permute.xlu0 %2618
  %2620 = vrot.lane.b32.xlu0 %v2605, 32
  %v2621 = vpop.permute.xlu0 %2620
  %v2622 = vsel %vm165, %v2619, 0
  %v2624 = vsel %vm165, %v2621, 0
  %2626 = vmatprep.subr.mxu0 0.0
  %2627 = vmatpush1.msra.mxu0 %v2000
  %2628 = vmatprep.subr.mxu0 0.0
  %2629 = vmatpush1.msra.mxu0 %v2001
  %2630 = vmatprep.subr.mxu0 0.0
  %2631 = vmatpush1.msra.mxu0 %v2002
  %2632 = vmatprep.subr.mxu0 0.0
  %2633 = vmatpush1.msra.mxu0 %v2003
  %2634 = vmatprep.subr.mxu0 0.0
  %2635 = vmatpush1.msra.mxu0 0.0
  %2636 = vmatprep.subr.mxu0 0.0
  %2637 = vmatpush1.msra.mxu0 0.0
  %2638 = vmatprep.subr.mxu0 0.0
  %2639 = vmatpush1.msra.mxu0 0.0
  %2640 = vmatprep.subr.mxu0 0.0
  %2641 = vmatpush1.msra.mxu0 0.0
  %2642 = vmatprep.subr.mxu0 0.0
  %2643 = vmatpush1.msra.mxu0 0.0
  %2644 = vmatprep.subr.mxu0 0.0
  %2645 = vmatpush1.msra.mxu0 0.0
  %2646 = vmatprep.subr.mxu0 0.0
  %2647 = vmatpush1.msra.mxu0 0.0
  %2648 = vmatprep.subr.mxu0 0.0
  %2649 = vmatpush1.msra.mxu0 0.0
  %2650 = vmatprep.subr.mxu0 0.0
  %2651 = vmatpush1.msra.mxu0 0.0
  %2652 = vmatprep.subr.mxu0 0.0
  %2653 = vmatpush1.msra.mxu0 0.0
  %2654 = vmatprep.subr.mxu0 0.0
  %2655 = vmatpush1.msra.mxu0 0.0
  %2656 = vmatprep.subr.mxu0 0.0
  %2657 = vmatpush1.msra.mxu0 0.0
  %2658 = vmatprep.subr.mxu0 0.0
  %2659 = vmatpush1.msra.mxu0 0.0
  %2660 = vmatprep.subr.mxu0 0.0
  %2661 = vmatpush1.msra.mxu0 0.0
  %2662 = vmatprep.subr.mxu0 0.0
  %2663 = vmatpush1.msra.mxu0 0.0
  %2664 = vmatprep.subr.mxu0 0.0
  %2665 = vmatpush1.msra.mxu0 0.0
  %2666 = vmatprep.subr.mxu0 0.0
  %2667 = vmatpush1.msra.mxu0 0.0
  %2668 = vmatprep.subr.mxu0 0.0
  %2669 = vmatpush1.msra.mxu0 0.0
  %2670 = vmatprep.subr.mxu0 0.0
  %2671 = vmatpush1.msra.mxu0 0.0
  %2672 = vmatprep.subr.mxu0 0.0
  %2673 = vmatpush1.msra.mxu0 0.0
  %2674 = vmatprep.subr.mxu0 0.0
  %2675 = vmatpush1.msra.mxu0 0.0
  %2676 = vmatprep.subr.mxu0 0.0
  %2677 = vmatpush1.msra.mxu0 0.0
  %2678 = vmatprep.subr.mxu0 0.0
  %2679 = vmatpush1.msra.mxu0 0.0
  %2680 = vmatprep.subr.mxu0 0.0
  %2681 = vmatpush1.msra.mxu0 0.0
  %2682 = vmatprep.subr.mxu0 0.0
  %2683 = vmatpush1.msra.mxu0 0.0
  %2684 = vmatprep.subr.mxu0 0.0
  %2685 = vmatpush1.msra.mxu0 0.0
  %2686 = vmatprep.subr.mxu0 0.0
  %2687 = vmatpush1.msra.mxu0 0.0
  %2688 = vmatprep.subr.mxu0 0.0
  %2689 = vmatpush1.msra.mxu0 0.0
  %2690 = vmatprep.mubr.f32.mxu0 0.0
  %2691 = vmatmul.mubr.f32.gmra.mrb[0].mxu0 %v2622
  %v2692 = vpop.f32.mrb[0].mxu0
  %v2693 = vadd.f32 0.0, %v2692
  %v2694 = vpop.f32.mrb[0].mxu0
  %2695 = vmatprep.mubr.f32.mxu0 0.0
  %2696 = vmatmul.mubr.f32.gmra.mrb[0].mxu0 %v2624
  %v2697 = vpop.f32.mrb[0].mxu0
  %v2698 = vadd.f32 0.0, %v2697
  %v2699 = vpop.f32.mrb[0].mxu0
  %2700 = vdwg.mxu0
  %v2701 = vadd.f32 %v2614, %v2693
  %v2702 = vadd.f32 %v2615, %v2698
  %v2703 = vxor.u32 %v2701, 2147483648
  %v2704 = vxor.u32 %v2702, 2147483648
  %v2705 = vmul.f32 %v2703, 1.442695
  %v2706 = vpow.pop %v2705
  %v2707 = vmul.f32 %v2704, 1.442695
  %v2708 = vpow.pop %v2707
  %v2709 = vadd.f32 %v2706, 1.0
  %v2710 = vadd.f32 %v2708, 1.0
  %v2711 = vrcp.pop %v2709
  %v2712 = vmul.f32 1.0, %v2711
  %v2713 = vrcp.pop %v2710
  %v2714 = vmul.f32 1.0, %v2713
  %v2715 = vtanh.pop %v2701
  %v2716 = vtanh.pop %v2702
  %v2717 = vmul.f32 %v2712, %v2606
  %v2718 = vmul.f32 %v2714, %v2607
  %2721 = vrot.lane.b32.xlu0 %v2715, 64
  %v2722 = vpop.permute.xlu0 %2721
  %2723 = vrot.lane.b32.xlu0 %v2716, 64
  %v2724 = vpop.permute.xlu0 %2723
  %v2727 = vmul.f32 %v2712, %v2722
  %v2728 = vmul.f32 %v2714, %v2724
  %2731 = vrot.lane.b32.xlu0 %v2727, 32
  %v2732 = vpop.permute.xlu0 %2731
  %2733 = vrot.lane.b32.xlu0 %v2728, 32
  %v2734 = vpop.permute.xlu0 %2733
  %v2737 = vadd.f32 %v2717, %v2732
  %v2738 = vadd.f32 %v2718, %v2734
  %v2739 = vtanh.pop %v2737
  %v2740 = vtanh.pop %v2738
  %2743 = vrot.lane.b32.xlu0 %v2739, 64
  %v2744 = vpop.permute.xlu0 %2743
  %2745 = vrot.lane.b32.xlu0 %v2740, 64
  %v2746 = vpop.permute.xlu0 %2745
  %v2749 = vmul.f32 %v2712, %v2744
  %v2750 = vmul.f32 %v2714, %v2746
  %2753 = vrot.lane.b32.xlu0 %v2749, 32
  %v2754 = vpop.permute.xlu0 %2753
  %2755 = vrot.lane.b32.xlu0 %v2750, 32
  %v2756 = vpop.permute.xlu0 %2755
  %2761 = vrot.lane.b32.xlu0 %v2608, 64
  %v2762 = vpop.permute.xlu0 %2761
  %2763 = vrot.lane.b32.xlu0 %v2609, 64
  %v2764 = vpop.permute.xlu0 %2763
  %v2767 = vsel %vm165, %v2754, %v2762
  %v2768 = vsel %vm165, %v2756, %v2764
  %v2770 = vsel %vm87, %v2767, 0
  %v2773 = vsel %vm87, %v2768, 0
  %2775 = vmatprep.subr.mxu0 0.0
  %2776 = vmatpush1.msra.mxu0 %v2004
  %2777 = vmatprep.subr.mxu0 0.0
  %2778 = vmatpush1.msra.mxu0 %v2005
  %2779 = vmatprep.subr.mxu0 0.0
  %2780 = vmatpush1.msra.mxu0 %v2006
  %2781 = vmatprep.subr.mxu0 0.0
  %2782 = vmatpush1.msra.mxu0 %v2007
  %2783 = vmatprep.subr.mxu0 0.0
  %2784 = vmatpush1.msra.mxu0 %v2008
  %2785 = vmatprep.subr.mxu0 0.0
  %2786 = vmatpush1.msra.mxu0 %v2009
  %2787 = vmatprep.subr.mxu0 0.0
  %2788 = vmatpush1.msra.mxu0 %v2010
  %2789 = vmatprep.subr.mxu0 0.0
  %2790 = vmatpush1.msra.mxu0 %v2011
  %2791 = vmatprep.subr.mxu0 0.0
  %2792 = vmatpush1.msra.mxu0 0.0
  %2793 = vmatprep.subr.mxu0 0.0
  %2794 = vmatpush1.msra.mxu0 0.0
  %2795 = vmatprep.subr.mxu0 0.0
  %2796 = vmatpush1.msra.mxu0 0.0
  %2797 = vmatprep.subr.mxu0 0.0
  %2798 = vmatpush1.msra.mxu0 0.0
  %2799 = vmatprep.subr.mxu0 0.0
  %2800 = vmatpush1.msra.mxu0 0.0
  %2801 = vmatprep.subr.mxu0 0.0
  %2802 = vmatpush1.msra.mxu0 0.0
  %2803 = vmatprep.subr.mxu0 0.0
  %2804 = vmatpush1.msra.mxu0 0.0
  %2805 = vmatprep.subr.mxu0 0.0
  %2806 = vmatpush1.msra.mxu0 0.0
  %2807 = vmatprep.subr.mxu0 0.0
  %2808 = vmatpush1.msra.mxu0 0.0
  %2809 = vmatprep.subr.mxu0 0.0
  %2810 = vmatpush1.msra.mxu0 0.0
  %2811 = vmatprep.subr.mxu0 0.0
  %2812 = vmatpush1.msra.mxu0 0.0
  %2813 = vmatprep.subr.mxu0 0.0
  %2814 = vmatpush1.msra.mxu0 0.0
  %2815 = vmatprep.subr.mxu0 0.0
  %2816 = vmatpush1.msra.mxu0 0.0
  %2817 = vmatprep.subr.mxu0 0.0
  %2818 = vmatpush1.msra.mxu0 0.0
  %2819 = vmatprep.subr.mxu0 0.0
  %2820 = vmatpush1.msra.mxu0 0.0
  %2821 = vmatprep.subr.mxu0 0.0
  %2822 = vmatpush1.msra.mxu0 0.0
  %2823 = vmatprep.subr.mxu0 0.0
  %2824 = vmatpush1.msra.mxu0 0.0
  %2825 = vmatprep.subr.mxu0 0.0
  %2826 = vmatpush1.msra.mxu0 0.0
  %2827 = vmatprep.subr.mxu0 0.0
  %2828 = vmatpush1.msra.mxu0 0.0
  %2829 = vmatprep.subr.mxu0 0.0
  %2830 = vmatpush1.msra.mxu0 0.0
  %2831 = vmatprep.subr.mxu0 0.0
  %2832 = vmatpush1.msra.mxu0 0.0
  %2833 = vmatprep.subr.mxu0 0.0
  %2834 = vmatpush1.msra.mxu0 0.0
  %2835 = vmatprep.subr.mxu0 0.0
  %2836 = vmatpush1.msra.mxu0 0.0
  %2837 = vmatprep.subr.mxu0 0.0
  %2838 = vmatpush1.msra.mxu0 0.0
  %2839 = vmatprep.mubr.f32.mxu0 0.0
  %2840 = vmatmul.mubr.f32.gmra.mrb[0].mxu0 %v2770
  %v2841 = vpop.f32.mrb[0].mxu0
  %v2842 = vadd.f32 %v2159, %v2841
  %v2843 = vpop.f32.mrb[0].mxu0
  %2844 = vmatprep.mubr.f32.mxu0 0.0
  %2845 = vmatmul.mubr.f32.gmra.mrb[0].mxu0 %v2773
  %v2846 = vpop.f32.mrb[0].mxu0
  %v2847 = vadd.f32 %v2159, %v2846
  %v2848 = vpop.f32.mrb[0].mxu0
  %2849 = vdwg.mxu0
  %v2850 = vxor.u32 %v2842, 2147483648
  %v2851 = vxor.u32 %v2847, 2147483648
  %v2852 = vmul.f32 %v2850, 1.442695
  %v2853 = vpow.pop %v2852
  %v2854 = vmul.f32 %v2851, 1.442695
  %v2855 = vpow.pop %v2854
  %v2856 = vadd.f32 %v2853, 1.0
  %v2857 = vadd.f32 %v2855, 1.0
  %v2858 = vrcp.pop %v2856
  %v2859 = vmul.f32 1.0, %v2858
  %v2860 = vrcp.pop %v2857
  %v2861 = vmul.f32 1.0, %v2860
  %v2862 = vtanh.pop %v2842
  %v2863 = vtanh.pop %v2847
  %v2864 = vmul.f32 %v2859, %v2610
  %v2865 = vmul.f32 %v2861, %v2611
  %2868 = vrot.lane.b32.xlu0 %v2862, 64
  %v2869 = vpop.permute.xlu0 %2868
  %2870 = vrot.lane.b32.xlu0 %v2863, 64
  %v2871 = vpop.permute.xlu0 %2870
  %v2874 = vmul.f32 %v2859, %v2869
  %v2875 = vmul.f32 %v2861, %v2871
  %2878 = vrot.lane.b32.xlu0 %v2874, 32
  %v2879 = vpop.permute.xlu0 %2878
  %2880 = vrot.lane.b32.xlu0 %v2875, 32
  %v2881 = vpop.permute.xlu0 %2880
  %v2884 = vadd.f32 %v2864, %v2879
  %v2885 = vadd.f32 %v2865, %v2881
  %v2886 = vtanh.pop %v2884
  %v2887 = vtanh.pop %v2885
  %2890 = vrot.lane.b32.xlu0 %v2886, 64
  %v2891 = vpop.permute.xlu0 %2890
  %2892 = vrot.lane.b32.xlu0 %v2887, 64
  %v2893 = vpop.permute.xlu0 %2892
  %v2896 = vmul.f32 %v2859, %v2891
  %v2897 = vmul.f32 %v2861, %v2893
  %v2898 = vsel %vm2612, 1, 0
  %v2899 = vsel %vm2613, 1, 0
  %2900 = vset.pattern.permute.xlu0 0
  %2901 = vperm.xlu0 %2900, %v2898
  %v2902 = vpop.permute.xlu0 %2901
  %2903 = vset.pattern.permute.xlu0 0
  %2904 = vperm.xlu0 %2903, %v2899
  %v2905 = vpop.permute.xlu0 %2904
  %vm2906 = vcmp.eq.s32.totalorder %v2902, 1
  %vm2907 = vcmp.eq.s32.totalorder %v2905, 1
  %v2908 = vsel %vm2906, %v2749, %v2604
  %v2909 = vsel %vm2907, %v2750, %v2605
  %v2910 = vsel %vm2906, %v2737, %v2606
  %v2911 = vsel %vm2907, %v2738, %v2607
  %v2912 = vsel %vm2906, %v2896, %v2608
  %v2913 = vsel %vm2907, %v2897, %v2609
  %v2914 = vsel %vm2906, %v2884, %v2610
  %v2915 = vsel %vm2907, %v2885, %v2611
  %vm2916 = vcmp.gt.s32.totalorder %v1998, 3
  %vm2917 = vcmp.gt.s32.totalorder %v1999, 3
  %v2918 = vld [vmem:[%s601] sm:$0xff]
  %v2919 = vld [vmem:[%s601 + $0x8] sm:$0xff]
  %2922 = vrot.lane.b32.xlu0 %v2908, 32
  %v2923 = vpop.permute.xlu0 %2922
  %2924 = vrot.lane.b32.xlu0 %v2909, 32
  %v2925 = vpop.permute.xlu0 %2924
  %v2926 = vsel %vm165, %v2923, 0
  %v2928 = vsel %vm165, %v2925, 0
  %2930 = vmatprep.subr.mxu0 0.0
  %2931 = vmatpush1.msra.mxu0 %v2000
  %2932 = vmatprep.subr.mxu0 0.0
  %2933 = vmatpush1.msra.mxu0 %v2001
  %2934 = vmatprep.subr.mxu0 0.0
  %2935 = vmatpush1.msra.mxu0 %v2002
  %2936 = vmatprep.subr.mxu0 0.0
  %2937 = vmatpush1.msra.mxu0 %v2003
  %2938 = vmatprep.subr.mxu0 0.0
  %2939 = vmatpush1.msra.mxu0 0.0
  %2940 = vmatprep.subr.mxu0 0.0
  %2941 = vmatpush1.msra.mxu0 0.0
  %2942 = vmatprep.subr.mxu0 0.0
  %2943 = vmatpush1.msra.mxu0 0.0
  %2944 = vmatprep.subr.mxu0 0.0
  %2945 = vmatpush1.msra.mxu0 0.0
  %2946 = vmatprep.subr.mxu0 0.0
  %2947 = vmatpush1.msra.mxu0 0.0
  %2948 = vmatprep.subr.mxu0 0.0
  %2949 = vmatpush1.msra.mxu0 0.0
  %2950 = vmatprep.subr.mxu0 0.0
  %2951 = vmatpush1.msra.mxu0 0.0
  %2952 = vmatprep.subr.mxu0 0.0
  %2953 = vmatpush1.msra.mxu0 0.0
  %2954 = vmatprep.subr.mxu0 0.0
  %2955 = vmatpush1.msra.mxu0 0.0
  %2956 = vmatprep.subr.mxu0 0.0
  %2957 = vmatpush1.msra.mxu0 0.0
  %2958 = vmatprep.subr.mxu0 0.0
  %2959 = vmatpush1.msra.mxu0 0.0
  %2960 = vmatprep.subr.mxu0 0.0
  %2961 = vmatpush1.msra.mxu0 0.0
  %2962 = vmatprep.subr.mxu0 0.0
  %2963 = vmatpush1.msra.mxu0 0.0
  %2964 = vmatprep.subr.mxu0 0.0
  %2965 = vmatpush1.msra.mxu0 0.0
  %2966 = vmatprep.subr.mxu0 0.0
  %2967 = vmatpush1.msra.mxu0 0.0
  %2968 = vmatprep.subr.mxu0 0.0
  %2969 = vmatpush1.msra.mxu0 0.0
  %2970 = vmatprep.subr.mxu0 0.0
  %2971 = vmatpush1.msra.mxu0 0.0
  %2972 = vmatprep.subr.mxu0 0.0
  %2973 = vmatpush1.msra.mxu0 0.0
  %2974 = vmatprep.subr.mxu0 0.0
  %2975 = vmatpush1.msra.mxu0 0.0
  %2976 = vmatprep.subr.mxu0 0.0
  %2977 = vmatpush1.msra.mxu0 0.0
  %2978 = vmatprep.subr.mxu0 0.0
  %2979 = vmatpush1.msra.mxu0 0.0
  %2980 = vmatprep.subr.mxu0 0.0
  %2981 = vmatpush1.msra.mxu0 0.0
  %2982 = vmatprep.subr.mxu0 0.0
  %2983 = vmatpush1.msra.mxu0 0.0
  %2984 = vmatprep.subr.mxu0 0.0
  %2985 = vmatpush1.msra.mxu0 0.0
  %2986 = vmatprep.subr.mxu0 0.0
  %2987 = vmatpush1.msra.mxu0 0.0
  %2988 = vmatprep.subr.mxu0 0.0
  %2989 = vmatpush1.msra.mxu0 0.0
  %2990 = vmatprep.subr.mxu0 0.0
  %2991 = vmatpush1.msra.mxu0 0.0
  %2992 = vmatprep.subr.mxu0 0.0
  %2993 = vmatpush1.msra.mxu0 0.0
  %2994 = vmatprep.mubr.f32.mxu0 0.0
  %2995 = vmatmul.mubr.f32.gmra.mrb[0].mxu0 %v2926
  %v2996 = vpop.f32.mrb[0].mxu0
  %v2997 = vadd.f32 0.0, %v2996
  %v2998 = vpop.f32.mrb[0].mxu0
  %2999 = vmatprep.mubr.f32.mxu0 0.0
  %3000 = vmatmul.mubr.f32.gmra.mrb[0].mxu0 %v2928
  %v3001 = vpop.f32.mrb[0].mxu0
  %v3002 = vadd.f32 0.0, %v3001
  %v3003 = vpop.f32.mrb[0].mxu0
  %3004 = vdwg.mxu0
  %v3005 = vadd.f32 %v2918, %v2997
  %v3006 = vadd.f32 %v2919, %v3002
  %v3007 = vxor.u32 %v3005, 2147483648
  %v3008 = vxor.u32 %v3006, 2147483648
  %v3009 = vmul.f32 %v3007, 1.442695
  %v3010 = vpow.pop %v3009
  %v3011 = vmul.f32 %v3008, 1.442695
  %v3012 = vpow.pop %v3011
  %v3013 = vadd.f32 %v3010, 1.0
  %v3014 = vadd.f32 %v3012, 1.0
  %v3015 = vrcp.pop %v3013
  %v3016 = vmul.f32 1.0, %v3015
  %v3017 = vrcp.pop %v3014
  %v3018 = vmul.f32 1.0, %v3017
  %v3019 = vtanh.pop %v3005
  %v3020 = vtanh.pop %v3006
  %v3021 = vmul.f32 %v3016, %v2910
  %v3022 = vmul.f32 %v3018, %v2911
  %3025 = vrot.lane.b32.xlu0 %v3019, 64
  %v3026 = vpop.permute.xlu0 %3025
  %3027 = vrot.lane.b32.xlu0 %v3020, 64
  %v3028 = vpop.permute.xlu0 %3027
  %v3031 = vmul.f32 %v3016, %v3026
  %v3032 = vmul.f32 %v3018, %v3028
  %3035 = vrot.lane.b32.xlu0 %v3031, 32
  %v3036 = vpop.permute.xlu0 %3035
  %3037 = vrot.lane.b32.xlu0 %v3032, 32
  %v3038 = vpop.permute.xlu0 %3037
  %v3041 = vadd.f32 %v3021, %v3036
  %v3042 = vadd.f32 %v3022, %v3038
  %v3043 = vtanh.pop %v3041
  %v3044 = vtanh.pop %v3042
  %3047 = vrot.lane.b32.xlu0 %v3043, 64
  %v3048 = vpop.permute.xlu0 %3047
  %3049 = vrot.lane.b32.xlu0 %v3044, 64
  %v3050 = vpop.permute.xlu0 %3049
  %v3053 = vmul.f32 %v3016, %v3048
  %v3054 = vmul.f32 %v3018, %v3050
  %3057 = vrot.lane.b32.xlu0 %v3053, 32
  %v3058 = vpop.permute.xlu0 %3057
  %3059 = vrot.lane.b32.xlu0 %v3054, 32
  %v3060 = vpop.permute.xlu0 %3059
  %3065 = vrot.lane.b32.xlu0 %v2912, 64
  %v3066 = vpop.permute.xlu0 %3065
  %3067 = vrot.lane.b32.xlu0 %v2913, 64
  %v3068 = vpop.permute.xlu0 %3067
  %v3071 = vsel %vm165, %v3058, %v3066
  %v3072 = vsel %vm165, %v3060, %v3068
  %v3074 = vsel %vm87, %v3071, 0
  %v3077 = vsel %vm87, %v3072, 0
  %3079 = vmatprep.subr.mxu0 0.0
  %3080 = vmatpush1.msra.mxu0 %v2004
  %3081 = vmatprep.subr.mxu0 0.0
  %3082 = vmatpush1.msra.mxu0 %v2005
  %3083 = vmatprep.subr.mxu0 0.0
  %3084 = vmatpush1.msra.mxu0 %v2006
  %3085 = vmatprep.subr.mxu0 0.0
  %3086 = vmatpush1.msra.mxu0 %v2007
  %3087 = vmatprep.subr.mxu0 0.0
  %3088 = vmatpush1.msra.mxu0 %v2008
  %3089 = vmatprep.subr.mxu0 0.0
  %3090 = vmatpush1.msra.mxu0 %v2009
  %3091 = vmatprep.subr.mxu0 0.0
  %3092 = vmatpush1.msra.mxu0 %v2010
  %3093 = vmatprep.subr.mxu0 0.0
  %3094 = vmatpush1.msra.mxu0 %v2011
  %3095 = vmatprep.subr.mxu0 0.0
  %3096 = vmatpush1.msra.mxu0 0.0
  %3097 = vmatprep.subr.mxu0 0.0
  %3098 = vmatpush1.msra.mxu0 0.0
  %3099 = vmatprep.subr.mxu0 0.0
  %3100 = vmatpush1.msra.mxu0 0.0
  %3101 = vmatprep.subr.mxu0 0.0
  %3102 = vmatpush1.msra.mxu0 0.0
  %3103 = vmatprep.subr.mxu0 0.0
  %3104 = vmatpush1.msra.mxu0 0.0
  %3105 = vmatprep.subr.mxu0 0.0
  %3106 = vmatpush1.msra.mxu0 0.0
  %3107 = vmatprep.subr.mxu0 0.0
  %3108 = vmatpush1.msra.mxu0 0.0
  %3109 = vmatprep.subr.mxu0 0.0
  %3110 = vmatpush1.msra.mxu0 0.0
  %3111 = vmatprep.subr.mxu0 0.0
  %3112 = vmatpush1.msra.mxu0 0.0
  %3113 = vmatprep.subr.mxu0 0.0
  %3114 = vmatpush1.msra.mxu0 0.0
  %3115 = vmatprep.subr.mxu0 0.0
  %3116 = vmatpush1.msra.mxu0 0.0
  %3117 = vmatprep.subr.mxu0 0.0
  %3118 = vmatpush1.msra.mxu0 0.0
  %3119 = vmatprep.subr.mxu0 0.0
  %3120 = vmatpush1.msra.mxu0 0.0
  %3121 = vmatprep.subr.mxu0 0.0
  %3122 = vmatpush1.msra.mxu0 0.0
  %3123 = vmatprep.subr.mxu0 0.0
  %3124 = vmatpush1.msra.mxu0 0.0
  %3125 = vmatprep.subr.mxu0 0.0
  %3126 = vmatpush1.msra.mxu0 0.0
  %3127 = vmatprep.subr.mxu0 0.0
  %3128 = vmatpush1.msra.mxu0 0.0
  %3129 = vmatprep.subr.mxu0 0.0
  %3130 = vmatpush1.msra.mxu0 0.0
  %3131 = vmatprep.subr.mxu0 0.0
  %3132 = vmatpush1.msra.mxu0 0.0
  %3133 = vmatprep.subr.mxu0 0.0
  %3134 = vmatpush1.msra.mxu0 0.0
  %3135 = vmatprep.subr.mxu0 0.0
  %3136 = vmatpush1.msra.mxu0 0.0
  %3137 = vmatprep.subr.mxu0 0.0
  %3138 = vmatpush1.msra.mxu0 0.0
  %3139 = vmatprep.subr.mxu0 0.0
  %3140 = vmatpush1.msra.mxu0 0.0
  %3141 = vmatprep.subr.mxu0 0.0
  %3142 = vmatpush1.msra.mxu0 0.0
  %3143 = vmatprep.mubr.f32.mxu0 0.0
  %3144 = vmatmul.mubr.f32.gmra.mrb[0].mxu0 %v3074
  %v3145 = vpop.f32.mrb[0].mxu0
  %v3146 = vadd.f32 %v2159, %v3145
  %v3147 = vpop.f32.mrb[0].mxu0
  %3148 = vmatprep.mubr.f32.mxu0 0.0
  %3149 = vmatmul.mubr.f32.gmra.mrb[0].mxu0 %v3077
  %v3150 = vpop.f32.mrb[0].mxu0
  %v3151 = vadd.f32 %v2159, %v3150
  %v3152 = vpop.f32.mrb[0].mxu0
  %3153 = vdwg.mxu0
  %v3154 = vxor.u32 %v3146, 2147483648
  %v3155 = vxor.u32 %v3151, 2147483648
  %v3156 = vmul.f32 %v3154, 1.442695
  %v3157 = vpow.pop %v3156
  %v3158 = vmul.f32 %v3155, 1.442695
  %v3159 = vpow.pop %v3158
  %v3160 = vadd.f32 %v3157, 1.0
  %v3161 = vadd.f32 %v3159, 1.0
  %v3162 = vrcp.pop %v3160
  %v3163 = vmul.f32 1.0, %v3162
  %v3164 = vrcp.pop %v3161
  %v3165 = vmul.f32 1.0, %v3164
  %v3166 = vtanh.pop %v3146
  %v3167 = vtanh.pop %v3151
  %v3168 = vmul.f32 %v3163, %v2914
  %v3169 = vmul.f32 %v3165, %v2915
  %3172 = vrot.lane.b32.xlu0 %v3166, 64
  %v3173 = vpop.permute.xlu0 %3172
  %3174 = vrot.lane.b32.xlu0 %v3167, 64
  %v3175 = vpop.permute.xlu0 %3174
  %v3178 = vmul.f32 %v3163, %v3173
  %v3179 = vmul.f32 %v3165, %v3175
  %3182 = vrot.lane.b32.xlu0 %v3178, 32
  %v3183 = vpop.permute.xlu0 %3182
  %3184 = vrot.lane.b32.xlu0 %v3179, 32
  %v3185 = vpop.permute.xlu0 %3184
  %v3188 = vadd.f32 %v3168, %v3183
  %v3189 = vadd.f32 %v3169, %v3185
  %v3190 = vtanh.pop %v3188
  %v3191 = vtanh.pop %v3189
  %3194 = vrot.lane.b32.xlu0 %v3190, 64
  %v3195 = vpop.permute.xlu0 %3194
  %3196 = vrot.lane.b32.xlu0 %v3191, 64
  %v3197 = vpop.permute.xlu0 %3196
  %v3200 = vmul.f32 %v3163, %v3195
  %v3201 = vmul.f32 %v3165, %v3197
  %v3202 = vsel %vm2916, 1, 0
  %v3203 = vsel %vm2917, 1, 0
  %3204 = vset.pattern.permute.xlu0 0
  %3205 = vperm.xlu0 %3204, %v3202
  %v3206 = vpop.permute.xlu0 %3205
  %3207 = vset.pattern.permute.xlu0 0
  %3208 = vperm.xlu0 %3207, %v3203
  %v3209 = vpop.permute.xlu0 %3208
  %vm3210 = vcmp.eq.s32.totalorder %v3206, 1
  %vm3211 = vcmp.eq.s32.totalorder %v3209, 1
  %v3212 = vsel %vm3210, %v3053, %v2908
  %v3213 = vsel %vm3211, %v3054, %v2909
  %v3214 = vsel %vm3210, %v3041, %v2910
  %v3215 = vsel %vm3211, %v3042, %v2911
  %v3216 = vsel %vm3210, %v3200, %v2912
  %v3217 = vsel %vm3211, %v3201, %v2913
  %v3218 = vsel %vm3210, %v3188, %v2914
  %v3219 = vsel %vm3211, %v3189, %v2915
  %vm3220 = vcmp.gt.s32.totalorder %v1998, 4
  %vm3221 = vcmp.gt.s32.totalorder %v1999, 4
  %v3222 = vld [vmem:[%s688] sm:$0xff]
  %v3223 = vld [vmem:[%s688 + $0x8] sm:$0xff]
  %3226 = vrot.lane.b32.xlu0 %v3212, 32
  %v3227 = vpop.permute.xlu0 %3226
  %3228 = vrot.lane.b32.xlu0 %v3213, 32
  %v3229 = vpop.permute.xlu0 %3228
  %v3230 = vsel %vm165, %v3227, 0
  %v3232 = vsel %vm165, %v3229, 0
  %3234 = vmatprep.subr.mxu0 0.0
  %3235 = vmatpush1.msra.mxu0 %v2000
  %3236 = vmatprep.subr.mxu0 0.0
  %3237 = vmatpush1.msra.mxu0 %v2001
  %3238 = vmatprep.subr.mxu0 0.0
  %3239 = vmatpush1.msra.mxu0 %v2002
  %3240 = vmatprep.subr.mxu0 0.0
  %3241 = vmatpush1.msra.mxu0 %v2003
  %3242 = vmatprep.subr.mxu0 0.0
  %3243 = vmatpush1.msra.mxu0 0.0
  %3244 = vmatprep.subr.mxu0 0.0
  %3245 = vmatpush1.msra.mxu0 0.0
  %3246 = vmatprep.subr.mxu0 0.0
  %3247 = vmatpush1.msra.mxu0 0.0
  %3248 = vmatprep.subr.mxu0 0.0
  %3249 = vmatpush1.msra.mxu0 0.0
  %3250 = vmatprep.subr.mxu0 0.0
  %3251 = vmatpush1.msra.mxu0 0.0
  %3252 = vmatprep.subr.mxu0 0.0
  %3253 = vmatpush1.msra.mxu0 0.0
  %3254 = vmatprep.subr.mxu0 0.0
  %3255 = vmatpush1.msra.mxu0 0.0
  %3256 = vmatprep.subr.mxu0 0.0
  %3257 = vmatpush1.msra.mxu0 0.0
  %3258 = vmatprep.subr.mxu0 0.0
  %3259 = vmatpush1.msra.mxu0 0.0
  %3260 = vmatprep.subr.mxu0 0.0
  %3261 = vmatpush1.msra.mxu0 0.0
  %3262 = vmatprep.subr.mxu0 0.0
  %3263 = vmatpush1.msra.mxu0 0.0
  %3264 = vmatprep.subr.mxu0 0.0
  %3265 = vmatpush1.msra.mxu0 0.0
  %3266 = vmatprep.subr.mxu0 0.0
  %3267 = vmatpush1.msra.mxu0 0.0
  %3268 = vmatprep.subr.mxu0 0.0
  %3269 = vmatpush1.msra.mxu0 0.0
  %3270 = vmatprep.subr.mxu0 0.0
  %3271 = vmatpush1.msra.mxu0 0.0
  %3272 = vmatprep.subr.mxu0 0.0
  %3273 = vmatpush1.msra.mxu0 0.0
  %3274 = vmatprep.subr.mxu0 0.0
  %3275 = vmatpush1.msra.mxu0 0.0
  %3276 = vmatprep.subr.mxu0 0.0
  %3277 = vmatpush1.msra.mxu0 0.0
  %3278 = vmatprep.subr.mxu0 0.0
  %3279 = vmatpush1.msra.mxu0 0.0
  %3280 = vmatprep.subr.mxu0 0.0
  %3281 = vmatpush1.msra.mxu0 0.0
  %3282 = vmatprep.subr.mxu0 0.0
  %3283 = vmatpush1.msra.mxu0 0.0
  %3284 = vmatprep.subr.mxu0 0.0
  %3285 = vmatpush1.msra.mxu0 0.0
  %3286 = vmatprep.subr.mxu0 0.0
  %3287 = vmatpush1.msra.mxu0 0.0
  %3288 = vmatprep.subr.mxu0 0.0
  %3289 = vmatpush1.msra.mxu0 0.0
  %3290 = vmatprep.subr.mxu0 0.0
  %3291 = vmatpush1.msra.mxu0 0.0
  %3292 = vmatprep.subr.mxu0 0.0
  %3293 = vmatpush1.msra.mxu0 0.0
  %3294 = vmatprep.subr.mxu0 0.0
  %3295 = vmatpush1.msra.mxu0 0.0
  %3296 = vmatprep.subr.mxu0 0.0
  %3297 = vmatpush1.msra.mxu0 0.0
  %3298 = vmatprep.mubr.f32.mxu0 0.0
  %3299 = vmatmul.mubr.f32.gmra.mrb[0].mxu0 %v3230
  %v3300 = vpop.f32.mrb[0].mxu0
  %v3301 = vadd.f32 0.0, %v3300
  %v3302 = vpop.f32.mrb[0].mxu0
  %3303 = vmatprep.mubr.f32.mxu0 0.0
  %3304 = vmatmul.mubr.f32.gmra.mrb[0].mxu0 %v3232
  %v3305 = vpop.f32.mrb[0].mxu0
  %v3306 = vadd.f32 0.0, %v3305
  %v3307 = vpop.f32.mrb[0].mxu0
  %3308 = vdwg.mxu0
  %v3309 = vadd.f32 %v3222, %v3301
  %v3310 = vadd.f32 %v3223, %v3306
  %v3311 = vxor.u32 %v3309, 2147483648
  %v3312 = vxor.u32 %v3310, 2147483648
  %v3313 = vmul.f32 %v3311, 1.442695
  %v3314 = vpow.pop %v3313
  %v3315 = vmul.f32 %v3312, 1.442695
  %v3316 = vpow.pop %v3315
  %v3317 = vadd.f32 %v3314, 1.0
  %v3318 = vadd.f32 %v3316, 1.0
  %v3319 = vrcp.pop %v3317
  %v3320 = vmul.f32 1.0, %v3319
  %v3321 = vrcp.pop %v3318
  %v3322 = vmul.f32 1.0, %v3321
  %v3323 = vtanh.pop %v3309
  %v3324 = vtanh.pop %v3310
  %v3325 = vmul.f32 %v3320, %v3214
  %v3326 = vmul.f32 %v3322, %v3215
  %3329 = vrot.lane.b32.xlu0 %v3323, 64
  %v3330 = vpop.permute.xlu0 %3329
  %3331 = vrot.lane.b32.xlu0 %v3324, 64
  %v3332 = vpop.permute.xlu0 %3331
  %v3335 = vmul.f32 %v3320, %v3330
  %v3336 = vmul.f32 %v3322, %v3332
  %3339 = vrot.lane.b32.xlu0 %v3335, 32
  %v3340 = vpop.permute.xlu0 %3339
  %3341 = vrot.lane.b32.xlu0 %v3336, 32
  %v3342 = vpop.permute.xlu0 %3341
  %v3345 = vadd.f32 %v3325, %v3340
  %v3346 = vadd.f32 %v3326, %v3342
  %v3347 = vtanh.pop %v3345
  %v3348 = vtanh.pop %v3346
  %3351 = vrot.lane.b32.xlu0 %v3347, 64
  %v3352 = vpop.permute.xlu0 %3351
  %3353 = vrot.lane.b32.xlu0 %v3348, 64
  %v3354 = vpop.permute.xlu0 %3353
  %v3357 = vmul.f32 %v3320, %v3352
  %v3358 = vmul.f32 %v3322, %v3354
  %3361 = vrot.lane.b32.xlu0 %v3357, 32
  %v3362 = vpop.permute.xlu0 %3361
  %3363 = vrot.lane.b32.xlu0 %v3358, 32
  %v3364 = vpop.permute.xlu0 %3363
  %3369 = vrot.lane.b32.xlu0 %v3216, 64
  %v3370 = vpop.permute.xlu0 %3369
  %3371 = vrot.lane.b32.xlu0 %v3217, 64
  %v3372 = vpop.permute.xlu0 %3371
  %v3375 = vsel %vm165, %v3362, %v3370
  %v3376 = vsel %vm165, %v3364, %v3372
  %v3378 = vsel %vm87, %v3375, 0
  %v3381 = vsel %vm87, %v3376, 0
  %3383 = vmatprep.subr.mxu0 0.0
  %3384 = vmatpush1.msra.mxu0 %v2004
  %3385 = vmatprep.subr.mxu0 0.0
  %3386 = vmatpush1.msra.mxu0 %v2005
  %3387 = vmatprep.subr.mxu0 0.0
  %3388 = vmatpush1.msra.mxu0 %v2006
  %3389 = vmatprep.subr.mxu0 0.0
  %3390 = vmatpush1.msra.mxu0 %v2007
  %3391 = vmatprep.subr.mxu0 0.0
  %3392 = vmatpush1.msra.mxu0 %v2008
  %3393 = vmatprep.subr.mxu0 0.0
  %3394 = vmatpush1.msra.mxu0 %v2009
  %3395 = vmatprep.subr.mxu0 0.0
  %3396 = vmatpush1.msra.mxu0 %v2010
  %3397 = vmatprep.subr.mxu0 0.0
  %3398 = vmatpush1.msra.mxu0 %v2011
  %3399 = vmatprep.subr.mxu0 0.0
  %3400 = vmatpush1.msra.mxu0 0.0
  %3401 = vmatprep.subr.mxu0 0.0
  %3402 = vmatpush1.msra.mxu0 0.0
  %3403 = vmatprep.subr.mxu0 0.0
  %3404 = vmatpush1.msra.mxu0 0.0
  %3405 = vmatprep.subr.mxu0 0.0
  %3406 = vmatpush1.msra.mxu0 0.0
  %3407 = vmatprep.subr.mxu0 0.0
  %3408 = vmatpush1.msra.mxu0 0.0
  %3409 = vmatprep.subr.mxu0 0.0
  %3410 = vmatpush1.msra.mxu0 0.0
  %3411 = vmatprep.subr.mxu0 0.0
  %3412 = vmatpush1.msra.mxu0 0.0
  %3413 = vmatprep.subr.mxu0 0.0
  %3414 = vmatpush1.msra.mxu0 0.0
  %3415 = vmatprep.subr.mxu0 0.0
  %3416 = vmatpush1.msra.mxu0 0.0
  %3417 = vmatprep.subr.mxu0 0.0
  %3418 = vmatpush1.msra.mxu0 0.0
  %3419 = vmatprep.subr.mxu0 0.0
  %3420 = vmatpush1.msra.mxu0 0.0
  %3421 = vmatprep.subr.mxu0 0.0
  %3422 = vmatpush1.msra.mxu0 0.0
  %3423 = vmatprep.subr.mxu0 0.0
  %3424 = vmatpush1.msra.mxu0 0.0
  %3425 = vmatprep.subr.mxu0 0.0
  %3426 = vmatpush1.msra.mxu0 0.0
  %3427 = vmatprep.subr.mxu0 0.0
  %3428 = vmatpush1.msra.mxu0 0.0
  %3429 = vmatprep.subr.mxu0 0.0
  %3430 = vmatpush1.msra.mxu0 0.0
  %3431 = vmatprep.subr.mxu0 0.0
  %3432 = vmatpush1.msra.mxu0 0.0
  %3433 = vmatprep.subr.mxu0 0.0
  %3434 = vmatpush1.msra.mxu0 0.0
  %3435 = vmatprep.subr.mxu0 0.0
  %3436 = vmatpush1.msra.mxu0 0.0
  %3437 = vmatprep.subr.mxu0 0.0
  %3438 = vmatpush1.msra.mxu0 0.0
  %3439 = vmatprep.subr.mxu0 0.0
  %3440 = vmatpush1.msra.mxu0 0.0
  %3441 = vmatprep.subr.mxu0 0.0
  %3442 = vmatpush1.msra.mxu0 0.0
  %3443 = vmatprep.subr.mxu0 0.0
  %3444 = vmatpush1.msra.mxu0 0.0
  %3445 = vmatprep.subr.mxu0 0.0
  %3446 = vmatpush1.msra.mxu0 0.0
  %3447 = vmatprep.mubr.f32.mxu0 0.0
  %3448 = vmatmul.mubr.f32.gmra.mrb[0].mxu0 %v3378
  %v3449 = vpop.f32.mrb[0].mxu0
  %v3450 = vadd.f32 %v2159, %v3449
  %v3451 = vpop.f32.mrb[0].mxu0
  %3452 = vmatprep.mubr.f32.mxu0 0.0
  %3453 = vmatmul.mubr.f32.gmra.mrb[0].mxu0 %v3381
  %v3454 = vpop.f32.mrb[0].mxu0
  %v3455 = vadd.f32 %v2159, %v3454
  %v3456 = vpop.f32.mrb[0].mxu0
  %3457 = vdwg.mxu0
  %v3458 = vxor.u32 %v3450, 2147483648
  %v3459 = vxor.u32 %v3455, 2147483648
  %v3460 = vmul.f32 %v3458, 1.442695
  %v3461 = vpow.pop %v3460
  %v3462 = vmul.f32 %v3459, 1.442695
  %v3463 = vpow.pop %v3462
  %v3464 = vadd.f32 %v3461, 1.0
  %v3465 = vadd.f32 %v3463, 1.0
  %v3466 = vrcp.pop %v3464
  %v3467 = vmul.f32 1.0, %v3466
  %v3468 = vrcp.pop %v3465
  %v3469 = vmul.f32 1.0, %v3468
  %v3470 = vtanh.pop %v3450
  %v3471 = vtanh.pop %v3455
  %v3472 = vmul.f32 %v3467, %v3218
  %v3473 = vmul.f32 %v3469, %v3219
  %3476 = vrot.lane.b32.xlu0 %v3470, 64
  %v3477 = vpop.permute.xlu0 %3476
  %3478 = vrot.lane.b32.xlu0 %v3471, 64
  %v3479 = vpop.permute.xlu0 %3478
  %v3482 = vmul.f32 %v3467, %v3477
  %v3483 = vmul.f32 %v3469, %v3479
  %3486 = vrot.lane.b32.xlu0 %v3482, 32
  %v3487 = vpop.permute.xlu0 %3486
  %3488 = vrot.lane.b32.xlu0 %v3483, 32
  %v3489 = vpop.permute.xlu0 %3488
  %v3492 = vadd.f32 %v3472, %v3487
  %v3493 = vadd.f32 %v3473, %v3489
  %v3494 = vtanh.pop %v3492
  %v3495 = vtanh.pop %v3493
  %3498 = vrot.lane.b32.xlu0 %v3494, 64
  %v3499 = vpop.permute.xlu0 %3498
  %3500 = vrot.lane.b32.xlu0 %v3495, 64
  %v3501 = vpop.permute.xlu0 %3500
  %v3504 = vmul.f32 %v3467, %v3499
  %v3505 = vmul.f32 %v3469, %v3501
  %v3506 = vsel %vm3220, 1, 0
  %v3507 = vsel %vm3221, 1, 0
  %3508 = vset.pattern.permute.xlu0 0
  %3509 = vperm.xlu0 %3508, %v3506
  %v3510 = vpop.permute.xlu0 %3509
  %3511 = vset.pattern.permute.xlu0 0
  %3512 = vperm.xlu0 %3511, %v3507
  %v3513 = vpop.permute.xlu0 %3512
  %vm3514 = vcmp.eq.s32.totalorder %v3510, 1
  %vm3515 = vcmp.eq.s32.totalorder %v3513, 1
  %v3516 = vsel %vm3514, %v3357, %v3212
  %v3517 = vsel %vm3515, %v3358, %v3213
  %v3518 = vsel %vm3514, %v3345, %v3214
  %v3519 = vsel %vm3515, %v3346, %v3215
  %v3520 = vsel %vm3514, %v3504, %v3216
  %v3521 = vsel %vm3515, %v3505, %v3217
  %v3522 = vsel %vm3514, %v3492, %v3218
  %v3523 = vsel %vm3515, %v3493, %v3219
  %vm3524 = vcmp.gt.s32.totalorder %v1998, 5
  %vm3525 = vcmp.gt.s32.totalorder %v1999, 5
  %v3526 = vld [vmem:[%s775] sm:$0xff]
  %v3527 = vld [vmem:[%s775 + $0x8] sm:$0xff]
  %3530 = vrot.lane.b32.xlu0 %v3516, 32
  %v3531 = vpop.permute.xlu0 %3530
  %3532 = vrot.lane.b32.xlu0 %v3517, 32
  %v3533 = vpop.permute.xlu0 %3532
  %v3534 = vsel %vm165, %v3531, 0
  %v3536 = vsel %vm165, %v3533, 0
  %3538 = vmatprep.subr.mxu0 0.0
  %3539 = vmatpush1.msra.mxu0 %v2000
  %3540 = vmatprep.subr.mxu0 0.0
  %3541 = vmatpush1.msra.mxu0 %v2001
  %3542 = vmatprep.subr.mxu0 0.0
  %3543 = vmatpush1.msra.mxu0 %v2002
  %3544 = vmatprep.subr.mxu0 0.0
  %3545 = vmatpush1.msra.mxu0 %v2003
  %3546 = vmatprep.subr.mxu0 0.0
  %3547 = vmatpush1.msra.mxu0 0.0
  %3548 = vmatprep.subr.mxu0 0.0
  %3549 = vmatpush1.msra.mxu0 0.0
  %3550 = vmatprep.subr.mxu0 0.0
  %3551 = vmatpush1.msra.mxu0 0.0
  %3552 = vmatprep.subr.mxu0 0.0
  %3553 = vmatpush1.msra.mxu0 0.0
  %3554 = vmatprep.subr.mxu0 0.0
  %3555 = vmatpush1.msra.mxu0 0.0
  %3556 = vmatprep.subr.mxu0 0.0
  %3557 = vmatpush1.msra.mxu0 0.0
  %3558 = vmatprep.subr.mxu0 0.0
  %3559 = vmatpush1.msra.mxu0 0.0
  %3560 = vmatprep.subr.mxu0 0.0
  %3561 = vmatpush1.msra.mxu0 0.0
  %3562 = vmatprep.subr.mxu0 0.0
  %3563 = vmatpush1.msra.mxu0 0.0
  %3564 = vmatprep.subr.mxu0 0.0
  %3565 = vmatpush1.msra.mxu0 0.0
  %3566 = vmatprep.subr.mxu0 0.0
  %3567 = vmatpush1.msra.mxu0 0.0
  %3568 = vmatprep.subr.mxu0 0.0
  %3569 = vmatpush1.msra.mxu0 0.0
  %3570 = vmatprep.subr.mxu0 0.0
  %3571 = vmatpush1.msra.mxu0 0.0
  %3572 = vmatprep.subr.mxu0 0.0
  %3573 = vmatpush1.msra.mxu0 0.0
  %3574 = vmatprep.subr.mxu0 0.0
  %3575 = vmatpush1.msra.mxu0 0.0
  %3576 = vmatprep.subr.mxu0 0.0
  %3577 = vmatpush1.msra.mxu0 0.0
  %3578 = vmatprep.subr.mxu0 0.0
  %3579 = vmatpush1.msra.mxu0 0.0
  %3580 = vmatprep.subr.mxu0 0.0
  %3581 = vmatpush1.msra.mxu0 0.0
  %3582 = vmatprep.subr.mxu0 0.0
  %3583 = vmatpush1.msra.mxu0 0.0
  %3584 = vmatprep.subr.mxu0 0.0
  %3585 = vmatpush1.msra.mxu0 0.0
  %3586 = vmatprep.subr.mxu0 0.0
  %3587 = vmatpush1.msra.mxu0 0.0
  %3588 = vmatprep.subr.mxu0 0.0
  %3589 = vmatpush1.msra.mxu0 0.0
  %3590 = vmatprep.subr.mxu0 0.0
  %3591 = vmatpush1.msra.mxu0 0.0
  %3592 = vmatprep.subr.mxu0 0.0
  %3593 = vmatpush1.msra.mxu0 0.0
  %3594 = vmatprep.subr.mxu0 0.0
  %3595 = vmatpush1.msra.mxu0 0.0
  %3596 = vmatprep.subr.mxu0 0.0
  %3597 = vmatpush1.msra.mxu0 0.0
  %3598 = vmatprep.subr.mxu0 0.0
  %3599 = vmatpush1.msra.mxu0 0.0
  %3600 = vmatprep.subr.mxu0 0.0
  %3601 = vmatpush1.msra.mxu0 0.0
  %3602 = vmatprep.mubr.f32.mxu0 0.0
  %3603 = vmatmul.mubr.f32.gmra.mrb[0].mxu0 %v3534
  %v3604 = vpop.f32.mrb[0].mxu0
  %v3605 = vadd.f32 0.0, %v3604
  %v3606 = vpop.f32.mrb[0].mxu0
  %3607 = vmatprep.mubr.f32.mxu0 0.0
  %3608 = vmatmul.mubr.f32.gmra.mrb[0].mxu0 %v3536
  %v3609 = vpop.f32.mrb[0].mxu0
  %v3610 = vadd.f32 0.0, %v3609
  %v3611 = vpop.f32.mrb[0].mxu0
  %3612 = vdwg.mxu0
  %v3613 = vadd.f32 %v3526, %v3605
  %v3614 = vadd.f32 %v3527, %v3610
  %v3615 = vxor.u32 %v3613, 2147483648
  %v3616 = vxor.u32 %v3614, 2147483648
  %v3617 = vmul.f32 %v3615, 1.442695
  %v3618 = vpow.pop %v3617
  %v3619 = vmul.f32 %v3616, 1.442695
  %v3620 = vpow.pop %v3619
  %v3621 = vadd.f32 %v3618, 1.0
  %v3622 = vadd.f32 %v3620, 1.0
  %v3623 = vrcp.pop %v3621
  %v3624 = vmul.f32 1.0, %v3623
  %v3625 = vrcp.pop %v3622
  %v3626 = vmul.f32 1.0, %v3625
  %v3627 = vtanh.pop %v3613
  %v3628 = vtanh.pop %v3614
  %v3629 = vmul.f32 %v3624, %v3518
  %v3630 = vmul.f32 %v3626, %v3519
  %3633 = vrot.lane.b32.xlu0 %v3627, 64
  %v3634 = vpop.permute.xlu0 %3633
  %3635 = vrot.lane.b32.xlu0 %v3628, 64
  %v3636 = vpop.permute.xlu0 %3635
  %v3639 = vmul.f32 %v3624, %v3634
  %v3640 = vmul.f32 %v3626, %v3636
  %3643 = vrot.lane.b32.xlu0 %v3639, 32
  %v3644 = vpop.permute.xlu0 %3643
  %3645 = vrot.lane.b32.xlu0 %v3640, 32
  %v3646 = vpop.permute.xlu0 %3645
  %v3649 = vadd.f32 %v3629, %v3644
  %v3650 = vadd.f32 %v3630, %v3646
  %v3651 = vtanh.pop %v3649
  %v3652 = vtanh.pop %v3650
  %3655 = vrot.lane.b32.xlu0 %v3651, 64
  %v3656 = vpop.permute.xlu0 %3655
  %3657 = vrot.lane.b32.xlu0 %v3652, 64
  %v3658 = vpop.permute.xlu0 %3657
  %v3661 = vmul.f32 %v3624, %v3656
  %v3662 = vmul.f32 %v3626, %v3658
  %3665 = vrot.lane.b32.xlu0 %v3661, 32
  %v3666 = vpop.permute.xlu0 %3665
  %3667 = vrot.lane.b32.xlu0 %v3662, 32
  %v3668 = vpop.permute.xlu0 %3667
  %3673 = vrot.lane.b32.xlu0 %v3520, 64
  %v3674 = vpop.permute.xlu0 %3673
  %3675 = vrot.lane.b32.xlu0 %v3521, 64
  %v3676 = vpop.permute.xlu0 %3675
  %v3679 = vsel %vm165, %v3666, %v3674
  %v3680 = vsel %vm165, %v3668, %v3676
  %v3682 = vsel %vm87, %v3679, 0
  %v3685 = vsel %vm87, %v3680, 0
  %3687 = vmatprep.subr.mxu0 0.0
  %3688 = vmatpush1.msra.mxu0 %v2004
  %3689 = vmatprep.subr.mxu0 0.0
  %3690 = vmatpush1.msra.mxu0 %v2005
  %3691 = vmatprep.subr.mxu0 0.0
  %3692 = vmatpush1.msra.mxu0 %v2006
  %3693 = vmatprep.subr.mxu0 0.0
  %3694 = vmatpush1.msra.mxu0 %v2007
  %3695 = vmatprep.subr.mxu0 0.0
  %3696 = vmatpush1.msra.mxu0 %v2008
  %3697 = vmatprep.subr.mxu0 0.0
  %3698 = vmatpush1.msra.mxu0 %v2009
  %3699 = vmatprep.subr.mxu0 0.0
  %3700 = vmatpush1.msra.mxu0 %v2010
  %3701 = vmatprep.subr.mxu0 0.0
  %3702 = vmatpush1.msra.mxu0 %v2011
  %3703 = vmatprep.subr.mxu0 0.0
  %3704 = vmatpush1.msra.mxu0 0.0
  %3705 = vmatprep.subr.mxu0 0.0
  %3706 = vmatpush1.msra.mxu0 0.0
  %3707 = vmatprep.subr.mxu0 0.0
  %3708 = vmatpush1.msra.mxu0 0.0
  %3709 = vmatprep.subr.mxu0 0.0
  %3710 = vmatpush1.msra.mxu0 0.0
  %3711 = vmatprep.subr.mxu0 0.0
  %3712 = vmatpush1.msra.mxu0 0.0
  %3713 = vmatprep.subr.mxu0 0.0
  %3714 = vmatpush1.msra.mxu0 0.0
  %3715 = vmatprep.subr.mxu0 0.0
  %3716 = vmatpush1.msra.mxu0 0.0
  %3717 = vmatprep.subr.mxu0 0.0
  %3718 = vmatpush1.msra.mxu0 0.0
  %3719 = vmatprep.subr.mxu0 0.0
  %3720 = vmatpush1.msra.mxu0 0.0
  %3721 = vmatprep.subr.mxu0 0.0
  %3722 = vmatpush1.msra.mxu0 0.0
  %3723 = vmatprep.subr.mxu0 0.0
  %3724 = vmatpush1.msra.mxu0 0.0
  %3725 = vmatprep.subr.mxu0 0.0
  %3726 = vmatpush1.msra.mxu0 0.0
  %3727 = vmatprep.subr.mxu0 0.0
  %3728 = vmatpush1.msra.mxu0 0.0
  %3729 = vmatprep.subr.mxu0 0.0
  %3730 = vmatpush1.msra.mxu0 0.0
  %3731 = vmatprep.subr.mxu0 0.0
  %3732 = vmatpush1.msra.mxu0 0.0
  %3733 = vmatprep.subr.mxu0 0.0
  %3734 = vmatpush1.msra.mxu0 0.0
  %3735 = vmatprep.subr.mxu0 0.0
  %3736 = vmatpush1.msra.mxu0 0.0
  %3737 = vmatprep.subr.mxu0 0.0
  %3738 = vmatpush1.msra.mxu0 0.0
  %3739 = vmatprep.subr.mxu0 0.0
  %3740 = vmatpush1.msra.mxu0 0.0
  %3741 = vmatprep.subr.mxu0 0.0
  %3742 = vmatpush1.msra.mxu0 0.0
  %3743 = vmatprep.subr.mxu0 0.0
  %3744 = vmatpush1.msra.mxu0 0.0
  %3745 = vmatprep.subr.mxu0 0.0
  %3746 = vmatpush1.msra.mxu0 0.0
  %3747 = vmatprep.subr.mxu0 0.0
  %3748 = vmatpush1.msra.mxu0 0.0
  %3749 = vmatprep.subr.mxu0 0.0
  %3750 = vmatpush1.msra.mxu0 0.0
  %3751 = vmatprep.mubr.f32.mxu0 0.0
  %3752 = vmatmul.mubr.f32.gmra.mrb[0].mxu0 %v3682
  %v3753 = vpop.f32.mrb[0].mxu0
  %v3754 = vadd.f32 %v2159, %v3753
  %v3755 = vpop.f32.mrb[0].mxu0
  %3756 = vmatprep.mubr.f32.mxu0 0.0
  %3757 = vmatmul.mubr.f32.gmra.mrb[0].mxu0 %v3685
  %v3758 = vpop.f32.mrb[0].mxu0
  %v3759 = vadd.f32 %v2159, %v3758
  %v3760 = vpop.f32.mrb[0].mxu0
  %3761 = vdwg.mxu0
  %v3762 = vxor.u32 %v3754, 2147483648
  %v3763 = vxor.u32 %v3759, 2147483648
  %v3764 = vmul.f32 %v3762, 1.442695
  %v3765 = vpow.pop %v3764
  %v3766 = vmul.f32 %v3763, 1.442695
  %v3767 = vpow.pop %v3766
  %v3768 = vadd.f32 %v3765, 1.0
  %v3769 = vadd.f32 %v3767, 1.0
  %v3770 = vrcp.pop %v3768
  %v3771 = vmul.f32 1.0, %v3770
  %v3772 = vrcp.pop %v3769
  %v3773 = vmul.f32 1.0, %v3772
  %v3774 = vtanh.pop %v3754
  %v3775 = vtanh.pop %v3759
  %v3776 = vmul.f32 %v3771, %v3522
  %v3777 = vmul.f32 %v3773, %v3523
  %3780 = vrot.lane.b32.xlu0 %v3774, 64
  %v3781 = vpop.permute.xlu0 %3780
  %3782 = vrot.lane.b32.xlu0 %v3775, 64
  %v3783 = vpop.permute.xlu0 %3782
  %v3786 = vmul.f32 %v3771, %v3781
  %v3787 = vmul.f32 %v3773, %v3783
  %3790 = vrot.lane.b32.xlu0 %v3786, 32
  %v3791 = vpop.permute.xlu0 %3790
  %3792 = vrot.lane.b32.xlu0 %v3787, 32
  %v3793 = vpop.permute.xlu0 %3792
  %v3796 = vadd.f32 %v3776, %v3791
  %v3797 = vadd.f32 %v3777, %v3793
  %v3798 = vtanh.pop %v3796
  %v3799 = vtanh.pop %v3797
  %3802 = vrot.lane.b32.xlu0 %v3798, 64
  %v3803 = vpop.permute.xlu0 %3802
  %3804 = vrot.lane.b32.xlu0 %v3799, 64
  %v3805 = vpop.permute.xlu0 %3804
  %v3808 = vmul.f32 %v3771, %v3803
  %v3809 = vmul.f32 %v3773, %v3805
  %v3810 = vsel %vm3524, 1, 0
  %v3811 = vsel %vm3525, 1, 0
  %3812 = vset.pattern.permute.xlu0 0
  %3813 = vperm.xlu0 %3812, %v3810
  %v3814 = vpop.permute.xlu0 %3813
  %3815 = vset.pattern.permute.xlu0 0
  %3816 = vperm.xlu0 %3815, %v3811
  %v3817 = vpop.permute.xlu0 %3816
  %vm3818 = vcmp.eq.s32.totalorder %v3814, 1
  %vm3819 = vcmp.eq.s32.totalorder %v3817, 1
  %v3820 = vsel %vm3818, %v3661, %v3516
  %v3821 = vsel %vm3819, %v3662, %v3517
  %v3822 = vsel %vm3818, %v3649, %v3518
  %v3823 = vsel %vm3819, %v3650, %v3519
  %v3824 = vsel %vm3818, %v3808, %v3520
  %v3825 = vsel %vm3819, %v3809, %v3521
  %v3826 = vsel %vm3818, %v3796, %v3522
  %v3827 = vsel %vm3819, %v3797, %v3523
  %vm3828 = vcmp.gt.s32.totalorder %v1998, 6
  %vm3829 = vcmp.gt.s32.totalorder %v1999, 6
  %v3830 = vld [vmem:[%s862] sm:$0xff]
  %v3831 = vld [vmem:[%s862 + $0x8] sm:$0xff]
  %3834 = vrot.lane.b32.xlu0 %v3820, 32
  %v3835 = vpop.permute.xlu0 %3834
  %3836 = vrot.lane.b32.xlu0 %v3821, 32
  %v3837 = vpop.permute.xlu0 %3836
  %v3838 = vsel %vm165, %v3835, 0
  %v3840 = vsel %vm165, %v3837, 0
  %3842 = vmatprep.subr.mxu0 0.0
  %3843 = vmatpush1.msra.mxu0 %v2000
  %3844 = vmatprep.subr.mxu0 0.0
  %3845 = vmatpush1.msra.mxu0 %v2001
  %3846 = vmatprep.subr.mxu0 0.0
  %3847 = vmatpush1.msra.mxu0 %v2002
  %3848 = vmatprep.subr.mxu0 0.0
  %3849 = vmatpush1.msra.mxu0 %v2003
  %3850 = vmatprep.subr.mxu0 0.0
  %3851 = vmatpush1.msra.mxu0 0.0
  %3852 = vmatprep.subr.mxu0 0.0
  %3853 = vmatpush1.msra.mxu0 0.0
  %3854 = vmatprep.subr.mxu0 0.0
  %3855 = vmatpush1.msra.mxu0 0.0
  %3856 = vmatprep.subr.mxu0 0.0
  %3857 = vmatpush1.msra.mxu0 0.0
  %3858 = vmatprep.subr.mxu0 0.0
  %3859 = vmatpush1.msra.mxu0 0.0
  %3860 = vmatprep.subr.mxu0 0.0
  %3861 = vmatpush1.msra.mxu0 0.0
  %3862 = vmatprep.subr.mxu0 0.0
  %3863 = vmatpush1.msra.mxu0 0.0
  %3864 = vmatprep.subr.mxu0 0.0
  %3865 = vmatpush1.msra.mxu0 0.0
  %3866 = vmatprep.subr.mxu0 0.0
  %3867 = vmatpush1.msra.mxu0 0.0
  %3868 = vmatprep.subr.mxu0 0.0
  %3869 = vmatpush1.msra.mxu0 0.0
  %3870 = vmatprep.subr.mxu0 0.0
  %3871 = vmatpush1.msra.mxu0 0.0
  %3872 = vmatprep.subr.mxu0 0.0
  %3873 = vmatpush1.msra.mxu0 0.0
  %3874 = vmatprep.subr.mxu0 0.0
  %3875 = vmatpush1.msra.mxu0 0.0
  %3876 = vmatprep.subr.mxu0 0.0
  %3877 = vmatpush1.msra.mxu0 0.0
  %3878 = vmatprep.subr.mxu0 0.0
  %3879 = vmatpush1.msra.mxu0 0.0
  %3880 = vmatprep.subr.mxu0 0.0
  %3881 = vmatpush1.msra.mxu0 0.0
  %3882 = vmatprep.subr.mxu0 0.0
  %3883 = vmatpush1.msra.mxu0 0.0
  %3884 = vmatprep.subr.mxu0 0.0
  %3885 = vmatpush1.msra.mxu0 0.0
  %3886 = vmatprep.subr.mxu0 0.0
  %3887 = vmatpush1.msra.mxu0 0.0
  %3888 = vmatprep.subr.mxu0 0.0
  %3889 = vmatpush1.msra.mxu0 0.0
  %3890 = vmatprep.subr.mxu0 0.0
  %3891 = vmatpush1.msra.mxu0 0.0
  %3892 = vmatprep.subr.mxu0 0.0
  %3893 = vmatpush1.msra.mxu0 0.0
  %3894 = vmatprep.subr.mxu0 0.0
  %3895 = vmatpush1.msra.mxu0 0.0
  %3896 = vmatprep.subr.mxu0 0.0
  %3897 = vmatpush1.msra.mxu0 0.0
  %3898 = vmatprep.subr.mxu0 0.0
  %3899 = vmatpush1.msra.mxu0 0.0
  %3900 = vmatprep.subr.mxu0 0.0
  %3901 = vmatpush1.msra.mxu0 0.0
  %3902 = vmatprep.subr.mxu0 0.0
  %3903 = vmatpush1.msra.mxu0 0.0
  %3904 = vmatprep.subr.mxu0 0.0
  %3905 = vmatpush1.msra.mxu0 0.0
  %3906 = vmatprep.mubr.f32.mxu0 0.0
  %3907 = vmatmul.mubr.f32.gmra.mrb[0].mxu0 %v3838
  %v3908 = vpop.f32.mrb[0].mxu0
  %v3909 = vadd.f32 0.0, %v3908
  %v3910 = vpop.f32.mrb[0].mxu0
  %3911 = vmatprep.mubr.f32.mxu0 0.0
  %3912 = vmatmul.mubr.f32.gmra.mrb[0].mxu0 %v3840
  %v3913 = vpop.f32.mrb[0].mxu0
  %v3914 = vadd.f32 0.0, %v3913
  %v3915 = vpop.f32.mrb[0].mxu0
  %3916 = vdwg.mxu0
  %v3917 = vadd.f32 %v3830, %v3909
  %v3918 = vadd.f32 %v3831, %v3914
  %v3919 = vxor.u32 %v3917, 2147483648
  %v3920 = vxor.u32 %v3918, 2147483648
  %v3921 = vmul.f32 %v3919, 1.442695
  %v3922 = vpow.pop %v3921
  %v3923 = vmul.f32 %v3920, 1.442695
  %v3924 = vpow.pop %v3923
  %v3925 = vadd.f32 %v3922, 1.0
  %v3926 = vadd.f32 %v3924, 1.0
  %v3927 = vrcp.pop %v3925
  %v3928 = vmul.f32 1.0, %v3927
  %v3929 = vrcp.pop %v3926
  %v3930 = vmul.f32 1.0, %v3929
  %v3931 = vtanh.pop %v3917
  %v3932 = vtanh.pop %v3918
  %v3933 = vmul.f32 %v3928, %v3822
  %v3934 = vmul.f32 %v3930, %v3823
  %3937 = vrot.lane.b32.xlu0 %v3931, 64
  %v3938 = vpop.permute.xlu0 %3937
  %3939 = vrot.lane.b32.xlu0 %v3932, 64
  %v3940 = vpop.permute.xlu0 %3939
  %v3943 = vmul.f32 %v3928, %v3938
  %v3944 = vmul.f32 %v3930, %v3940
  %3947 = vrot.lane.b32.xlu0 %v3943, 32
  %v3948 = vpop.permute.xlu0 %3947
  %3949 = vrot.lane.b32.xlu0 %v3944, 32
  %v3950 = vpop.permute.xlu0 %3949
  %v3953 = vadd.f32 %v3933, %v3948
  %v3954 = vadd.f32 %v3934, %v3950
  %v3955 = vtanh.pop %v3953
  %v3956 = vtanh.pop %v3954
  %3959 = vrot.lane.b32.xlu0 %v3955, 64
  %v3960 = vpop.permute.xlu0 %3959
  %3961 = vrot.lane.b32.xlu0 %v3956, 64
  %v3962 = vpop.permute.xlu0 %3961
  %v3965 = vmul.f32 %v3928, %v3960
  %v3966 = vmul.f32 %v3930, %v3962
  %3969 = vrot.lane.b32.xlu0 %v3965, 32
  %v3970 = vpop.permute.xlu0 %3969
  %3971 = vrot.lane.b32.xlu0 %v3966, 32
  %v3972 = vpop.permute.xlu0 %3971
  %3977 = vrot.lane.b32.xlu0 %v3824, 64
  %v3978 = vpop.permute.xlu0 %3977
  %3979 = vrot.lane.b32.xlu0 %v3825, 64
  %v3980 = vpop.permute.xlu0 %3979
  %v3983 = vsel %vm165, %v3970, %v3978
  %v3984 = vsel %vm165, %v3972, %v3980
  %v3986 = vsel %vm87, %v3983, 0
  %v3989 = vsel %vm87, %v3984, 0
  %3991 = vmatprep.subr.mxu0 0.0
  %3992 = vmatpush1.msra.mxu0 %v2004
  %3993 = vmatprep.subr.mxu0 0.0
  %3994 = vmatpush1.msra.mxu0 %v2005
  %3995 = vmatprep.subr.mxu0 0.0
  %3996 = vmatpush1.msra.mxu0 %v2006
  %3997 = vmatprep.subr.mxu0 0.0
  %3998 = vmatpush1.msra.mxu0 %v2007
  %3999 = vmatprep.subr.mxu0 0.0
  %4000 = vmatpush1.msra.mxu0 %v2008
  %4001 = vmatprep.subr.mxu0 0.0
  %4002 = vmatpush1.msra.mxu0 %v2009
  %4003 = vmatprep.subr.mxu0 0.0
  %4004 = vmatpush1.msra.mxu0 %v2010
  %4005 = vmatprep.subr.mxu0 0.0
  %4006 = vmatpush1.msra.mxu0 %v2011
  %4007 = vmatprep.subr.mxu0 0.0
  %4008 = vmatpush1.msra.mxu0 0.0
  %4009 = vmatprep.subr.mxu0 0.0
  %4010 = vmatpush1.msra.mxu0 0.0
  %4011 = vmatprep.subr.mxu0 0.0
  %4012 = vmatpush1.msra.mxu0 0.0
  %4013 = vmatprep.subr.mxu0 0.0
  %4014 = vmatpush1.msra.mxu0 0.0
  %4015 = vmatprep.subr.mxu0 0.0
  %4016 = vmatpush1.msra.mxu0 0.0
  %4017 = vmatprep.subr.mxu0 0.0
  %4018 = vmatpush1.msra.mxu0 0.0
  %4019 = vmatprep.subr.mxu0 0.0
  %4020 = vmatpush1.msra.mxu0 0.0
  %4021 = vmatprep.subr.mxu0 0.0
  %4022 = vmatpush1.msra.mxu0 0.0
  %4023 = vmatprep.subr.mxu0 0.0
  %4024 = vmatpush1.msra.mxu0 0.0
  %4025 = vmatprep.subr.mxu0 0.0
  %4026 = vmatpush1.msra.mxu0 0.0
  %4027 = vmatprep.subr.mxu0 0.0
  %4028 = vmatpush1.msra.mxu0 0.0
  %4029 = vmatprep.subr.mxu0 0.0
  %4030 = vmatpush1.msra.mxu0 0.0
  %4031 = vmatprep.subr.mxu0 0.0
  %4032 = vmatpush1.msra.mxu0 0.0
  %4033 = vmatprep.subr.mxu0 0.0
  %4034 = vmatpush1.msra.mxu0 0.0
  %4035 = vmatprep.subr.mxu0 0.0
  %4036 = vmatpush1.msra.mxu0 0.0
  %4037 = vmatprep.subr.mxu0 0.0
  %4038 = vmatpush1.msra.mxu0 0.0
  %4039 = vmatprep.subr.mxu0 0.0
  %4040 = vmatpush1.msra.mxu0 0.0
  %4041 = vmatprep.subr.mxu0 0.0
  %4042 = vmatpush1.msra.mxu0 0.0
  %4043 = vmatprep.subr.mxu0 0.0
  %4044 = vmatpush1.msra.mxu0 0.0
  %4045 = vmatprep.subr.mxu0 0.0
  %4046 = vmatpush1.msra.mxu0 0.0
  %4047 = vmatprep.subr.mxu0 0.0
  %4048 = vmatpush1.msra.mxu0 0.0
  %4049 = vmatprep.subr.mxu0 0.0
  %4050 = vmatpush1.msra.mxu0 0.0
  %4051 = vmatprep.subr.mxu0 0.0
  %4052 = vmatpush1.msra.mxu0 0.0
  %4053 = vmatprep.subr.mxu0 0.0
  %4054 = vmatpush1.msra.mxu0 0.0
  %4055 = vmatprep.mubr.f32.mxu0 0.0
  %4056 = vmatmul.mubr.f32.gmra.mrb[0].mxu0 %v3986
  %v4057 = vpop.f32.mrb[0].mxu0
  %v4058 = vadd.f32 %v2159, %v4057
  %v4059 = vpop.f32.mrb[0].mxu0
  %4060 = vmatprep.mubr.f32.mxu0 0.0
  %4061 = vmatmul.mubr.f32.gmra.mrb[0].mxu0 %v3989
  %v4062 = vpop.f32.mrb[0].mxu0
  %v4063 = vadd.f32 %v2159, %v4062
  %v4064 = vpop.f32.mrb[0].mxu0
  %4065 = vdwg.mxu0
  %v4066 = vxor.u32 %v4058, 2147483648
  %v4067 = vxor.u32 %v4063, 2147483648
  %v4068 = vmul.f32 %v4066, 1.442695
  %v4069 = vpow.pop %v4068
  %v4070 = vmul.f32 %v4067, 1.442695
  %v4071 = vpow.pop %v4070
  %v4072 = vadd.f32 %v4069, 1.0
  %v4073 = vadd.f32 %v4071, 1.0
  %v4074 = vrcp.pop %v4072
  %v4075 = vmul.f32 1.0, %v4074
  %v4076 = vrcp.pop %v4073
  %v4077 = vmul.f32 1.0, %v4076
  %v4078 = vtanh.pop %v4058
  %v4079 = vtanh.pop %v4063
  %v4080 = vmul.f32 %v4075, %v3826
  %v4081 = vmul.f32 %v4077, %v3827
  %4084 = vrot.lane.b32.xlu0 %v4078, 64
  %v4085 = vpop.permute.xlu0 %4084
  %4086 = vrot.lane.b32.xlu0 %v4079, 64
  %v4087 = vpop.permute.xlu0 %4086
  %v4090 = vmul.f32 %v4075, %v4085
  %v4091 = vmul.f32 %v4077, %v4087
  %4094 = vrot.lane.b32.xlu0 %v4090, 32
  %v4095 = vpop.permute.xlu0 %4094
  %4096 = vrot.lane.b32.xlu0 %v4091, 32
  %v4097 = vpop.permute.xlu0 %4096
  %v4100 = vadd.f32 %v4080, %v4095
  %v4101 = vadd.f32 %v4081, %v4097
  %v4102 = vtanh.pop %v4100
  %v4103 = vtanh.pop %v4101
  %4106 = vrot.lane.b32.xlu0 %v4102, 64
  %v4107 = vpop.permute.xlu0 %4106
  %4108 = vrot.lane.b32.xlu0 %v4103, 64
  %v4109 = vpop.permute.xlu0 %4108
  %v4112 = vmul.f32 %v4075, %v4107
  %v4113 = vmul.f32 %v4077, %v4109
  %v4114 = vsel %vm3828, 1, 0
  %v4115 = vsel %vm3829, 1, 0
  %4116 = vset.pattern.permute.xlu0 0
  %4117 = vperm.xlu0 %4116, %v4114
  %v4118 = vpop.permute.xlu0 %4117
  %4119 = vset.pattern.permute.xlu0 0
  %4120 = vperm.xlu0 %4119, %v4115
  %v4121 = vpop.permute.xlu0 %4120
  %vm4122 = vcmp.eq.s32.totalorder %v4118, 1
  %vm4123 = vcmp.eq.s32.totalorder %v4121, 1
  %v4124 = vsel %vm4122, %v3965, %v3820
  %v4125 = vsel %vm4123, %v3966, %v3821
  %v4126 = vsel %vm4122, %v3953, %v3822
  %v4127 = vsel %vm4123, %v3954, %v3823
  %v4128 = vsel %vm4122, %v4112, %v3824
  %v4129 = vsel %vm4123, %v4113, %v3825
  %v4130 = vsel %vm4122, %v4100, %v3826
  %v4131 = vsel %vm4123, %v4101, %v3827
  %vm4132 = vcmp.gt.s32.totalorder %v1998, 7
  %vm4133 = vcmp.gt.s32.totalorder %v1999, 7
  %v4134 = vld [vmem:[%s949] sm:$0xff]
  %v4135 = vld [vmem:[%s949 + $0x8] sm:$0xff]
  %4138 = vrot.lane.b32.xlu0 %v4124, 32
  %v4139 = vpop.permute.xlu0 %4138
  %4140 = vrot.lane.b32.xlu0 %v4125, 32
  %v4141 = vpop.permute.xlu0 %4140
  %v4142 = vsel %vm165, %v4139, 0
  %v4144 = vsel %vm165, %v4141, 0
  %4146 = vmatprep.subr.mxu0 0.0
  %4147 = vmatpush1.msra.mxu0 %v2000
  %4148 = vmatprep.subr.mxu0 0.0
  %4149 = vmatpush1.msra.mxu0 %v2001
  %4150 = vmatprep.subr.mxu0 0.0
  %4151 = vmatpush1.msra.mxu0 %v2002
  %4152 = vmatprep.subr.mxu0 0.0
  %4153 = vmatpush1.msra.mxu0 %v2003
  %4154 = vmatprep.subr.mxu0 0.0
  %4155 = vmatpush1.msra.mxu0 0.0
  %4156 = vmatprep.subr.mxu0 0.0
  %4157 = vmatpush1.msra.mxu0 0.0
  %4158 = vmatprep.subr.mxu0 0.0
  %4159 = vmatpush1.msra.mxu0 0.0
  %4160 = vmatprep.subr.mxu0 0.0
  %4161 = vmatpush1.msra.mxu0 0.0
  %4162 = vmatprep.subr.mxu0 0.0
  %4163 = vmatpush1.msra.mxu0 0.0
  %4164 = vmatprep.subr.mxu0 0.0
  %4165 = vmatpush1.msra.mxu0 0.0
  %4166 = vmatprep.subr.mxu0 0.0
  %4167 = vmatpush1.msra.mxu0 0.0
  %4168 = vmatprep.subr.mxu0 0.0
  %4169 = vmatpush1.msra.mxu0 0.0
  %4170 = vmatprep.subr.mxu0 0.0
  %4171 = vmatpush1.msra.mxu0 0.0
  %4172 = vmatprep.subr.mxu0 0.0
  %4173 = vmatpush1.msra.mxu0 0.0
  %4174 = vmatprep.subr.mxu0 0.0
  %4175 = vmatpush1.msra.mxu0 0.0
  %4176 = vmatprep.subr.mxu0 0.0
  %4177 = vmatpush1.msra.mxu0 0.0
  %4178 = vmatprep.subr.mxu0 0.0
  %4179 = vmatpush1.msra.mxu0 0.0
  %4180 = vmatprep.subr.mxu0 0.0
  %4181 = vmatpush1.msra.mxu0 0.0
  %4182 = vmatprep.subr.mxu0 0.0
  %4183 = vmatpush1.msra.mxu0 0.0
  %4184 = vmatprep.subr.mxu0 0.0
  %4185 = vmatpush1.msra.mxu0 0.0
  %4186 = vmatprep.subr.mxu0 0.0
  %4187 = vmatpush1.msra.mxu0 0.0
  %4188 = vmatprep.subr.mxu0 0.0
  %4189 = vmatpush1.msra.mxu0 0.0
  %4190 = vmatprep.subr.mxu0 0.0
  %4191 = vmatpush1.msra.mxu0 0.0
  %4192 = vmatprep.subr.mxu0 0.0
  %4193 = vmatpush1.msra.mxu0 0.0
  %4194 = vmatprep.subr.mxu0 0.0
  %4195 = vmatpush1.msra.mxu0 0.0
  %4196 = vmatprep.subr.mxu0 0.0
  %4197 = vmatpush1.msra.mxu0 0.0
  %4198 = vmatprep.subr.mxu0 0.0
  %4199 = vmatpush1.msra.mxu0 0.0
  %4200 = vmatprep.subr.mxu0 0.0
  %4201 = vmatpush1.msra.mxu0 0.0
  %4202 = vmatprep.subr.mxu0 0.0
  %4203 = vmatpush1.msra.mxu0 0.0
  %4204 = vmatprep.subr.mxu0 0.0
  %4205 = vmatpush1.msra.mxu0 0.0
  %4206 = vmatprep.subr.mxu0 0.0
  %4207 = vmatpush1.msra.mxu0 0.0
  %4208 = vmatprep.subr.mxu0 0.0
  %4209 = vmatpush1.msra.mxu0 0.0
  %4210 = vmatprep.mubr.f32.mxu0 0.0
  %4211 = vmatmul.mubr.f32.gmra.mrb[0].mxu0 %v4142
  %v4212 = vpop.f32.mrb[0].mxu0
  %v4213 = vadd.f32 0.0, %v4212
  %v4214 = vpop.f32.mrb[0].mxu0
  %4215 = vmatprep.mubr.f32.mxu0 0.0
  %4216 = vmatmul.mubr.f32.gmra.mrb[0].mxu0 %v4144
  %v4217 = vpop.f32.mrb[0].mxu0
  %v4218 = vadd.f32 0.0, %v4217
  %v4219 = vpop.f32.mrb[0].mxu0
  %4220 = vdwg.mxu0
  %v4221 = vadd.f32 %v4134, %v4213
  %v4222 = vadd.f32 %v4135, %v4218
  %v4223 = vxor.u32 %v4221, 2147483648
  %v4224 = vxor.u32 %v4222, 2147483648
  %v4225 = vmul.f32 %v4223, 1.442695
  %v4226 = vpow.pop %v4225
  %v4227 = vmul.f32 %v4224, 1.442695
  %v4228 = vpow.pop %v4227
  %v4229 = vadd.f32 %v4226, 1.0
  %v4230 = vadd.f32 %v4228, 1.0
  %v4231 = vrcp.pop %v4229
  %v4232 = vmul.f32 1.0, %v4231
  %v4233 = vrcp.pop %v4230
  %v4234 = vmul.f32 1.0, %v4233
  %v4235 = vtanh.pop %v4221
  %v4236 = vtanh.pop %v4222
  %v4237 = vmul.f32 %v4232, %v4126
  %v4238 = vmul.f32 %v4234, %v4127
  %4241 = vrot.lane.b32.xlu0 %v4235, 64
  %v4242 = vpop.permute.xlu0 %4241
  %4243 = vrot.lane.b32.xlu0 %v4236, 64
  %v4244 = vpop.permute.xlu0 %4243
  %v4247 = vmul.f32 %v4232, %v4242
  %v4248 = vmul.f32 %v4234, %v4244
  %4251 = vrot.lane.b32.xlu0 %v4247, 32
  %v4252 = vpop.permute.xlu0 %4251
  %4253 = vrot.lane.b32.xlu0 %v4248, 32
  %v4254 = vpop.permute.xlu0 %4253
  %v4257 = vadd.f32 %v4237, %v4252
  %v4258 = vadd.f32 %v4238, %v4254
  %v4259 = vtanh.pop %v4257
  %v4260 = vtanh.pop %v4258
  %4263 = vrot.lane.b32.xlu0 %v4259, 64
  %v4264 = vpop.permute.xlu0 %4263
  %4265 = vrot.lane.b32.xlu0 %v4260, 64
  %v4266 = vpop.permute.xlu0 %4265
  %v4269 = vmul.f32 %v4232, %v4264
  %v4270 = vmul.f32 %v4234, %v4266
  %4273 = vrot.lane.b32.xlu0 %v4269, 32
  %v4274 = vpop.permute.xlu0 %4273
  %4275 = vrot.lane.b32.xlu0 %v4270, 32
  %v4276 = vpop.permute.xlu0 %4275
  %4281 = vrot.lane.b32.xlu0 %v4128, 64
  %v4282 = vpop.permute.xlu0 %4281
  %4283 = vrot.lane.b32.xlu0 %v4129, 64
  %v4284 = vpop.permute.xlu0 %4283
  %v4287 = vsel %vm165, %v4274, %v4282
  %v4288 = vsel %vm165, %v4276, %v4284
  %v4290 = vsel %vm87, %v4287, 0
  %v4293 = vsel %vm87, %v4288, 0
  %4295 = vmatprep.subr.mxu0 0.0
  %4296 = vmatpush1.msra.mxu0 %v2004
  %4297 = vmatprep.subr.mxu0 0.0
  %4298 = vmatpush1.msra.mxu0 %v2005
  %4299 = vmatprep.subr.mxu0 0.0
  %4300 = vmatpush1.msra.mxu0 %v2006
  %4301 = vmatprep.subr.mxu0 0.0
  %4302 = vmatpush1.msra.mxu0 %v2007
  %4303 = vmatprep.subr.mxu0 0.0
  %4304 = vmatpush1.msra.mxu0 %v2008
  %4305 = vmatprep.subr.mxu0 0.0
  %4306 = vmatpush1.msra.mxu0 %v2009
  %4307 = vmatprep.subr.mxu0 0.0
  %4308 = vmatpush1.msra.mxu0 %v2010
  %4309 = vmatprep.subr.mxu0 0.0
  %4310 = vmatpush1.msra.mxu0 %v2011
  %4311 = vmatprep.subr.mxu0 0.0
  %4312 = vmatpush1.msra.mxu0 0.0
  %4313 = vmatprep.subr.mxu0 0.0
  %4314 = vmatpush1.msra.mxu0 0.0
  %4315 = vmatprep.subr.mxu0 0.0
  %4316 = vmatpush1.msra.mxu0 0.0
  %4317 = vmatprep.subr.mxu0 0.0
  %4318 = vmatpush1.msra.mxu0 0.0
  %4319 = vmatprep.subr.mxu0 0.0
  %4320 = vmatpush1.msra.mxu0 0.0
  %4321 = vmatprep.subr.mxu0 0.0
  %4322 = vmatpush1.msra.mxu0 0.0
  %4323 = vmatprep.subr.mxu0 0.0
  %4324 = vmatpush1.msra.mxu0 0.0
  %4325 = vmatprep.subr.mxu0 0.0
  %4326 = vmatpush1.msra.mxu0 0.0
  %4327 = vmatprep.subr.mxu0 0.0
  %4328 = vmatpush1.msra.mxu0 0.0
  %4329 = vmatprep.subr.mxu0 0.0
  %4330 = vmatpush1.msra.mxu0 0.0
  %4331 = vmatprep.subr.mxu0 0.0
  %4332 = vmatpush1.msra.mxu0 0.0
  %4333 = vmatprep.subr.mxu0 0.0
  %4334 = vmatpush1.msra.mxu0 0.0
  %4335 = vmatprep.subr.mxu0 0.0
  %4336 = vmatpush1.msra.mxu0 0.0
  %4337 = vmatprep.subr.mxu0 0.0
  %4338 = vmatpush1.msra.mxu0 0.0
  %4339 = vmatprep.subr.mxu0 0.0
  %4340 = vmatpush1.msra.mxu0 0.0
  %4341 = vmatprep.subr.mxu0 0.0
  %4342 = vmatpush1.msra.mxu0 0.0
  %4343 = vmatprep.subr.mxu0 0.0
  %4344 = vmatpush1.msra.mxu0 0.0
  %4345 = vmatprep.subr.mxu0 0.0
  %4346 = vmatpush1.msra.mxu0 0.0
  %4347 = vmatprep.subr.mxu0 0.0
  %4348 = vmatpush1.msra.mxu0 0.0
  %4349 = vmatprep.subr.mxu0 0.0
  %4350 = vmatpush1.msra.mxu0 0.0
  %4351 = vmatprep.subr.mxu0 0.0
  %4352 = vmatpush1.msra.mxu0 0.0
  %4353 = vmatprep.subr.mxu0 0.0
  %4354 = vmatpush1.msra.mxu0 0.0
  %4355 = vmatprep.subr.mxu0 0.0
  %4356 = vmatpush1.msra.mxu0 0.0
  %4357 = vmatprep.subr.mxu0 0.0
  %4358 = vmatpush1.msra.mxu0 0.0
  %4359 = vmatprep.mubr.f32.mxu0 0.0
  %4360 = vmatmul.mubr.f32.gmra.mrb[0].mxu0 %v4290
  %v4361 = vpop.f32.mrb[0].mxu0
  %v4362 = vadd.f32 %v2159, %v4361
  %v4363 = vpop.f32.mrb[0].mxu0
  %4364 = vmatprep.mubr.f32.mxu0 0.0
  %4365 = vmatmul.mubr.f32.gmra.mrb[0].mxu0 %v4293
  %v4366 = vpop.f32.mrb[0].mxu0
  %v4367 = vadd.f32 %v2159, %v4366
  %v4368 = vpop.f32.mrb[0].mxu0
  %4369 = vdwg.mxu0
  %v4370 = vxor.u32 %v4362, 2147483648
  %v4371 = vxor.u32 %v4367, 2147483648
  %v4372 = vmul.f32 %v4370, 1.442695
  %v4373 = vpow.pop %v4372
  %v4374 = vmul.f32 %v4371, 1.442695
  %v4375 = vpow.pop %v4374
  %v4376 = vadd.f32 %v4373, 1.0
  %v4377 = vadd.f32 %v4375, 1.0
  %v4378 = vrcp.pop %v4376
  %v4379 = vmul.f32 1.0, %v4378
  %v4380 = vrcp.pop %v4377
  %v4381 = vmul.f32 1.0, %v4380
  %v4382 = vtanh.pop %v4362
  %v4383 = vtanh.pop %v4367
  %v4384 = vmul.f32 %v4379, %v4130
  %v4385 = vmul.f32 %v4381, %v4131
  %4388 = vrot.lane.b32.xlu0 %v4382, 64
  %v4389 = vpop.permute.xlu0 %4388
  %4390 = vrot.lane.b32.xlu0 %v4383, 64
  %v4391 = vpop.permute.xlu0 %4390
  %v4394 = vmul.f32 %v4379, %v4389
  %v4395 = vmul.f32 %v4381, %v4391
  %4398 = vrot.lane.b32.xlu0 %v4394, 32
  %v4399 = vpop.permute.xlu0 %4398
  %4400 = vrot.lane.b32.xlu0 %v4395, 32
  %v4401 = vpop.permute.xlu0 %4400
  %v4404 = vadd.f32 %v4384, %v4399
  %v4405 = vadd.f32 %v4385, %v4401
  %v4406 = vtanh.pop %v4404
  %v4407 = vtanh.pop %v4405
  %4410 = vrot.lane.b32.xlu0 %v4406, 64
  %v4411 = vpop.permute.xlu0 %4410
  %4412 = vrot.lane.b32.xlu0 %v4407, 64
  %v4413 = vpop.permute.xlu0 %4412
  %v4416 = vmul.f32 %v4379, %v4411
  %v4417 = vmul.f32 %v4381, %v4413
  %v4418 = vsel %vm4132, 1, 0
  %v4419 = vsel %vm4133, 1, 0
  %4420 = vset.pattern.permute.xlu0 0
  %4421 = vperm.xlu0 %4420, %v4418
  %v4422 = vpop.permute.xlu0 %4421
  %4423 = vset.pattern.permute.xlu0 0
  %4424 = vperm.xlu0 %4423, %v4419
  %v4425 = vpop.permute.xlu0 %4424
  %vm4426 = vcmp.eq.s32.totalorder %v4422, 1
  %vm4427 = vcmp.eq.s32.totalorder %v4425, 1
  %v4428 = vsel %vm4426, %v4269, %v4124
  %v4429 = vsel %vm4427, %v4270, %v4125
  %v4430 = vsel %vm4426, %v4257, %v4126
  %v4431 = vsel %vm4427, %v4258, %v4127
  %v4432 = vsel %vm4426, %v4416, %v4128
  %v4433 = vsel %vm4427, %v4417, %v4129
  %v4434 = vsel %vm4426, %v4404, %v4130
  %v4435 = vsel %vm4427, %v4405, %v4131
  %vm4436 = vcmp.gt.s32.totalorder %v1998, 8
  %vm4437 = vcmp.gt.s32.totalorder %v1999, 8
  %v4438 = vld [vmem:[%s1036] sm:$0xff]
  %v4439 = vld [vmem:[%s1036 + $0x8] sm:$0xff]
  %4442 = vrot.lane.b32.xlu0 %v4428, 32
  %v4443 = vpop.permute.xlu0 %4442
  %4444 = vrot.lane.b32.xlu0 %v4429, 32
  %v4445 = vpop.permute.xlu0 %4444
  %v4446 = vsel %vm165, %v4443, 0
  %v4448 = vsel %vm165, %v4445, 0
  %4450 = vmatprep.subr.mxu0 0.0
  %4451 = vmatpush1.msra.mxu0 %v2000
  %4452 = vmatprep.subr.mxu0 0.0
  %4453 = vmatpush1.msra.mxu0 %v2001
  %4454 = vmatprep.subr.mxu0 0.0
  %4455 = vmatpush1.msra.mxu0 %v2002
  %4456 = vmatprep.subr.mxu0 0.0
  %4457 = vmatpush1.msra.mxu0 %v2003
  %4458 = vmatprep.subr.mxu0 0.0
  %4459 = vmatpush1.msra.mxu0 0.0
  %4460 = vmatprep.subr.mxu0 0.0
  %4461 = vmatpush1.msra.mxu0 0.0
  %4462 = vmatprep.subr.mxu0 0.0
  %4463 = vmatpush1.msra.mxu0 0.0
  %4464 = vmatprep.subr.mxu0 0.0
  %4465 = vmatpush1.msra.mxu0 0.0
  %4466 = vmatprep.subr.mxu0 0.0
  %4467 = vmatpush1.msra.mxu0 0.0
  %4468 = vmatprep.subr.mxu0 0.0
  %4469 = vmatpush1.msra.mxu0 0.0
  %4470 = vmatprep.subr.mxu0 0.0
  %4471 = vmatpush1.msra.mxu0 0.0
  %4472 = vmatprep.subr.mxu0 0.0
  %4473 = vmatpush1.msra.mxu0 0.0
  %4474 = vmatprep.subr.mxu0 0.0
  %4475 = vmatpush1.msra.mxu0 0.0
  %4476 = vmatprep.subr.mxu0 0.0
  %4477 = vmatpush1.msra.mxu0 0.0
  %4478 = vmatprep.subr.mxu0 0.0
  %4479 = vmatpush1.msra.mxu0 0.0
  %4480 = vmatprep.subr.mxu0 0.0
  %4481 = vmatpush1.msra.mxu0 0.0
  %4482 = vmatprep.subr.mxu0 0.0
  %4483 = vmatpush1.msra.mxu0 0.0
  %4484 = vmatprep.subr.mxu0 0.0
  %4485 = vmatpush1.msra.mxu0 0.0
  %4486 = vmatprep.subr.mxu0 0.0
  %4487 = vmatpush1.msra.mxu0 0.0
  %4488 = vmatprep.subr.mxu0 0.0
  %4489 = vmatpush1.msra.mxu0 0.0
  %4490 = vmatprep.subr.mxu0 0.0
  %4491 = vmatpush1.msra.mxu0 0.0
  %4492 = vmatprep.subr.mxu0 0.0
  %4493 = vmatpush1.msra.mxu0 0.0
  %4494 = vmatprep.subr.mxu0 0.0
  %4495 = vmatpush1.msra.mxu0 0.0
  %4496 = vmatprep.subr.mxu0 0.0
  %4497 = vmatpush1.msra.mxu0 0.0
  %4498 = vmatprep.subr.mxu0 0.0
  %4499 = vmatpush1.msra.mxu0 0.0
  %4500 = vmatprep.subr.mxu0 0.0
  %4501 = vmatpush1.msra.mxu0 0.0
  %4502 = vmatprep.subr.mxu0 0.0
  %4503 = vmatpush1.msra.mxu0 0.0
  %4504 = vmatprep.subr.mxu0 0.0
  %4505 = vmatpush1.msra.mxu0 0.0
  %4506 = vmatprep.subr.mxu0 0.0
  %4507 = vmatpush1.msra.mxu0 0.0
  %4508 = vmatprep.subr.mxu0 0.0
  %4509 = vmatpush1.msra.mxu0 0.0
  %4510 = vmatprep.subr.mxu0 0.0
  %4511 = vmatpush1.msra.mxu0 0.0
  %4512 = vmatprep.subr.mxu0 0.0
  %4513 = vmatpush1.msra.mxu0 0.0
  %4514 = vmatprep.mubr.f32.mxu0 0.0
  %4515 = vmatmul.mubr.f32.gmra.mrb[0].mxu0 %v4446
  %v4516 = vpop.f32.mrb[0].mxu0
  %v4517 = vadd.f32 0.0, %v4516
  %v4518 = vpop.f32.mrb[0].mxu0
  %4519 = vmatprep.mubr.f32.mxu0 0.0
  %4520 = vmatmul.mubr.f32.gmra.mrb[0].mxu0 %v4448
  %v4521 = vpop.f32.mrb[0].mxu0
  %v4522 = vadd.f32 0.0, %v4521
  %v4523 = vpop.f32.mrb[0].mxu0
  %4524 = vdwg.mxu0
  %v4525 = vadd.f32 %v4438, %v4517
  %v4526 = vadd.f32 %v4439, %v4522
  %v4527 = vxor.u32 %v4525, 2147483648
  %v4528 = vxor.u32 %v4526, 2147483648
  %v4529 = vmul.f32 %v4527, 1.442695
  %v4530 = vpow.pop %v4529
  %v4531 = vmul.f32 %v4528, 1.442695
  %v4532 = vpow.pop %v4531
  %v4533 = vadd.f32 %v4530, 1.0
  %v4534 = vadd.f32 %v4532, 1.0
  %v4535 = vrcp.pop %v4533
  %v4536 = vmul.f32 1.0, %v4535
  %v4537 = vrcp.pop %v4534
  %v4538 = vmul.f32 1.0, %v4537
  %v4539 = vtanh.pop %v4525
  %v4540 = vtanh.pop %v4526
  %v4541 = vmul.f32 %v4536, %v4430
  %v4542 = vmul.f32 %v4538, %v4431
  %4545 = vrot.lane.b32.xlu0 %v4539, 64
  %v4546 = vpop.permute.xlu0 %4545
  %4547 = vrot.lane.b32.xlu0 %v4540, 64
  %v4548 = vpop.permute.xlu0 %4547
  %v4551 = vmul.f32 %v4536, %v4546
  %v4552 = vmul.f32 %v4538, %v4548
  %4555 = vrot.lane.b32.xlu0 %v4551, 32
  %v4556 = vpop.permute.xlu0 %4555
  %4557 = vrot.lane.b32.xlu0 %v4552, 32
  %v4558 = vpop.permute.xlu0 %4557
  %v4561 = vadd.f32 %v4541, %v4556
  %v4562 = vadd.f32 %v4542, %v4558
  %v4563 = vtanh.pop %v4561
  %v4564 = vtanh.pop %v4562
  %4567 = vrot.lane.b32.xlu0 %v4563, 64
  %v4568 = vpop.permute.xlu0 %4567
  %4569 = vrot.lane.b32.xlu0 %v4564, 64
  %v4570 = vpop.permute.xlu0 %4569
  %v4573 = vmul.f32 %v4536, %v4568
  %v4574 = vmul.f32 %v4538, %v4570
  %4577 = vrot.lane.b32.xlu0 %v4573, 32
  %v4578 = vpop.permute.xlu0 %4577
  %4579 = vrot.lane.b32.xlu0 %v4574, 32
  %v4580 = vpop.permute.xlu0 %4579
  %4585 = vrot.lane.b32.xlu0 %v4432, 64
  %v4586 = vpop.permute.xlu0 %4585
  %4587 = vrot.lane.b32.xlu0 %v4433, 64
  %v4588 = vpop.permute.xlu0 %4587
  %v4591 = vsel %vm165, %v4578, %v4586
  %v4592 = vsel %vm165, %v4580, %v4588
  %v4594 = vsel %vm87, %v4591, 0
  %v4597 = vsel %vm87, %v4592, 0
  %4599 = vmatprep.subr.mxu0 0.0
  %4600 = vmatpush1.msra.mxu0 %v2004
  %4601 = vmatprep.subr.mxu0 0.0
  %4602 = vmatpush1.msra.mxu0 %v2005
  %4603 = vmatprep.subr.mxu0 0.0
  %4604 = vmatpush1.msra.mxu0 %v2006
  %4605 = vmatprep.subr.mxu0 0.0
  %4606 = vmatpush1.msra.mxu0 %v2007
  %4607 = vmatprep.subr.mxu0 0.0
  %4608 = vmatpush1.msra.mxu0 %v2008
  %4609 = vmatprep.subr.mxu0 0.0
  %4610 = vmatpush1.msra.mxu0 %v2009
  %4611 = vmatprep.subr.mxu0 0.0
  %4612 = vmatpush1.msra.mxu0 %v2010
  %4613 = vmatprep.subr.mxu0 0.0
  %4614 = vmatpush1.msra.mxu0 %v2011
  %4615 = vmatprep.subr.mxu0 0.0
  %4616 = vmatpush1.msra.mxu0 0.0
  %4617 = vmatprep.subr.mxu0 0.0
  %4618 = vmatpush1.msra.mxu0 0.0
  %4619 = vmatprep.subr.mxu0 0.0
  %4620 = vmatpush1.msra.mxu0 0.0
  %4621 = vmatprep.subr.mxu0 0.0
  %4622 = vmatpush1.msra.mxu0 0.0
  %4623 = vmatprep.subr.mxu0 0.0
  %4624 = vmatpush1.msra.mxu0 0.0
  %4625 = vmatprep.subr.mxu0 0.0
  %4626 = vmatpush1.msra.mxu0 0.0
  %4627 = vmatprep.subr.mxu0 0.0
  %4628 = vmatpush1.msra.mxu0 0.0
  %4629 = vmatprep.subr.mxu0 0.0
  %4630 = vmatpush1.msra.mxu0 0.0
  %4631 = vmatprep.subr.mxu0 0.0
  %4632 = vmatpush1.msra.mxu0 0.0
  %4633 = vmatprep.subr.mxu0 0.0
  %4634 = vmatpush1.msra.mxu0 0.0
  %4635 = vmatprep.subr.mxu0 0.0
  %4636 = vmatpush1.msra.mxu0 0.0
  %4637 = vmatprep.subr.mxu0 0.0
  %4638 = vmatpush1.msra.mxu0 0.0
  %4639 = vmatprep.subr.mxu0 0.0
  %4640 = vmatpush1.msra.mxu0 0.0
  %4641 = vmatprep.subr.mxu0 0.0
  %4642 = vmatpush1.msra.mxu0 0.0
  %4643 = vmatprep.subr.mxu0 0.0
  %4644 = vmatpush1.msra.mxu0 0.0
  %4645 = vmatprep.subr.mxu0 0.0
  %4646 = vmatpush1.msra.mxu0 0.0
  %4647 = vmatprep.subr.mxu0 0.0
  %4648 = vmatpush1.msra.mxu0 0.0
  %4649 = vmatprep.subr.mxu0 0.0
  %4650 = vmatpush1.msra.mxu0 0.0
  %4651 = vmatprep.subr.mxu0 0.0
  %4652 = vmatpush1.msra.mxu0 0.0
  %4653 = vmatprep.subr.mxu0 0.0
  %4654 = vmatpush1.msra.mxu0 0.0
  %4655 = vmatprep.subr.mxu0 0.0
  %4656 = vmatpush1.msra.mxu0 0.0
  %4657 = vmatprep.subr.mxu0 0.0
  %4658 = vmatpush1.msra.mxu0 0.0
  %4659 = vmatprep.subr.mxu0 0.0
  %4660 = vmatpush1.msra.mxu0 0.0
  %4661 = vmatprep.subr.mxu0 0.0
  %4662 = vmatpush1.msra.mxu0 0.0
  %4663 = vmatprep.mubr.f32.mxu0 0.0
  %4664 = vmatmul.mubr.f32.gmra.mrb[0].mxu0 %v4594
  %v4665 = vpop.f32.mrb[0].mxu0
  %v4666 = vadd.f32 %v2159, %v4665
  %v4667 = vpop.f32.mrb[0].mxu0
  %4668 = vmatprep.mubr.f32.mxu0 0.0
  %4669 = vmatmul.mubr.f32.gmra.mrb[0].mxu0 %v4597
  %v4670 = vpop.f32.mrb[0].mxu0
  %v4671 = vadd.f32 %v2159, %v4670
  %v4672 = vpop.f32.mrb[0].mxu0
  %4673 = vdwg.mxu0
  %v4674 = vxor.u32 %v4666, 2147483648
  %v4675 = vxor.u32 %v4671, 2147483648
  %v4676 = vmul.f32 %v4674, 1.442695
  %v4677 = vpow.pop %v4676
  %v4678 = vmul.f32 %v4675, 1.442695
  %v4679 = vpow.pop %v4678
  %v4680 = vadd.f32 %v4677, 1.0
  %v4681 = vadd.f32 %v4679, 1.0
  %v4682 = vrcp.pop %v4680
  %v4683 = vmul.f32 1.0, %v4682
  %v4684 = vrcp.pop %v4681
  %v4685 = vmul.f32 1.0, %v4684
  %v4686 = vtanh.pop %v4666
  %v4687 = vtanh.pop %v4671
  %v4688 = vmul.f32 %v4683, %v4434
  %v4689 = vmul.f32 %v4685, %v4435
  %4692 = vrot.lane.b32.xlu0 %v4686, 64
  %v4693 = vpop.permute.xlu0 %4692
  %4694 = vrot.lane.b32.xlu0 %v4687, 64
  %v4695 = vpop.permute.xlu0 %4694
  %v4698 = vmul.f32 %v4683, %v4693
  %v4699 = vmul.f32 %v4685, %v4695
  %4702 = vrot.lane.b32.xlu0 %v4698, 32
  %v4703 = vpop.permute.xlu0 %4702
  %4704 = vrot.lane.b32.xlu0 %v4699, 32
  %v4705 = vpop.permute.xlu0 %4704
  %v4708 = vadd.f32 %v4688, %v4703
  %v4709 = vadd.f32 %v4689, %v4705
  %v4710 = vtanh.pop %v4708
  %v4711 = vtanh.pop %v4709
  %4714 = vrot.lane.b32.xlu0 %v4710, 64
  %v4715 = vpop.permute.xlu0 %4714
  %4716 = vrot.lane.b32.xlu0 %v4711, 64
  %v4717 = vpop.permute.xlu0 %4716
  %v4720 = vmul.f32 %v4683, %v4715
  %v4721 = vmul.f32 %v4685, %v4717
  %v4722 = vsel %vm4436, 1, 0
  %v4723 = vsel %vm4437, 1, 0
  %4724 = vset.pattern.permute.xlu0 0
  %4725 = vperm.xlu0 %4724, %v4722
  %v4726 = vpop.permute.xlu0 %4725
  %4727 = vset.pattern.permute.xlu0 0
  %4728 = vperm.xlu0 %4727, %v4723
  %v4729 = vpop.permute.xlu0 %4728
  %vm4730 = vcmp.eq.s32.totalorder %v4726, 1
  %vm4731 = vcmp.eq.s32.totalorder %v4729, 1
  %v4732 = vsel %vm4730, %v4573, %v4428
  %v4733 = vsel %vm4731, %v4574, %v4429
  %v4734 = vsel %vm4730, %v4561, %v4430
  %v4735 = vsel %vm4731, %v4562, %v4431
  %v4736 = vsel %vm4730, %v4720, %v4432
  %v4737 = vsel %vm4731, %v4721, %v4433
  %v4738 = vsel %vm4730, %v4708, %v4434
  %v4739 = vsel %vm4731, %v4709, %v4435
  %vm4740 = vcmp.gt.s32.totalorder %v1998, 9
  %vm4741 = vcmp.gt.s32.totalorder %v1999, 9
  %v4742 = vld [vmem:[%s1123] sm:$0xff]
  %v4743 = vld [vmem:[%s1123 + $0x8] sm:$0xff]
  %4746 = vrot.lane.b32.xlu0 %v4732, 32
  %v4747 = vpop.permute.xlu0 %4746
  %4748 = vrot.lane.b32.xlu0 %v4733, 32
  %v4749 = vpop.permute.xlu0 %4748
  %v4750 = vsel %vm165, %v4747, 0
  %v4752 = vsel %vm165, %v4749, 0
  %4754 = vmatprep.subr.mxu0 0.0
  %4755 = vmatpush1.msra.mxu0 %v2000
  %4756 = vmatprep.subr.mxu0 0.0
  %4757 = vmatpush1.msra.mxu0 %v2001
  %4758 = vmatprep.subr.mxu0 0.0
  %4759 = vmatpush1.msra.mxu0 %v2002
  %4760 = vmatprep.subr.mxu0 0.0
  %4761 = vmatpush1.msra.mxu0 %v2003
  %4762 = vmatprep.subr.mxu0 0.0
  %4763 = vmatpush1.msra.mxu0 0.0
  %4764 = vmatprep.subr.mxu0 0.0
  %4765 = vmatpush1.msra.mxu0 0.0
  %4766 = vmatprep.subr.mxu0 0.0
  %4767 = vmatpush1.msra.mxu0 0.0
  %4768 = vmatprep.subr.mxu0 0.0
  %4769 = vmatpush1.msra.mxu0 0.0
  %4770 = vmatprep.subr.mxu0 0.0
  %4771 = vmatpush1.msra.mxu0 0.0
  %4772 = vmatprep.subr.mxu0 0.0
  %4773 = vmatpush1.msra.mxu0 0.0
  %4774 = vmatprep.subr.mxu0 0.0
  %4775 = vmatpush1.msra.mxu0 0.0
  %4776 = vmatprep.subr.mxu0 0.0
  %4777 = vmatpush1.msra.mxu0 0.0
  %4778 = vmatprep.subr.mxu0 0.0
  %4779 = vmatpush1.msra.mxu0 0.0
  %4780 = vmatprep.subr.mxu0 0.0
  %4781 = vmatpush1.msra.mxu0 0.0
  %4782 = vmatprep.subr.mxu0 0.0
  %4783 = vmatpush1.msra.mxu0 0.0
  %4784 = vmatprep.subr.mxu0 0.0
  %4785 = vmatpush1.msra.mxu0 0.0
  %4786 = vmatprep.subr.mxu0 0.0
  %4787 = vmatpush1.msra.mxu0 0.0
  %4788 = vmatprep.subr.mxu0 0.0
  %4789 = vmatpush1.msra.mxu0 0.0
  %4790 = vmatprep.subr.mxu0 0.0
  %4791 = vmatpush1.msra.mxu0 0.0
  %4792 = vmatprep.subr.mxu0 0.0
  %4793 = vmatpush1.msra.mxu0 0.0
  %4794 = vmatprep.subr.mxu0 0.0
  %4795 = vmatpush1.msra.mxu0 0.0
  %4796 = vmatprep.subr.mxu0 0.0
  %4797 = vmatpush1.msra.mxu0 0.0
  %4798 = vmatprep.subr.mxu0 0.0
  %4799 = vmatpush1.msra.mxu0 0.0
  %4800 = vmatprep.subr.mxu0 0.0
  %4801 = vmatpush1.msra.mxu0 0.0
  %4802 = vmatprep.subr.mxu0 0.0
  %4803 = vmatpush1.msra.mxu0 0.0
  %4804 = vmatprep.subr.mxu0 0.0
  %4805 = vmatpush1.msra.mxu0 0.0
  %4806 = vmatprep.subr.mxu0 0.0
  %4807 = vmatpush1.msra.mxu0 0.0
  %4808 = vmatprep.subr.mxu0 0.0
  %4809 = vmatpush1.msra.mxu0 0.0
  %4810 = vmatprep.subr.mxu0 0.0
  %4811 = vmatpush1.msra.mxu0 0.0
  %4812 = vmatprep.subr.mxu0 0.0
  %4813 = vmatpush1.msra.mxu0 0.0
  %4814 = vmatprep.subr.mxu0 0.0
  %4815 = vmatpush1.msra.mxu0 0.0
  %4816 = vmatprep.subr.mxu0 0.0
  %4817 = vmatpush1.msra.mxu0 0.0
  %4818 = vmatprep.mubr.f32.mxu0 0.0
  %4819 = vmatmul.mubr.f32.gmra.mrb[0].mxu0 %v4750
  %v4820 = vpop.f32.mrb[0].mxu0
  %v4821 = vadd.f32 0.0, %v4820
  %v4822 = vpop.f32.mrb[0].mxu0
  %4823 = vmatprep.mubr.f32.mxu0 0.0
  %4824 = vmatmul.mubr.f32.gmra.mrb[0].mxu0 %v4752
  %v4825 = vpop.f32.mrb[0].mxu0
  %v4826 = vadd.f32 0.0, %v4825
  %v4827 = vpop.f32.mrb[0].mxu0
  %4828 = vdwg.mxu0
  %v4829 = vadd.f32 %v4742, %v4821
  %v4830 = vadd.f32 %v4743, %v4826
  %v4831 = vxor.u32 %v4829, 2147483648
  %v4832 = vxor.u32 %v4830, 2147483648
  %v4833 = vmul.f32 %v4831, 1.442695
  %v4834 = vpow.pop %v4833
  %v4835 = vmul.f32 %v4832, 1.442695
  %v4836 = vpow.pop %v4835
  %v4837 = vadd.f32 %v4834, 1.0
  %v4838 = vadd.f32 %v4836, 1.0
  %v4839 = vrcp.pop %v4837
  %v4840 = vmul.f32 1.0, %v4839
  %v4841 = vrcp.pop %v4838
  %v4842 = vmul.f32 1.0, %v4841
  %v4843 = vtanh.pop %v4829
  %v4844 = vtanh.pop %v4830
  %v4845 = vmul.f32 %v4840, %v4734
  %v4846 = vmul.f32 %v4842, %v4735
  %4849 = vrot.lane.b32.xlu0 %v4843, 64
  %v4850 = vpop.permute.xlu0 %4849
  %4851 = vrot.lane.b32.xlu0 %v4844, 64
  %v4852 = vpop.permute.xlu0 %4851
  %v4855 = vmul.f32 %v4840, %v4850
  %v4856 = vmul.f32 %v4842, %v4852
  %4859 = vrot.lane.b32.xlu0 %v4855, 32
  %v4860 = vpop.permute.xlu0 %4859
  %4861 = vrot.lane.b32.xlu0 %v4856, 32
  %v4862 = vpop.permute.xlu0 %4861
  %v4865 = vadd.f32 %v4845, %v4860
  %v4866 = vadd.f32 %v4846, %v4862
  %v4867 = vtanh.pop %v4865
  %v4868 = vtanh.pop %v4866
  %4871 = vrot.lane.b32.xlu0 %v4867, 64
  %v4872 = vpop.permute.xlu0 %4871
  %4873 = vrot.lane.b32.xlu0 %v4868, 64
  %v4874 = vpop.permute.xlu0 %4873
  %v4877 = vmul.f32 %v4840, %v4872
  %v4878 = vmul.f32 %v4842, %v4874
  %4881 = vrot.lane.b32.xlu0 %v4877, 32
  %v4882 = vpop.permute.xlu0 %4881
  %4883 = vrot.lane.b32.xlu0 %v4878, 32
  %v4884 = vpop.permute.xlu0 %4883
  %4889 = vrot.lane.b32.xlu0 %v4736, 64
  %v4890 = vpop.permute.xlu0 %4889
  %4891 = vrot.lane.b32.xlu0 %v4737, 64
  %v4892 = vpop.permute.xlu0 %4891
  %v4895 = vsel %vm165, %v4882, %v4890
  %v4896 = vsel %vm165, %v4884, %v4892
  %v4898 = vsel %vm87, %v4895, 0
  %v4901 = vsel %vm87, %v4896, 0
  %4903 = vmatprep.subr.mxu0 0.0
  %4904 = vmatpush1.msra.mxu0 %v2004
  %4905 = vmatprep.subr.mxu0 0.0
  %4906 = vmatpush1.msra.mxu0 %v2005
  %4907 = vmatprep.subr.mxu0 0.0
  %4908 = vmatpush1.msra.mxu0 %v2006
  %4909 = vmatprep.subr.mxu0 0.0
  %4910 = vmatpush1.msra.mxu0 %v2007
  %4911 = vmatprep.subr.mxu0 0.0
  %4912 = vmatpush1.msra.mxu0 %v2008
  %4913 = vmatprep.subr.mxu0 0.0
  %4914 = vmatpush1.msra.mxu0 %v2009
  %4915 = vmatprep.subr.mxu0 0.0
  %4916 = vmatpush1.msra.mxu0 %v2010
  %4917 = vmatprep.subr.mxu0 0.0
  %4918 = vmatpush1.msra.mxu0 %v2011
  %4919 = vmatprep.subr.mxu0 0.0
  %4920 = vmatpush1.msra.mxu0 0.0
  %4921 = vmatprep.subr.mxu0 0.0
  %4922 = vmatpush1.msra.mxu0 0.0
  %4923 = vmatprep.subr.mxu0 0.0
  %4924 = vmatpush1.msra.mxu0 0.0
  %4925 = vmatprep.subr.mxu0 0.0
  %4926 = vmatpush1.msra.mxu0 0.0
  %4927 = vmatprep.subr.mxu0 0.0
  %4928 = vmatpush1.msra.mxu0 0.0
  %4929 = vmatprep.subr.mxu0 0.0
  %4930 = vmatpush1.msra.mxu0 0.0
  %4931 = vmatprep.subr.mxu0 0.0
  %4932 = vmatpush1.msra.mxu0 0.0
  %4933 = vmatprep.subr.mxu0 0.0
  %4934 = vmatpush1.msra.mxu0 0.0
  %4935 = vmatprep.subr.mxu0 0.0
  %4936 = vmatpush1.msra.mxu0 0.0
  %4937 = vmatprep.subr.mxu0 0.0
  %4938 = vmatpush1.msra.mxu0 0.0
  %4939 = vmatprep.subr.mxu0 0.0
  %4940 = vmatpush1.msra.mxu0 0.0
  %4941 = vmatprep.subr.mxu0 0.0
  %4942 = vmatpush1.msra.mxu0 0.0
  %4943 = vmatprep.subr.mxu0 0.0
  %4944 = vmatpush1.msra.mxu0 0.0
  %4945 = vmatprep.subr.mxu0 0.0
  %4946 = vmatpush1.msra.mxu0 0.0
  %4947 = vmatprep.subr.mxu0 0.0
  %4948 = vmatpush1.msra.mxu0 0.0
  %4949 = vmatprep.subr.mxu0 0.0
  %4950 = vmatpush1.msra.mxu0 0.0
  %4951 = vmatprep.subr.mxu0 0.0
  %4952 = vmatpush1.msra.mxu0 0.0
  %4953 = vmatprep.subr.mxu0 0.0
  %4954 = vmatpush1.msra.mxu0 0.0
  %4955 = vmatprep.subr.mxu0 0.0
  %4956 = vmatpush1.msra.mxu0 0.0
  %4957 = vmatprep.subr.mxu0 0.0
  %4958 = vmatpush1.msra.mxu0 0.0
  %4959 = vmatprep.subr.mxu0 0.0
  %4960 = vmatpush1.msra.mxu0 0.0
  %4961 = vmatprep.subr.mxu0 0.0
  %4962 = vmatpush1.msra.mxu0 0.0
  %4963 = vmatprep.subr.mxu0 0.0
  %4964 = vmatpush1.msra.mxu0 0.0
  %4965 = vmatprep.subr.mxu0 0.0
  %4966 = vmatpush1.msra.mxu0 0.0
  %4967 = vmatprep.mubr.f32.mxu0 0.0
  %4968 = vmatmul.mubr.f32.gmra.mrb[0].mxu0 %v4898
  %v4969 = vpop.f32.mrb[0].mxu0
  %v4970 = vadd.f32 %v2159, %v4969
  %v4971 = vpop.f32.mrb[0].mxu0
  %4972 = vmatprep.mubr.f32.mxu0 0.0
  %4973 = vmatmul.mubr.f32.gmra.mrb[0].mxu0 %v4901
  %v4974 = vpop.f32.mrb[0].mxu0
  %v4975 = vadd.f32 %v2159, %v4974
  %v4976 = vpop.f32.mrb[0].mxu0
  %4977 = vdwg.mxu0
  %v4978 = vxor.u32 %v4970, 2147483648
  %v4979 = vxor.u32 %v4975, 2147483648
  %v4980 = vmul.f32 %v4978, 1.442695
  %v4981 = vpow.pop %v4980
  %v4982 = vmul.f32 %v4979, 1.442695
  %v4983 = vpow.pop %v4982
  %v4984 = vadd.f32 %v4981, 1.0
  %v4985 = vadd.f32 %v4983, 1.0
  %v4986 = vrcp.pop %v4984
  %v4987 = vmul.f32 1.0, %v4986
  %v4988 = vrcp.pop %v4985
  %v4989 = vmul.f32 1.0, %v4988
  %v4990 = vtanh.pop %v4970
  %v4991 = vtanh.pop %v4975
  %v4992 = vmul.f32 %v4987, %v4738
  %v4993 = vmul.f32 %v4989, %v4739
  %4996 = vrot.lane.b32.xlu0 %v4990, 64
  %v4997 = vpop.permute.xlu0 %4996
  %4998 = vrot.lane.b32.xlu0 %v4991, 64
  %v4999 = vpop.permute.xlu0 %4998
  %v5002 = vmul.f32 %v4987, %v4997
  %v5003 = vmul.f32 %v4989, %v4999
  %5006 = vrot.lane.b32.xlu0 %v5002, 32
  %v5007 = vpop.permute.xlu0 %5006
  %5008 = vrot.lane.b32.xlu0 %v5003, 32
  %v5009 = vpop.permute.xlu0 %5008
  %v5012 = vadd.f32 %v4992, %v5007
  %v5013 = vadd.f32 %v4993, %v5009
  %v5014 = vtanh.pop %v5012
  %v5015 = vtanh.pop %v5013
  %5018 = vrot.lane.b32.xlu0 %v5014, 64
  %v5019 = vpop.permute.xlu0 %5018
  %5020 = vrot.lane.b32.xlu0 %v5015, 64
  %v5021 = vpop.permute.xlu0 %5020
  %v5024 = vmul.f32 %v4987, %v5019
  %v5025 = vmul.f32 %v4989, %v5021
  %v5026 = vsel %vm4740, 1, 0
  %v5027 = vsel %vm4741, 1, 0
  %5028 = vset.pattern.permute.xlu0 0
  %5029 = vperm.xlu0 %5028, %v5026
  %v5030 = vpop.permute.xlu0 %5029
  %5031 = vset.pattern.permute.xlu0 0
  %5032 = vperm.xlu0 %5031, %v5027
  %v5033 = vpop.permute.xlu0 %5032
  %vm5034 = vcmp.eq.s32.totalorder %v5030, 1
  %vm5035 = vcmp.eq.s32.totalorder %v5033, 1
  %v5036 = vsel %vm5034, %v4877, %v4732
  %v5037 = vsel %vm5035, %v4878, %v4733
  %v5038 = vsel %vm5034, %v4865, %v4734
  %v5039 = vsel %vm5035, %v4866, %v4735
  %v5040 = vsel %vm5034, %v5024, %v4736
  %v5041 = vsel %vm5035, %v5025, %v4737
  %v5042 = vsel %vm5034, %v5012, %v4738
  %v5043 = vsel %vm5035, %v5013, %v4739
  %vm5044 = vcmp.gt.s32.totalorder %v1998, 10
  %vm5045 = vcmp.gt.s32.totalorder %v1999, 10
  %v5046 = vld [vmem:[%s1210] sm:$0xff]
  %v5047 = vld [vmem:[%s1210 + $0x8] sm:$0xff]
  %5050 = vrot.lane.b32.xlu0 %v5036, 32
  %v5051 = vpop.permute.xlu0 %5050
  %5052 = vrot.lane.b32.xlu0 %v5037, 32
  %v5053 = vpop.permute.xlu0 %5052
  %v5054 = vsel %vm165, %v5051, 0
  %v5056 = vsel %vm165, %v5053, 0
  %5058 = vmatprep.subr.mxu0 0.0
  %5059 = vmatpush1.msra.mxu0 %v2000
  %5060 = vmatprep.subr.mxu0 0.0
  %5061 = vmatpush1.msra.mxu0 %v2001
  %5062 = vmatprep.subr.mxu0 0.0
  %5063 = vmatpush1.msra.mxu0 %v2002
  %5064 = vmatprep.subr.mxu0 0.0
  %5065 = vmatpush1.msra.mxu0 %v2003
  %5066 = vmatprep.subr.mxu0 0.0
  %5067 = vmatpush1.msra.mxu0 0.0
  %5068 = vmatprep.subr.mxu0 0.0
  %5069 = vmatpush1.msra.mxu0 0.0
  %5070 = vmatprep.subr.mxu0 0.0
  %5071 = vmatpush1.msra.mxu0 0.0
  %5072 = vmatprep.subr.mxu0 0.0
  %5073 = vmatpush1.msra.mxu0 0.0
  %5074 = vmatprep.subr.mxu0 0.0
  %5075 = vmatpush1.msra.mxu0 0.0
  %5076 = vmatprep.subr.mxu0 0.0
  %5077 = vmatpush1.msra.mxu0 0.0
  %5078 = vmatprep.subr.mxu0 0.0
  %5079 = vmatpush1.msra.mxu0 0.0
  %5080 = vmatprep.subr.mxu0 0.0
  %5081 = vmatpush1.msra.mxu0 0.0
  %5082 = vmatprep.subr.mxu0 0.0
  %5083 = vmatpush1.msra.mxu0 0.0
  %5084 = vmatprep.subr.mxu0 0.0
  %5085 = vmatpush1.msra.mxu0 0.0
  %5086 = vmatprep.subr.mxu0 0.0
  %5087 = vmatpush1.msra.mxu0 0.0
  %5088 = vmatprep.subr.mxu0 0.0
  %5089 = vmatpush1.msra.mxu0 0.0
  %5090 = vmatprep.subr.mxu0 0.0
  %5091 = vmatpush1.msra.mxu0 0.0
  %5092 = vmatprep.subr.mxu0 0.0
  %5093 = vmatpush1.msra.mxu0 0.0
  %5094 = vmatprep.subr.mxu0 0.0
  %5095 = vmatpush1.msra.mxu0 0.0
  %5096 = vmatprep.subr.mxu0 0.0
  %5097 = vmatpush1.msra.mxu0 0.0
  %5098 = vmatprep.subr.mxu0 0.0
  %5099 = vmatpush1.msra.mxu0 0.0
  %5100 = vmatprep.subr.mxu0 0.0
  %5101 = vmatpush1.msra.mxu0 0.0
  %5102 = vmatprep.subr.mxu0 0.0
  %5103 = vmatpush1.msra.mxu0 0.0
  %5104 = vmatprep.subr.mxu0 0.0
  %5105 = vmatpush1.msra.mxu0 0.0
  %5106 = vmatprep.subr.mxu0 0.0
  %5107 = vmatpush1.msra.mxu0 0.0
  %5108 = vmatprep.subr.mxu0 0.0
  %5109 = vmatpush1.msra.mxu0 0.0
  %5110 = vmatprep.subr.mxu0 0.0
  %5111 = vmatpush1.msra.mxu0 0.0
  %5112 = vmatprep.subr.mxu0 0.0
  %5113 = vmatpush1.msra.mxu0 0.0
  %5114 = vmatprep.subr.mxu0 0.0
  %5115 = vmatpush1.msra.mxu0 0.0
  %5116 = vmatprep.subr.mxu0 0.0
  %5117 = vmatpush1.msra.mxu0 0.0
  %5118 = vmatprep.subr.mxu0 0.0
  %5119 = vmatpush1.msra.mxu0 0.0
  %5120 = vmatprep.subr.mxu0 0.0
  %5121 = vmatpush1.msra.mxu0 0.0
  %5122 = vmatprep.mubr.f32.mxu0 0.0
  %5123 = vmatmul.mubr.f32.gmra.mrb[0].mxu0 %v5054
  %v5124 = vpop.f32.mrb[0].mxu0
  %v5125 = vadd.f32 0.0, %v5124
  %v5126 = vpop.f32.mrb[0].mxu0
  %5127 = vmatprep.mubr.f32.mxu0 0.0
  %5128 = vmatmul.mubr.f32.gmra.mrb[0].mxu0 %v5056
  %v5129 = vpop.f32.mrb[0].mxu0
  %v5130 = vadd.f32 0.0, %v5129
  %v5131 = vpop.f32.mrb[0].mxu0
  %5132 = vdwg.mxu0
  %v5133 = vadd.f32 %v5046, %v5125
  %v5134 = vadd.f32 %v5047, %v5130
  %v5135 = vxor.u32 %v5133, 2147483648
  %v5136 = vxor.u32 %v5134, 2147483648
  %v5137 = vmul.f32 %v5135, 1.442695
  %v5138 = vpow.pop %v5137
  %v5139 = vmul.f32 %v5136, 1.442695
  %v5140 = vpow.pop %v5139
  %v5141 = vadd.f32 %v5138, 1.0
  %v5142 = vadd.f32 %v5140, 1.0
  %v5143 = vrcp.pop %v5141
  %v5144 = vmul.f32 1.0, %v5143
  %v5145 = vrcp.pop %v5142
  %v5146 = vmul.f32 1.0, %v5145
  %v5147 = vtanh.pop %v5133
  %v5148 = vtanh.pop %v5134
  %v5149 = vmul.f32 %v5144, %v5038
  %v5150 = vmul.f32 %v5146, %v5039
  %5153 = vrot.lane.b32.xlu0 %v5147, 64
  %v5154 = vpop.permute.xlu0 %5153
  %5155 = vrot.lane.b32.xlu0 %v5148, 64
  %v5156 = vpop.permute.xlu0 %5155
  %v5159 = vmul.f32 %v5144, %v5154
  %v5160 = vmul.f32 %v5146, %v5156
  %5163 = vrot.lane.b32.xlu0 %v5159, 32
  %v5164 = vpop.permute.xlu0 %5163
  %5165 = vrot.lane.b32.xlu0 %v5160, 32
  %v5166 = vpop.permute.xlu0 %5165
  %v5169 = vadd.f32 %v5149, %v5164
  %v5170 = vadd.f32 %v5150, %v5166
  %v5171 = vtanh.pop %v5169
  %v5172 = vtanh.pop %v5170
  %5175 = vrot.lane.b32.xlu0 %v5171, 64
  %v5176 = vpop.permute.xlu0 %5175
  %5177 = vrot.lane.b32.xlu0 %v5172, 64
  %v5178 = vpop.permute.xlu0 %5177
  %v5181 = vmul.f32 %v5144, %v5176
  %v5182 = vmul.f32 %v5146, %v5178
  %5185 = vrot.lane.b32.xlu0 %v5181, 32
  %v5186 = vpop.permute.xlu0 %5185
  %5187 = vrot.lane.b32.xlu0 %v5182, 32
  %v5188 = vpop.permute.xlu0 %5187
  %5193 = vrot.lane.b32.xlu0 %v5040, 64
  %v5194 = vpop.permute.xlu0 %5193
  %5195 = vrot.lane.b32.xlu0 %v5041, 64
  %v5196 = vpop.permute.xlu0 %5195
  %v5199 = vsel %vm165, %v5186, %v5194
  %v5200 = vsel %vm165, %v5188, %v5196
  %v5202 = vsel %vm87, %v5199, 0
  %v5205 = vsel %vm87, %v5200, 0
  %5207 = vmatprep.subr.mxu0 0.0
  %5208 = vmatpush1.msra.mxu0 %v2004
  %5209 = vmatprep.subr.mxu0 0.0
  %5210 = vmatpush1.msra.mxu0 %v2005
  %5211 = vmatprep.subr.mxu0 0.0
  %5212 = vmatpush1.msra.mxu0 %v2006
  %5213 = vmatprep.subr.mxu0 0.0
  %5214 = vmatpush1.msra.mxu0 %v2007
  %5215 = vmatprep.subr.mxu0 0.0
  %5216 = vmatpush1.msra.mxu0 %v2008
  %5217 = vmatprep.subr.mxu0 0.0
  %5218 = vmatpush1.msra.mxu0 %v2009
  %5219 = vmatprep.subr.mxu0 0.0
  %5220 = vmatpush1.msra.mxu0 %v2010
  %5221 = vmatprep.subr.mxu0 0.0
  %5222 = vmatpush1.msra.mxu0 %v2011
  %5223 = vmatprep.subr.mxu0 0.0
  %5224 = vmatpush1.msra.mxu0 0.0
  %5225 = vmatprep.subr.mxu0 0.0
  %5226 = vmatpush1.msra.mxu0 0.0
  %5227 = vmatprep.subr.mxu0 0.0
  %5228 = vmatpush1.msra.mxu0 0.0
  %5229 = vmatprep.subr.mxu0 0.0
  %5230 = vmatpush1.msra.mxu0 0.0
  %5231 = vmatprep.subr.mxu0 0.0
  %5232 = vmatpush1.msra.mxu0 0.0
  %5233 = vmatprep.subr.mxu0 0.0
  %5234 = vmatpush1.msra.mxu0 0.0
  %5235 = vmatprep.subr.mxu0 0.0
  %5236 = vmatpush1.msra.mxu0 0.0
  %5237 = vmatprep.subr.mxu0 0.0
  %5238 = vmatpush1.msra.mxu0 0.0
  %5239 = vmatprep.subr.mxu0 0.0
  %5240 = vmatpush1.msra.mxu0 0.0
  %5241 = vmatprep.subr.mxu0 0.0
  %5242 = vmatpush1.msra.mxu0 0.0
  %5243 = vmatprep.subr.mxu0 0.0
  %5244 = vmatpush1.msra.mxu0 0.0
  %5245 = vmatprep.subr.mxu0 0.0
  %5246 = vmatpush1.msra.mxu0 0.0
  %5247 = vmatprep.subr.mxu0 0.0
  %5248 = vmatpush1.msra.mxu0 0.0
  %5249 = vmatprep.subr.mxu0 0.0
  %5250 = vmatpush1.msra.mxu0 0.0
  %5251 = vmatprep.subr.mxu0 0.0
  %5252 = vmatpush1.msra.mxu0 0.0
  %5253 = vmatprep.subr.mxu0 0.0
  %5254 = vmatpush1.msra.mxu0 0.0
  %5255 = vmatprep.subr.mxu0 0.0
  %5256 = vmatpush1.msra.mxu0 0.0
  %5257 = vmatprep.subr.mxu0 0.0
  %5258 = vmatpush1.msra.mxu0 0.0
  %5259 = vmatprep.subr.mxu0 0.0
  %5260 = vmatpush1.msra.mxu0 0.0
  %5261 = vmatprep.subr.mxu0 0.0
  %5262 = vmatpush1.msra.mxu0 0.0
  %5263 = vmatprep.subr.mxu0 0.0
  %5264 = vmatpush1.msra.mxu0 0.0
  %5265 = vmatprep.subr.mxu0 0.0
  %5266 = vmatpush1.msra.mxu0 0.0
  %5267 = vmatprep.subr.mxu0 0.0
  %5268 = vmatpush1.msra.mxu0 0.0
  %5269 = vmatprep.subr.mxu0 0.0
  %5270 = vmatpush1.msra.mxu0 0.0
  %5271 = vmatprep.mubr.f32.mxu0 0.0
  %5272 = vmatmul.mubr.f32.gmra.mrb[0].mxu0 %v5202
  %v5273 = vpop.f32.mrb[0].mxu0
  %v5274 = vadd.f32 %v2159, %v5273
  %v5275 = vpop.f32.mrb[0].mxu0
  %5276 = vmatprep.mubr.f32.mxu0 0.0
  %5277 = vmatmul.mubr.f32.gmra.mrb[0].mxu0 %v5205
  %v5278 = vpop.f32.mrb[0].mxu0
  %v5279 = vadd.f32 %v2159, %v5278
  %v5280 = vpop.f32.mrb[0].mxu0
  %5281 = vdwg.mxu0
  %v5282 = vxor.u32 %v5274, 2147483648
  %v5283 = vxor.u32 %v5279, 2147483648
  %v5284 = vmul.f32 %v5282, 1.442695
  %v5285 = vpow.pop %v5284
  %v5286 = vmul.f32 %v5283, 1.442695
  %v5287 = vpow.pop %v5286
  %v5288 = vadd.f32 %v5285, 1.0
  %v5289 = vadd.f32 %v5287, 1.0
  %v5290 = vrcp.pop %v5288
  %v5291 = vmul.f32 1.0, %v5290
  %v5292 = vrcp.pop %v5289
  %v5293 = vmul.f32 1.0, %v5292
  %v5294 = vtanh.pop %v5274
  %v5295 = vtanh.pop %v5279
  %v5296 = vmul.f32 %v5291, %v5042
  %v5297 = vmul.f32 %v5293, %v5043
  %5300 = vrot.lane.b32.xlu0 %v5294, 64
  %v5301 = vpop.permute.xlu0 %5300
  %5302 = vrot.lane.b32.xlu0 %v5295, 64
  %v5303 = vpop.permute.xlu0 %5302
  %v5306 = vmul.f32 %v5291, %v5301
  %v5307 = vmul.f32 %v5293, %v5303
  %5310 = vrot.lane.b32.xlu0 %v5306, 32
  %v5311 = vpop.permute.xlu0 %5310
  %5312 = vrot.lane.b32.xlu0 %v5307, 32
  %v5313 = vpop.permute.xlu0 %5312
  %v5316 = vadd.f32 %v5296, %v5311
  %v5317 = vadd.f32 %v5297, %v5313
  %v5318 = vtanh.pop %v5316
  %v5319 = vtanh.pop %v5317
  %5322 = vrot.lane.b32.xlu0 %v5318, 64
  %v5323 = vpop.permute.xlu0 %5322
  %5324 = vrot.lane.b32.xlu0 %v5319, 64
  %v5325 = vpop.permute.xlu0 %5324
  %v5328 = vmul.f32 %v5291, %v5323
  %v5329 = vmul.f32 %v5293, %v5325
  %v5330 = vsel %vm5044, 1, 0
  %v5331 = vsel %vm5045, 1, 0
  %5332 = vset.pattern.permute.xlu0 0
  %5333 = vperm.xlu0 %5332, %v5330
  %v5334 = vpop.permute.xlu0 %5333
  %5335 = vset.pattern.permute.xlu0 0
  %5336 = vperm.xlu0 %5335, %v5331
  %v5337 = vpop.permute.xlu0 %5336
  %vm5338 = vcmp.eq.s32.totalorder %v5334, 1
  %vm5339 = vcmp.eq.s32.totalorder %v5337, 1
  %v5340 = vsel %vm5338, %v5181, %v5036
  %v5341 = vsel %vm5339, %v5182, %v5037
  %v5342 = vsel %vm5338, %v5169, %v5038
  %v5343 = vsel %vm5339, %v5170, %v5039
  %v5344 = vsel %vm5338, %v5328, %v5040
  %v5345 = vsel %vm5339, %v5329, %v5041
  %v5346 = vsel %vm5338, %v5316, %v5042
  %v5347 = vsel %vm5339, %v5317, %v5043
  %vm5348 = vcmp.gt.s32.totalorder %v1998, 11
  %vm5349 = vcmp.gt.s32.totalorder %v1999, 11
  %v5350 = vld [vmem:[%s1297] sm:$0xff]
  %v5351 = vld [vmem:[%s1297 + $0x8] sm:$0xff]
  %5354 = vrot.lane.b32.xlu0 %v5340, 32
  %v5355 = vpop.permute.xlu0 %5354
  %5356 = vrot.lane.b32.xlu0 %v5341, 32
  %v5357 = vpop.permute.xlu0 %5356
  %v5358 = vsel %vm165, %v5355, 0
  %v5360 = vsel %vm165, %v5357, 0
  %5362 = vmatprep.subr.mxu0 0.0
  %5363 = vmatpush1.msra.mxu0 %v2000
  %5364 = vmatprep.subr.mxu0 0.0
  %5365 = vmatpush1.msra.mxu0 %v2001
  %5366 = vmatprep.subr.mxu0 0.0
  %5367 = vmatpush1.msra.mxu0 %v2002
  %5368 = vmatprep.subr.mxu0 0.0
  %5369 = vmatpush1.msra.mxu0 %v2003
  %5370 = vmatprep.subr.mxu0 0.0
  %5371 = vmatpush1.msra.mxu0 0.0
  %5372 = vmatprep.subr.mxu0 0.0
  %5373 = vmatpush1.msra.mxu0 0.0
  %5374 = vmatprep.subr.mxu0 0.0
  %5375 = vmatpush1.msra.mxu0 0.0
  %5376 = vmatprep.subr.mxu0 0.0
  %5377 = vmatpush1.msra.mxu0 0.0
  %5378 = vmatprep.subr.mxu0 0.0
  %5379 = vmatpush1.msra.mxu0 0.0
  %5380 = vmatprep.subr.mxu0 0.0
  %5381 = vmatpush1.msra.mxu0 0.0
  %5382 = vmatprep.subr.mxu0 0.0
  %5383 = vmatpush1.msra.mxu0 0.0
  %5384 = vmatprep.subr.mxu0 0.0
  %5385 = vmatpush1.msra.mxu0 0.0
  %5386 = vmatprep.subr.mxu0 0.0
  %5387 = vmatpush1.msra.mxu0 0.0
  %5388 = vmatprep.subr.mxu0 0.0
  %5389 = vmatpush1.msra.mxu0 0.0
  %5390 = vmatprep.subr.mxu0 0.0
  %5391 = vmatpush1.msra.mxu0 0.0
  %5392 = vmatprep.subr.mxu0 0.0
  %5393 = vmatpush1.msra.mxu0 0.0
  %5394 = vmatprep.subr.mxu0 0.0
  %5395 = vmatpush1.msra.mxu0 0.0
  %5396 = vmatprep.subr.mxu0 0.0
  %5397 = vmatpush1.msra.mxu0 0.0
  %5398 = vmatprep.subr.mxu0 0.0
  %5399 = vmatpush1.msra.mxu0 0.0
  %5400 = vmatprep.subr.mxu0 0.0
  %5401 = vmatpush1.msra.mxu0 0.0
  %5402 = vmatprep.subr.mxu0 0.0
  %5403 = vmatpush1.msra.mxu0 0.0
  %5404 = vmatprep.subr.mxu0 0.0
  %5405 = vmatpush1.msra.mxu0 0.0
  %5406 = vmatprep.subr.mxu0 0.0
  %5407 = vmatpush1.msra.mxu0 0.0
  %5408 = vmatprep.subr.mxu0 0.0
  %5409 = vmatpush1.msra.mxu0 0.0
  %5410 = vmatprep.subr.mxu0 0.0
  %5411 = vmatpush1.msra.mxu0 0.0
  %5412 = vmatprep.subr.mxu0 0.0
  %5413 = vmatpush1.msra.mxu0 0.0
  %5414 = vmatprep.subr.mxu0 0.0
  %5415 = vmatpush1.msra.mxu0 0.0
  %5416 = vmatprep.subr.mxu0 0.0
  %5417 = vmatpush1.msra.mxu0 0.0
  %5418 = vmatprep.subr.mxu0 0.0
  %5419 = vmatpush1.msra.mxu0 0.0
  %5420 = vmatprep.subr.mxu0 0.0
  %5421 = vmatpush1.msra.mxu0 0.0
  %5422 = vmatprep.subr.mxu0 0.0
  %5423 = vmatpush1.msra.mxu0 0.0
  %5424 = vmatprep.subr.mxu0 0.0
  %5425 = vmatpush1.msra.mxu0 0.0
  %5426 = vmatprep.mubr.f32.mxu0 0.0
  %5427 = vmatmul.mubr.f32.gmra.mrb[0].mxu0 %v5358
  %v5428 = vpop.f32.mrb[0].mxu0
  %v5429 = vadd.f32 0.0, %v5428
  %v5430 = vpop.f32.mrb[0].mxu0
  %5431 = vmatprep.mubr.f32.mxu0 0.0
  %5432 = vmatmul.mubr.f32.gmra.mrb[0].mxu0 %v5360
  %v5433 = vpop.f32.mrb[0].mxu0
  %v5434 = vadd.f32 0.0, %v5433
  %v5435 = vpop.f32.mrb[0].mxu0
  %5436 = vdwg.mxu0
  %v5437 = vadd.f32 %v5350, %v5429
  %v5438 = vadd.f32 %v5351, %v5434
  %v5439 = vxor.u32 %v5437, 2147483648
  %v5440 = vxor.u32 %v5438, 2147483648
  %v5441 = vmul.f32 %v5439, 1.442695
  %v5442 = vpow.pop %v5441
  %v5443 = vmul.f32 %v5440, 1.442695
  %v5444 = vpow.pop %v5443
  %v5445 = vadd.f32 %v5442, 1.0
  %v5446 = vadd.f32 %v5444, 1.0
  %v5447 = vrcp.pop %v5445
  %v5448 = vmul.f32 1.0, %v5447
  %v5449 = vrcp.pop %v5446
  %v5450 = vmul.f32 1.0, %v5449
  %v5451 = vtanh.pop %v5437
  %v5452 = vtanh.pop %v5438
  %v5453 = vmul.f32 %v5448, %v5342
  %v5454 = vmul.f32 %v5450, %v5343
  %5457 = vrot.lane.b32.xlu0 %v5451, 64
  %v5458 = vpop.permute.xlu0 %5457
  %5459 = vrot.lane.b32.xlu0 %v5452, 64
  %v5460 = vpop.permute.xlu0 %5459
  %v5463 = vmul.f32 %v5448, %v5458
  %v5464 = vmul.f32 %v5450, %v5460
  %5467 = vrot.lane.b32.xlu0 %v5463, 32
  %v5468 = vpop.permute.xlu0 %5467
  %5469 = vrot.lane.b32.xlu0 %v5464, 32
  %v5470 = vpop.permute.xlu0 %5469
  %v5473 = vadd.f32 %v5453, %v5468
  %v5474 = vadd.f32 %v5454, %v5470
  %v5475 = vtanh.pop %v5473
  %v5476 = vtanh.pop %v5474
  %5479 = vrot.lane.b32.xlu0 %v5475, 64
  %v5480 = vpop.permute.xlu0 %5479
  %5481 = vrot.lane.b32.xlu0 %v5476, 64
  %v5482 = vpop.permute.xlu0 %5481
  %v5485 = vmul.f32 %v5448, %v5480
  %v5486 = vmul.f32 %v5450, %v5482
  %5489 = vrot.lane.b32.xlu0 %v5485, 32
  %v5490 = vpop.permute.xlu0 %5489
  %5491 = vrot.lane.b32.xlu0 %v5486, 32
  %v5492 = vpop.permute.xlu0 %5491
  %5497 = vrot.lane.b32.xlu0 %v5344, 64
  %v5498 = vpop.permute.xlu0 %5497
  %5499 = vrot.lane.b32.xlu0 %v5345, 64
  %v5500 = vpop.permute.xlu0 %5499
  %v5503 = vsel %vm165, %v5490, %v5498
  %v5504 = vsel %vm165, %v5492, %v5500
  %v5506 = vsel %vm87, %v5503, 0
  %v5509 = vsel %vm87, %v5504, 0
  %5511 = vmatprep.subr.mxu0 0.0
  %5512 = vmatpush1.msra.mxu0 %v2004
  %5513 = vmatprep.subr.mxu0 0.0
  %5514 = vmatpush1.msra.mxu0 %v2005
  %5515 = vmatprep.subr.mxu0 0.0
  %5516 = vmatpush1.msra.mxu0 %v2006
  %5517 = vmatprep.subr.mxu0 0.0
  %5518 = vmatpush1.msra.mxu0 %v2007
  %5519 = vmatprep.subr.mxu0 0.0
  %5520 = vmatpush1.msra.mxu0 %v2008
  %5521 = vmatprep.subr.mxu0 0.0
  %5522 = vmatpush1.msra.mxu0 %v2009
  %5523 = vmatprep.subr.mxu0 0.0
  %5524 = vmatpush1.msra.mxu0 %v2010
  %5525 = vmatprep.subr.mxu0 0.0
  %5526 = vmatpush1.msra.mxu0 %v2011
  %5527 = vmatprep.subr.mxu0 0.0
  %5528 = vmatpush1.msra.mxu0 0.0
  %5529 = vmatprep.subr.mxu0 0.0
  %5530 = vmatpush1.msra.mxu0 0.0
  %5531 = vmatprep.subr.mxu0 0.0
  %5532 = vmatpush1.msra.mxu0 0.0
  %5533 = vmatprep.subr.mxu0 0.0
  %5534 = vmatpush1.msra.mxu0 0.0
  %5535 = vmatprep.subr.mxu0 0.0
  %5536 = vmatpush1.msra.mxu0 0.0
  %5537 = vmatprep.subr.mxu0 0.0
  %5538 = vmatpush1.msra.mxu0 0.0
  %5539 = vmatprep.subr.mxu0 0.0
  %5540 = vmatpush1.msra.mxu0 0.0
  %5541 = vmatprep.subr.mxu0 0.0
  %5542 = vmatpush1.msra.mxu0 0.0
  %5543 = vmatprep.subr.mxu0 0.0
  %5544 = vmatpush1.msra.mxu0 0.0
  %5545 = vmatprep.subr.mxu0 0.0
  %5546 = vmatpush1.msra.mxu0 0.0
  %5547 = vmatprep.subr.mxu0 0.0
  %5548 = vmatpush1.msra.mxu0 0.0
  %5549 = vmatprep.subr.mxu0 0.0
  %5550 = vmatpush1.msra.mxu0 0.0
  %5551 = vmatprep.subr.mxu0 0.0
  %5552 = vmatpush1.msra.mxu0 0.0
  %5553 = vmatprep.subr.mxu0 0.0
  %5554 = vmatpush1.msra.mxu0 0.0
  %5555 = vmatprep.subr.mxu0 0.0
  %5556 = vmatpush1.msra.mxu0 0.0
  %5557 = vmatprep.subr.mxu0 0.0
  %5558 = vmatpush1.msra.mxu0 0.0
  %5559 = vmatprep.subr.mxu0 0.0
  %5560 = vmatpush1.msra.mxu0 0.0
  %5561 = vmatprep.subr.mxu0 0.0
  %5562 = vmatpush1.msra.mxu0 0.0
  %5563 = vmatprep.subr.mxu0 0.0
  %5564 = vmatpush1.msra.mxu0 0.0
  %5565 = vmatprep.subr.mxu0 0.0
  %5566 = vmatpush1.msra.mxu0 0.0
  %5567 = vmatprep.subr.mxu0 0.0
  %5568 = vmatpush1.msra.mxu0 0.0
  %5569 = vmatprep.subr.mxu0 0.0
  %5570 = vmatpush1.msra.mxu0 0.0
  %5571 = vmatprep.subr.mxu0 0.0
  %5572 = vmatpush1.msra.mxu0 0.0
  %5573 = vmatprep.subr.mxu0 0.0
  %5574 = vmatpush1.msra.mxu0 0.0
  %5575 = vmatprep.mubr.f32.mxu0 0.0
  %5576 = vmatmul.mubr.f32.gmra.mrb[0].mxu0 %v5506
  %v5577 = vpop.f32.mrb[0].mxu0
  %v5578 = vadd.f32 %v2159, %v5577
  %v5579 = vpop.f32.mrb[0].mxu0
  %5580 = vmatprep.mubr.f32.mxu0 0.0
  %5581 = vmatmul.mubr.f32.gmra.mrb[0].mxu0 %v5509
  %v5582 = vpop.f32.mrb[0].mxu0
  %v5583 = vadd.f32 %v2159, %v5582
  %v5584 = vpop.f32.mrb[0].mxu0
  %5585 = vdwg.mxu0
  %v5586 = vxor.u32 %v5578, 2147483648
  %v5587 = vxor.u32 %v5583, 2147483648
  %v5588 = vmul.f32 %v5586, 1.442695
  %v5589 = vpow.pop %v5588
  %v5590 = vmul.f32 %v5587, 1.442695
  %v5591 = vpow.pop %v5590
  %v5592 = vadd.f32 %v5589, 1.0
  %v5593 = vadd.f32 %v5591, 1.0
  %v5594 = vrcp.pop %v5592
  %v5595 = vmul.f32 1.0, %v5594
  %v5596 = vrcp.pop %v5593
  %v5597 = vmul.f32 1.0, %v5596
  %v5598 = vtanh.pop %v5578
  %v5599 = vtanh.pop %v5583
  %v5600 = vmul.f32 %v5595, %v5346
  %v5601 = vmul.f32 %v5597, %v5347
  %5604 = vrot.lane.b32.xlu0 %v5598, 64
  %v5605 = vpop.permute.xlu0 %5604
  %5606 = vrot.lane.b32.xlu0 %v5599, 64
  %v5607 = vpop.permute.xlu0 %5606
  %v5610 = vmul.f32 %v5595, %v5605
  %v5611 = vmul.f32 %v5597, %v5607
  %5614 = vrot.lane.b32.xlu0 %v5610, 32
  %v5615 = vpop.permute.xlu0 %5614
  %5616 = vrot.lane.b32.xlu0 %v5611, 32
  %v5617 = vpop.permute.xlu0 %5616
  %v5620 = vadd.f32 %v5600, %v5615
  %v5621 = vadd.f32 %v5601, %v5617
  %v5622 = vtanh.pop %v5620
  %v5623 = vtanh.pop %v5621
  %5626 = vrot.lane.b32.xlu0 %v5622, 64
  %v5627 = vpop.permute.xlu0 %5626
  %5628 = vrot.lane.b32.xlu0 %v5623, 64
  %v5629 = vpop.permute.xlu0 %5628
  %v5632 = vmul.f32 %v5595, %v5627
  %v5633 = vmul.f32 %v5597, %v5629
  %v5634 = vsel %vm5348, 1, 0
  %v5635 = vsel %vm5349, 1, 0
  %5636 = vset.pattern.permute.xlu0 0
  %5637 = vperm.xlu0 %5636, %v5634
  %v5638 = vpop.permute.xlu0 %5637
  %5639 = vset.pattern.permute.xlu0 0
  %5640 = vperm.xlu0 %5639, %v5635
  %v5641 = vpop.permute.xlu0 %5640
  %vm5642 = vcmp.eq.s32.totalorder %v5638, 1
  %vm5643 = vcmp.eq.s32.totalorder %v5641, 1
  %v5644 = vsel %vm5642, %v5485, %v5340
  %v5645 = vsel %vm5643, %v5486, %v5341
  %v5646 = vsel %vm5642, %v5473, %v5342
  %v5647 = vsel %vm5643, %v5474, %v5343
  %v5648 = vsel %vm5642, %v5632, %v5344
  %v5649 = vsel %vm5643, %v5633, %v5345
  %v5650 = vsel %vm5642, %v5620, %v5346
  %v5651 = vsel %vm5643, %v5621, %v5347
  %vm5652 = vcmp.gt.s32.totalorder %v1998, 12
  %vm5653 = vcmp.gt.s32.totalorder %v1999, 12
  %v5654 = vld [vmem:[%s1384] sm:$0xff]
  %v5655 = vld [vmem:[%s1384 + $0x8] sm:$0xff]
  %5658 = vrot.lane.b32.xlu0 %v5644, 32
  %v5659 = vpop.permute.xlu0 %5658
  %5660 = vrot.lane.b32.xlu0 %v5645, 32
  %v5661 = vpop.permute.xlu0 %5660
  %v5662 = vsel %vm165, %v5659, 0
  %v5664 = vsel %vm165, %v5661, 0
  %5666 = vmatprep.subr.mxu0 0.0
  %5667 = vmatpush1.msra.mxu0 %v2000
  %5668 = vmatprep.subr.mxu0 0.0
  %5669 = vmatpush1.msra.mxu0 %v2001
  %5670 = vmatprep.subr.mxu0 0.0
  %5671 = vmatpush1.msra.mxu0 %v2002
  %5672 = vmatprep.subr.mxu0 0.0
  %5673 = vmatpush1.msra.mxu0 %v2003
  %5674 = vmatprep.subr.mxu0 0.0
  %5675 = vmatpush1.msra.mxu0 0.0
  %5676 = vmatprep.subr.mxu0 0.0
  %5677 = vmatpush1.msra.mxu0 0.0
  %5678 = vmatprep.subr.mxu0 0.0
  %5679 = vmatpush1.msra.mxu0 0.0
  %5680 = vmatprep.subr.mxu0 0.0
  %5681 = vmatpush1.msra.mxu0 0.0
  %5682 = vmatprep.subr.mxu0 0.0
  %5683 = vmatpush1.msra.mxu0 0.0
  %5684 = vmatprep.subr.mxu0 0.0
  %5685 = vmatpush1.msra.mxu0 0.0
  %5686 = vmatprep.subr.mxu0 0.0
  %5687 = vmatpush1.msra.mxu0 0.0
  %5688 = vmatprep.subr.mxu0 0.0
  %5689 = vmatpush1.msra.mxu0 0.0
  %5690 = vmatprep.subr.mxu0 0.0
  %5691 = vmatpush1.msra.mxu0 0.0
  %5692 = vmatprep.subr.mxu0 0.0
  %5693 = vmatpush1.msra.mxu0 0.0
  %5694 = vmatprep.subr.mxu0 0.0
  %5695 = vmatpush1.msra.mxu0 0.0
  %5696 = vmatprep.subr.mxu0 0.0
  %5697 = vmatpush1.msra.mxu0 0.0
  %5698 = vmatprep.subr.mxu0 0.0
  %5699 = vmatpush1.msra.mxu0 0.0
  %5700 = vmatprep.subr.mxu0 0.0
  %5701 = vmatpush1.msra.mxu0 0.0
  %5702 = vmatprep.subr.mxu0 0.0
  %5703 = vmatpush1.msra.mxu0 0.0
  %5704 = vmatprep.subr.mxu0 0.0
  %5705 = vmatpush1.msra.mxu0 0.0
  %5706 = vmatprep.subr.mxu0 0.0
  %5707 = vmatpush1.msra.mxu0 0.0
  %5708 = vmatprep.subr.mxu0 0.0
  %5709 = vmatpush1.msra.mxu0 0.0
  %5710 = vmatprep.subr.mxu0 0.0
  %5711 = vmatpush1.msra.mxu0 0.0
  %5712 = vmatprep.subr.mxu0 0.0
  %5713 = vmatpush1.msra.mxu0 0.0
  %5714 = vmatprep.subr.mxu0 0.0
  %5715 = vmatpush1.msra.mxu0 0.0
  %5716 = vmatprep.subr.mxu0 0.0
  %5717 = vmatpush1.msra.mxu0 0.0
  %5718 = vmatprep.subr.mxu0 0.0
  %5719 = vmatpush1.msra.mxu0 0.0
  %5720 = vmatprep.subr.mxu0 0.0
  %5721 = vmatpush1.msra.mxu0 0.0
  %5722 = vmatprep.subr.mxu0 0.0
  %5723 = vmatpush1.msra.mxu0 0.0
  %5724 = vmatprep.subr.mxu0 0.0
  %5725 = vmatpush1.msra.mxu0 0.0
  %5726 = vmatprep.subr.mxu0 0.0
  %5727 = vmatpush1.msra.mxu0 0.0
  %5728 = vmatprep.subr.mxu0 0.0
  %5729 = vmatpush1.msra.mxu0 0.0
  %5730 = vmatprep.mubr.f32.mxu0 0.0
  %5731 = vmatmul.mubr.f32.gmra.mrb[0].mxu0 %v5662
  %v5732 = vpop.f32.mrb[0].mxu0
  %v5733 = vadd.f32 0.0, %v5732
  %v5734 = vpop.f32.mrb[0].mxu0
  %5735 = vmatprep.mubr.f32.mxu0 0.0
  %5736 = vmatmul.mubr.f32.gmra.mrb[0].mxu0 %v5664
  %v5737 = vpop.f32.mrb[0].mxu0
  %v5738 = vadd.f32 0.0, %v5737
  %v5739 = vpop.f32.mrb[0].mxu0
  %5740 = vdwg.mxu0
  %v5741 = vadd.f32 %v5654, %v5733
  %v5742 = vadd.f32 %v5655, %v5738
  %v5743 = vxor.u32 %v5741, 2147483648
  %v5744 = vxor.u32 %v5742, 2147483648
  %v5745 = vmul.f32 %v5743, 1.442695
  %v5746 = vpow.pop %v5745
  %v5747 = vmul.f32 %v5744, 1.442695
  %v5748 = vpow.pop %v5747
  %v5749 = vadd.f32 %v5746, 1.0
  %v5750 = vadd.f32 %v5748, 1.0
  %v5751 = vrcp.pop %v5749
  %v5752 = vmul.f32 1.0, %v5751
  %v5753 = vrcp.pop %v5750
  %v5754 = vmul.f32 1.0, %v5753
  %v5755 = vtanh.pop %v5741
  %v5756 = vtanh.pop %v5742
  %v5757 = vmul.f32 %v5752, %v5646
  %v5758 = vmul.f32 %v5754, %v5647
  %5761 = vrot.lane.b32.xlu0 %v5755, 64
  %v5762 = vpop.permute.xlu0 %5761
  %5763 = vrot.lane.b32.xlu0 %v5756, 64
  %v5764 = vpop.permute.xlu0 %5763
  %v5767 = vmul.f32 %v5752, %v5762
  %v5768 = vmul.f32 %v5754, %v5764
  %5771 = vrot.lane.b32.xlu0 %v5767, 32
  %v5772 = vpop.permute.xlu0 %5771
  %5773 = vrot.lane.b32.xlu0 %v5768, 32
  %v5774 = vpop.permute.xlu0 %5773
  %v5777 = vadd.f32 %v5757, %v5772
  %v5778 = vadd.f32 %v5758, %v5774
  %v5779 = vtanh.pop %v5777
  %v5780 = vtanh.pop %v5778
  %5783 = vrot.lane.b32.xlu0 %v5779, 64
  %v5784 = vpop.permute.xlu0 %5783
  %5785 = vrot.lane.b32.xlu0 %v5780, 64
  %v5786 = vpop.permute.xlu0 %5785
  %v5789 = vmul.f32 %v5752, %v5784
  %v5790 = vmul.f32 %v5754, %v5786
  %5793 = vrot.lane.b32.xlu0 %v5789, 32
  %v5794 = vpop.permute.xlu0 %5793
  %5795 = vrot.lane.b32.xlu0 %v5790, 32
  %v5796 = vpop.permute.xlu0 %5795
  %5801 = vrot.lane.b32.xlu0 %v5648, 64
  %v5802 = vpop.permute.xlu0 %5801
  %5803 = vrot.lane.b32.xlu0 %v5649, 64
  %v5804 = vpop.permute.xlu0 %5803
  %v5807 = vsel %vm165, %v5794, %v5802
  %v5808 = vsel %vm165, %v5796, %v5804
  %v5810 = vsel %vm87, %v5807, 0
  %v5813 = vsel %vm87, %v5808, 0
  %5815 = vmatprep.subr.mxu0 0.0
  %5816 = vmatpush1.msra.mxu0 %v2004
  %5817 = vmatprep.subr.mxu0 0.0
  %5818 = vmatpush1.msra.mxu0 %v2005
  %5819 = vmatprep.subr.mxu0 0.0
  %5820 = vmatpush1.msra.mxu0 %v2006
  %5821 = vmatprep.subr.mxu0 0.0
  %5822 = vmatpush1.msra.mxu0 %v2007
  %5823 = vmatprep.subr.mxu0 0.0
  %5824 = vmatpush1.msra.mxu0 %v2008
  %5825 = vmatprep.subr.mxu0 0.0
  %5826 = vmatpush1.msra.mxu0 %v2009
  %5827 = vmatprep.subr.mxu0 0.0
  %5828 = vmatpush1.msra.mxu0 %v2010
  %5829 = vmatprep.subr.mxu0 0.0
  %5830 = vmatpush1.msra.mxu0 %v2011
  %5831 = vmatprep.subr.mxu0 0.0
  %5832 = vmatpush1.msra.mxu0 0.0
  %5833 = vmatprep.subr.mxu0 0.0
  %5834 = vmatpush1.msra.mxu0 0.0
  %5835 = vmatprep.subr.mxu0 0.0
  %5836 = vmatpush1.msra.mxu0 0.0
  %5837 = vmatprep.subr.mxu0 0.0
  %5838 = vmatpush1.msra.mxu0 0.0
  %5839 = vmatprep.subr.mxu0 0.0
  %5840 = vmatpush1.msra.mxu0 0.0
  %5841 = vmatprep.subr.mxu0 0.0
  %5842 = vmatpush1.msra.mxu0 0.0
  %5843 = vmatprep.subr.mxu0 0.0
  %5844 = vmatpush1.msra.mxu0 0.0
  %5845 = vmatprep.subr.mxu0 0.0
  %5846 = vmatpush1.msra.mxu0 0.0
  %5847 = vmatprep.subr.mxu0 0.0
  %5848 = vmatpush1.msra.mxu0 0.0
  %5849 = vmatprep.subr.mxu0 0.0
  %5850 = vmatpush1.msra.mxu0 0.0
  %5851 = vmatprep.subr.mxu0 0.0
  %5852 = vmatpush1.msra.mxu0 0.0
  %5853 = vmatprep.subr.mxu0 0.0
  %5854 = vmatpush1.msra.mxu0 0.0
  %5855 = vmatprep.subr.mxu0 0.0
  %5856 = vmatpush1.msra.mxu0 0.0
  %5857 = vmatprep.subr.mxu0 0.0
  %5858 = vmatpush1.msra.mxu0 0.0
  %5859 = vmatprep.subr.mxu0 0.0
  %5860 = vmatpush1.msra.mxu0 0.0
  %5861 = vmatprep.subr.mxu0 0.0
  %5862 = vmatpush1.msra.mxu0 0.0
  %5863 = vmatprep.subr.mxu0 0.0
  %5864 = vmatpush1.msra.mxu0 0.0
  %5865 = vmatprep.subr.mxu0 0.0
  %5866 = vmatpush1.msra.mxu0 0.0
  %5867 = vmatprep.subr.mxu0 0.0
  %5868 = vmatpush1.msra.mxu0 0.0
  %5869 = vmatprep.subr.mxu0 0.0
  %5870 = vmatpush1.msra.mxu0 0.0
  %5871 = vmatprep.subr.mxu0 0.0
  %5872 = vmatpush1.msra.mxu0 0.0
  %5873 = vmatprep.subr.mxu0 0.0
  %5874 = vmatpush1.msra.mxu0 0.0
  %5875 = vmatprep.subr.mxu0 0.0
  %5876 = vmatpush1.msra.mxu0 0.0
  %5877 = vmatprep.subr.mxu0 0.0
  %5878 = vmatpush1.msra.mxu0 0.0
  %5879 = vmatprep.mubr.f32.mxu0 0.0
  %5880 = vmatmul.mubr.f32.gmra.mrb[0].mxu0 %v5810
  %v5881 = vpop.f32.mrb[0].mxu0
  %v5882 = vadd.f32 %v2159, %v5881
  %v5883 = vpop.f32.mrb[0].mxu0
  %5884 = vmatprep.mubr.f32.mxu0 0.0
  %5885 = vmatmul.mubr.f32.gmra.mrb[0].mxu0 %v5813
  %v5886 = vpop.f32.mrb[0].mxu0
  %v5887 = vadd.f32 %v2159, %v5886
  %v5888 = vpop.f32.mrb[0].mxu0
  %5889 = vdwg.mxu0
  %v5890 = vxor.u32 %v5882, 2147483648
  %v5891 = vxor.u32 %v5887, 2147483648
  %v5892 = vmul.f32 %v5890, 1.442695
  %v5893 = vpow.pop %v5892
  %v5894 = vmul.f32 %v5891, 1.442695
  %v5895 = vpow.pop %v5894
  %v5896 = vadd.f32 %v5893, 1.0
  %v5897 = vadd.f32 %v5895, 1.0
  %v5898 = vrcp.pop %v5896
  %v5899 = vmul.f32 1.0, %v5898
  %v5900 = vrcp.pop %v5897
  %v5901 = vmul.f32 1.0, %v5900
  %v5902 = vtanh.pop %v5882
  %v5903 = vtanh.pop %v5887
  %v5904 = vmul.f32 %v5899, %v5650
  %v5905 = vmul.f32 %v5901, %v5651
  %5908 = vrot.lane.b32.xlu0 %v5902, 64
  %v5909 = vpop.permute.xlu0 %5908
  %5910 = vrot.lane.b32.xlu0 %v5903, 64
  %v5911 = vpop.permute.xlu0 %5910
  %v5914 = vmul.f32 %v5899, %v5909
  %v5915 = vmul.f32 %v5901, %v5911
  %5918 = vrot.lane.b32.xlu0 %v5914, 32
  %v5919 = vpop.permute.xlu0 %5918
  %5920 = vrot.lane.b32.xlu0 %v5915, 32
  %v5921 = vpop.permute.xlu0 %5920
  %v5924 = vadd.f32 %v5904, %v5919
  %v5925 = vadd.f32 %v5905, %v5921
  %v5926 = vtanh.pop %v5924
  %v5927 = vtanh.pop %v5925
  %5930 = vrot.lane.b32.xlu0 %v5926, 64
  %v5931 = vpop.permute.xlu0 %5930
  %5932 = vrot.lane.b32.xlu0 %v5927, 64
  %v5933 = vpop.permute.xlu0 %5932
  %v5936 = vmul.f32 %v5899, %v5931
  %v5937 = vmul.f32 %v5901, %v5933
  %v5938 = vsel %vm5652, 1, 0
  %v5939 = vsel %vm5653, 1, 0
  %5940 = vset.pattern.permute.xlu0 0
  %5941 = vperm.xlu0 %5940, %v5938
  %v5942 = vpop.permute.xlu0 %5941
  %5943 = vset.pattern.permute.xlu0 0
  %5944 = vperm.xlu0 %5943, %v5939
  %v5945 = vpop.permute.xlu0 %5944
  %vm5946 = vcmp.eq.s32.totalorder %v5942, 1
  %vm5947 = vcmp.eq.s32.totalorder %v5945, 1
  %v5948 = vsel %vm5946, %v5936, %v5648
  %v5949 = vsel %vm5947, %v5937, %v5649
  %v5950 = vld [vmem:[%s4] sm:$0xff]
  %v5951 = vld [vmem:[%s4 + $0x8] sm:$0xff]
  %v5952 = vld [vmem:[%s14] sm:$0xff]
  %v5953 = vld [vmem:[%s14 + $0x8] sm:$0xff]
  %v5954 = vld [vmem:[%s14 + $0x10] sm:$0xff]
  %v5955 = vld [vmem:[%s14 + $0x18] sm:$0xff]
  %v5956 = vld [vmem:[%s16] sm:$0xff]
  %v5957 = vld [vmem:[%s16 + $0x8] sm:$0xff]
  %v5958 = vld [vmem:[%s16 + $0x10] sm:$0xff]
  %v5959 = vld [vmem:[%s16 + $0x18] sm:$0xff]
  %v5960 = vld [vmem:[%s16 + $0x20] sm:$0xff]
  %v5961 = vld [vmem:[%s16 + $0x28] sm:$0xff]
  %v5962 = vld [vmem:[%s16 + $0x30] sm:$0xff]
  %v5963 = vld [vmem:[%s16 + $0x38] sm:$0xff]
  %v5964 = vld [vmem:[%s17] sm:$0x1]
  %vm5965 = vcmp.gt.s32.totalorder %v5950, 0
  %vm5966 = vcmp.gt.s32.totalorder %v5951, 0
  %v5967 = vld [vmem:[#allocation3] sm:$0xff]
  %v5968 = vld [vmem:[#allocation3 + $0x8] sm:$0xff]
  %5969 = vmatprep.subr.mxu0 0.0
  %5970 = vmatpush1.msra.mxu0 %v5952
  %5971 = vmatprep.subr.mxu0 0.0
  %5972 = vmatpush1.msra.mxu0 %v5953
  %5973 = vmatprep.subr.mxu0 0.0
  %5974 = vmatpush1.msra.mxu0 %v5954
  %5975 = vmatprep.subr.mxu0 0.0
  %5976 = vmatpush1.msra.mxu0 %v5955
  %5977 = vmatprep.subr.mxu0 0.0
  %5978 = vmatpush1.msra.mxu0 0.0
  %5979 = vmatprep.subr.mxu0 0.0
  %5980 = vmatpush1.msra.mxu0 0.0
  %5981 = vmatprep.subr.mxu0 0.0
  %5982 = vmatpush1.msra.mxu0 0.0
  %5983 = vmatprep.subr.mxu0 0.0
  %5984 = vmatpush1.msra.mxu0 0.0
  %5985 = vmatprep.subr.mxu0 0.0
  %5986 = vmatpush1.msra.mxu0 0.0
  %5987 = vmatprep.subr.mxu0 0.0
  %5988 = vmatpush1.msra.mxu0 0.0
  %5989 = vmatprep.subr.mxu0 0.0
  %5990 = vmatpush1.msra.mxu0 0.0
  %5991 = vmatprep.subr.mxu0 0.0
  %5992 = vmatpush1.msra.mxu0 0.0
  %5993 = vmatprep.subr.mxu0 0.0
  %5994 = vmatpush1.msra.mxu0 0.0
  %5995 = vmatprep.subr.mxu0 0.0
  %5996 = vmatpush1.msra.mxu0 0.0
  %5997 = vmatprep.subr.mxu0 0.0
  %5998 = vmatpush1.msra.mxu0 0.0
  %5999 = vmatprep.subr.mxu0 0.0
  %6000 = vmatpush1.msra.mxu0 0.0
  %6001 = vmatprep.subr.mxu0 0.0
  %6002 = vmatpush1.msra.mxu0 0.0
  %6003 = vmatprep.subr.mxu0 0.0
  %6004 = vmatpush1.msra.mxu0 0.0
  %6005 = vmatprep.subr.mxu0 0.0
  %6006 = vmatpush1.msra.mxu0 0.0
  %6007 = vmatprep.subr.mxu0 0.0
  %6008 = vmatpush1.msra.mxu0 0.0
  %6009 = vmatprep.subr.mxu0 0.0
  %6010 = vmatpush1.msra.mxu0 0.0
  %6011 = vmatprep.subr.mxu0 0.0
  %6012 = vmatpush1.msra.mxu0 0.0
  %6013 = vmatprep.subr.mxu0 0.0
  %6014 = vmatpush1.msra.mxu0 0.0
  %6015 = vmatprep.subr.mxu0 0.0
  %6016 = vmatpush1.msra.mxu0 0.0
  %6017 = vmatprep.subr.mxu0 0.0
  %6018 = vmatpush1.msra.mxu0 0.0
  %6019 = vmatprep.subr.mxu0 0.0
  %6020 = vmatpush1.msra.mxu0 0.0
  %6021 = vmatprep.subr.mxu0 0.0
  %6022 = vmatpush1.msra.mxu0 0.0
  %6023 = vmatprep.subr.mxu0 0.0
  %6024 = vmatpush1.msra.mxu0 0.0
  %6025 = vmatprep.subr.mxu0 0.0
  %6026 = vmatpush1.msra.mxu0 0.0
  %6027 = vmatprep.subr.mxu0 0.0
  %6028 = vmatpush1.msra.mxu0 0.0
  %6029 = vmatprep.subr.mxu0 0.0
  %6030 = vmatpush1.msra.mxu0 0.0
  %6031 = vmatprep.subr.mxu0 0.0
  %6032 = vmatpush1.msra.mxu0 0.0
  %6033 = vmatprep.mubr.f32.mxu0 0.0
  %6034 = vmatmul.mubr.f32.gmra.mrb[0].mxu0 %v2018
  %v6035 = vpop.f32.mrb[0].mxu0
  %v6036 = vadd.f32 0.0, %v6035
  %v6037 = vpop.f32.mrb[0].mxu0
  %6038 = vmatprep.mubr.f32.mxu0 0.0
  %6039 = vmatmul.mubr.f32.gmra.mrb[0].mxu0 %v2018
  %v6040 = vpop.f32.mrb[0].mxu0
  %v6041 = vadd.f32 0.0, %v6040
  %v6042 = vpop.f32.mrb[0].mxu0
  %6043 = vdwg.mxu0
  %v6044 = vadd.f32 %v5967, %v6036
  %v6045 = vadd.f32 %v5968, %v6041
  %v6046 = vxor.u32 %v6044, 2147483648
  %v6047 = vxor.u32 %v6045, 2147483648
  %v6048 = vmul.f32 %v6046, 1.442695
  %v6049 = vpow.pop %v6048
  %v6050 = vmul.f32 %v6047, 1.442695
  %v6051 = vpow.pop %v6050
  %v6052 = vadd.f32 %v6049, 1.0
  %v6053 = vadd.f32 %v6051, 1.0
  %v6054 = vrcp.pop %v6052
  %v6055 = vmul.f32 1.0, %v6054
  %v6056 = vrcp.pop %v6053
  %v6057 = vmul.f32 1.0, %v6056
  %v6058 = vtanh.pop %v6044
  %v6059 = vtanh.pop %v6045
  %v6060 = vmul.f32 %v6055, 0.0
  %v6061 = vmul.f32 %v6057, 0.0
  %6064 = vrot.lane.b32.xlu0 %v6058, 64
  %v6065 = vpop.permute.xlu0 %6064
  %6066 = vrot.lane.b32.xlu0 %v6059, 64
  %v6067 = vpop.permute.xlu0 %6066
  %v6070 = vmul.f32 %v6055, %v6065
  %v6071 = vmul.f32 %v6057, %v6067
  %6074 = vrot.lane.b32.xlu0 %v6070, 32
  %v6075 = vpop.permute.xlu0 %6074
  %6076 = vrot.lane.b32.xlu0 %v6071, 32
  %v6077 = vpop.permute.xlu0 %6076
  %v6080 = vadd.f32 %v6060, %v6075
  %v6081 = vadd.f32 %v6061, %v6077
  %v6082 = vtanh.pop %v6080
  %v6083 = vtanh.pop %v6081
  %6086 = vrot.lane.b32.xlu0 %v6082, 64
  %v6087 = vpop.permute.xlu0 %6086
  %6088 = vrot.lane.b32.xlu0 %v6083, 64
  %v6089 = vpop.permute.xlu0 %6088
  %v6092 = vmul.f32 %v6055, %v6087
  %v6093 = vmul.f32 %v6057, %v6089
  %6096 = vrot.lane.b32.xlu0 %v6092, 32
  %v6097 = vpop.permute.xlu0 %6096
  %6098 = vrot.lane.b32.xlu0 %v6093, 32
  %v6099 = vpop.permute.xlu0 %6098
  %v6102 = vsel %vm165, %v6097, 0.0
  %v6103 = vsel %vm165, %v6099, 0.0
  %v6105 = vlaneseq
  %v6106 = vshrl.u32 %v6105, 7
  %v6107 = vsub.s32 0, %v6106
  %v6108 = vrot.slane %v5964, %v6107
  %v6111 = vsel %vm87, %v6102, 0
  %v6114 = vsel %vm87, %v6103, 0
  %6116 = vmatprep.subr.mxu0 0.0
  %6117 = vmatpush1.msra.mxu0 %v5956
  %6118 = vmatprep.subr.mxu0 0.0
  %6119 = vmatpush1.msra.mxu0 %v5957
  %6120 = vmatprep.subr.mxu0 0.0
  %6121 = vmatpush1.msra.mxu0 %v5958
  %6122 = vmatprep.subr.mxu0 0.0
  %6123 = vmatpush1.msra.mxu0 %v5959
  %6124 = vmatprep.subr.mxu0 0.0
  %6125 = vmatpush1.msra.mxu0 %v5960
  %6126 = vmatprep.subr.mxu0 0.0
  %6127 = vmatpush1.msra.mxu0 %v5961
  %6128 = vmatprep.subr.mxu0 0.0
  %6129 = vmatpush1.msra.mxu0 %v5962
  %6130 = vmatprep.subr.mxu0 0.0
  %6131 = vmatpush1.msra.mxu0 %v5963
  %6132 = vmatprep.subr.mxu0 0.0
  %6133 = vmatpush1.msra.mxu0 0.0
  %6134 = vmatprep.subr.mxu0 0.0
  %6135 = vmatpush1.msra.mxu0 0.0
  %6136 = vmatprep.subr.mxu0 0.0
  %6137 = vmatpush1.msra.mxu0 0.0
  %6138 = vmatprep.subr.mxu0 0.0
  %6139 = vmatpush1.msra.mxu0 0.0
  %6140 = vmatprep.subr.mxu0 0.0
  %6141 = vmatpush1.msra.mxu0 0.0
  %6142 = vmatprep.subr.mxu0 0.0
  %6143 = vmatpush1.msra.mxu0 0.0
  %6144 = vmatprep.subr.mxu0 0.0
  %6145 = vmatpush1.msra.mxu0 0.0
  %6146 = vmatprep.subr.mxu0 0.0
  %6147 = vmatpush1.msra.mxu0 0.0
  %6148 = vmatprep.subr.mxu0 0.0
  %6149 = vmatpush1.msra.mxu0 0.0
  %6150 = vmatprep.subr.mxu0 0.0
  %6151 = vmatpush1.msra.mxu0 0.0
  %6152 = vmatprep.subr.mxu0 0.0
  %6153 = vmatpush1.msra.mxu0 0.0
  %6154 = vmatprep.subr.mxu0 0.0
  %6155 = vmatpush1.msra.mxu0 0.0
  %6156 = vmatprep.subr.mxu0 0.0
  %6157 = vmatpush1.msra.mxu0 0.0
  %6158 = vmatprep.subr.mxu0 0.0
  %6159 = vmatpush1.msra.mxu0 0.0
  %6160 = vmatprep.subr.mxu0 0.0
  %6161 = vmatpush1.msra.mxu0 0.0
  %6162 = vmatprep.subr.mxu0 0.0
  %6163 = vmatpush1.msra.mxu0 0.0
  %6164 = vmatprep.subr.mxu0 0.0
  %6165 = vmatpush1.msra.mxu0 0.0
  %6166 = vmatprep.subr.mxu0 0.0
  %6167 = vmatpush1.msra.mxu0 0.0
  %6168 = vmatprep.subr.mxu0 0.0
  %6169 = vmatpush1.msra.mxu0 0.0
  %6170 = vmatprep.subr.mxu0 0.0
  %6171 = vmatpush1.msra.mxu0 0.0
  %6172 = vmatprep.subr.mxu0 0.0
  %6173 = vmatpush1.msra.mxu0 0.0
  %6174 = vmatprep.subr.mxu0 0.0
  %6175 = vmatpush1.msra.mxu0 0.0
  %6176 = vmatprep.subr.mxu0 0.0
  %6177 = vmatpush1.msra.mxu0 0.0
  %6178 = vmatprep.subr.mxu0 0.0
  %6179 = vmatpush1.msra.mxu0 0.0
  %6180 = vmatprep.mubr.f32.mxu0 0.0
  %6181 = vmatmul.mubr.f32.gmra.mrb[0].mxu0 %v6111
  %v6182 = vpop.f32.mrb[0].mxu0
  %v6183 = vadd.f32 %v6108, %v6182
  %v6184 = vpop.f32.mrb[0].mxu0
  %6185 = vmatprep.mubr.f32.mxu0 0.0
  %6186 = vmatmul.mubr.f32.gmra.mrb[0].mxu0 %v6114
  %v6187 = vpop.f32.mrb[0].mxu0
  %v6188 = vadd.f32 %v6108, %v6187
  %v6189 = vpop.f32.mrb[0].mxu0
  %6190 = vdwg.mxu0
  %v6191 = vxor.u32 %v6183, 2147483648
  %v6192 = vxor.u32 %v6188, 2147483648
  %v6193 = vmul.f32 %v6191, 1.442695
  %v6194 = vpow.pop %v6193
  %v6195 = vmul.f32 %v6192, 1.442695
  %v6196 = vpow.pop %v6195
  %v6197 = vadd.f32 %v6194, 1.0
  %v6198 = vadd.f32 %v6196, 1.0
  %v6199 = vrcp.pop %v6197
  %v6200 = vmul.f32 1.0, %v6199
  %v6201 = vrcp.pop %v6198
  %v6202 = vmul.f32 1.0, %v6201
  %v6203 = vtanh.pop %v6183
  %v6204 = vtanh.pop %v6188
  %v6205 = vmul.f32 %v6200, 0.0
  %v6206 = vmul.f32 %v6202, 0.0
  %6209 = vrot.lane.b32.xlu0 %v6203, 64
  %v6210 = vpop.permute.xlu0 %6209
  %6211 = vrot.lane.b32.xlu0 %v6204, 64
  %v6212 = vpop.permute.xlu0 %6211
  %v6215 = vmul.f32 %v6200, %v6210
  %v6216 = vmul.f32 %v6202, %v6212
  %6219 = vrot.lane.b32.xlu0 %v6215, 32
  %v6220 = vpop.permute.xlu0 %6219
  %6221 = vrot.lane.b32.xlu0 %v6216, 32
  %v6222 = vpop.permute.xlu0 %6221
  %v6225 = vadd.f32 %v6205, %v6220
  %v6226 = vadd.f32 %v6206, %v6222
  %v6227 = vtanh.pop %v6225
  %v6228 = vtanh.pop %v6226
  %6231 = vrot.lane.b32.xlu0 %v6227, 64
  %v6232 = vpop.permute.xlu0 %6231
  %6233 = vrot.lane.b32.xlu0 %v6228, 64
  %v6234 = vpop.permute.xlu0 %6233
  %v6237 = vmul.f32 %v6200, %v6232
  %v6238 = vmul.f32 %v6202, %v6234
  %v6239 = vsel %vm5965, 1, 0
  %v6240 = vsel %vm5966, 1, 0
  %6241 = vset.pattern.permute.xlu0 0
  %6242 = vperm.xlu0 %6241, %v6239
  %v6243 = vpop.permute.xlu0 %6242
  %6244 = vset.pattern.permute.xlu0 0
  %6245 = vperm.xlu0 %6244, %v6240
  %v6246 = vpop.permute.xlu0 %6245
  %vm6247 = vcmp.eq.s32.totalorder %v6243, 1
  %vm6248 = vcmp.eq.s32.totalorder %v6246, 1
  %v6249 = vsel %vm6247, %v6092, 0.0
  %v6250 = vsel %vm6248, %v6093, 0.0
  %v6251 = vsel %vm6247, %v6080, 0.0
  %v6252 = vsel %vm6248, %v6081, 0.0
  %v6253 = vsel %vm6247, %v6237, 0.0
  %v6254 = vsel %vm6248, %v6238, 0.0
  %v6255 = vsel %vm6247, %v6225, 0.0
  %v6256 = vsel %vm6248, %v6226, 0.0
  %vm6257 = vcmp.gt.s32.totalorder %v5950, 1
  %vm6258 = vcmp.gt.s32.totalorder %v5951, 1
  %v6259 = vld [vmem:[%s1560] sm:$0xff]
  %v6260 = vld [vmem:[%s1560 + $0x8] sm:$0xff]
  %6263 = vrot.lane.b32.xlu0 %v6249, 32
  %v6264 = vpop.permute.xlu0 %6263
  %6265 = vrot.lane.b32.xlu0 %v6250, 32
  %v6266 = vpop.permute.xlu0 %6265
  %v6267 = vsel %vm165, %v6264, 0
  %v6269 = vsel %vm165, %v6266, 0
  %6271 = vmatprep.subr.mxu0 0.0
  %6272 = vmatpush1.msra.mxu0 %v5952
  %6273 = vmatprep.subr.mxu0 0.0
  %6274 = vmatpush1.msra.mxu0 %v5953
  %6275 = vmatprep.subr.mxu0 0.0
  %6276 = vmatpush1.msra.mxu0 %v5954
  %6277 = vmatprep.subr.mxu0 0.0
  %6278 = vmatpush1.msra.mxu0 %v5955
  %6279 = vmatprep.subr.mxu0 0.0
  %6280 = vmatpush1.msra.mxu0 0.0
  %6281 = vmatprep.subr.mxu0 0.0
  %6282 = vmatpush1.msra.mxu0 0.0
  %6283 = vmatprep.subr.mxu0 0.0
  %6284 = vmatpush1.msra.mxu0 0.0
  %6285 = vmatprep.subr.mxu0 0.0
  %6286 = vmatpush1.msra.mxu0 0.0
  %6287 = vmatprep.subr.mxu0 0.0
  %6288 = vmatpush1.msra.mxu0 0.0
  %6289 = vmatprep.subr.mxu0 0.0
  %6290 = vmatpush1.msra.mxu0 0.0
  %6291 = vmatprep.subr.mxu0 0.0
  %6292 = vmatpush1.msra.mxu0 0.0
  %6293 = vmatprep.subr.mxu0 0.0
  %6294 = vmatpush1.msra.mxu0 0.0
  %6295 = vmatprep.subr.mxu0 0.0
  %6296 = vmatpush1.msra.mxu0 0.0
  %6297 = vmatprep.subr.mxu0 0.0
  %6298 = vmatpush1.msra.mxu0 0.0
  %6299 = vmatprep.subr.mxu0 0.0
  %6300 = vmatpush1.msra.mxu0 0.0
  %6301 = vmatprep.subr.mxu0 0.0
  %6302 = vmatpush1.msra.mxu0 0.0
  %6303 = vmatprep.subr.mxu0 0.0
  %6304 = vmatpush1.msra.mxu0 0.0
  %6305 = vmatprep.subr.mxu0 0.0
  %6306 = vmatpush1.msra.mxu0 0.0
  %6307 = vmatprep.subr.mxu0 0.0
  %6308 = vmatpush1.msra.mxu0 0.0
  %6309 = vmatprep.subr.mxu0 0.0
  %6310 = vmatpush1.msra.mxu0 0.0
  %6311 = vmatprep.subr.mxu0 0.0
  %6312 = vmatpush1.msra.mxu0 0.0
  %6313 = vmatprep.subr.mxu0 0.0
  %6314 = vmatpush1.msra.mxu0 0.0
  %6315 = vmatprep.subr.mxu0 0.0
  %6316 = vmatpush1.msra.mxu0 0.0
  %6317 = vmatprep.subr.mxu0 0.0
  %6318 = vmatpush1.msra.mxu0 0.0
  %6319 = vmatprep.subr.mxu0 0.0
  %6320 = vmatpush1.msra.mxu0 0.0
  %6321 = vmatprep.subr.mxu0 0.0
  %6322 = vmatpush1.msra.mxu0 0.0
  %6323 = vmatprep.subr.mxu0 0.0
  %6324 = vmatpush1.msra.mxu0 0.0
  %6325 = vmatprep.subr.mxu0 0.0
  %6326 = vmatpush1.msra.mxu0 0.0
  %6327 = vmatprep.subr.mxu0 0.0
  %6328 = vmatpush1.msra.mxu0 0.0
  %6329 = vmatprep.subr.mxu0 0.0
  %6330 = vmatpush1.msra.mxu0 0.0
  %6331 = vmatprep.subr.mxu0 0.0
  %6332 = vmatpush1.msra.mxu0 0.0
  %6333 = vmatprep.subr.mxu0 0.0
  %6334 = vmatpush1.msra.mxu0 0.0
  %6335 = vmatprep.mubr.f32.mxu0 0.0
  %6336 = vmatmul.mubr.f32.gmra.mrb[0].mxu0 %v6267
  %v6337 = vpop.f32.mrb[0].mxu0
  %v6338 = vadd.f32 0.0, %v6337
  %v6339 = vpop.f32.mrb[0].mxu0
  %6340 = vmatprep.mubr.f32.mxu0 0.0
  %6341 = vmatmul.mubr.f32.gmra.mrb[0].mxu0 %v6269
  %v6342 = vpop.f32.mrb[0].mxu0
  %v6343 = vadd.f32 0.0, %v6342
  %v6344 = vpop.f32.mrb[0].mxu0
  %6345 = vdwg.mxu0
  %v6346 = vadd.f32 %v6259, %v6338
  %v6347 = vadd.f32 %v6260, %v6343
  %v6348 = vxor.u32 %v6346, 2147483648
  %v6349 = vxor.u32 %v6347, 2147483648
  %v6350 = vmul.f32 %v6348, 1.442695
  %v6351 = vpow.pop %v6350
  %v6352 = vmul.f32 %v6349, 1.442695
  %v6353 = vpow.pop %v6352
  %v6354 = vadd.f32 %v6351, 1.0
  %v6355 = vadd.f32 %v6353, 1.0
  %v6356 = vrcp.pop %v6354
  %v6357 = vmul.f32 1.0, %v6356
  %v6358 = vrcp.pop %v6355
  %v6359 = vmul.f32 1.0, %v6358
  %v6360 = vtanh.pop %v6346
  %v6361 = vtanh.pop %v6347
  %v6362 = vmul.f32 %v6357, %v6251
  %v6363 = vmul.f32 %v6359, %v6252
  %6366 = vrot.lane.b32.xlu0 %v6360, 64
  %v6367 = vpop.permute.xlu0 %6366
  %6368 = vrot.lane.b32.xlu0 %v6361, 64
  %v6369 = vpop.permute.xlu0 %6368
  %v6372 = vmul.f32 %v6357, %v6367
  %v6373 = vmul.f32 %v6359, %v6369
  %6376 = vrot.lane.b32.xlu0 %v6372, 32
  %v6377 = vpop.permute.xlu0 %6376
  %6378 = vrot.lane.b32.xlu0 %v6373, 32
  %v6379 = vpop.permute.xlu0 %6378
  %v6382 = vadd.f32 %v6362, %v6377
  %v6383 = vadd.f32 %v6363, %v6379
  %v6384 = vtanh.pop %v6382
  %v6385 = vtanh.pop %v6383
  %6388 = vrot.lane.b32.xlu0 %v6384, 64
  %v6389 = vpop.permute.xlu0 %6388
  %6390 = vrot.lane.b32.xlu0 %v6385, 64
  %v6391 = vpop.permute.xlu0 %6390
  %v6394 = vmul.f32 %v6357, %v6389
  %v6395 = vmul.f32 %v6359, %v6391
  %6398 = vrot.lane.b32.xlu0 %v6394, 32
  %v6399 = vpop.permute.xlu0 %6398
  %6400 = vrot.lane.b32.xlu0 %v6395, 32
  %v6401 = vpop.permute.xlu0 %6400
  %6406 = vrot.lane.b32.xlu0 %v6253, 64
  %v6407 = vpop.permute.xlu0 %6406
  %6408 = vrot.lane.b32.xlu0 %v6254, 64
  %v6409 = vpop.permute.xlu0 %6408
  %v6412 = vsel %vm165, %v6399, %v6407
  %v6413 = vsel %vm165, %v6401, %v6409
  %v6415 = vsel %vm87, %v6412, 0
  %v6418 = vsel %vm87, %v6413, 0
  %6420 = vmatprep.subr.mxu0 0.0
  %6421 = vmatpush1.msra.mxu0 %v5956
  %6422 = vmatprep.subr.mxu0 0.0
  %6423 = vmatpush1.msra.mxu0 %v5957
  %6424 = vmatprep.subr.mxu0 0.0
  %6425 = vmatpush1.msra.mxu0 %v5958
  %6426 = vmatprep.subr.mxu0 0.0
  %6427 = vmatpush1.msra.mxu0 %v5959
  %6428 = vmatprep.subr.mxu0 0.0
  %6429 = vmatpush1.msra.mxu0 %v5960
  %6430 = vmatprep.subr.mxu0 0.0
  %6431 = vmatpush1.msra.mxu0 %v5961
  %6432 = vmatprep.subr.mxu0 0.0
  %6433 = vmatpush1.msra.mxu0 %v5962
  %6434 = vmatprep.subr.mxu0 0.0
  %6435 = vmatpush1.msra.mxu0 %v5963
  %6436 = vmatprep.subr.mxu0 0.0
  %6437 = vmatpush1.msra.mxu0 0.0
  %6438 = vmatprep.subr.mxu0 0.0
  %6439 = vmatpush1.msra.mxu0 0.0
  %6440 = vmatprep.subr.mxu0 0.0
  %6441 = vmatpush1.msra.mxu0 0.0
  %6442 = vmatprep.subr.mxu0 0.0
  %6443 = vmatpush1.msra.mxu0 0.0
  %6444 = vmatprep.subr.mxu0 0.0
  %6445 = vmatpush1.msra.mxu0 0.0
  %6446 = vmatprep.subr.mxu0 0.0
  %6447 = vmatpush1.msra.mxu0 0.0
  %6448 = vmatprep.subr.mxu0 0.0
  %6449 = vmatpush1.msra.mxu0 0.0
  %6450 = vmatprep.subr.mxu0 0.0
  %6451 = vmatpush1.msra.mxu0 0.0
  %6452 = vmatprep.subr.mxu0 0.0
  %6453 = vmatpush1.msra.mxu0 0.0
  %6454 = vmatprep.subr.mxu0 0.0
  %6455 = vmatpush1.msra.mxu0 0.0
  %6456 = vmatprep.subr.mxu0 0.0
  %6457 = vmatpush1.msra.mxu0 0.0
  %6458 = vmatprep.subr.mxu0 0.0
  %6459 = vmatpush1.msra.mxu0 0.0
  %6460 = vmatprep.subr.mxu0 0.0
  %6461 = vmatpush1.msra.mxu0 0.0
  %6462 = vmatprep.subr.mxu0 0.0
  %6463 = vmatpush1.msra.mxu0 0.0
  %6464 = vmatprep.subr.mxu0 0.0
  %6465 = vmatpush1.msra.mxu0 0.0
  %6466 = vmatprep.subr.mxu0 0.0
  %6467 = vmatpush1.msra.mxu0 0.0
  %6468 = vmatprep.subr.mxu0 0.0
  %6469 = vmatpush1.msra.mxu0 0.0
  %6470 = vmatprep.subr.mxu0 0.0
  %6471 = vmatpush1.msra.mxu0 0.0
  %6472 = vmatprep.subr.mxu0 0.0
  %6473 = vmatpush1.msra.mxu0 0.0
  %6474 = vmatprep.subr.mxu0 0.0
  %6475 = vmatpush1.msra.mxu0 0.0
  %6476 = vmatprep.subr.mxu0 0.0
  %6477 = vmatpush1.msra.mxu0 0.0
  %6478 = vmatprep.subr.mxu0 0.0
  %6479 = vmatpush1.msra.mxu0 0.0
  %6480 = vmatprep.subr.mxu0 0.0
  %6481 = vmatpush1.msra.mxu0 0.0
  %6482 = vmatprep.subr.mxu0 0.0
  %6483 = vmatpush1.msra.mxu0 0.0
  %6484 = vmatprep.mubr.f32.mxu0 0.0
  %6485 = vmatmul.mubr.f32.gmra.mrb[0].mxu0 %v6415
  %v6486 = vpop.f32.mrb[0].mxu0
  %v6487 = vadd.f32 %v6108, %v6486
  %v6488 = vpop.f32.mrb[0].mxu0
  %6489 = vmatprep.mubr.f32.mxu0 0.0
  %6490 = vmatmul.mubr.f32.gmra.mrb[0].mxu0 %v6418
  %v6491 = vpop.f32.mrb[0].mxu0
  %v6492 = vadd.f32 %v6108, %v6491
  %v6493 = vpop.f32.mrb[0].mxu0
  %6494 = vdwg.mxu0
  %v6495 = vxor.u32 %v6487, 2147483648
  %v6496 = vxor.u32 %v6492, 2147483648
  %v6497 = vmul.f32 %v6495, 1.442695
  %v6498 = vpow.pop %v6497
  %v6499 = vmul.f32 %v6496, 1.442695
  %v6500 = vpow.pop %v6499
  %v6501 = vadd.f32 %v6498, 1.0
  %v6502 = vadd.f32 %v6500, 1.0
  %v6503 = vrcp.pop %v6501
  %v6504 = vmul.f32 1.0, %v6503
  %v6505 = vrcp.pop %v6502
  %v6506 = vmul.f32 1.0, %v6505
  %v6507 = vtanh.pop %v6487
  %v6508 = vtanh.pop %v6492
  %v6509 = vmul.f32 %v6504, %v6255
  %v6510 = vmul.f32 %v6506, %v6256
  %6513 = vrot.lane.b32.xlu0 %v6507, 64
  %v6514 = vpop.permute.xlu0 %6513
  %6515 = vrot.lane.b32.xlu0 %v6508, 64
  %v6516 = vpop.permute.xlu0 %6515
  %v6519 = vmul.f32 %v6504, %v6514
  %v6520 = vmul.f32 %v6506, %v6516
  %6523 = vrot.lane.b32.xlu0 %v6519, 32
  %v6524 = vpop.permute.xlu0 %6523
  %6525 = vrot.lane.b32.xlu0 %v6520, 32
  %v6526 = vpop.permute.xlu0 %6525
  %v6529 = vadd.f32 %v6509, %v6524
  %v6530 = vadd.f32 %v6510, %v6526
  %v6531 = vtanh.pop %v6529
  %v6532 = vtanh.pop %v6530
  %6535 = vrot.lane.b32.xlu0 %v6531, 64
  %v6536 = vpop.permute.xlu0 %6535
  %6537 = vrot.lane.b32.xlu0 %v6532, 64
  %v6538 = vpop.permute.xlu0 %6537
  %v6541 = vmul.f32 %v6504, %v6536
  %v6542 = vmul.f32 %v6506, %v6538
  %v6543 = vsel %vm6257, 1, 0
  %v6544 = vsel %vm6258, 1, 0
  %6545 = vset.pattern.permute.xlu0 0
  %6546 = vperm.xlu0 %6545, %v6543
  %v6547 = vpop.permute.xlu0 %6546
  %6548 = vset.pattern.permute.xlu0 0
  %6549 = vperm.xlu0 %6548, %v6544
  %v6550 = vpop.permute.xlu0 %6549
  %vm6551 = vcmp.eq.s32.totalorder %v6547, 1
  %vm6552 = vcmp.eq.s32.totalorder %v6550, 1
  %v6553 = vsel %vm6551, %v6394, %v6249
  %v6554 = vsel %vm6552, %v6395, %v6250
  %v6555 = vsel %vm6551, %v6382, %v6251
  %v6556 = vsel %vm6552, %v6383, %v6252
  %v6557 = vsel %vm6551, %v6541, %v6253
  %v6558 = vsel %vm6552, %v6542, %v6254
  %v6559 = vsel %vm6551, %v6529, %v6255
  %v6560 = vsel %vm6552, %v6530, %v6256
  %vm6561 = vcmp.gt.s32.totalorder %v5950, 2
  %vm6562 = vcmp.gt.s32.totalorder %v5951, 2
  %v6563 = vld [vmem:[%s1647] sm:$0xff]
  %v6564 = vld [vmem:[%s1647 + $0x8] sm:$0xff]
  %6567 = vrot.lane.b32.xlu0 %v6553, 32
  %v6568 = vpop.permute.xlu0 %6567
  %6569 = vrot.lane.b32.xlu0 %v6554, 32
  %v6570 = vpop.permute.xlu0 %6569
  %v6571 = vsel %vm165, %v6568, 0
  %v6573 = vsel %vm165, %v6570, 0
  %6575 = vmatprep.subr.mxu0 0.0
  %6576 = vmatpush1.msra.mxu0 %v5952
  %6577 = vmatprep.subr.mxu0 0.0
  %6578 = vmatpush1.msra.mxu0 %v5953
  %6579 = vmatprep.subr.mxu0 0.0
  %6580 = vmatpush1.msra.mxu0 %v5954
  %6581 = vmatprep.subr.mxu0 0.0
  %6582 = vmatpush1.msra.mxu0 %v5955
  %6583 = vmatprep.subr.mxu0 0.0
  %6584 = vmatpush1.msra.mxu0 0.0
  %6585 = vmatprep.subr.mxu0 0.0
  %6586 = vmatpush1.msra.mxu0 0.0
  %6587 = vmatprep.subr.mxu0 0.0
  %6588 = vmatpush1.msra.mxu0 0.0
  %6589 = vmatprep.subr.mxu0 0.0
  %6590 = vmatpush1.msra.mxu0 0.0
  %6591 = vmatprep.subr.mxu0 0.0
  %6592 = vmatpush1.msra.mxu0 0.0
  %6593 = vmatprep.subr.mxu0 0.0
  %6594 = vmatpush1.msra.mxu0 0.0
  %6595 = vmatprep.subr.mxu0 0.0
  %6596 = vmatpush1.msra.mxu0 0.0
  %6597 = vmatprep.subr.mxu0 0.0
  %6598 = vmatpush1.msra.mxu0 0.0
  %6599 = vmatprep.subr.mxu0 0.0
  %6600 = vmatpush1.msra.mxu0 0.0
  %6601 = vmatprep.subr.mxu0 0.0
  %6602 = vmatpush1.msra.mxu0 0.0
  %6603 = vmatprep.subr.mxu0 0.0
  %6604 = vmatpush1.msra.mxu0 0.0
  %6605 = vmatprep.subr.mxu0 0.0
  %6606 = vmatpush1.msra.mxu0 0.0
  %6607 = vmatprep.subr.mxu0 0.0
  %6608 = vmatpush1.msra.mxu0 0.0
  %6609 = vmatprep.subr.mxu0 0.0
  %6610 = vmatpush1.msra.mxu0 0.0
  %6611 = vmatprep.subr.mxu0 0.0
  %6612 = vmatpush1.msra.mxu0 0.0
  %6613 = vmatprep.subr.mxu0 0.0
  %6614 = vmatpush1.msra.mxu0 0.0
  %6615 = vmatprep.subr.mxu0 0.0
  %6616 = vmatpush1.msra.mxu0 0.0
  %6617 = vmatprep.subr.mxu0 0.0
  %6618 = vmatpush1.msra.mxu0 0.0
  %6619 = vmatprep.subr.mxu0 0.0
  %6620 = vmatpush1.msra.mxu0 0.0
  %6621 = vmatprep.subr.mxu0 0.0
  %6622 = vmatpush1.msra.mxu0 0.0
  %6623 = vmatprep.subr.mxu0 0.0
  %6624 = vmatpush1.msra.mxu0 0.0
  %6625 = vmatprep.subr.mxu0 0.0
  %6626 = vmatpush1.msra.mxu0 0.0
  %6627 = vmatprep.subr.mxu0 0.0
  %6628 = vmatpush1.msra.mxu0 0.0
  %6629 = vmatprep.subr.mxu0 0.0
  %6630 = vmatpush1.msra.mxu0 0.0
  %6631 = vmatprep.subr.mxu0 0.0
  %6632 = vmatpush1.msra.mxu0 0.0
  %6633 = vmatprep.subr.mxu0 0.0
  %6634 = vmatpush1.msra.mxu0 0.0
  %6635 = vmatprep.subr.mxu0 0.0
  %6636 = vmatpush1.msra.mxu0 0.0
  %6637 = vmatprep.subr.mxu0 0.0
  %6638 = vmatpush1.msra.mxu0 0.0
  %6639 = vmatprep.mubr.f32.mxu0 0.0
  %6640 = vmatmul.mubr.f32.gmra.mrb[0].mxu0 %v6571
  %v6641 = vpop.f32.mrb[0].mxu0
  %v6642 = vadd.f32 0.0, %v6641
  %v6643 = vpop.f32.mrb[0].mxu0
  %6644 = vmatprep.mubr.f32.mxu0 0.0
  %6645 = vmatmul.mubr.f32.gmra.mrb[0].mxu0 %v6573
  %v6646 = vpop.f32.mrb[0].mxu0
  %v6647 = vadd.f32 0.0, %v6646
  %v6648 = vpop.f32.mrb[0].mxu0
  %6649 = vdwg.mxu0
  %v6650 = vadd.f32 %v6563, %v6642
  %v6651 = vadd.f32 %v6564, %v6647
  %v6652 = vxor.u32 %v6650, 2147483648
  %v6653 = vxor.u32 %v6651, 2147483648
  %v6654 = vmul.f32 %v6652, 1.442695
  %v6655 = vpow.pop %v6654
  %v6656 = vmul.f32 %v6653, 1.442695
  %v6657 = vpow.pop %v6656
  %v6658 = vadd.f32 %v6655, 1.0
  %v6659 = vadd.f32 %v6657, 1.0
  %v6660 = vrcp.pop %v6658
  %v6661 = vmul.f32 1.0, %v6660
  %v6662 = vrcp.pop %v6659
  %v6663 = vmul.f32 1.0, %v6662
  %v6664 = vtanh.pop %v6650
  %v6665 = vtanh.pop %v6651
  %v6666 = vmul.f32 %v6661, %v6555
  %v6667 = vmul.f32 %v6663, %v6556
  %6670 = vrot.lane.b32.xlu0 %v6664, 64
  %v6671 = vpop.permute.xlu0 %6670
  %6672 = vrot.lane.b32.xlu0 %v6665, 64
  %v6673 = vpop.permute.xlu0 %6672
  %v6676 = vmul.f32 %v6661, %v6671
  %v6677 = vmul.f32 %v6663, %v6673
  %6680 = vrot.lane.b32.xlu0 %v6676, 32
  %v6681 = vpop.permute.xlu0 %6680
  %6682 = vrot.lane.b32.xlu0 %v6677, 32
  %v6683 = vpop.permute.xlu0 %6682
  %v6686 = vadd.f32 %v6666, %v6681
  %v6687 = vadd.f32 %v6667, %v6683
  %v6688 = vtanh.pop %v6686
  %v6689 = vtanh.pop %v6687
  %6692 = vrot.lane.b32.xlu0 %v6688, 64
  %v6693 = vpop.permute.xlu0 %6692
  %6694 = vrot.lane.b32.xlu0 %v6689, 64
  %v6695 = vpop.permute.xlu0 %6694
  %v6698 = vmul.f32 %v6661, %v6693
  %v6699 = vmul.f32 %v6663, %v6695
  %6702 = vrot.lane.b32.xlu0 %v6698, 32
  %v6703 = vpop.permute.xlu0 %6702
  %6704 = vrot.lane.b32.xlu0 %v6699, 32
  %v6705 = vpop.permute.xlu0 %6704
  %6710 = vrot.lane.b32.xlu0 %v6557, 64
  %v6711 = vpop.permute.xlu0 %6710
  %6712 = vrot.lane.b32.xlu0 %v6558, 64
  %v6713 = vpop.permute.xlu0 %6712
  %v6716 = vsel %vm165, %v6703, %v6711
  %v6717 = vsel %vm165, %v6705, %v6713
  %v6719 = vsel %vm87, %v6716, 0
  %v6722 = vsel %vm87, %v6717, 0
  %6724 = vmatprep.subr.mxu0 0.0
  %6725 = vmatpush1.msra.mxu0 %v5956
  %6726 = vmatprep.subr.mxu0 0.0
  %6727 = vmatpush1.msra.mxu0 %v5957
  %6728 = vmatprep.subr.mxu0 0.0
  %6729 = vmatpush1.msra.mxu0 %v5958
  %6730 = vmatprep.subr.mxu0 0.0
  %6731 = vmatpush1.msra.mxu0 %v5959
  %6732 = vmatprep.subr.mxu0 0.0
  %6733 = vmatpush1.msra.mxu0 %v5960
  %6734 = vmatprep.subr.mxu0 0.0
  %6735 = vmatpush1.msra.mxu0 %v5961
  %6736 = vmatprep.subr.mxu0 0.0
  %6737 = vmatpush1.msra.mxu0 %v5962
  %6738 = vmatprep.subr.mxu0 0.0
  %6739 = vmatpush1.msra.mxu0 %v5963
  %6740 = vmatprep.subr.mxu0 0.0
  %6741 = vmatpush1.msra.mxu0 0.0
  %6742 = vmatprep.subr.mxu0 0.0
  %6743 = vmatpush1.msra.mxu0 0.0
  %6744 = vmatprep.subr.mxu0 0.0
  %6745 = vmatpush1.msra.mxu0 0.0
  %6746 = vmatprep.subr.mxu0 0.0
  %6747 = vmatpush1.msra.mxu0 0.0
  %6748 = vmatprep.subr.mxu0 0.0
  %6749 = vmatpush1.msra.mxu0 0.0
  %6750 = vmatprep.subr.mxu0 0.0
  %6751 = vmatpush1.msra.mxu0 0.0
  %6752 = vmatprep.subr.mxu0 0.0
  %6753 = vmatpush1.msra.mxu0 0.0
  %6754 = vmatprep.subr.mxu0 0.0
  %6755 = vmatpush1.msra.mxu0 0.0
  %6756 = vmatprep.subr.mxu0 0.0
  %6757 = vmatpush1.msra.mxu0 0.0
  %6758 = vmatprep.subr.mxu0 0.0
  %6759 = vmatpush1.msra.mxu0 0.0
  %6760 = vmatprep.subr.mxu0 0.0
  %6761 = vmatpush1.msra.mxu0 0.0
  %6762 = vmatprep.subr.mxu0 0.0
  %6763 = vmatpush1.msra.mxu0 0.0
  %6764 = vmatprep.subr.mxu0 0.0
  %6765 = vmatpush1.msra.mxu0 0.0
  %6766 = vmatprep.subr.mxu0 0.0
  %6767 = vmatpush1.msra.mxu0 0.0
  %6768 = vmatprep.subr.mxu0 0.0
  %6769 = vmatpush1.msra.mxu0 0.0
  %6770 = vmatprep.subr.mxu0 0.0
  %6771 = vmatpush1.msra.mxu0 0.0
  %6772 = vmatprep.subr.mxu0 0.0
  %6773 = vmatpush1.msra.mxu0 0.0
  %6774 = vmatprep.subr.mxu0 0.0
  %6775 = vmatpush1.msra.mxu0 0.0
  %6776 = vmatprep.subr.mxu0 0.0
  %6777 = vmatpush1.msra.mxu0 0.0
  %6778 = vmatprep.subr.mxu0 0.0
  %6779 = vmatpush1.msra.mxu0 0.0
  %6780 = vmatprep.subr.mxu0 0.0
  %6781 = vmatpush1.msra.mxu0 0.0
  %6782 = vmatprep.subr.mxu0 0.0
  %6783 = vmatpush1.msra.mxu0 0.0
  %6784 = vmatprep.subr.mxu0 0.0
  %6785 = vmatpush1.msra.mxu0 0.0
  %6786 = vmatprep.subr.mxu0 0.0
  %6787 = vmatpush1.msra.mxu0 0.0
  %6788 = vmatprep.mubr.f32.mxu0 0.0
  %6789 = vmatmul.mubr.f32.gmra.mrb[0].mxu0 %v6719
  %v6790 = vpop.f32.mrb[0].mxu0
  %v6791 = vadd.f32 %v6108, %v6790
  %v6792 = vpop.f32.mrb[0].mxu0
  %6793 = vmatprep.mubr.f32.mxu0 0.0
  %6794 = vmatmul.mubr.f32.gmra.mrb[0].mxu0 %v6722
  %v6795 = vpop.f32.mrb[0].mxu0
  %v6796 = vadd.f32 %v6108, %v6795
  %v6797 = vpop.f32.mrb[0].mxu0
  %6798 = vdwg.mxu0
  %v6799 = vxor.u32 %v6791, 2147483648
  %v6800 = vxor.u32 %v6796, 2147483648
  %v6801 = vmul.f32 %v6799, 1.442695
  %v6802 = vpow.pop %v6801
  %v6803 = vmul.f32 %v6800, 1.442695
  %v6804 = vpow.pop %v6803
  %v6805 = vadd.f32 %v6802, 1.0
  %v6806 = vadd.f32 %v6804, 1.0
  %v6807 = vrcp.pop %v6805
  %v6808 = vmul.f32 1.0, %v6807
  %v6809 = vrcp.pop %v6806
  %v6810 = vmul.f32 1.0, %v6809
  %v6811 = vtanh.pop %v6791
  %v6812 = vtanh.pop %v6796
  %v6813 = vmul.f32 %v6808, %v6559
  %v6814 = vmul.f32 %v6810, %v6560
  %6817 = vrot.lane.b32.xlu0 %v6811, 64
  %v6818 = vpop.permute.xlu0 %6817
  %6819 = vrot.lane.b32.xlu0 %v6812, 64
  %v6820 = vpop.permute.xlu0 %6819
  %v6823 = vmul.f32 %v6808, %v6818
  %v6824 = vmul.f32 %v6810, %v6820
  %6827 = vrot.lane.b32.xlu0 %v6823, 32
  %v6828 = vpop.permute.xlu0 %6827
  %6829 = vrot.lane.b32.xlu0 %v6824, 32
  %v6830 = vpop.permute.xlu0 %6829
  %v6833 = vadd.f32 %v6813, %v6828
  %v6834 = vadd.f32 %v6814, %v6830
  %v6835 = vtanh.pop %v6833
  %v6836 = vtanh.pop %v6834
  %6839 = vrot.lane.b32.xlu0 %v6835, 64
  %v6840 = vpop.permute.xlu0 %6839
  %6841 = vrot.lane.b32.xlu0 %v6836, 64
  %v6842 = vpop.permute.xlu0 %6841
  %v6845 = vmul.f32 %v6808, %v6840
  %v6846 = vmul.f32 %v6810, %v6842
  %v6847 = vsel %vm6561, 1, 0
  %v6848 = vsel %vm6562, 1, 0
  %6849 = vset.pattern.permute.xlu0 0
  %6850 = vperm.xlu0 %6849, %v6847
  %v6851 = vpop.permute.xlu0 %6850
  %6852 = vset.pattern.permute.xlu0 0
  %6853 = vperm.xlu0 %6852, %v6848
  %v6854 = vpop.permute.xlu0 %6853
  %vm6855 = vcmp.eq.s32.totalorder %v6851, 1
  %vm6856 = vcmp.eq.s32.totalorder %v6854, 1
  %v6857 = vsel %vm6855, %v6698, %v6553
  %v6858 = vsel %vm6856, %v6699, %v6554
  %v6859 = vsel %vm6855, %v6686, %v6555
  %v6860 = vsel %vm6856, %v6687, %v6556
  %v6861 = vsel %vm6855, %v6845, %v6557
  %v6862 = vsel %vm6856, %v6846, %v6558
  %v6863 = vsel %vm6855, %v6833, %v6559
  %v6864 = vsel %vm6856, %v6834, %v6560
  %vm6865 = vcmp.gt.s32.totalorder %v5950, 3
  %vm6866 = vcmp.gt.s32.totalorder %v5951, 3
  %v6867 = vld [vmem:[%s1734] sm:$0xff]
  %v6868 = vld [vmem:[%s1734 + $0x8] sm:$0xff]
  %6871 = vrot.lane.b32.xlu0 %v6857, 32
  %v6872 = vpop.permute.xlu0 %6871
  %6873 = vrot.lane.b32.xlu0 %v6858, 32
  %v6874 = vpop.permute.xlu0 %6873
  %v6875 = vsel %vm165, %v6872, 0
  %v6877 = vsel %vm165, %v6874, 0
  %6879 = vmatprep.subr.mxu0 0.0
  %6880 = vmatpush1.msra.mxu0 %v5952
  %6881 = vmatprep.subr.mxu0 0.0
  %6882 = vmatpush1.msra.mxu0 %v5953
  %6883 = vmatprep.subr.mxu0 0.0
  %6884 = vmatpush1.msra.mxu0 %v5954
  %6885 = vmatprep.subr.mxu0 0.0
  %6886 = vmatpush1.msra.mxu0 %v5955
  %6887 = vmatprep.subr.mxu0 0.0
  %6888 = vmatpush1.msra.mxu0 0.0
  %6889 = vmatprep.subr.mxu0 0.0
  %6890 = vmatpush1.msra.mxu0 0.0
  %6891 = vmatprep.subr.mxu0 0.0
  %6892 = vmatpush1.msra.mxu0 0.0
  %6893 = vmatprep.subr.mxu0 0.0
  %6894 = vmatpush1.msra.mxu0 0.0
  %6895 = vmatprep.subr.mxu0 0.0
  %6896 = vmatpush1.msra.mxu0 0.0
  %6897 = vmatprep.subr.mxu0 0.0
  %6898 = vmatpush1.msra.mxu0 0.0
  %6899 = vmatprep.subr.mxu0 0.0
  %6900 = vmatpush1.msra.mxu0 0.0
  %6901 = vmatprep.subr.mxu0 0.0
  %6902 = vmatpush1.msra.mxu0 0.0
  %6903 = vmatprep.subr.mxu0 0.0
  %6904 = vmatpush1.msra.mxu0 0.0
  %6905 = vmatprep.subr.mxu0 0.0
  %6906 = vmatpush1.msra.mxu0 0.0
  %6907 = vmatprep.subr.mxu0 0.0
  %6908 = vmatpush1.msra.mxu0 0.0
  %6909 = vmatprep.subr.mxu0 0.0
  %6910 = vmatpush1.msra.mxu0 0.0
  %6911 = vmatprep.subr.mxu0 0.0
  %6912 = vmatpush1.msra.mxu0 0.0
  %6913 = vmatprep.subr.mxu0 0.0
  %6914 = vmatpush1.msra.mxu0 0.0
  %6915 = vmatprep.subr.mxu0 0.0
  %6916 = vmatpush1.msra.mxu0 0.0
  %6917 = vmatprep.subr.mxu0 0.0
  %6918 = vmatpush1.msra.mxu0 0.0
  %6919 = vmatprep.subr.mxu0 0.0
  %6920 = vmatpush1.msra.mxu0 0.0
  %6921 = vmatprep.subr.mxu0 0.0
  %6922 = vmatpush1.msra.mxu0 0.0
  %6923 = vmatprep.subr.mxu0 0.0
  %6924 = vmatpush1.msra.mxu0 0.0
  %6925 = vmatprep.subr.mxu0 0.0
  %6926 = vmatpush1.msra.mxu0 0.0
  %6927 = vmatprep.subr.mxu0 0.0
  %6928 = vmatpush1.msra.mxu0 0.0
  %6929 = vmatprep.subr.mxu0 0.0
  %6930 = vmatpush1.msra.mxu0 0.0
  %6931 = vmatprep.subr.mxu0 0.0
  %6932 = vmatpush1.msra.mxu0 0.0
  %6933 = vmatprep.subr.mxu0 0.0
  %6934 = vmatpush1.msra.mxu0 0.0
  %6935 = vmatprep.subr.mxu0 0.0
  %6936 = vmatpush1.msra.mxu0 0.0
  %6937 = vmatprep.subr.mxu0 0.0
  %6938 = vmatpush1.msra.mxu0 0.0
  %6939 = vmatprep.subr.mxu0 0.0
  %6940 = vmatpush1.msra.mxu0 0.0
  %6941 = vmatprep.subr.mxu0 0.0
  %6942 = vmatpush1.msra.mxu0 0.0
  %6943 = vmatprep.mubr.f32.mxu0 0.0
  %6944 = vmatmul.mubr.f32.gmra.mrb[0].mxu0 %v6875
  %v6945 = vpop.f32.mrb[0].mxu0
  %v6946 = vadd.f32 0.0, %v6945
  %v6947 = vpop.f32.mrb[0].mxu0
  %6948 = vmatprep.mubr.f32.mxu0 0.0
  %6949 = vmatmul.mubr.f32.gmra.mrb[0].mxu0 %v6877
  %v6950 = vpop.f32.mrb[0].mxu0
  %v6951 = vadd.f32 0.0, %v6950
  %v6952 = vpop.f32.mrb[0].mxu0
  %6953 = vdwg.mxu0
  %v6954 = vadd.f32 %v6867, %v6946
  %v6955 = vadd.f32 %v6868, %v6951
  %v6956 = vxor.u32 %v6954, 2147483648
  %v6957 = vxor.u32 %v6955, 2147483648
  %v6958 = vmul.f32 %v6956, 1.442695
  %v6959 = vpow.pop %v6958
  %v6960 = vmul.f32 %v6957, 1.442695
  %v6961 = vpow.pop %v6960
  %v6962 = vadd.f32 %v6959, 1.0
  %v6963 = vadd.f32 %v6961, 1.0
  %v6964 = vrcp.pop %v6962
  %v6965 = vmul.f32 1.0, %v6964
  %v6966 = vrcp.pop %v6963
  %v6967 = vmul.f32 1.0, %v6966
  %v6968 = vtanh.pop %v6954
  %v6969 = vtanh.pop %v6955
  %v6970 = vmul.f32 %v6965, %v6859
  %v6971 = vmul.f32 %v6967, %v6860
  %6974 = vrot.lane.b32.xlu0 %v6968, 64
  %v6975 = vpop.permute.xlu0 %6974
  %6976 = vrot.lane.b32.xlu0 %v6969, 64
  %v6977 = vpop.permute.xlu0 %6976
  %v6980 = vmul.f32 %v6965, %v6975
  %v6981 = vmul.f32 %v6967, %v6977
  %6984 = vrot.lane.b32.xlu0 %v6980, 32
  %v6985 = vpop.permute.xlu0 %6984
  %6986 = vrot.lane.b32.xlu0 %v6981, 32
  %v6987 = vpop.permute.xlu0 %6986
  %v6990 = vadd.f32 %v6970, %v6985
  %v6991 = vadd.f32 %v6971, %v6987
  %v6992 = vtanh.pop %v6990
  %v6993 = vtanh.pop %v6991
  %6996 = vrot.lane.b32.xlu0 %v6992, 64
  %v6997 = vpop.permute.xlu0 %6996
  %6998 = vrot.lane.b32.xlu0 %v6993, 64
  %v6999 = vpop.permute.xlu0 %6998
  %v7002 = vmul.f32 %v6965, %v6997
  %v7003 = vmul.f32 %v6967, %v6999
  %7006 = vrot.lane.b32.xlu0 %v7002, 32
  %v7007 = vpop.permute.xlu0 %7006
  %7008 = vrot.lane.b32.xlu0 %v7003, 32
  %v7009 = vpop.permute.xlu0 %7008
  %7014 = vrot.lane.b32.xlu0 %v6861, 64
  %v7015 = vpop.permute.xlu0 %7014
  %7016 = vrot.lane.b32.xlu0 %v6862, 64
  %v7017 = vpop.permute.xlu0 %7016
  %v7020 = vsel %vm165, %v7007, %v7015
  %v7021 = vsel %vm165, %v7009, %v7017
  %v7023 = vsel %vm87, %v7020, 0
  %v7026 = vsel %vm87, %v7021, 0
  %7028 = vmatprep.subr.mxu0 0.0
  %7029 = vmatpush1.msra.mxu0 %v5956
  %7030 = vmatprep.subr.mxu0 0.0
  %7031 = vmatpush1.msra.mxu0 %v5957
  %7032 = vmatprep.subr.mxu0 0.0
  %7033 = vmatpush1.msra.mxu0 %v5958
  %7034 = vmatprep.subr.mxu0 0.0
  %7035 = vmatpush1.msra.mxu0 %v5959
  %7036 = vmatprep.subr.mxu0 0.0
  %7037 = vmatpush1.msra.mxu0 %v5960
  %7038 = vmatprep.subr.mxu0 0.0
  %7039 = vmatpush1.msra.mxu0 %v5961
  %7040 = vmatprep.subr.mxu0 0.0
  %7041 = vmatpush1.msra.mxu0 %v5962
  %7042 = vmatprep.subr.mxu0 0.0
  %7043 = vmatpush1.msra.mxu0 %v5963
  %7044 = vmatprep.subr.mxu0 0.0
  %7045 = vmatpush1.msra.mxu0 0.0
  %7046 = vmatprep.subr.mxu0 0.0
  %7047 = vmatpush1.msra.mxu0 0.0
  %7048 = vmatprep.subr.mxu0 0.0
  %7049 = vmatpush1.msra.mxu0 0.0
  %7050 = vmatprep.subr.mxu0 0.0
  %7051 = vmatpush1.msra.mxu0 0.0
  %7052 = vmatprep.subr.mxu0 0.0
  %7053 = vmatpush1.msra.mxu0 0.0
  %7054 = vmatprep.subr.mxu0 0.0
  %7055 = vmatpush1.msra.mxu0 0.0
  %7056 = vmatprep.subr.mxu0 0.0
  %7057 = vmatpush1.msra.mxu0 0.0
  %7058 = vmatprep.subr.mxu0 0.0
  %7059 = vmatpush1.msra.mxu0 0.0
  %7060 = vmatprep.subr.mxu0 0.0
  %7061 = vmatpush1.msra.mxu0 0.0
  %7062 = vmatprep.subr.mxu0 0.0
  %7063 = vmatpush1.msra.mxu0 0.0
  %7064 = vmatprep.subr.mxu0 0.0
  %7065 = vmatpush1.msra.mxu0 0.0
  %7066 = vmatprep.subr.mxu0 0.0
  %7067 = vmatpush1.msra.mxu0 0.0
  %7068 = vmatprep.subr.mxu0 0.0
  %7069 = vmatpush1.msra.mxu0 0.0
  %7070 = vmatprep.subr.mxu0 0.0
  %7071 = vmatpush1.msra.mxu0 0.0
  %7072 = vmatprep.subr.mxu0 0.0
  %7073 = vmatpush1.msra.mxu0 0.0
  %7074 = vmatprep.subr.mxu0 0.0
  %7075 = vmatpush1.msra.mxu0 0.0
  %7076 = vmatprep.subr.mxu0 0.0
  %7077 = vmatpush1.msra.mxu0 0.0
  %7078 = vmatprep.subr.mxu0 0.0
  %7079 = vmatpush1.msra.mxu0 0.0
  %7080 = vmatprep.subr.mxu0 0.0
  %7081 = vmatpush1.msra.mxu0 0.0
  %7082 = vmatprep.subr.mxu0 0.0
  %7083 = vmatpush1.msra.mxu0 0.0
  %7084 = vmatprep.subr.mxu0 0.0
  %7085 = vmatpush1.msra.mxu0 0.0
  %7086 = vmatprep.subr.mxu0 0.0
  %7087 = vmatpush1.msra.mxu0 0.0
  %7088 = vmatprep.subr.mxu0 0.0
  %7089 = vmatpush1.msra.mxu0 0.0
  %7090 = vmatprep.subr.mxu0 0.0
  %7091 = vmatpush1.msra.mxu0 0.0
  %7092 = vmatprep.mubr.f32.mxu0 0.0
  %7093 = vmatmul.mubr.f32.gmra.mrb[0].mxu0 %v7023
  %v7094 = vpop.f32.mrb[0].mxu0
  %v7095 = vadd.f32 %v6108, %v7094
  %v7096 = vpop.f32.mrb[0].mxu0
  %7097 = vmatprep.mubr.f32.mxu0 0.0
  %7098 = vmatmul.mubr.f32.gmra.mrb[0].mxu0 %v7026
  %v7099 = vpop.f32.mrb[0].mxu0
  %v7100 = vadd.f32 %v6108, %v7099
  %v7101 = vpop.f32.mrb[0].mxu0
  %7102 = vdwg.mxu0
  %v7103 = vxor.u32 %v7095, 2147483648
  %v7104 = vxor.u32 %v7100, 2147483648
  %v7105 = vmul.f32 %v7103, 1.442695
  %v7106 = vpow.pop %v7105
  %v7107 = vmul.f32 %v7104, 1.442695
  %v7108 = vpow.pop %v7107
  %v7109 = vadd.f32 %v7106, 1.0
  %v7110 = vadd.f32 %v7108, 1.0
  %v7111 = vrcp.pop %v7109
  %v7112 = vmul.f32 1.0, %v7111
  %v7113 = vrcp.pop %v7110
  %v7114 = vmul.f32 1.0, %v7113
  %v7115 = vtanh.pop %v7095
  %v7116 = vtanh.pop %v7100
  %v7117 = vmul.f32 %v7112, %v6863
  %v7118 = vmul.f32 %v7114, %v6864
  %7121 = vrot.lane.b32.xlu0 %v7115, 64
  %v7122 = vpop.permute.xlu0 %7121
  %7123 = vrot.lane.b32.xlu0 %v7116, 64
  %v7124 = vpop.permute.xlu0 %7123
  %v7127 = vmul.f32 %v7112, %v7122
  %v7128 = vmul.f32 %v7114, %v7124
  %7131 = vrot.lane.b32.xlu0 %v7127, 32
  %v7132 = vpop.permute.xlu0 %7131
  %7133 = vrot.lane.b32.xlu0 %v7128, 32
  %v7134 = vpop.permute.xlu0 %7133
  %v7137 = vadd.f32 %v7117, %v7132
  %v7138 = vadd.f32 %v7118, %v7134
  %v7139 = vtanh.pop %v7137
  %v7140 = vtanh.pop %v7138
  %7143 = vrot.lane.b32.xlu0 %v7139, 64
  %v7144 = vpop.permute.xlu0 %7143
  %7145 = vrot.lane.b32.xlu0 %v7140, 64
  %v7146 = vpop.permute.xlu0 %7145
  %v7149 = vmul.f32 %v7112, %v7144
  %v7150 = vmul.f32 %v7114, %v7146
  %v7151 = vsel %vm6865, 1, 0
  %v7152 = vsel %vm6866, 1, 0
  %7153 = vset.pattern.permute.xlu0 0
  %7154 = vperm.xlu0 %7153, %v7151
  %v7155 = vpop.permute.xlu0 %7154
  %7156 = vset.pattern.permute.xlu0 0
  %7157 = vperm.xlu0 %7156, %v7152
  %v7158 = vpop.permute.xlu0 %7157
  %vm7159 = vcmp.eq.s32.totalorder %v7155, 1
  %vm7160 = vcmp.eq.s32.totalorder %v7158, 1
  %v7161 = vsel %vm7159, %v7002, %v6857
  %v7162 = vsel %vm7160, %v7003, %v6858
  %v7163 = vsel %vm7159, %v6990, %v6859
  %v7164 = vsel %vm7160, %v6991, %v6860
  %v7165 = vsel %vm7159, %v7149, %v6861
  %v7166 = vsel %vm7160, %v7150, %v6862
  %v7167 = vsel %vm7159, %v7137, %v6863
  %v7168 = vsel %vm7160, %v7138, %v6864
  %vm7169 = vcmp.gt.s32.totalorder %v5950, 4
  %vm7170 = vcmp.gt.s32.totalorder %v5951, 4
  %v7171 = vld [vmem:[%s1821] sm:$0xff]
  %v7172 = vld [vmem:[%s1821 + $0x8] sm:$0xff]
  %7175 = vrot.lane.b32.xlu0 %v7161, 32
  %v7176 = vpop.permute.xlu0 %7175
  %7177 = vrot.lane.b32.xlu0 %v7162, 32
  %v7178 = vpop.permute.xlu0 %7177
  %v7179 = vsel %vm165, %v7176, 0
  %v7181 = vsel %vm165, %v7178, 0
  %7183 = vmatprep.subr.mxu0 0.0
  %7184 = vmatpush1.msra.mxu0 %v5952
  %7185 = vmatprep.subr.mxu0 0.0
  %7186 = vmatpush1.msra.mxu0 %v5953
  %7187 = vmatprep.subr.mxu0 0.0
  %7188 = vmatpush1.msra.mxu0 %v5954
  %7189 = vmatprep.subr.mxu0 0.0
  %7190 = vmatpush1.msra.mxu0 %v5955
  %7191 = vmatprep.subr.mxu0 0.0
  %7192 = vmatpush1.msra.mxu0 0.0
  %7193 = vmatprep.subr.mxu0 0.0
  %7194 = vmatpush1.msra.mxu0 0.0
  %7195 = vmatprep.subr.mxu0 0.0
  %7196 = vmatpush1.msra.mxu0 0.0
  %7197 = vmatprep.subr.mxu0 0.0
  %7198 = vmatpush1.msra.mxu0 0.0
  %7199 = vmatprep.subr.mxu0 0.0
  %7200 = vmatpush1.msra.mxu0 0.0
  %7201 = vmatprep.subr.mxu0 0.0
  %7202 = vmatpush1.msra.mxu0 0.0
  %7203 = vmatprep.subr.mxu0 0.0
  %7204 = vmatpush1.msra.mxu0 0.0
  %7205 = vmatprep.subr.mxu0 0.0
  %7206 = vmatpush1.msra.mxu0 0.0
  %7207 = vmatprep.subr.mxu0 0.0
  %7208 = vmatpush1.msra.mxu0 0.0
  %7209 = vmatprep.subr.mxu0 0.0
  %7210 = vmatpush1.msra.mxu0 0.0
  %7211 = vmatprep.subr.mxu0 0.0
  %7212 = vmatpush1.msra.mxu0 0.0
  %7213 = vmatprep.subr.mxu0 0.0
  %7214 = vmatpush1.msra.mxu0 0.0
  %7215 = vmatprep.subr.mxu0 0.0
  %7216 = vmatpush1.msra.mxu0 0.0
  %7217 = vmatprep.subr.mxu0 0.0
  %7218 = vmatpush1.msra.mxu0 0.0
  %7219 = vmatprep.subr.mxu0 0.0
  %7220 = vmatpush1.msra.mxu0 0.0
  %7221 = vmatprep.subr.mxu0 0.0
  %7222 = vmatpush1.msra.mxu0 0.0
  %7223 = vmatprep.subr.mxu0 0.0
  %7224 = vmatpush1.msra.mxu0 0.0
  %7225 = vmatprep.subr.mxu0 0.0
  %7226 = vmatpush1.msra.mxu0 0.0
  %7227 = vmatprep.subr.mxu0 0.0
  %7228 = vmatpush1.msra.mxu0 0.0
  %7229 = vmatprep.subr.mxu0 0.0
  %7230 = vmatpush1.msra.mxu0 0.0
  %7231 = vmatprep.subr.mxu0 0.0
  %7232 = vmatpush1.msra.mxu0 0.0
  %7233 = vmatprep.subr.mxu0 0.0
  %7234 = vmatpush1.msra.mxu0 0.0
  %7235 = vmatprep.subr.mxu0 0.0
  %7236 = vmatpush1.msra.mxu0 0.0
  %7237 = vmatprep.subr.mxu0 0.0
  %7238 = vmatpush1.msra.mxu0 0.0
  %7239 = vmatprep.subr.mxu0 0.0
  %7240 = vmatpush1.msra.mxu0 0.0
  %7241 = vmatprep.subr.mxu0 0.0
  %7242 = vmatpush1.msra.mxu0 0.0
  %7243 = vmatprep.subr.mxu0 0.0
  %7244 = vmatpush1.msra.mxu0 0.0
  %7245 = vmatprep.subr.mxu0 0.0
  %7246 = vmatpush1.msra.mxu0 0.0
  %7247 = vmatprep.mubr.f32.mxu0 0.0
  %7248 = vmatmul.mubr.f32.gmra.mrb[0].mxu0 %v7179
  %v7249 = vpop.f32.mrb[0].mxu0
  %v7250 = vadd.f32 0.0, %v7249
  %v7251 = vpop.f32.mrb[0].mxu0
  %7252 = vmatprep.mubr.f32.mxu0 0.0
  %7253 = vmatmul.mubr.f32.gmra.mrb[0].mxu0 %v7181
  %v7254 = vpop.f32.mrb[0].mxu0
  %v7255 = vadd.f32 0.0, %v7254
  %v7256 = vpop.f32.mrb[0].mxu0
  %7257 = vdwg.mxu0
  %v7258 = vadd.f32 %v7171, %v7250
  %v7259 = vadd.f32 %v7172, %v7255
  %v7260 = vxor.u32 %v7258, 2147483648
  %v7261 = vxor.u32 %v7259, 2147483648
  %v7262 = vmul.f32 %v7260, 1.442695
  %v7263 = vpow.pop %v7262
  %v7264 = vmul.f32 %v7261, 1.442695
  %v7265 = vpow.pop %v7264
  %v7266 = vadd.f32 %v7263, 1.0
  %v7267 = vadd.f32 %v7265, 1.0
  %v7268 = vrcp.pop %v7266
  %v7269 = vmul.f32 1.0, %v7268
  %v7270 = vrcp.pop %v7267
  %v7271 = vmul.f32 1.0, %v7270
  %v7272 = vtanh.pop %v7258
  %v7273 = vtanh.pop %v7259
  %v7274 = vmul.f32 %v7269, %v7163
  %v7275 = vmul.f32 %v7271, %v7164
  %7278 = vrot.lane.b32.xlu0 %v7272, 64
  %v7279 = vpop.permute.xlu0 %7278
  %7280 = vrot.lane.b32.xlu0 %v7273, 64
  %v7281 = vpop.permute.xlu0 %7280
  %v7284 = vmul.f32 %v7269, %v7279
  %v7285 = vmul.f32 %v7271, %v7281
  %7288 = vrot.lane.b32.xlu0 %v7284, 32
  %v7289 = vpop.permute.xlu0 %7288
  %7290 = vrot.lane.b32.xlu0 %v7285, 32
  %v7291 = vpop.permute.xlu0 %7290
  %v7294 = vadd.f32 %v7274, %v7289
  %v7295 = vadd.f32 %v7275, %v7291
  %v7296 = vtanh.pop %v7294
  %v7297 = vtanh.pop %v7295
  %7300 = vrot.lane.b32.xlu0 %v7296, 64
  %v7301 = vpop.permute.xlu0 %7300
  %7302 = vrot.lane.b32.xlu0 %v7297, 64
  %v7303 = vpop.permute.xlu0 %7302
  %v7306 = vmul.f32 %v7269, %v7301
  %v7307 = vmul.f32 %v7271, %v7303
  %7310 = vrot.lane.b32.xlu0 %v7306, 32
  %v7311 = vpop.permute.xlu0 %7310
  %7312 = vrot.lane.b32.xlu0 %v7307, 32
  %v7313 = vpop.permute.xlu0 %7312
  %7318 = vrot.lane.b32.xlu0 %v7165, 64
  %v7319 = vpop.permute.xlu0 %7318
  %7320 = vrot.lane.b32.xlu0 %v7166, 64
  %v7321 = vpop.permute.xlu0 %7320
  %v7324 = vsel %vm165, %v7311, %v7319
  %v7325 = vsel %vm165, %v7313, %v7321
  %v7327 = vsel %vm87, %v7324, 0
  %v7330 = vsel %vm87, %v7325, 0
  %7332 = vmatprep.subr.mxu0 0.0
  %7333 = vmatpush1.msra.mxu0 %v5956
  %7334 = vmatprep.subr.mxu0 0.0
  %7335 = vmatpush1.msra.mxu0 %v5957
  %7336 = vmatprep.subr.mxu0 0.0
  %7337 = vmatpush1.msra.mxu0 %v5958
  %7338 = vmatprep.subr.mxu0 0.0
  %7339 = vmatpush1.msra.mxu0 %v5959
  %7340 = vmatprep.subr.mxu0 0.0
  %7341 = vmatpush1.msra.mxu0 %v5960
  %7342 = vmatprep.subr.mxu0 0.0
  %7343 = vmatpush1.msra.mxu0 %v5961
  %7344 = vmatprep.subr.mxu0 0.0
  %7345 = vmatpush1.msra.mxu0 %v5962
  %7346 = vmatprep.subr.mxu0 0.0
  %7347 = vmatpush1.msra.mxu0 %v5963
  %7348 = vmatprep.subr.mxu0 0.0
  %7349 = vmatpush1.msra.mxu0 0.0
  %7350 = vmatprep.subr.mxu0 0.0
  %7351 = vmatpush1.msra.mxu0 0.0
  %7352 = vmatprep.subr.mxu0 0.0
  %7353 = vmatpush1.msra.mxu0 0.0
  %7354 = vmatprep.subr.mxu0 0.0
  %7355 = vmatpush1.msra.mxu0 0.0
  %7356 = vmatprep.subr.mxu0 0.0
  %7357 = vmatpush1.msra.mxu0 0.0
  %7358 = vmatprep.subr.mxu0 0.0
  %7359 = vmatpush1.msra.mxu0 0.0
  %7360 = vmatprep.subr.mxu0 0.0
  %7361 = vmatpush1.msra.mxu0 0.0
  %7362 = vmatprep.subr.mxu0 0.0
  %7363 = vmatpush1.msra.mxu0 0.0
  %7364 = vmatprep.subr.mxu0 0.0
  %7365 = vmatpush1.msra.mxu0 0.0
  %7366 = vmatprep.subr.mxu0 0.0
  %7367 = vmatpush1.msra.mxu0 0.0
  %7368 = vmatprep.subr.mxu0 0.0
  %7369 = vmatpush1.msra.mxu0 0.0
  %7370 = vmatprep.subr.mxu0 0.0
  %7371 = vmatpush1.msra.mxu0 0.0
  %7372 = vmatprep.subr.mxu0 0.0
  %7373 = vmatpush1.msra.mxu0 0.0
  %7374 = vmatprep.subr.mxu0 0.0
  %7375 = vmatpush1.msra.mxu0 0.0
  %7376 = vmatprep.subr.mxu0 0.0
  %7377 = vmatpush1.msra.mxu0 0.0
  %7378 = vmatprep.subr.mxu0 0.0
  %7379 = vmatpush1.msra.mxu0 0.0
  %7380 = vmatprep.subr.mxu0 0.0
  %7381 = vmatpush1.msra.mxu0 0.0
  %7382 = vmatprep.subr.mxu0 0.0
  %7383 = vmatpush1.msra.mxu0 0.0
  %7384 = vmatprep.subr.mxu0 0.0
  %7385 = vmatpush1.msra.mxu0 0.0
  %7386 = vmatprep.subr.mxu0 0.0
  %7387 = vmatpush1.msra.mxu0 0.0
  %7388 = vmatprep.subr.mxu0 0.0
  %7389 = vmatpush1.msra.mxu0 0.0
  %7390 = vmatprep.subr.mxu0 0.0
  %7391 = vmatpush1.msra.mxu0 0.0
  %7392 = vmatprep.subr.mxu0 0.0
  %7393 = vmatpush1.msra.mxu0 0.0
  %7394 = vmatprep.subr.mxu0 0.0
  %7395 = vmatpush1.msra.mxu0 0.0
  %7396 = vmatprep.mubr.f32.mxu0 0.0
  %7397 = vmatmul.mubr.f32.gmra.mrb[0].mxu0 %v7327
  %v7398 = vpop.f32.mrb[0].mxu0
  %v7399 = vadd.f32 %v6108, %v7398
  %v7400 = vpop.f32.mrb[0].mxu0
  %7401 = vmatprep.mubr.f32.mxu0 0.0
  %7402 = vmatmul.mubr.f32.gmra.mrb[0].mxu0 %v7330
  %v7403 = vpop.f32.mrb[0].mxu0
  %v7404 = vadd.f32 %v6108, %v7403
  %v7405 = vpop.f32.mrb[0].mxu0
  %7406 = vdwg.mxu0
  %v7407 = vxor.u32 %v7399, 2147483648
  %v7408 = vxor.u32 %v7404, 2147483648
  %v7409 = vmul.f32 %v7407, 1.442695
  %v7410 = vpow.pop %v7409
  %v7411 = vmul.f32 %v7408, 1.442695
  %v7412 = vpow.pop %v7411
  %v7413 = vadd.f32 %v7410, 1.0
  %v7414 = vadd.f32 %v7412, 1.0
  %v7415 = vrcp.pop %v7413
  %v7416 = vmul.f32 1.0, %v7415
  %v7417 = vrcp.pop %v7414
  %v7418 = vmul.f32 1.0, %v7417
  %v7419 = vtanh.pop %v7399
  %v7420 = vtanh.pop %v7404
  %v7421 = vmul.f32 %v7416, %v7167
  %v7422 = vmul.f32 %v7418, %v7168
  %7425 = vrot.lane.b32.xlu0 %v7419, 64
  %v7426 = vpop.permute.xlu0 %7425
  %7427 = vrot.lane.b32.xlu0 %v7420, 64
  %v7428 = vpop.permute.xlu0 %7427
  %v7431 = vmul.f32 %v7416, %v7426
  %v7432 = vmul.f32 %v7418, %v7428
  %7435 = vrot.lane.b32.xlu0 %v7431, 32
  %v7436 = vpop.permute.xlu0 %7435
  %7437 = vrot.lane.b32.xlu0 %v7432, 32
  %v7438 = vpop.permute.xlu0 %7437
  %v7441 = vadd.f32 %v7421, %v7436
  %v7442 = vadd.f32 %v7422, %v7438
  %v7443 = vtanh.pop %v7441
  %v7444 = vtanh.pop %v7442
  %7447 = vrot.lane.b32.xlu0 %v7443, 64
  %v7448 = vpop.permute.xlu0 %7447
  %7449 = vrot.lane.b32.xlu0 %v7444, 64
  %v7450 = vpop.permute.xlu0 %7449
  %v7453 = vmul.f32 %v7416, %v7448
  %v7454 = vmul.f32 %v7418, %v7450
  %v7455 = vsel %vm7169, 1, 0
  %v7456 = vsel %vm7170, 1, 0
  %7457 = vset.pattern.permute.xlu0 0
  %7458 = vperm.xlu0 %7457, %v7455
  %v7459 = vpop.permute.xlu0 %7458
  %7460 = vset.pattern.permute.xlu0 0
  %7461 = vperm.xlu0 %7460, %v7456
  %v7462 = vpop.permute.xlu0 %7461
  %vm7463 = vcmp.eq.s32.totalorder %v7459, 1
  %vm7464 = vcmp.eq.s32.totalorder %v7462, 1
  %v7465 = vsel %vm7463, %v7306, %v7161
  %v7466 = vsel %vm7464, %v7307, %v7162
  %v7467 = vsel %vm7463, %v7294, %v7163
  %v7468 = vsel %vm7464, %v7295, %v7164
  %v7469 = vsel %vm7463, %v7453, %v7165
  %v7470 = vsel %vm7464, %v7454, %v7166
  %v7471 = vsel %vm7463, %v7441, %v7167
  %v7472 = vsel %vm7464, %v7442, %v7168
  %vm7473 = vcmp.gt.s32.totalorder %v5950, 5
  %vm7474 = vcmp.gt.s32.totalorder %v5951, 5
  %v7475 = vld [vmem:[%s1908] sm:$0xff]
  %v7476 = vld [vmem:[%s1908 + $0x8] sm:$0xff]
  %7479 = vrot.lane.b32.xlu0 %v7465, 32
  %v7480 = vpop.permute.xlu0 %7479
  %7481 = vrot.lane.b32.xlu0 %v7466, 32
  %v7482 = vpop.permute.xlu0 %7481
  %v7483 = vsel %vm165, %v7480, 0
  %v7485 = vsel %vm165, %v7482, 0
  %7487 = vmatprep.subr.mxu0 0.0
  %7488 = vmatpush1.msra.mxu0 %v5952
  %7489 = vmatprep.subr.mxu0 0.0
  %7490 = vmatpush1.msra.mxu0 %v5953
  %7491 = vmatprep.subr.mxu0 0.0
  %7492 = vmatpush1.msra.mxu0 %v5954
  %7493 = vmatprep.subr.mxu0 0.0
  %7494 = vmatpush1.msra.mxu0 %v5955
  %7495 = vmatprep.subr.mxu0 0.0
  %7496 = vmatpush1.msra.mxu0 0.0
  %7497 = vmatprep.subr.mxu0 0.0
  %7498 = vmatpush1.msra.mxu0 0.0
  %7499 = vmatprep.subr.mxu0 0.0
  %7500 = vmatpush1.msra.mxu0 0.0
  %7501 = vmatprep.subr.mxu0 0.0
  %7502 = vmatpush1.msra.mxu0 0.0
  %7503 = vmatprep.subr.mxu0 0.0
  %7504 = vmatpush1.msra.mxu0 0.0
  %7505 = vmatprep.subr.mxu0 0.0
  %7506 = vmatpush1.msra.mxu0 0.0
  %7507 = vmatprep.subr.mxu0 0.0
  %7508 = vmatpush1.msra.mxu0 0.0
  %7509 = vmatprep.subr.mxu0 0.0
  %7510 = vmatpush1.msra.mxu0 0.0
  %7511 = vmatprep.subr.mxu0 0.0
  %7512 = vmatpush1.msra.mxu0 0.0
  %7513 = vmatprep.subr.mxu0 0.0
  %7514 = vmatpush1.msra.mxu0 0.0
  %7515 = vmatprep.subr.mxu0 0.0
  %7516 = vmatpush1.msra.mxu0 0.0
  %7517 = vmatprep.subr.mxu0 0.0
  %7518 = vmatpush1.msra.mxu0 0.0
  %7519 = vmatprep.subr.mxu0 0.0
  %7520 = vmatpush1.msra.mxu0 0.0
  %7521 = vmatprep.subr.mxu0 0.0
  %7522 = vmatpush1.msra.mxu0 0.0
  %7523 = vmatprep.subr.mxu0 0.0
  %7524 = vmatpush1.msra.mxu0 0.0
  %7525 = vmatprep.subr.mxu0 0.0
  %7526 = vmatpush1.msra.mxu0 0.0
  %7527 = vmatprep.subr.mxu0 0.0
  %7528 = vmatpush1.msra.mxu0 0.0
  %7529 = vmatprep.subr.mxu0 0.0
  %7530 = vmatpush1.msra.mxu0 0.0
  %7531 = vmatprep.subr.mxu0 0.0
  %7532 = vmatpush1.msra.mxu0 0.0
  %7533 = vmatprep.subr.mxu0 0.0
  %7534 = vmatpush1.msra.mxu0 0.0
  %7535 = vmatprep.subr.mxu0 0.0
  %7536 = vmatpush1.msra.mxu0 0.0
  %7537 = vmatprep.subr.mxu0 0.0
  %7538 = vmatpush1.msra.mxu0 0.0
  %7539 = vmatprep.subr.mxu0 0.0
  %7540 = vmatpush1.msra.mxu0 0.0
  %7541 = vmatprep.subr.mxu0 0.0
  %7542 = vmatpush1.msra.mxu0 0.0
  %7543 = vmatprep.subr.mxu0 0.0
  %7544 = vmatpush1.msra.mxu0 0.0
  %7545 = vmatprep.subr.mxu0 0.0
  %7546 = vmatpush1.msra.mxu0 0.0
  %7547 = vmatprep.subr.mxu0 0.0
  %7548 = vmatpush1.msra.mxu0 0.0
  %7549 = vmatprep.subr.mxu0 0.0
  %7550 = vmatpush1.msra.mxu0 0.0
  %7551 = vmatprep.mubr.f32.mxu0 0.0
  %7552 = vmatmul.mubr.f32.gmra.mrb[0].mxu0 %v7483
  %v7553 = vpop.f32.mrb[0].mxu0
  %v7554 = vadd.f32 0.0, %v7553
  %v7555 = vpop.f32.mrb[0].mxu0
  %7556 = vmatprep.mubr.f32.mxu0 0.0
  %7557 = vmatmul.mubr.f32.gmra.mrb[0].mxu0 %v7485
  %v7558 = vpop.f32.mrb[0].mxu0
  %v7559 = vadd.f32 0.0, %v7558
  %v7560 = vpop.f32.mrb[0].mxu0
  %7561 = vdwg.mxu0
  %v7562 = vadd.f32 %v7475, %v7554
  %v7563 = vadd.f32 %v7476, %v7559
  %v7564 = vxor.u32 %v7562, 2147483648
  %v7565 = vxor.u32 %v7563, 2147483648
  %v7566 = vmul.f32 %v7564, 1.442695
  %v7567 = vpow.pop %v7566
  %v7568 = vmul.f32 %v7565, 1.442695
  %v7569 = vpow.pop %v7568
  %v7570 = vadd.f32 %v7567, 1.0
  %v7571 = vadd.f32 %v7569, 1.0
  %v7572 = vrcp.pop %v7570
  %v7573 = vmul.f32 1.0, %v7572
  %v7574 = vrcp.pop %v7571
  %v7575 = vmul.f32 1.0, %v7574
  %v7576 = vtanh.pop %v7562
  %v7577 = vtanh.pop %v7563
  %v7578 = vmul.f32 %v7573, %v7467
  %v7579 = vmul.f32 %v7575, %v7468
  %7582 = vrot.lane.b32.xlu0 %v7576, 64
  %v7583 = vpop.permute.xlu0 %7582
  %7584 = vrot.lane.b32.xlu0 %v7577, 64
  %v7585 = vpop.permute.xlu0 %7584
  %v7588 = vmul.f32 %v7573, %v7583
  %v7589 = vmul.f32 %v7575, %v7585
  %7592 = vrot.lane.b32.xlu0 %v7588, 32
  %v7593 = vpop.permute.xlu0 %7592
  %7594 = vrot.lane.b32.xlu0 %v7589, 32
  %v7595 = vpop.permute.xlu0 %7594
  %v7598 = vadd.f32 %v7578, %v7593
  %v7599 = vadd.f32 %v7579, %v7595
  %v7600 = vtanh.pop %v7598
  %v7601 = vtanh.pop %v7599
  %7604 = vrot.lane.b32.xlu0 %v7600, 64
  %v7605 = vpop.permute.xlu0 %7604
  %7606 = vrot.lane.b32.xlu0 %v7601, 64
  %v7607 = vpop.permute.xlu0 %7606
  %v7610 = vmul.f32 %v7573, %v7605
  %v7611 = vmul.f32 %v7575, %v7607
  %7614 = vrot.lane.b32.xlu0 %v7610, 32
  %v7615 = vpop.permute.xlu0 %7614
  %7616 = vrot.lane.b32.xlu0 %v7611, 32
  %v7617 = vpop.permute.xlu0 %7616
  %7622 = vrot.lane.b32.xlu0 %v7469, 64
  %v7623 = vpop.permute.xlu0 %7622
  %7624 = vrot.lane.b32.xlu0 %v7470, 64
  %v7625 = vpop.permute.xlu0 %7624
  %v7628 = vsel %vm165, %v7615, %v7623
  %v7629 = vsel %vm165, %v7617, %v7625
  %v7631 = vsel %vm87, %v7628, 0
  %v7634 = vsel %vm87, %v7629, 0
  %7636 = vmatprep.subr.mxu0 0.0
  %7637 = vmatpush1.msra.mxu0 %v5956
  %7638 = vmatprep.subr.mxu0 0.0
  %7639 = vmatpush1.msra.mxu0 %v5957
  %7640 = vmatprep.subr.mxu0 0.0
  %7641 = vmatpush1.msra.mxu0 %v5958
  %7642 = vmatprep.subr.mxu0 0.0
  %7643 = vmatpush1.msra.mxu0 %v5959
  %7644 = vmatprep.subr.mxu0 0.0
  %7645 = vmatpush1.msra.mxu0 %v5960
  %7646 = vmatprep.subr.mxu0 0.0
  %7647 = vmatpush1.msra.mxu0 %v5961
  %7648 = vmatprep.subr.mxu0 0.0
  %7649 = vmatpush1.msra.mxu0 %v5962
  %7650 = vmatprep.subr.mxu0 0.0
  %7651 = vmatpush1.msra.mxu0 %v5963
  %7652 = vmatprep.subr.mxu0 0.0
  %7653 = vmatpush1.msra.mxu0 0.0
  %7654 = vmatprep.subr.mxu0 0.0
  %7655 = vmatpush1.msra.mxu0 0.0
  %7656 = vmatprep.subr.mxu0 0.0
  %7657 = vmatpush1.msra.mxu0 0.0
  %7658 = vmatprep.subr.mxu0 0.0
  %7659 = vmatpush1.msra.mxu0 0.0
  %7660 = vmatprep.subr.mxu0 0.0
  %7661 = vmatpush1.msra.mxu0 0.0
  %7662 = vmatprep.subr.mxu0 0.0
  %7663 = vmatpush1.msra.mxu0 0.0
  %7664 = vmatprep.subr.mxu0 0.0
  %7665 = vmatpush1.msra.mxu0 0.0
  %7666 = vmatprep.subr.mxu0 0.0
  %7667 = vmatpush1.msra.mxu0 0.0
  %7668 = vmatprep.subr.mxu0 0.0
  %7669 = vmatpush1.msra.mxu0 0.0
  %7670 = vmatprep.subr.mxu0 0.0
  %7671 = vmatpush1.msra.mxu0 0.0
  %7672 = vmatprep.subr.mxu0 0.0
  %7673 = vmatpush1.msra.mxu0 0.0
  %7674 = vmatprep.subr.mxu0 0.0
  %7675 = vmatpush1.msra.mxu0 0.0
  %7676 = vmatprep.subr.mxu0 0.0
  %7677 = vmatpush1.msra.mxu0 0.0
  %7678 = vmatprep.subr.mxu0 0.0
  %7679 = vmatpush1.msra.mxu0 0.0
  %7680 = vmatprep.subr.mxu0 0.0
  %7681 = vmatpush1.msra.mxu0 0.0
  %7682 = vmatprep.subr.mxu0 0.0
  %7683 = vmatpush1.msra.mxu0 0.0
  %7684 = vmatprep.subr.mxu0 0.0
  %7685 = vmatpush1.msra.mxu0 0.0
  %7686 = vmatprep.subr.mxu0 0.0
  %7687 = vmatpush1.msra.mxu0 0.0
  %7688 = vmatprep.subr.mxu0 0.0
  %7689 = vmatpush1.msra.mxu0 0.0
  %7690 = vmatprep.subr.mxu0 0.0
  %7691 = vmatpush1.msra.mxu0 0.0
  %7692 = vmatprep.subr.mxu0 0.0
  %7693 = vmatpush1.msra.mxu0 0.0
  %7694 = vmatprep.subr.mxu0 0.0
  %7695 = vmatpush1.msra.mxu0 0.0
  %7696 = vmatprep.subr.mxu0 0.0
  %7697 = vmatpush1.msra.mxu0 0.0
  %7698 = vmatprep.subr.mxu0 0.0
  %7699 = vmatpush1.msra.mxu0 0.0
  %7700 = vmatprep.mubr.f32.mxu0 0.0
  %7701 = vmatmul.mubr.f32.gmra.mrb[0].mxu0 %v7631
  %v7702 = vpop.f32.mrb[0].mxu0
  %v7703 = vadd.f32 %v6108, %v7702
  %v7704 = vpop.f32.mrb[0].mxu0
  %7705 = vmatprep.mubr.f32.mxu0 0.0
  %7706 = vmatmul.mubr.f32.gmra.mrb[0].mxu0 %v7634
  %v7707 = vpop.f32.mrb[0].mxu0
  %v7708 = vadd.f32 %v6108, %v7707
  %v7709 = vpop.f32.mrb[0].mxu0
  %7710 = vdwg.mxu0
  %v7711 = vxor.u32 %v7703, 2147483648
  %v7712 = vxor.u32 %v7708, 2147483648
  %v7713 = vmul.f32 %v7711, 1.442695
  %v7714 = vpow.pop %v7713
  %v7715 = vmul.f32 %v7712, 1.442695
  %v7716 = vpow.pop %v7715
  %v7717 = vadd.f32 %v7714, 1.0
  %v7718 = vadd.f32 %v7716, 1.0
  %v7719 = vrcp.pop %v7717
  %v7720 = vmul.f32 1.0, %v7719
  %v7721 = vrcp.pop %v7718
  %v7722 = vmul.f32 1.0, %v7721
  %v7723 = vtanh.pop %v7703
  %v7724 = vtanh.pop %v7708
  %v7725 = vmul.f32 %v7720, %v7471
  %v7726 = vmul.f32 %v7722, %v7472
  %7729 = vrot.lane.b32.xlu0 %v7723, 64
  %v7730 = vpop.permute.xlu0 %7729
  %7731 = vrot.lane.b32.xlu0 %v7724, 64
  %v7732 = vpop.permute.xlu0 %7731
  %v7735 = vmul.f32 %v7720, %v7730
  %v7736 = vmul.f32 %v7722, %v7732
  %7739 = vrot.lane.b32.xlu0 %v7735, 32
  %v7740 = vpop.permute.xlu0 %7739
  %7741 = vrot.lane.b32.xlu0 %v7736, 32
  %v7742 = vpop.permute.xlu0 %7741
  %v7745 = vadd.f32 %v7725, %v7740
  %v7746 = vadd.f32 %v7726, %v7742
  %v7747 = vtanh.pop %v7745
  %v7748 = vtanh.pop %v7746
  %7751 = vrot.lane.b32.xlu0 %v7747, 64
  %v7752 = vpop.permute.xlu0 %7751
  %7753 = vrot.lane.b32.xlu0 %v7748, 64
  %v7754 = vpop.permute.xlu0 %7753
  %v7757 = vmul.f32 %v7720, %v7752
  %v7758 = vmul.f32 %v7722, %v7754
  %v7759 = vsel %vm7473, 1, 0
  %v7760 = vsel %vm7474, 1, 0
  %7761 = vset.pattern.permute.xlu0 0
  %7762 = vperm.xlu0 %7761, %v7759
  %v7763 = vpop.permute.xlu0 %7762
  %7764 = vset.pattern.permute.xlu0 0
  %7765 = vperm.xlu0 %7764, %v7760
  %v7766 = vpop.permute.xlu0 %7765
  %vm7767 = vcmp.eq.s32.totalorder %v7763, 1
  %vm7768 = vcmp.eq.s32.totalorder %v7766, 1
  %v7769 = vsel %vm7767, %v7610, %v7465
  %v7770 = vsel %vm7768, %v7611, %v7466
  %v7771 = vsel %vm7767, %v7598, %v7467
  %v7772 = vsel %vm7768, %v7599, %v7468
  %v7773 = vsel %vm7767, %v7757, %v7469
  %v7774 = vsel %vm7768, %v7758, %v7470
  %v7775 = vsel %vm7767, %v7745, %v7471
  %v7776 = vsel %vm7768, %v7746, %v7472
  %vm7777 = vcmp.gt.s32.totalorder %v5950, 6
  %vm7778 = vcmp.gt.s32.totalorder %v5951, 6
  %v7779 = vld [vmem:[%s1995] sm:$0xff]
  %v7780 = vld [vmem:[%s1995 + $0x8] sm:$0xff]
  %7783 = vrot.lane.b32.xlu0 %v7769, 32
  %v7784 = vpop.permute.xlu0 %7783
  %7785 = vrot.lane.b32.xlu0 %v7770, 32
  %v7786 = vpop.permute.xlu0 %7785
  %v7787 = vsel %vm165, %v7784, 0
  %v7789 = vsel %vm165, %v7786, 0
  %7791 = vmatprep.subr.mxu0 0.0
  %7792 = vmatpush1.msra.mxu0 %v5952
  %7793 = vmatprep.subr.mxu0 0.0
  %7794 = vmatpush1.msra.mxu0 %v5953
  %7795 = vmatprep.subr.mxu0 0.0
  %7796 = vmatpush1.msra.mxu0 %v5954
  %7797 = vmatprep.subr.mxu0 0.0
  %7798 = vmatpush1.msra.mxu0 %v5955
  %7799 = vmatprep.subr.mxu0 0.0
  %7800 = vmatpush1.msra.mxu0 0.0
  %7801 = vmatprep.subr.mxu0 0.0
  %7802 = vmatpush1.msra.mxu0 0.0
  %7803 = vmatprep.subr.mxu0 0.0
  %7804 = vmatpush1.msra.mxu0 0.0
  %7805 = vmatprep.subr.mxu0 0.0
  %7806 = vmatpush1.msra.mxu0 0.0
  %7807 = vmatprep.subr.mxu0 0.0
  %7808 = vmatpush1.msra.mxu0 0.0
  %7809 = vmatprep.subr.mxu0 0.0
  %7810 = vmatpush1.msra.mxu0 0.0
  %7811 = vmatprep.subr.mxu0 0.0
  %7812 = vmatpush1.msra.mxu0 0.0
  %7813 = vmatprep.subr.mxu0 0.0
  %7814 = vmatpush1.msra.mxu0 0.0
  %7815 = vmatprep.subr.mxu0 0.0
  %7816 = vmatpush1.msra.mxu0 0.0
  %7817 = vmatprep.subr.mxu0 0.0
  %7818 = vmatpush1.msra.mxu0 0.0
  %7819 = vmatprep.subr.mxu0 0.0
  %7820 = vmatpush1.msra.mxu0 0.0
  %7821 = vmatprep.subr.mxu0 0.0
  %7822 = vmatpush1.msra.mxu0 0.0
  %7823 = vmatprep.subr.mxu0 0.0
  %7824 = vmatpush1.msra.mxu0 0.0
  %7825 = vmatprep.subr.mxu0 0.0
  %7826 = vmatpush1.msra.mxu0 0.0
  %7827 = vmatprep.subr.mxu0 0.0
  %7828 = vmatpush1.msra.mxu0 0.0
  %7829 = vmatprep.subr.mxu0 0.0
  %7830 = vmatpush1.msra.mxu0 0.0
  %7831 = vmatprep.subr.mxu0 0.0
  %7832 = vmatpush1.msra.mxu0 0.0
  %7833 = vmatprep.subr.mxu0 0.0
  %7834 = vmatpush1.msra.mxu0 0.0
  %7835 = vmatprep.subr.mxu0 0.0
  %7836 = vmatpush1.msra.mxu0 0.0
  %7837 = vmatprep.subr.mxu0 0.0
  %7838 = vmatpush1.msra.mxu0 0.0
  %7839 = vmatprep.subr.mxu0 0.0
  %7840 = vmatpush1.msra.mxu0 0.0
  %7841 = vmatprep.subr.mxu0 0.0
  %7842 = vmatpush1.msra.mxu0 0.0
  %7843 = vmatprep.subr.mxu0 0.0
  %7844 = vmatpush1.msra.mxu0 0.0
  %7845 = vmatprep.subr.mxu0 0.0
  %7846 = vmatpush1.msra.mxu0 0.0
  %7847 = vmatprep.subr.mxu0 0.0
  %7848 = vmatpush1.msra.mxu0 0.0
  %7849 = vmatprep.subr.mxu0 0.0
  %7850 = vmatpush1.msra.mxu0 0.0
  %7851 = vmatprep.subr.mxu0 0.0
  %7852 = vmatpush1.msra.mxu0 0.0
  %7853 = vmatprep.subr.mxu0 0.0
  %7854 = vmatpush1.msra.mxu0 0.0
  %7855 = vmatprep.mubr.f32.mxu0 0.0
  %7856 = vmatmul.mubr.f32.gmra.mrb[0].mxu0 %v7787
  %v7857 = vpop.f32.mrb[0].mxu0
  %v7858 = vadd.f32 0.0, %v7857
  %v7859 = vpop.f32.mrb[0].mxu0
  %7860 = vmatprep.mubr.f32.mxu0 0.0
  %7861 = vmatmul.mubr.f32.gmra.mrb[0].mxu0 %v7789
  %v7862 = vpop.f32.mrb[0].mxu0
  %v7863 = vadd.f32 0.0, %v7862
  %v7864 = vpop.f32.mrb[0].mxu0
  %7865 = vdwg.mxu0
  %v7866 = vadd.f32 %v7779, %v7858
  %v7867 = vadd.f32 %v7780, %v7863
  %v7868 = vxor.u32 %v7866, 2147483648
  %v7869 = vxor.u32 %v7867, 2147483648
  %v7870 = vmul.f32 %v7868, 1.442695
  %v7871 = vpow.pop %v7870
  %v7872 = vmul.f32 %v7869, 1.442695
  %v7873 = vpow.pop %v7872
  %v7874 = vadd.f32 %v7871, 1.0
  %v7875 = vadd.f32 %v7873, 1.0
  %v7876 = vrcp.pop %v7874
  %v7877 = vmul.f32 1.0, %v7876
  %v7878 = vrcp.pop %v7875
  %v7879 = vmul.f32 1.0, %v7878
  %v7880 = vtanh.pop %v7866
  %v7881 = vtanh.pop %v7867
  %v7882 = vmul.f32 %v7877, %v7771
  %v7883 = vmul.f32 %v7879, %v7772
  %7886 = vrot.lane.b32.xlu0 %v7880, 64
  %v7887 = vpop.permute.xlu0 %7886
  %7888 = vrot.lane.b32.xlu0 %v7881, 64
  %v7889 = vpop.permute.xlu0 %7888
  %v7892 = vmul.f32 %v7877, %v7887
  %v7893 = vmul.f32 %v7879, %v7889
  %7896 = vrot.lane.b32.xlu0 %v7892, 32
  %v7897 = vpop.permute.xlu0 %7896
  %7898 = vrot.lane.b32.xlu0 %v7893, 32
  %v7899 = vpop.permute.xlu0 %7898
  %v7902 = vadd.f32 %v7882, %v7897
  %v7903 = vadd.f32 %v7883, %v7899
  %v7904 = vtanh.pop %v7902
  %v7905 = vtanh.pop %v7903
  %7908 = vrot.lane.b32.xlu0 %v7904, 64
  %v7909 = vpop.permute.xlu0 %7908
  %7910 = vrot.lane.b32.xlu0 %v7905, 64
  %v7911 = vpop.permute.xlu0 %7910
  %v7914 = vmul.f32 %v7877, %v7909
  %v7915 = vmul.f32 %v7879, %v7911
  %7918 = vrot.lane.b32.xlu0 %v7914, 32
  %v7919 = vpop.permute.xlu0 %7918
  %7920 = vrot.lane.b32.xlu0 %v7915, 32
  %v7921 = vpop.permute.xlu0 %7920
  %7926 = vrot.lane.b32.xlu0 %v7773, 64
  %v7927 = vpop.permute.xlu0 %7926
  %7928 = vrot.lane.b32.xlu0 %v7774, 64
  %v7929 = vpop.permute.xlu0 %7928
  %v7932 = vsel %vm165, %v7919, %v7927
  %v7933 = vsel %vm165, %v7921, %v7929
  %v7935 = vsel %vm87, %v7932, 0
  %v7938 = vsel %vm87, %v7933, 0
  %7940 = vmatprep.subr.mxu0 0.0
  %7941 = vmatpush1.msra.mxu0 %v5956
  %7942 = vmatprep.subr.mxu0 0.0
  %7943 = vmatpush1.msra.mxu0 %v5957
  %7944 = vmatprep.subr.mxu0 0.0
  %7945 = vmatpush1.msra.mxu0 %v5958
  %7946 = vmatprep.subr.mxu0 0.0
  %7947 = vmatpush1.msra.mxu0 %v5959
  %7948 = vmatprep.subr.mxu0 0.0
  %7949 = vmatpush1.msra.mxu0 %v5960
  %7950 = vmatprep.subr.mxu0 0.0
  %7951 = vmatpush1.msra.mxu0 %v5961
  %7952 = vmatprep.subr.mxu0 0.0
  %7953 = vmatpush1.msra.mxu0 %v5962
  %7954 = vmatprep.subr.mxu0 0.0
  %7955 = vmatpush1.msra.mxu0 %v5963
  %7956 = vmatprep.subr.mxu0 0.0
  %7957 = vmatpush1.msra.mxu0 0.0
  %7958 = vmatprep.subr.mxu0 0.0
  %7959 = vmatpush1.msra.mxu0 0.0
  %7960 = vmatprep.subr.mxu0 0.0
  %7961 = vmatpush1.msra.mxu0 0.0
  %7962 = vmatprep.subr.mxu0 0.0
  %7963 = vmatpush1.msra.mxu0 0.0
  %7964 = vmatprep.subr.mxu0 0.0
  %7965 = vmatpush1.msra.mxu0 0.0
  %7966 = vmatprep.subr.mxu0 0.0
  %7967 = vmatpush1.msra.mxu0 0.0
  %7968 = vmatprep.subr.mxu0 0.0
  %7969 = vmatpush1.msra.mxu0 0.0
  %7970 = vmatprep.subr.mxu0 0.0
  %7971 = vmatpush1.msra.mxu0 0.0
  %7972 = vmatprep.subr.mxu0 0.0
  %7973 = vmatpush1.msra.mxu0 0.0
  %7974 = vmatprep.subr.mxu0 0.0
  %7975 = vmatpush1.msra.mxu0 0.0
  %7976 = vmatprep.subr.mxu0 0.0
  %7977 = vmatpush1.msra.mxu0 0.0
  %7978 = vmatprep.subr.mxu0 0.0
  %7979 = vmatpush1.msra.mxu0 0.0
  %7980 = vmatprep.subr.mxu0 0.0
  %7981 = vmatpush1.msra.mxu0 0.0
  %7982 = vmatprep.subr.mxu0 0.0
  %7983 = vmatpush1.msra.mxu0 0.0
  %7984 = vmatprep.subr.mxu0 0.0
  %7985 = vmatpush1.msra.mxu0 0.0
  %7986 = vmatprep.subr.mxu0 0.0
  %7987 = vmatpush1.msra.mxu0 0.0
  %7988 = vmatprep.subr.mxu0 0.0
  %7989 = vmatpush1.msra.mxu0 0.0
  %7990 = vmatprep.subr.mxu0 0.0
  %7991 = vmatpush1.msra.mxu0 0.0
  %7992 = vmatprep.subr.mxu0 0.0
  %7993 = vmatpush1.msra.mxu0 0.0
  %7994 = vmatprep.subr.mxu0 0.0
  %7995 = vmatpush1.msra.mxu0 0.0
  %7996 = vmatprep.subr.mxu0 0.0
  %7997 = vmatpush1.msra.mxu0 0.0
  %7998 = vmatprep.subr.mxu0 0.0
  %7999 = vmatpush1.msra.mxu0 0.0
  %8000 = vmatprep.subr.mxu0 0.0
  %8001 = vmatpush1.msra.mxu0 0.0
  %8002 = vmatprep.subr.mxu0 0.0
  %8003 = vmatpush1.msra.mxu0 0.0
  %8004 = vmatprep.mubr.f32.mxu0 0.0
  %8005 = vmatmul.mubr.f32.gmra.mrb[0].mxu0 %v7935
  %v8006 = vpop.f32.mrb[0].mxu0
  %v8007 = vadd.f32 %v6108, %v8006
  %v8008 = vpop.f32.mrb[0].mxu0
  %8009 = vmatprep.mubr.f32.mxu0 0.0
  %8010 = vmatmul.mubr.f32.gmra.mrb[0].mxu0 %v7938
  %v8011 = vpop.f32.mrb[0].mxu0
  %v8012 = vadd.f32 %v6108, %v8011
  %v8013 = vpop.f32.mrb[0].mxu0
  %8014 = vdwg.mxu0
  %v8015 = vxor.u32 %v8007, 2147483648
  %v8016 = vxor.u32 %v8012, 2147483648
  %v8017 = vmul.f32 %v8015, 1.442695
  %v8018 = vpow.pop %v8017
  %v8019 = vmul.f32 %v8016, 1.442695
  %v8020 = vpow.pop %v8019
  %v8021 = vadd.f32 %v8018, 1.0
  %v8022 = vadd.f32 %v8020, 1.0
  %v8023 = vrcp.pop %v8021
  %v8024 = vmul.f32 1.0, %v8023
  %v8025 = vrcp.pop %v8022
  %v8026 = vmul.f32 1.0, %v8025
  %v8027 = vtanh.pop %v8007
  %v8028 = vtanh.pop %v8012
  %v8029 = vmul.f32 %v8024, %v7775
  %v8030 = vmul.f32 %v8026, %v7776
  %8033 = vrot.lane.b32.xlu0 %v8027, 64
  %v8034 = vpop.permute.xlu0 %8033
  %8035 = vrot.lane.b32.xlu0 %v8028, 64
  %v8036 = vpop.permute.xlu0 %8035
  %v8039 = vmul.f32 %v8024, %v8034
  %v8040 = vmul.f32 %v8026, %v8036
  %8043 = vrot.lane.b32.xlu0 %v8039, 32
  %v8044 = vpop.permute.xlu0 %8043
  %8045 = vrot.lane.b32.xlu0 %v8040, 32
  %v8046 = vpop.permute.xlu0 %8045
  %v8049 = vadd.f32 %v8029, %v8044
  %v8050 = vadd.f32 %v8030, %v8046
  %v8051 = vtanh.pop %v8049
  %v8052 = vtanh.pop %v8050
  %8055 = vrot.lane.b32.xlu0 %v8051, 64
  %v8056 = vpop.permute.xlu0 %8055
  %8057 = vrot.lane.b32.xlu0 %v8052, 64
  %v8058 = vpop.permute.xlu0 %8057
  %v8061 = vmul.f32 %v8024, %v8056
  %v8062 = vmul.f32 %v8026, %v8058
  %v8063 = vsel %vm7777, 1, 0
  %v8064 = vsel %vm7778, 1, 0
  %8065 = vset.pattern.permute.xlu0 0
  %8066 = vperm.xlu0 %8065, %v8063
  %v8067 = vpop.permute.xlu0 %8066
  %8068 = vset.pattern.permute.xlu0 0
  %8069 = vperm.xlu0 %8068, %v8064
  %v8070 = vpop.permute.xlu0 %8069
  %vm8071 = vcmp.eq.s32.totalorder %v8067, 1
  %vm8072 = vcmp.eq.s32.totalorder %v8070, 1
  %v8073 = vsel %vm8072, %v7915, %v7770
  %v8074 = vsel %vm8072, %v7903, %v7772
  %v8075 = vsel %vm8071, %v8061, %v7773
  %v8076 = vsel %vm8072, %v8062, %v7774
  %v8077 = vsel %vm8072, %v8050, %v7776
  %v8078 = vld [vmem:[%s18] sm:$0xff]
  %v8079 = vld [vmem:[%s18 + $0x8] sm:$0xff]
  %v8080 = vld [vmem:[%s18 + $0x10] sm:$0xff]
  %v8081 = vld [vmem:[%s18 + $0x18] sm:$0xff]
  %v8082 = vld [vmem:[%s19] sm:$0xff]
  %v8083 = vld [vmem:[%s19 + $0x8] sm:$0xff]
  %v8084 = vld [vmem:[%s19 + $0x10] sm:$0xff]
  %v8085 = vld [vmem:[%s19 + $0x18] sm:$0xff]
  %8088 = vrot.lane.b32.xlu0 %v8075, 32
  %v8089 = vpop.permute.xlu0 %8088
  %8090 = vrot.lane.b32.xlu0 %v8076, 32
  %v8091 = vpop.permute.xlu0 %8090
  %v8092 = vsel %vm165, %v8089, 0
  %v8094 = vsel %vm165, %v8091, 0
  %8096 = vmatprep.subr.mxu0 0.0
  %8097 = vmatpush1.msra.mxu0 %v8082
  %8098 = vmatprep.subr.mxu0 0.0
  %8099 = vmatpush1.msra.mxu0 %v8083
  %8100 = vmatprep.subr.mxu0 0.0
  %8101 = vmatpush1.msra.mxu0 %v8084
  %8102 = vmatprep.subr.mxu0 0.0
  %8103 = vmatpush1.msra.mxu0 %v8085
  %8104 = vmatprep.subr.mxu0 0.0
  %8105 = vmatpush1.msra.mxu0 0.0
  %8106 = vmatprep.subr.mxu0 0.0
  %8107 = vmatpush1.msra.mxu0 0.0
  %8108 = vmatprep.subr.mxu0 0.0
  %8109 = vmatpush1.msra.mxu0 0.0
  %8110 = vmatprep.subr.mxu0 0.0
  %8111 = vmatpush1.msra.mxu0 0.0
  %8112 = vmatprep.subr.mxu0 0.0
  %8113 = vmatpush1.msra.mxu0 0.0
  %8114 = vmatprep.subr.mxu0 0.0
  %8115 = vmatpush1.msra.mxu0 0.0
  %8116 = vmatprep.subr.mxu0 0.0
  %8117 = vmatpush1.msra.mxu0 0.0
  %8118 = vmatprep.subr.mxu0 0.0
  %8119 = vmatpush1.msra.mxu0 0.0
  %8120 = vmatprep.subr.mxu0 0.0
  %8121 = vmatpush1.msra.mxu0 0.0
  %8122 = vmatprep.subr.mxu0 0.0
  %8123 = vmatpush1.msra.mxu0 0.0
  %8124 = vmatprep.subr.mxu0 0.0
  %8125 = vmatpush1.msra.mxu0 0.0
  %8126 = vmatprep.subr.mxu0 0.0
  %8127 = vmatpush1.msra.mxu0 0.0
  %8128 = vmatprep.subr.mxu0 0.0
  %8129 = vmatpush1.msra.mxu0 0.0
  %8130 = vmatprep.subr.mxu0 0.0
  %8131 = vmatpush1.msra.mxu0 0.0
  %8132 = vmatprep.subr.mxu0 0.0
  %8133 = vmatpush1.msra.mxu0 0.0
  %8134 = vmatprep.subr.mxu0 0.0
  %8135 = vmatpush1.msra.mxu0 0.0
  %8136 = vmatprep.subr.mxu0 0.0
  %8137 = vmatpush1.msra.mxu0 0.0
  %8138 = vmatprep.subr.mxu0 0.0
  %8139 = vmatpush1.msra.mxu0 0.0
  %8140 = vmatprep.subr.mxu0 0.0
  %8141 = vmatpush1.msra.mxu0 0.0
  %8142 = vmatprep.subr.mxu0 0.0
  %8143 = vmatpush1.msra.mxu0 0.0
  %8144 = vmatprep.subr.mxu0 0.0
  %8145 = vmatpush1.msra.mxu0 0.0
  %8146 = vmatprep.subr.mxu0 0.0
  %8147 = vmatpush1.msra.mxu0 0.0
  %8148 = vmatprep.subr.mxu0 0.0
  %8149 = vmatpush1.msra.mxu0 0.0
  %8150 = vmatprep.subr.mxu0 0.0
  %8151 = vmatpush1.msra.mxu0 0.0
  %8152 = vmatprep.subr.mxu0 0.0
  %8153 = vmatpush1.msra.mxu0 0.0
  %8154 = vmatprep.subr.mxu0 0.0
  %8155 = vmatpush1.msra.mxu0 0.0
  %8156 = vmatprep.subr.mxu0 0.0
  %8157 = vmatpush1.msra.mxu0 0.0
  %8158 = vmatprep.subr.mxu0 0.0
  %8159 = vmatpush1.msra.mxu0 0.0
  %8160 = vmatprep.mubr.f32.mxu0 0.0
  %8161 = vmatmul.mubr.f32.gmra.mrb[0].mxu0 %v8092
  %v8162 = vpop.f32.mrb[0].mxu0
  %v8163 = vadd.f32 0.0, %v8162
  %v8164 = vpop.f32.mrb[0].mxu0
  %8165 = vmatprep.mubr.f32.mxu0 0.0
  %8166 = vmatmul.mubr.f32.gmra.mrb[0].mxu0 %v8094
  %v8167 = vpop.f32.mrb[0].mxu0
  %v8168 = vadd.f32 0.0, %v8167
  %v8169 = vpop.f32.mrb[0].mxu0
  %8170 = vdwg.mxu0
  %8173 = vrot.lane.b32.xlu0 %v5948, 32
  %v8174 = vpop.permute.xlu0 %8173
  %8175 = vrot.lane.b32.xlu0 %v5949, 32
  %v8176 = vpop.permute.xlu0 %8175
  %v8177 = vsel %vm165, %v8174, 0
  %v8179 = vsel %vm165, %v8176, 0
  %8181 = vmatprep.subr.mxu0 0.0
  %8182 = vmatpush1.msra.mxu0 %v8078
  %8183 = vmatprep.subr.mxu0 0.0
  %8184 = vmatpush1.msra.mxu0 %v8079
  %8185 = vmatprep.subr.mxu0 0.0
  %8186 = vmatpush1.msra.mxu0 %v8080
  %8187 = vmatprep.subr.mxu0 0.0
  %8188 = vmatpush1.msra.mxu0 %v8081
  %8189 = vmatprep.subr.mxu0 0.0
  %8190 = vmatpush1.msra.mxu0 0.0
  %8191 = vmatprep.subr.mxu0 0.0
  %8192 = vmatpush1.msra.mxu0 0.0
  %8193 = vmatprep.subr.mxu0 0.0
  %8194 = vmatpush1.msra.mxu0 0.0
  %8195 = vmatprep.subr.mxu0 0.0
  %8196 = vmatpush1.msra.mxu0 0.0
  %8197 = vmatprep.subr.mxu0 0.0
  %8198 = vmatpush1.msra.mxu0 0.0
  %8199 = vmatprep.subr.mxu0 0.0
  %8200 = vmatpush1.msra.mxu0 0.0
  %8201 = vmatprep.subr.mxu0 0.0
  %8202 = vmatpush1.msra.mxu0 0.0
  %8203 = vmatprep.subr.mxu0 0.0
  %8204 = vmatpush1.msra.mxu0 0.0
  %8205 = vmatprep.subr.mxu0 0.0
  %8206 = vmatpush1.msra.mxu0 0.0
  %8207 = vmatprep.subr.mxu0 0.0
  %8208 = vmatpush1.msra.mxu0 0.0
  %8209 = vmatprep.subr.mxu0 0.0
  %8210 = vmatpush1.msra.mxu0 0.0
  %8211 = vmatprep.subr.mxu0 0.0
  %8212 = vmatpush1.msra.mxu0 0.0
  %8213 = vmatprep.subr.mxu0 0.0
  %8214 = vmatpush1.msra.mxu0 0.0
  %8215 = vmatprep.subr.mxu0 0.0
  %8216 = vmatpush1.msra.mxu0 0.0
  %8217 = vmatprep.subr.mxu0 0.0
  %8218 = vmatpush1.msra.mxu0 0.0
  %8219 = vmatprep.subr.mxu0 0.0
  %8220 = vmatpush1.msra.mxu0 0.0
  %8221 = vmatprep.subr.mxu0 0.0
  %8222 = vmatpush1.msra.mxu0 0.0
  %8223 = vmatprep.subr.mxu0 0.0
  %8224 = vmatpush1.msra.mxu0 0.0
  %8225 = vmatprep.subr.mxu0 0.0
  %8226 = vmatpush1.msra.mxu0 0.0
  %8227 = vmatprep.subr.mxu0 0.0
  %8228 = vmatpush1.msra.mxu0 0.0
  %8229 = vmatprep.subr.mxu0 0.0
  %8230 = vmatpush1.msra.mxu0 0.0
  %8231 = vmatprep.subr.mxu0 0.0
  %8232 = vmatpush1.msra.mxu0 0.0
  %8233 = vmatprep.subr.mxu0 0.0
  %8234 = vmatpush1.msra.mxu0 0.0
  %8235 = vmatprep.subr.mxu0 0.0
  %8236 = vmatpush1.msra.mxu0 0.0
  %8237 = vmatprep.subr.mxu0 0.0
  %8238 = vmatpush1.msra.mxu0 0.0
  %8239 = vmatprep.subr.mxu0 0.0
  %8240 = vmatpush1.msra.mxu0 0.0
  %8241 = vmatprep.subr.mxu0 0.0
  %8242 = vmatpush1.msra.mxu0 0.0
  %8243 = vmatprep.subr.mxu0 0.0
  %8244 = vmatpush1.msra.mxu0 0.0
  %8245 = vmatprep.mubr.f32.mxu0 0.0
  %8246 = vmatmul.mubr.f32.gmra.mrb[0].mxu0 %v8177
  %v8247 = vpop.f32.mrb[0].mxu0
  %v8248 = vadd.f32 %v8163, %v8247
  %v8249 = vpop.f32.mrb[0].mxu0
  %8250 = vmatprep.mubr.f32.mxu0 0.0
  %8251 = vmatmul.mubr.f32.gmra.mrb[0].mxu0 %v8179
  %v8252 = vpop.f32.mrb[0].mxu0
  %v8253 = vadd.f32 %v8168, %v8252
  %v8254 = vpop.f32.mrb[0].mxu0
  %8255 = vdwg.mxu0
  %v8256 = vld [vmem:[%s21] sm:$0x1]
  %v8258 = vlaneseq
  %v8259 = vshrl.u32 %v8258, 7
  %v8260 = vsub.s32 0, %v8259
  %v8261 = vrot.slane %v8256, %v8260
  %v8263 = vadd.f32 %v8248, %v8261
  %v8264 = vadd.f32 %v8253, %v8261
  %v8265 = vld [vmem:[%s20] sm:$0xff]
  %v8266 = vld [vmem:[%s20 + $0x8] sm:$0xff]
  %v8267 = vld [vmem:[%s20 + $0x10] sm:$0xff]
  %v8268 = vld [vmem:[%s20 + $0x18] sm:$0xff]
  %8269 = vmatprep.subr.mxu0 0.0
  %8270 = vmatpush1.msra.mxu0 %v8265
  %8271 = vmatprep.subr.mxu0 0.0
  %8272 = vmatpush1.msra.mxu0 %v8266
  %8273 = vmatprep.subr.mxu0 0.0
  %8274 = vmatpush1.msra.mxu0 %v8267
  %8275 = vmatprep.subr.mxu0 0.0
  %8276 = vmatpush1.msra.mxu0 %v8268
  %8277 = vmatprep.subr.mxu0 0.0
  %8278 = vmatpush1.msra.mxu0 0.0
  %8279 = vmatprep.subr.mxu0 0.0
  %8280 = vmatpush1.msra.mxu0 0.0
  %8281 = vmatprep.subr.mxu0 0.0
  %8282 = vmatpush1.msra.mxu0 0.0
  %8283 = vmatprep.subr.mxu0 0.0
  %8284 = vmatpush1.msra.mxu0 0.0
  %8285 = vmatprep.subr.mxu0 0.0
  %8286 = vmatpush1.msra.mxu0 0.0
  %8287 = vmatprep.subr.mxu0 0.0
  %8288 = vmatpush1.msra.mxu0 0.0
  %8289 = vmatprep.subr.mxu0 0.0
  %8290 = vmatpush1.msra.mxu0 0.0
  %8291 = vmatprep.subr.mxu0 0.0
  %8292 = vmatpush1.msra.mxu0 0.0
  %8293 = vmatprep.subr.mxu0 0.0
  %8294 = vmatpush1.msra.mxu0 0.0
  %8295 = vmatprep.subr.mxu0 0.0
  %8296 = vmatpush1.msra.mxu0 0.0
  %8297 = vmatprep.subr.mxu0 0.0
  %8298 = vmatpush1.msra.mxu0 0.0
  %8299 = vmatprep.subr.mxu0 0.0
  %8300 = vmatpush1.msra.mxu0 0.0
  %8301 = vmatprep.subr.mxu0 0.0
  %8302 = vmatpush1.msra.mxu0 0.0
  %8303 = vmatprep.subr.mxu0 0.0
  %8304 = vmatpush1.msra.mxu0 0.0
  %8305 = vmatprep.subr.mxu0 0.0
  %8306 = vmatpush1.msra.mxu0 0.0
  %8307 = vmatprep.subr.mxu0 0.0
  %8308 = vmatpush1.msra.mxu0 0.0
  %8309 = vmatprep.subr.mxu0 0.0
  %8310 = vmatpush1.msra.mxu0 0.0
  %8311 = vmatprep.subr.mxu0 0.0
  %8312 = vmatpush1.msra.mxu0 0.0
  %8313 = vmatprep.subr.mxu0 0.0
  %8314 = vmatpush1.msra.mxu0 0.0
  %8315 = vmatprep.subr.mxu0 0.0
  %8316 = vmatpush1.msra.mxu0 0.0
  %8317 = vmatprep.subr.mxu0 0.0
  %8318 = vmatpush1.msra.mxu0 0.0
  %8319 = vmatprep.subr.mxu0 0.0
  %8320 = vmatpush1.msra.mxu0 0.0
  %8321 = vmatprep.subr.mxu0 0.0
  %8322 = vmatpush1.msra.mxu0 0.0
  %8323 = vmatprep.subr.mxu0 0.0
  %8324 = vmatpush1.msra.mxu0 0.0
  %8325 = vmatprep.subr.mxu0 0.0
  %8326 = vmatpush1.msra.mxu0 0.0
  %8327 = vmatprep.subr.mxu0 0.0
  %8328 = vmatpush1.msra.mxu0 0.0
  %8329 = vmatprep.subr.mxu0 0.0
  %8330 = vmatpush1.msra.mxu0 0.0
  %8331 = vmatprep.subr.mxu0 0.0
  %8332 = vmatpush1.msra.mxu0 0.0
  %8333 = vmatprep.mubr.f32.mxu0 0.0
  %8334 = vmatmul.mubr.f32.gmra.mrb[0].mxu0 %v2018
  %v8335 = vpop.f32.mrb[0].mxu0
  %v8336 = vadd.f32 0.0, %v8335
  %v8337 = vpop.f32.mrb[0].mxu0
  %8338 = vdwg.mxu0
  %v8339 = vadd.f32 %v8263, %v8336
  %v8340 = vxor.u32 %v8339, 2147483648
  %v8341 = vmul.f32 %v8340, 1.442695
  %v8342 = vpow.pop %v8341
  %v8343 = vadd.f32 %v8342, 1.0
  %v8344 = vrcp.pop %v8343
  %v8345 = vmul.f32 1.0, %v8344
  %v8346 = vtanh.pop %v8339
  %v8347 = vmul.f32 %v8345, 0.0
  %8349 = vrot.lane.b32.xlu0 %v8346, 64
  %v8350 = vpop.permute.xlu0 %8349
  %v8352 = vmul.f32 %v8345, %v8350
  %8354 = vrot.lane.b32.xlu0 %v8352, 32
  %v8355 = vpop.permute.xlu0 %8354
  %v8357 = vadd.f32 %v8347, %v8355
  %v8358 = vtanh.pop %v8357
  %8360 = vrot.lane.b32.xlu0 %v8358, 64
  %v8361 = vpop.permute.xlu0 %8360
  %v8363 = vmul.f32 %v8345, %v8361
  %8365 = vrot.lane.b32.xlu0 %v8363, 32
  %v8366 = vpop.permute.xlu0 %8365
  %v8367 = vsel %vm165, %v8366, 0
  %8369 = vmatprep.subr.mxu0 0.0
  %8370 = vmatpush1.msra.mxu0 %v8265
  %8371 = vmatprep.subr.mxu0 0.0
  %8372 = vmatpush1.msra.mxu0 %v8266
  %8373 = vmatprep.subr.mxu0 0.0
  %8374 = vmatpush1.msra.mxu0 %v8267
  %8375 = vmatprep.subr.mxu0 0.0
  %8376 = vmatpush1.msra.mxu0 %v8268
  %8377 = vmatprep.subr.mxu0 0.0
  %8378 = vmatpush1.msra.mxu0 0.0
  %8379 = vmatprep.subr.mxu0 0.0
  %8380 = vmatpush1.msra.mxu0 0.0
  %8381 = vmatprep.subr.mxu0 0.0
  %8382 = vmatpush1.msra.mxu0 0.0
  %8383 = vmatprep.subr.mxu0 0.0
  %8384 = vmatpush1.msra.mxu0 0.0
  %8385 = vmatprep.subr.mxu0 0.0
  %8386 = vmatpush1.msra.mxu0 0.0
  %8387 = vmatprep.subr.mxu0 0.0
  %8388 = vmatpush1.msra.mxu0 0.0
  %8389 = vmatprep.subr.mxu0 0.0
  %8390 = vmatpush1.msra.mxu0 0.0
  %8391 = vmatprep.subr.mxu0 0.0
  %8392 = vmatpush1.msra.mxu0 0.0
  %8393 = vmatprep.subr.mxu0 0.0
  %8394 = vmatpush1.msra.mxu0 0.0
  %8395 = vmatprep.subr.mxu0 0.0
  %8396 = vmatpush1.msra.mxu0 0.0
  %8397 = vmatprep.subr.mxu0 0.0
  %8398 = vmatpush1.msra.mxu0 0.0
  %8399 = vmatprep.subr.mxu0 0.0
  %8400 = vmatpush1.msra.mxu0 0.0
  %8401 = vmatprep.subr.mxu0 0.0
  %8402 = vmatpush1.msra.mxu0 0.0
  %8403 = vmatprep.subr.mxu0 0.0
  %8404 = vmatpush1.msra.mxu0 0.0
  %8405 = vmatprep.subr.mxu0 0.0
  %8406 = vmatpush1.msra.mxu0 0.0
  %8407 = vmatprep.subr.mxu0 0.0
  %8408 = vmatpush1.msra.mxu0 0.0
  %8409 = vmatprep.subr.mxu0 0.0
  %8410 = vmatpush1.msra.mxu0 0.0
  %8411 = vmatprep.subr.mxu0 0.0
  %8412 = vmatpush1.msra.mxu0 0.0
  %8413 = vmatprep.subr.mxu0 0.0
  %8414 = vmatpush1.msra.mxu0 0.0
  %8415 = vmatprep.subr.mxu0 0.0
  %8416 = vmatpush1.msra.mxu0 0.0
  %8417 = vmatprep.subr.mxu0 0.0
  %8418 = vmatpush1.msra.mxu0 0.0
  %8419 = vmatprep.subr.mxu0 0.0
  %8420 = vmatpush1.msra.mxu0 0.0
  %8421 = vmatprep.subr.mxu0 0.0
  %8422 = vmatpush1.msra.mxu0 0.0
  %8423 = vmatprep.subr.mxu0 0.0
  %8424 = vmatpush1.msra.mxu0 0.0
  %8425 = vmatprep.subr.mxu0 0.0
  %8426 = vmatpush1.msra.mxu0 0.0
  %8427 = vmatprep.subr.mxu0 0.0
  %8428 = vmatpush1.msra.mxu0 0.0
  %8429 = vmatprep.subr.mxu0 0.0
  %8430 = vmatpush1.msra.mxu0 0.0
  %8431 = vmatprep.subr.mxu0 0.0
  %8432 = vmatpush1.msra.mxu0 0.0
  %8433 = vmatprep.mubr.f32.mxu0 0.0
  %8434 = vmatmul.mubr.f32.gmra.mrb[0].mxu0 %v8367
  %v8435 = vpop.f32.mrb[0].mxu0
  %v8436 = vadd.f32 0.0, %v8435
  %v8437 = vpop.f32.mrb[0].mxu0
  %8438 = vdwg.mxu0
  %v8439 = vadd.f32 %v8264, %v8436
  %v8440 = vxor.u32 %v8439, 2147483648
  %v8441 = vmul.f32 %v8440, 1.442695
  %v8442 = vpow.pop %v8441
  %v8443 = vadd.f32 %v8442, 1.0
  %v8444 = vrcp.pop %v8443
  %v8445 = vmul.f32 1.0, %v8444
  %v8446 = vtanh.pop %v8439
  %v8447 = vmul.f32 %v8445, %v8357
  %8449 = vrot.lane.b32.xlu0 %v8446, 64
  %v8450 = vpop.permute.xlu0 %8449
  %v8452 = vmul.f32 %v8445, %v8450
  %8454 = vrot.lane.b32.xlu0 %v8452, 32
  %v8455 = vpop.permute.xlu0 %8454
  %v8457 = vadd.f32 %v8447, %v8455
  %v8458 = vtanh.pop %v8457
  %8460 = vrot.lane.b32.xlu0 %v8458, 64
  %v8461 = vpop.permute.xlu0 %8460
  %v8463 = vmul.f32 %v8445, %v8461
  %8465 = vrot.lane.b32.xlu0 %v8073, 32
  %v8466 = vpop.permute.xlu0 %8465
  %8469 = vrot.lane.b32.xlu0 %v8463, 64
  %v8470 = vpop.permute.xlu0 %8469
  %8473 = vrot.lane.b32.xlu0 %v8074, 32
  %v8474 = vpop.permute.xlu0 %8473
  %8477 = vrot.lane.b32.xlu0 %v8077, 64
  %v8478 = vpop.permute.xlu0 %8477
  %v8480 = vsel %vm165, %v8466, %v8470
  %v8481 = vsel %vm87, %v8480, %v8474
  %vm8482 = vcmask 785408
  %v8483 = vsel %vm8482, %v8481, %v8478
  %8484 = vst [vmem:[%s22] sm:$0xff] %v8483
  // Predicated region
  $region90: #{encoder_forward.1} parent=0 // pred_check
    _
  $region91: #{encoder_forward.1} parent=0 // pred_check_branch
    %8486 = sbr.rel (0) target = $region93
  $region92: #{encoder_forward.1} parent=0 // pred_region
    _
  $region93: #{encoder_forward.1} parent=0 // pred_fallthru
    _
  // Predicated region
  $region94: #{encoder_forward.1} parent=0 // pred_check
    _
  $region95: #{encoder_forward.1} parent=0 // pred_check_branch
    %8488 = sbr.rel (0) target = $region97
  $region96: #{encoder_forward.1} parent=0 // pred_region
    _
  $region97: #{encoder_forward.1} parent=0 // pred_fallthru
    _

</llo_original>
